<compile_context>
chip_gen: v7x
topology: tpu7x:2x2x1
jax: 0.10.0
libtpu: 0.0.40
codegen_flags: <defaults>
</compile_context>

<pallas_src>
import math

import numpy as np
import jax
import jax.numpy as jnp
from jax.experimental import pallas as pl
from jax.experimental.pallas import tpu as pltpu

NEG_SLOPE = 0.01  # F.leaky_relu default
OUT_DIM = 256

_VMEM_SPEC = pl.BlockSpec(memory_space=pltpu.MemorySpace.VMEM)


def _leaky(h):
    return jnp.where(h > 0, h, NEG_SLOPE * h)


def _round8(n):
    return (n + 7) // 8 * 8


# ------------------------------ Pallas kernels --------------------------------
def _make_layer1_kernel(m_pad):
    """conv1 as ONE stacked-tap GEMM + fused 2x2 max-pool + bias + leaky_relu.

    The LHS stacks the four pool-tap patch matrices along M; tap t occupies
    rows [t*m_pad, (t+1)*m_pad).  The pool is a 4-way max over row blocks.
    """
    def kernel(p_ref, w_ref, b_ref, o_ref):
        f32 = jnp.float32
        y = jnp.dot(p_ref[...], w_ref[...], preferred_element_type=f32)
        m01 = jnp.maximum(y[0:m_pad], y[m_pad:2 * m_pad])
        m23 = jnp.maximum(y[2 * m_pad:3 * m_pad], y[3 * m_pad:4 * m_pad])
        h = jnp.maximum(m01, m23) + b_ref[...]
        o_ref[...] = _leaky(h).astype(o_ref.dtype)
    return kernel


def _make_layers234_kernel(batch, m2_pad, cin3, k3=3, oc3=2):
    """Fused conv2(+pool) -> conv3(+pool) -> conv4, all with leaky_relu.

    conv2: one stacked-tap GEMM + 4-way pool max (like layer 1).
    conv3: in-kernel im2col via a constant 0/1 selection matrix (matmul-gather
           on the MXU; zero rows encode the conv padding), then k3*k3
           accumulated (rpb, cin3) x (cin3, cout3) GEMMs; the 2x2 pool of the
           2x2 conv-3 output collapses to a 4-way row-block max (output 1x1).
    conv4: the layer-3 pooled activation is 1x1 spatial, so with k=3, pad=1
           only the kernel centre tap touches real data -> a plain matmul.
    """
    rpb = oc3 * oc3 * batch            # rows per (kh,kw) block of the gather
    nk3 = k3 * k3

    def kernel(p2_ref, w2_ref, b2_ref, sel3_ref, w3_ref, b3_ref,
               w4c_ref, b4_ref, o_ref):
        f32 = jnp.float32
        # ---- conv2: stacked GEMM + pool max + bias + leaky ----
        y2 = jnp.dot(p2_ref[...], w2_ref[...], preferred_element_type=f32)
        m01 = jnp.maximum(y2[0:m2_pad], y2[m2_pad:2 * m2_pad])
        m23 = jnp.maximum(y2[2 * m2_pad:3 * m2_pad], y2[3 * m2_pad:4 * m2_pad])
        h2 = _leaky(jnp.maximum(m01, m23) + b2_ref[...])      # (m2_pad, 128)

        # ---- conv3: matmul-gather im2col + accumulated GEMMs + pool ----
        a3 = jnp.dot(sel3_ref[...], h2, preferred_element_type=f32)
        y3 = jnp.dot(a3[0:rpb, :], w3_ref[0:cin3, :],
                     preferred_element_type=f32)
        for kk in range(1, nk3):
            y3 = y3 + jnp.dot(a3[kk * rpb:(kk + 1) * rpb, :],
                              w3_ref[kk * cin3:(kk + 1) * cin3, :],
                              preferred_element_type=f32)
        # y3 rows are ordered (i, j, b) over the 2x2 conv-3 outputs.
        pooled = jnp.maximum(
            jnp.maximum(y3[0:batch], y3[batch:2 * batch]),
            jnp.maximum(y3[2 * batch:3 * batch], y3[3 * batch:4 * batch]))
        h3 = _leaky(pooled + b3_ref[...])                      # (batch, 256)

        # ---- conv4 (1x1 input): exact centre-tap matmul + bias + leaky ----
        y4 = jnp.dot(h3, w4c_ref[...], preferred_element_type=f32) + b4_ref[...]
        o_ref[...] = _leaky(y4).astype(o_ref.dtype)
    return kernel


# ------------------------ wrapper-side layout plumbing ------------------------
def _pool_tap_matrices(x_nhwc, k, stride, pad):
    """im2col for conv(k, stride, pad) followed by max_pool2d(2, 2).

    Returns the FOUR tap patch matrices (one per 2x2 pool-window position),
    built directly at stride 2*stride so the full `patches` intermediate is
    never materialized.  Tap rows are ordered (b, ph, pw); columns (kh,kw,ci).
    """
    B, H, W, C = x_nhwc.shape
    OH = (H + 2 * pad - k) // stride + 1
    OW = (W + 2 * pad - k) // stride + 1
    PH, PW = OH // 2, OW // 2                       # floor mode, like PyTorch
    xp = jnp.pad(x_nhwc, ((0, 0), (pad, pad), (pad, pad), (0, 0)))
    s2 = 2 * stride
    taps = []
    for dh in (0, 1):
        for dw in (0, 1):
            cols = []
            for kh in range(k):
                for kw in range(k):
                    r0 = dh * stride + kh
                    c0 = dw * stride + kw
                    cols.append(xp[:, r0:r0 + s2 * PH:s2,
                                   c0:c0 + s2 * PW:s2, :])
            taps.append(jnp.concatenate(cols, axis=-1)
                        .reshape(B * PH * PW, k * k * C))
    return taps, PH, PW


def _stack_taps(taps, m_pad, k_pad):
    """Zero-pad each tap to (m_pad, k_pad) and stack the 4 taps along M."""
    m, kdim = taps[0].shape
    padded = [jnp.pad(t, ((0, m_pad - m), (0, k_pad - kdim))) for t in taps]
    return jnp.concatenate(padded, axis=0)


def _build_sel3(batch, n_cols, hw, k, stride, pad):
    """Constant 0/1 selection matrix implementing conv-3's im2col as a matmul.

    Gathers, for every (kh,kw) block and every (i,j,b) conv-3 output position,
    the input pixel row from the (b,oh,ow)-flattened layer-2 activation; rows
    that fall into the conv padding are all-zero.
    """
    oc = (hw + 2 * pad - k) // stride + 1
    rpb = oc * oc * batch
    sel = np.zeros((k * k * rpb, n_cols), np.float32)
    for kh in range(k):
        for kw in range(k):
            kk = kh * k + kw
            for i in range(oc):
                for j in range(oc):
                    for b in range(batch):
                        r = i * stride + kh - pad
                        c = j * stride + kw - pad
                        if 0 <= r < hw and 0 <= c < hw:
                            row = kk * rpb + (i * oc + j) * batch + b
                            sel[row, b * hw * hw + r * hw + c] = 1.0
    return jnp.asarray(sel), oc


def cnn_forward(params, x_nhwc):
    B = x_nhwc.shape[0]
    f32 = jnp.float32

    # -------- layer 1: conv1 + leaky_relu + max_pool (kernel A) --------------
    taps1, PH1, PW1 = _pool_tap_matrices(x_nhwc, k=5, stride=3, pad=2)
    m1 = taps1[0].shape[0]
    m1p = _round8(m1)
    p1 = _stack_taps(taps1, m_pad=m1p, k_pad=32)            # K: 25 -> 32
    cin = x_nhwc.shape[-1]
    w1p = jnp.pad(params["w1"].reshape(5 * 5 * cin, 64),
                  ((0, 32 - 5 * 5 * cin), (0, 0)))
    h1 = pl.pallas_call(
        _make_layer1_kernel(m1p),
        out_shape=jax.ShapeDtypeStruct((m1p, 64), f32),
        in_specs=[_VMEM_SPEC] * 3,
        out_specs=_VMEM_SPEC,
    )(p1, w1p, params["b1"])
    h1 = h1[:m1].reshape(B, PH1, PW1, 64)

    # -------- layers 2-4 fused into a single call (kernel B) -----------------
    # The only remaining wrapper data movement is conv-2's tap construction
    # from the layer-1 output (~0.5 MB); conv-3/conv-4 im2col is in-kernel.
    taps2, PH2, PW2 = _pool_tap_matrices(h1, k=5, stride=4, pad=2)
    # Kernel B is specialized to the module's intended regime (final spatial
    # extent 1x1, i.e. conv-2 pooled output is 3x3).
    assert PH2 == 3 and PW2 == 3, (PH2, PW2)
    m2 = taps2[0].shape[0]
    m2p = _round8(m2)
    p2 = _stack_taps(taps2, m_pad=m2p, k_pad=taps2[0].shape[1])
    sel3, oc3 = _build_sel3(B, n_cols=m2p, hw=PH2, k=3, stride=2, pad=1)
    w2f = params["w2"].reshape(5 * 5 * 64, 128)
    w3f = params["w3"].reshape(3 * 3 * 128, 256)
    w4c = params["w4"][1, 1]                                 # centre tap (256,256)
    out = pl.pallas_call(
        _make_layers234_kernel(B, m2p, cin3=128, k3=3, oc3=oc3),
        out_shape=jax.ShapeDtypeStruct((B, OUT_DIM), f32),
        in_specs=[_VMEM_SPEC] * 8,
        out_specs=_VMEM_SPEC,
    )(p2, w2f, params["b2"], sel3, w3f, params["b3"], w4c, params["b4"])
    # x.view(-1, out_dim): the pipeline ends at 1x1 spatial, so the flattened
    # output is exactly (B, out_dim).
    return out


# --------- deterministic init (kaiming_uniform fan_in, bias = 0.01) ----------
def _kaiming_uniform_hwio(key, kh, kw, cin, cout):
    fan_in = cin * kh * kw
    bound = math.sqrt(2.0) * math.sqrt(3.0 / fan_in)   # gain(leaky_relu,a=0)=sqrt(2)
    return jax.random.uniform(key, (kh, kw, cin, cout), jnp.float32,
                              -bound, bound)


def init_params(key, input_dim=1, out_dim=OUT_DIM):
    ks = jax.random.split(key, 4)
    p = {}
    p["w1"] = _kaiming_uniform_hwio(ks[0], 5, 5, input_dim, 64)
    p["b1"] = jnp.full((1, 64), 0.01, jnp.float32)
    p["w2"] = _kaiming_uniform_hwio(ks[1], 5, 5, 64, 128)
    p["b2"] = jnp.full((1, 128), 0.01, jnp.float32)
    p["w3"] = _kaiming_uniform_hwio(ks[2], 3, 3, 128, 256)
    p["b3"] = jnp.full((1, 256), 0.01, jnp.float32)
    p["w4"] = _kaiming_uniform_hwio(ks[3], 3, 3, 256, out_dim)
    p["b4"] = jnp.full((1, out_dim), 0.01, jnp.float32)
    return p


# ------------- pure-JAX reference (mirrors the PyTorch forward) --------------
def cnn_ref(params, x_nhwc):
    def conv(x, w, b, stride, pad):
        y = jax.lax.conv_general_dilated(
            x, w, window_strides=(stride, stride),
            padding=[(pad, pad), (pad, pad)],
            dimension_numbers=("NHWC", "HWIO", "NHWC"))
        return y + b.reshape(1, 1, 1, -1)

    def pool(x):
        return jax.lax.reduce_window(x, -jnp.inf, jax.lax.max,
                                     (1, 2, 2, 1), (1, 2, 2, 1), "VALID")

    h = pool(_leaky(conv(x_nhwc, params["w1"], params["b1"], 3, 2)))
    h = pool(_leaky(conv(h, params["w2"], params["b2"], 4, 2)))
    h = pool(_leaky(conv(h, params["w3"], params["b3"], 2, 1)))
    h = _leaky(conv(h, params["w4"], params["b4"], 2, 1))
    B, OH, OW, C = h.shape
    return h.reshape(B * OH * OW, C)


if __name__ == "__main__":
    key = jax.random.PRNGKey(0)
    kp, kx = jax.random.split(key)
    params = init_params(kp)

    # NHWC input; equivalent to a PyTorch NCHW input of shape (2, 1, 128, 128)
    # — the module's intended regime (final spatial extent 1x1, as required by
    # x.view(-1, out_dim)).  128x128 -> 21x21 -> 3x3 -> 1x1 -> 1x1.
    B, H, W = 2, 128, 128
    x = jax.random.normal(kx, (B, H, W, 1), jnp.float32)

    out = jax.block_until_ready(jax.jit(cnn_forward)(params, x))
    assert out.shape == (B, OUT_DIM), out.shape

    ref = jax.block_until_ready(jax.jit(cnn_ref)(params, x))
    err = float(jnp.max(jnp.abs(out - ref)))
    assert err < 1e-3, f"mismatch vs reference: max abs err = {err}"

    print("KERNEL_OK")
</pallas_src>

<mosaic_0001>
module attributes {stable_mosaic.version = 11 : i64} {
  func.func @kernel(%arg0: memref<3552x32xf32, #tpu.memory_space<vmem>>, %arg1: memref<32x64xf32, #tpu.memory_space<vmem>>, %arg2: memref<1x64xf32, #tpu.memory_space<vmem>>, %arg3: memref<888x64xf32, #tpu.memory_space<vmem>>) attributes {dimension_semantics = [], scalar_prefetch = 0 : i64, scratch_operands = 0 : i64, tpu.core_type = #tpu.core_type<tc>} {
    %c0 = arith.constant 0 : index
    %c0_0 = arith.constant 0 : index
    %0 = vector.load %arg0[%c0, %c0_0] : memref<3552x32xf32, #tpu.memory_space<vmem>>, vector<3552x32xf32>
    %c0_1 = arith.constant 0 : index
    %c0_2 = arith.constant 0 : index
    %1 = vector.load %arg1[%c0_1, %c0_2] : memref<32x64xf32, #tpu.memory_space<vmem>>, vector<32x64xf32>
    %cst = arith.constant dense<0.000000e+00> : vector<3552x64xf32>
    %2 = tpu.matmul %0, %1, %cst {dimension_numbers = #tpu.dot_dimension_numbers<[1], [0], [0], [1], [0, 0, 1, 1], [], []>} : vector<3552x32xf32>, vector<32x64xf32>, vector<3552x64xf32> -> vector<3552x64xf32>
    %3 = vector.extract_strided_slice %2 {offsets = [0, 0], sizes = [888, 64], strides = [1, 1]} : vector<3552x64xf32> to vector<888x64xf32>
    %4 = vector.extract_strided_slice %2 {offsets = [888, 0], sizes = [888, 64], strides = [1, 1]} : vector<3552x64xf32> to vector<888x64xf32>
    %5 = arith.maximumf %3, %4 : vector<888x64xf32>
    %6 = vector.extract_strided_slice %2 {offsets = [1776, 0], sizes = [888, 64], strides = [1, 1]} : vector<3552x64xf32> to vector<888x64xf32>
    %7 = vector.extract_strided_slice %2 {offsets = [2664, 0], sizes = [888, 64], strides = [1, 1]} : vector<3552x64xf32> to vector<888x64xf32>
    %8 = arith.maximumf %6, %7 : vector<888x64xf32>
    %9 = arith.maximumf %5, %8 : vector<888x64xf32>
    %c0_3 = arith.constant 0 : index
    %c0_4 = arith.constant 0 : index
    %10 = vector.load %arg2[%c0_3, %c0_4] : memref<1x64xf32, #tpu.memory_space<vmem>>, vector<1x64xf32>
    %11 = vector.broadcast %10 : vector<1x64xf32> to vector<888x64xf32>
    %12 = arith.addf %9, %11 : vector<888x64xf32>
    %cst_5 = arith.constant 0.000000e+00 : f32
    %13 = vector.broadcast %cst_5 : f32 to vector<888x64xf32>
    %14 = arith.cmpf ogt, %12, %13 : vector<888x64xf32>
    %cst_6 = arith.constant 0.00999999977 : f32
    %15 = vector.broadcast %cst_6 : f32 to vector<888x64xf32>
    %16 = arith.mulf %15, %12 : vector<888x64xf32>
    %17 = arith.select %14, %12, %16 : vector<888x64xi1>, vector<888x64xf32>
    %c0_7 = arith.constant 0 : index
    %c0_8 = arith.constant 0 : index
    %18 = vector.load %arg3[%c0_7, %c0_8] : memref<888x64xf32, #tpu.memory_space<vmem>>, vector<888x64xf32>
    tpu.vector_store %arg3[%c0_7, %c0_8], %17 {strides = array<i32>} : memref<888x64xf32, #tpu.memory_space<vmem>>, vector<888x64xf32>,
    return
  }
}

module attributes {stable_mosaic.version = 11 : i64} {
  func.func @kernel(%arg0: memref<96x1600xf32, #tpu.memory_space<vmem>>, %arg1: memref<1600x128xf32, #tpu.memory_space<vmem>>, %arg2: memref<1x128xf32, #tpu.memory_space<vmem>>, %arg3: memref<72x24xf32, #tpu.memory_space<vmem>>, %arg4: memref<1152x256xf32, #tpu.memory_space<vmem>>, %arg5: memref<1x256xf32, #tpu.memory_space<vmem>>, %arg6: memref<256x256xf32, #tpu.memory_space<vmem>>, %arg7: memref<1x256xf32, #tpu.memory_space<vmem>>, %arg8: memref<2x256xf32, #tpu.memory_space<vmem>>) attributes {dimension_semantics = [], scalar_prefetch = 0 : i64, scratch_operands = 0 : i64, tpu.core_type = #tpu.core_type<tc>} {
    %c0 = arith.constant 0 : index
    %c0_0 = arith.constant 0 : index
    %0 = vector.load %arg0[%c0, %c0_0] : memref<96x1600xf32, #tpu.memory_space<vmem>>, vector<96x1600xf32>
    %c0_1 = arith.constant 0 : index
    %c0_2 = arith.constant 0 : index
    %1 = vector.load %arg1[%c0_1, %c0_2] : memref<1600x128xf32, #tpu.memory_space<vmem>>, vector<1600x128xf32>
    %cst = arith.constant dense<0.000000e+00> : vector<96x128xf32>
    %2 = tpu.matmul %0, %1, %cst {dimension_numbers = #tpu.dot_dimension_numbers<[1], [0], [0], [1], [0, 0, 1, 1], [], []>} : vector<96x1600xf32>, vector<1600x128xf32>, vector<96x128xf32> -> vector<96x128xf32>
    %3 = vector.extract_strided_slice %2 {offsets = [0, 0], sizes = [24, 128], strides = [1, 1]} : vector<96x128xf32> to vector<24x128xf32>
    %4 = vector.extract_strided_slice %2 {offsets = [24, 0], sizes = [24, 128], strides = [1, 1]} : vector<96x128xf32> to vector<24x128xf32>
    %5 = arith.maximumf %3, %4 : vector<24x128xf32>
    %6 = vector.extract_strided_slice %2 {offsets = [48, 0], sizes = [24, 128], strides = [1, 1]} : vector<96x128xf32> to vector<24x128xf32>
    %7 = vector.extract_strided_slice %2 {offsets = [72, 0], sizes = [24, 128], strides = [1, 1]} : vector<96x128xf32> to vector<24x128xf32>
    %8 = arith.maximumf %6, %7 : vector<24x128xf32>
    %9 = arith.maximumf %5, %8 : vector<24x128xf32>
    %c0_3 = arith.constant 0 : index
    %c0_4 = arith.constant 0 : index
    %10 = vector.load %arg2[%c0_3, %c0_4] : memref<1x128xf32, #tpu.memory_space<vmem>>, vector<1x128xf32>
    %11 = vector.broadcast %10 : vector<1x128xf32> to vector<24x128xf32>
    %12 = arith.addf %9, %11 : vector<24x128xf32>
    %cst_5 = arith.constant 0.000000e+00 : f32
    %13 = vector.broadcast %cst_5 : f32 to vector<24x128xf32>
    %14 = arith.cmpf ogt, %12, %13 : vector<24x128xf32>
    %cst_6 = arith.constant 0.00999999977 : f32
    %15 = vector.broadcast %cst_6 : f32 to vector<24x128xf32>
    %16 = arith.mulf %15, %12 : vector<24x128xf32>
    %17 = arith.select %14, %12, %16 : vector<24x128xi1>, vector<24x128xf32>
    %c0_7 = arith.constant 0 : index
    %c0_8 = arith.constant 0 : index
    %18 = vector.load %arg3[%c0_7, %c0_8] : memref<72x24xf32, #tpu.memory_space<vmem>>, vector<72x24xf32>
    %cst_9 = arith.constant dense<0.000000e+00> : vector<72x128xf32>
    %19 = tpu.matmul %18, %17, %cst_9 {dimension_numbers = #tpu.dot_dimension_numbers<[1], [0], [0], [1], [0, 0, 1, 1], [], []>} : vector<72x24xf32>, vector<24x128xf32>, vector<72x128xf32> -> vector<72x128xf32>
    %20 = vector.extract_strided_slice %19 {offsets = [0, 0], sizes = [8, 128], strides = [1, 1]} : vector<72x128xf32> to vector<8x128xf32>
    %c0_10 = arith.constant 0 : index
    %c0_11 = arith.constant 0 : index
    %21 = vector.load %arg4[%c0_10, %c0_11] : memref<1152x256xf32, #tpu.memory_space<vmem>>, vector<128x256xf32>
    %cst_12 = arith.constant dense<0.000000e+00> : vector<8x256xf32>
    %22 = tpu.matmul %20, %21, %cst_12 {dimension_numbers = #tpu.dot_dimension_numbers<[1], [0], [0], [1], [0, 0, 1, 1], [], []>} : vector<8x128xf32>, vector<128x256xf32>, vector<8x256xf32> -> vector<8x256xf32>
    %23 = vector.extract_strided_slice %19 {offsets = [8, 0], sizes = [8, 128], strides = [1, 1]} : vector<72x128xf32> to vector<8x128xf32>
    %c128 = arith.constant 128 : index
    %c0_13 = arith.constant 0 : index
    %24 = vector.load %arg4[%c128, %c0_13] : memref<1152x256xf32, #tpu.memory_space<vmem>>, vector<128x256xf32>
    %cst_14 = arith.constant dense<0.000000e+00> : vector<8x256xf32>
    %25 = tpu.matmul %23, %24, %cst_14 {dimension_numbers = #tpu.dot_dimension_numbers<[1], [0], [0], [1], [0, 0, 1, 1], [], []>} : vector<8x128xf32>, vector<128x256xf32>, vector<8x256xf32> -> vector<8x256xf32>
    %26 = arith.addf %22, %25 : vector<8x256xf32>
    %27 = vector.extract_strided_slice %19 {offsets = [16, 0], sizes = [8, 128], strides = [1, 1]} : vector<72x128xf32> to vector<8x128xf32>
    %c256 = arith.constant 256 : index
    %c0_15 = arith.constant 0 : index
    %28 = vector.load %arg4[%c256, %c0_15] : memref<1152x256xf32, #tpu.memory_space<vmem>>, vector<128x256xf32>
    %cst_16 = arith.constant dense<0.000000e+00> : vector<8x256xf32>
    %29 = tpu.matmul %27, %28, %cst_16 {dimension_numbers = #tpu.dot_dimension_numbers<[1], [0], [0], [1], [0, 0, 1, 1], [], []>} : vector<8x128xf32>, vector<128x256xf32>, vector<8x256xf32> -> vector<8x256xf32>
    %30 = arith.addf %26, %29 : vector<8x256xf32>
    %31 = vector.extract_strided_slice %19 {offsets = [24, 0], sizes = [8, 128], strides = [1, 1]} : vector<72x128xf32> to vector<8x128xf32>
    %c384 = arith.constant 384 : index
    %c0_17 = arith.constant 0 : index
    %32 = vector.load %arg4[%c384, %c0_17] : memref<1152x256xf32, #tpu.memory_space<vmem>>, vector<128x256xf32>
    %cst_18 = arith.constant dense<0.000000e+00> : vector<8x256xf32>
    %33 = tpu.matmul %31, %32, %cst_18 {dimension_numbers = #tpu.dot_dimension_numbers<[1], [0], [0], [1], [0, 0, 1, 1], [], []>} : vector<8x128xf32>, vector<128x256xf32>, vector<8x256xf32> -> vector<8x256xf32>
    %34 = arith.addf %30, %33 : vector<8x256xf32>
    %35 = vector.extract_strided_slice %19 {offsets = [32, 0], sizes = [8, 128], strides = [1, 1]} : vector<72x128xf32> to vector<8x128xf32>
    %c512 = arith.constant 512 : index
    %c0_19 = arith.constant 0 : index
    %36 = vector.load %arg4[%c512, %c0_19] : memref<1152x256xf32, #tpu.memory_space<vmem>>, vector<128x256xf32>
    %cst_20 = arith.constant dense<0.000000e+00> : vector<8x256xf32>
    %37 = tpu.matmul %35, %36, %cst_20 {dimension_numbers = #tpu.dot_dimension_numbers<[1], [0], [0], [1], [0, 0, 1, 1], [], []>} : vector<8x128xf32>, vector<128x256xf32>, vector<8x256xf32> -> vector<8x256xf32>
    %38 = arith.addf %34, %37 : vector<8x256xf32>
    %39 = vector.extract_strided_slice %19 {offsets = [40, 0], sizes = [8, 128], strides = [1, 1]} : vector<72x128xf32> to vector<8x128xf32>
    %c640 = arith.constant 640 : index
    %c0_21 = arith.constant 0 : index
    %40 = vector.load %arg4[%c640, %c0_21] : memref<1152x256xf32, #tpu.memory_space<vmem>>, vector<128x256xf32>
    %cst_22 = arith.constant dense<0.000000e+00> : vector<8x256xf32>
    %41 = tpu.matmul %39, %40, %cst_22 {dimension_numbers = #tpu.dot_dimension_numbers<[1], [0], [0], [1], [0, 0, 1, 1], [], []>} : vector<8x128xf32>, vector<128x256xf32>, vector<8x256xf32> -> vector<8x256xf32>
    %42 = arith.addf %38, %41 : vector<8x256xf32>
    %43 = vector.extract_strided_slice %19 {offsets = [48, 0], sizes = [8, 128], strides = [1, 1]} : vector<72x128xf32> to vector<8x128xf32>
    %c768 = arith.constant 768 : index
    %c0_23 = arith.constant 0 : index
    %44 = vector.load %arg4[%c768, %c0_23] : memref<1152x256xf32, #tpu.memory_space<vmem>>, vector<128x256xf32>
    %cst_24 = arith.constant dense<0.000000e+00> : vector<8x256xf32>
    %45 = tpu.matmul %43, %44, %cst_24 {dimension_numbers = #tpu.dot_dimension_numbers<[1], [0], [0], [1], [0, 0, 1, 1], [], []>} : vector<8x128xf32>, vector<128x256xf32>, vector<8x256xf32> -> vector<8x256xf32>
    %46 = arith.addf %42, %45 : vector<8x256xf32>
    %47 = vector.extract_strided_slice %19 {offsets = [56, 0], sizes = [8, 128], strides = [1, 1]} : vector<72x128xf32> to vector<8x128xf32>
    %c896 = arith.constant 896 : index
    %c0_25 = arith.constant 0 : index
    %48 = vector.load %arg4[%c896, %c0_25] : memref<1152x256xf32, #tpu.memory_space<vmem>>, vector<128x256xf32>
    %cst_26 = arith.constant dense<0.000000e+00> : vector<8x256xf32>
    %49 = tpu.matmul %47, %48, %cst_26 {dimension_numbers = #tpu.dot_dimension_numbers<[1], [0], [0], [1], [0, 0, 1, 1], [], []>} : vector<8x128xf32>, vector<128x256xf32>, vector<8x256xf32> -> vector<8x256xf32>
    %50 = arith.addf %46, %49 : vector<8x256xf32>
    %51 = vector.extract_strided_slice %19 {offsets = [64, 0], sizes = [8, 128], strides = [1, 1]} : vector<72x128xf32> to vector<8x128xf32>
    %c1024 = arith.constant 1024 : index
    %c0_27 = arith.constant 0 : index
    %52 = vector.load %arg4[%c1024, %c0_27] : memref<1152x256xf32, #tpu.memory_space<vmem>>, vector<128x256xf32>
    %cst_28 = arith.constant dense<0.000000e+00> : vector<8x256xf32>
    %53 = tpu.matmul %51, %52, %cst_28 {dimension_numbers = #tpu.dot_dimension_numbers<[1], [0], [0], [1], [0, 0, 1, 1], [], []>} : vector<8x128xf32>, vector<128x256xf32>, vector<8x256xf32> -> vector<8x256xf32>
    %54 = arith.addf %50, %53 : vector<8x256xf32>
    %55 = vector.extract_strided_slice %54 {offsets = [0, 0], sizes = [2, 256], strides = [1, 1]} : vector<8x256xf32> to vector<2x256xf32>
    %56 = vector.extract_strided_slice %54 {offsets = [2, 0], sizes = [2, 256], strides = [1, 1]} : vector<8x256xf32> to vector<2x256xf32>
    %57 = arith.maximumf %55, %56 : vector<2x256xf32>
    %58 = vector.extract_strided_slice %54 {offsets = [4, 0], sizes = [2, 256], strides = [1, 1]} : vector<8x256xf32> to vector<2x256xf32>
    %59 = vector.extract_strided_slice %54 {offsets = [6, 0], sizes = [2, 256], strides = [1, 1]} : vector<8x256xf32> to vector<2x256xf32>
    %60 = arith.maximumf %58, %59 : vector<2x256xf32>
    %61 = arith.maximumf %57, %60 : vector<2x256xf32>
    %c0_29 = arith.constant 0 : index
    %c0_30 = arith.constant 0 : index
    %62 = vector.load %arg5[%c0_29, %c0_30] : memref<1x256xf32, #tpu.memory_space<vmem>>, vector<1x256xf32>
    %63 = vector.broadcast %62 : vector<1x256xf32> to vector<2x256xf32>
    %64 = arith.addf %61, %63 : vector<2x256xf32>
    %cst_31 = arith.constant 0.000000e+00 : f32
    %65 = vector.broadcast %cst_31 : f32 to vector<2x256xf32>
    %66 = arith.cmpf ogt, %64, %65 : vector<2x256xf32>
    %cst_32 = arith.constant 0.00999999977 : f32
    %67 = vector.broadcast %cst_32 : f32 to vector<2x256xf32>
    %68 = arith.mulf %67, %64 : vector<2x256xf32>
    %69 = arith.select %66, %64, %68 : vector<2x256xi1>, vector<2x256xf32>
    %c0_33 = arith.constant 0 : index
    %c0_34 = arith.constant 0 : index
    %70 = vector.load %arg6[%c0_33, %c0_34] : memref<256x256xf32, #tpu.memory_space<vmem>>, vector<256x256xf32>
    %cst_35 = arith.constant dense<0.000000e+00> : vector<2x256xf32>
    %71 = tpu.matmul %69, %70, %cst_35 {dimension_numbers = #tpu.dot_dimension_numbers<[1], [0], [0], [1], [0, 0, 1, 1], [], []>} : vector<2x256xf32>, vector<256x256xf32>, vector<2x256xf32> -> vector<2x256xf32>
    %c0_36 = arith.constant 0 : index
    %c0_37 = arith.constant 0 : index
    %72 = vector.load %arg7[%c0_36, %c0_37] : memref<1x256xf32, #tpu.memory_space<vmem>>, vector<1x256xf32>
    %73 = vector.broadcast %72 : vector<1x256xf32> to vector<2x256xf32>
    %74 = arith.addf %71, %73 : vector<2x256xf32>
    %cst_38 = arith.constant 0.000000e+00 : f32
    %75 = vector.broadcast %cst_38 : f32 to vector<2x256xf32>
    %76 = arith.cmpf ogt, %74, %75 : vector<2x256xf32>
    %cst_39 = arith.constant 0.00999999977 : f32
    %77 = vector.broadcast %cst_39 : f32 to vector<2x256xf32>
    %78 = arith.mulf %77, %74 : vector<2x256xf32>
    %79 = arith.select %76, %74, %78 : vector<2x256xi1>, vector<2x256xf32>
    %c0_40 = arith.constant 0 : index
    %c0_41 = arith.constant 0 : index
    %80 = vector.load %arg8[%c0_40, %c0_41] : memref<2x256xf32, #tpu.memory_space<vmem>>, vector<2x256xf32>
    tpu.vector_store %arg8[%c0_40, %c0_41], %79 {strides = array<i32>} : memref<2x256xf32, #tpu.memory_space<vmem>>, vector<2x256xf32>,
    return
  }
}

</mosaic_0001>

<llo_original>
// kernel: cnn_forward.2
$region0: #{cnn_forward.2}
  #allocation0 [shape = 'u32[]', space=smem, size = 0x4, offset = 0x4, fixed_abs, tag = 'smem constant byte address 0x4 - core index']
  #allocation1 [shape = 'u32[144,128]{1,0:T(1,128)}', space=vmem, size = 0x12000, scoped, tag = 'internal scratch']
  %s0 = inlined_call_operand.vmem [shape: f32[3552,32], index: 0, kind: input, shape index: {}]
  %s1 = inlined_call_operand.vmem [shape: f32[32,64], index: 1, kind: input, shape index: {}]
  %s2 = inlined_call_operand.vmem [shape: f32[1,64], index: 2, kind: input, shape index: {}]
  %s3 = inlined_call_operand.vmem [shape: f32[888,64], index: 3, kind: output, shape index: {}]
  %s4 = sld [smem:[#allocation0]]
  $region22: #{cnn_forward.2} parent=0
    _
  %s6 = ssub.s32 1, %s4
  %s7 = scalar_select 0, %s6, %s4
  // Predicated region
  $region2: #{cnn_forward.2} parent=0 // pred_check
    _
  $region3: #{cnn_forward.2} parent=0 // pred_check_branch
    %9 = sbr.rel (0) target = $region5
  $region4: #{cnn_forward.2} parent=0 // pred_region
    _
  $region5: #{cnn_forward.2} parent=0 // pred_fallthru
    _
  // Predicated region
  $region6: #{cnn_forward.2} parent=0 // pred_check
    _
  $region7: #{cnn_forward.2} parent=0 // pred_check_branch
    %11 = sbr.rel (0) target = $region9
  $region8: #{cnn_forward.2} parent=0 // pred_region
    _
  $region9: #{cnn_forward.2} parent=0 // pred_fallthru
    _
  // Predicated region
  $region10: #{cnn_forward.2} parent=0 // pred_check
    _
  $region11: #{cnn_forward.2} parent=0 // pred_check_branch
    %13 = sbr.rel (0) target = $region13
  $region12: #{cnn_forward.2} parent=0 // pred_region
    _
  $region13: #{cnn_forward.2} parent=0 // pred_fallthru
    _
  %v14 = vld [vmem:[%s0] sm:$0xff]
  %v15 = vld [vmem:[%s0 + $0x8] sm:$0xff]
  %v16 = vld [vmem:[%s0 + $0x10] sm:$0xff]
  %v17 = vld [vmem:[%s0 + $0x18] sm:$0xff]
  %v18 = vld [vmem:[%s0 + $0x20] sm:$0xff]
  %v19 = vld [vmem:[%s0 + $0x28] sm:$0xff]
  %v20 = vld [vmem:[%s0 + $0x30] sm:$0xff]
  %v21 = vld [vmem:[%s0 + $0x38] sm:$0xff]
  %v22 = vld [vmem:[%s0 + $0x40] sm:$0xff]
  %v23 = vld [vmem:[%s0 + $0x48] sm:$0xff]
  %v24 = vld [vmem:[%s0 + $0x50] sm:$0xff]
  %v25 = vld [vmem:[%s0 + $0x58] sm:$0xff]
  %v26 = vld [vmem:[%s0 + $0x60] sm:$0xff]
  %v27 = vld [vmem:[%s0 + $0x68] sm:$0xff]
  %v28 = vld [vmem:[%s0 + $0x70] sm:$0xff]
  %v29 = vld [vmem:[%s0 + $0x78] sm:$0xff]
  %v30 = vld [vmem:[%s0 + $0x80] sm:$0xff]
  %v31 = vld [vmem:[%s0 + $0x88] sm:$0xff]
  %v32 = vld [vmem:[%s0 + $0x90] sm:$0xff]
  %v33 = vld [vmem:[%s0 + $0x98] sm:$0xff]
  %v34 = vld [vmem:[%s0 + $0xa0] sm:$0xff]
  %v35 = vld [vmem:[%s0 + $0xa8] sm:$0xff]
  %v36 = vld [vmem:[%s0 + $0xb0] sm:$0xff]
  %v37 = vld [vmem:[%s0 + $0xb8] sm:$0xff]
  %v38 = vld [vmem:[%s0 + $0xc0] sm:$0xff]
  %v39 = vld [vmem:[%s0 + $0xc8] sm:$0xff]
  %v40 = vld [vmem:[%s0 + $0xd0] sm:$0xff]
  %v41 = vld [vmem:[%s0 + $0xd8] sm:$0xff]
  %v42 = vld [vmem:[%s0 + $0xe0] sm:$0xff]
  %v43 = vld [vmem:[%s0 + $0xe8] sm:$0xff]
  %v44 = vld [vmem:[%s0 + $0xf0] sm:$0xff]
  %v45 = vld [vmem:[%s0 + $0xf8] sm:$0xff]
  %v46 = vld [vmem:[%s0 + $0x100] sm:$0xff]
  %v47 = vld [vmem:[%s0 + $0x108] sm:$0xff]
  %v48 = vld [vmem:[%s0 + $0x110] sm:$0xff]
  %v49 = vld [vmem:[%s0 + $0x118] sm:$0xff]
  %v50 = vld [vmem:[%s0 + $0x120] sm:$0xff]
  %v51 = vld [vmem:[%s0 + $0x128] sm:$0xff]
  %v52 = vld [vmem:[%s0 + $0x130] sm:$0xff]
  %v53 = vld [vmem:[%s0 + $0x138] sm:$0xff]
  %v54 = vld [vmem:[%s0 + $0x140] sm:$0xff]
  %v55 = vld [vmem:[%s0 + $0x148] sm:$0xff]
  %v56 = vld [vmem:[%s0 + $0x150] sm:$0xff]
  %v57 = vld [vmem:[%s0 + $0x158] sm:$0xff]
  %v58 = vld [vmem:[%s0 + $0x160] sm:$0xff]
  %v59 = vld [vmem:[%s0 + $0x168] sm:$0xff]
  %v60 = vld [vmem:[%s0 + $0x170] sm:$0xff]
  %v61 = vld [vmem:[%s0 + $0x178] sm:$0xff]
  %v62 = vld [vmem:[%s0 + $0x180] sm:$0xff]
  %v63 = vld [vmem:[%s0 + $0x188] sm:$0xff]
  %v64 = vld [vmem:[%s0 + $0x190] sm:$0xff]
  %v65 = vld [vmem:[%s0 + $0x198] sm:$0xff]
  %v66 = vld [vmem:[%s0 + $0x1a0] sm:$0xff]
  %v67 = vld [vmem:[%s0 + $0x1a8] sm:$0xff]
  %v68 = vld [vmem:[%s0 + $0x1b0] sm:$0xff]
  %v69 = vld [vmem:[%s0 + $0x1b8] sm:$0xff]
  %v70 = vld [vmem:[%s0 + $0x1c0] sm:$0xff]
  %v71 = vld [vmem:[%s0 + $0x1c8] sm:$0xff]
  %v72 = vld [vmem:[%s0 + $0x1d0] sm:$0xff]
  %v73 = vld [vmem:[%s0 + $0x1d8] sm:$0xff]
  %v74 = vld [vmem:[%s0 + $0x1e0] sm:$0xff]
  %v75 = vld [vmem:[%s0 + $0x1e8] sm:$0xff]
  %v76 = vld [vmem:[%s0 + $0x1f0] sm:$0xff]
  %v77 = vld [vmem:[%s0 + $0x1f8] sm:$0xff]
  %v78 = vld [vmem:[%s0 + $0x200] sm:$0xff]
  %v79 = vld [vmem:[%s0 + $0x208] sm:$0xff]
  %v80 = vld [vmem:[%s0 + $0x210] sm:$0xff]
  %v81 = vld [vmem:[%s0 + $0x218] sm:$0xff]
  %v82 = vld [vmem:[%s0 + $0x220] sm:$0xff]
  %v83 = vld [vmem:[%s0 + $0x228] sm:$0xff]
  %v84 = vld [vmem:[%s0 + $0x230] sm:$0xff]
  %v85 = vld [vmem:[%s0 + $0x238] sm:$0xff]
  %v86 = vld [vmem:[%s0 + $0x240] sm:$0xff]
  %v87 = vld [vmem:[%s0 + $0x248] sm:$0xff]
  %v88 = vld [vmem:[%s0 + $0x250] sm:$0xff]
  %v89 = vld [vmem:[%s0 + $0x258] sm:$0xff]
  %v90 = vld [vmem:[%s0 + $0x260] sm:$0xff]
  %v91 = vld [vmem:[%s0 + $0x268] sm:$0xff]
  %v92 = vld [vmem:[%s0 + $0x270] sm:$0xff]
  %v93 = vld [vmem:[%s0 + $0x278] sm:$0xff]
  %v94 = vld [vmem:[%s0 + $0x280] sm:$0xff]
  %v95 = vld [vmem:[%s0 + $0x288] sm:$0xff]
  %v96 = vld [vmem:[%s0 + $0x290] sm:$0xff]
  %v97 = vld [vmem:[%s0 + $0x298] sm:$0xff]
  %v98 = vld [vmem:[%s0 + $0x2a0] sm:$0xff]
  %v99 = vld [vmem:[%s0 + $0x2a8] sm:$0xff]
  %v100 = vld [vmem:[%s0 + $0x2b0] sm:$0xff]
  %v101 = vld [vmem:[%s0 + $0x2b8] sm:$0xff]
  %v102 = vld [vmem:[%s0 + $0x2c0] sm:$0xff]
  %v103 = vld [vmem:[%s0 + $0x2c8] sm:$0xff]
  %v104 = vld [vmem:[%s0 + $0x2d0] sm:$0xff]
  %v105 = vld [vmem:[%s0 + $0x2d8] sm:$0xff]
  %v106 = vld [vmem:[%s0 + $0x2e0] sm:$0xff]
  %v107 = vld [vmem:[%s0 + $0x2e8] sm:$0xff]
  %v108 = vld [vmem:[%s0 + $0x2f0] sm:$0xff]
  %v109 = vld [vmem:[%s0 + $0x2f8] sm:$0xff]
  %v110 = vld [vmem:[%s0 + $0x300] sm:$0xff]
  %v111 = vld [vmem:[%s0 + $0x308] sm:$0xff]
  %v112 = vld [vmem:[%s0 + $0x310] sm:$0xff]
  %v113 = vld [vmem:[%s0 + $0x318] sm:$0xff]
  %v114 = vld [vmem:[%s0 + $0x320] sm:$0xff]
  %v115 = vld [vmem:[%s0 + $0x328] sm:$0xff]
  %v116 = vld [vmem:[%s0 + $0x330] sm:$0xff]
  %v117 = vld [vmem:[%s0 + $0x338] sm:$0xff]
  %v118 = vld [vmem:[%s0 + $0x340] sm:$0xff]
  %v119 = vld [vmem:[%s0 + $0x348] sm:$0xff]
  %v120 = vld [vmem:[%s0 + $0x350] sm:$0xff]
  %v121 = vld [vmem:[%s0 + $0x358] sm:$0xff]
  %v122 = vld [vmem:[%s0 + $0x360] sm:$0xff]
  %v123 = vld [vmem:[%s0 + $0x368] sm:$0xff]
  %v124 = vld [vmem:[%s0 + $0x370] sm:$0xff]
  %v125 = vld [vmem:[%s0 + $0x378] sm:$0xff]
  %v126 = vld [vmem:[%s0 + $0x380] sm:$0xff]
  %v127 = vld [vmem:[%s0 + $0x388] sm:$0xff]
  %v128 = vld [vmem:[%s0 + $0x390] sm:$0xff]
  %v129 = vld [vmem:[%s0 + $0x398] sm:$0xff]
  %v130 = vld [vmem:[%s0 + $0x3a0] sm:$0xff]
  %v131 = vld [vmem:[%s0 + $0x3a8] sm:$0xff]
  %v132 = vld [vmem:[%s0 + $0x3b0] sm:$0xff]
  %v133 = vld [vmem:[%s0 + $0x3b8] sm:$0xff]
  %v134 = vld [vmem:[%s0 + $0x3c0] sm:$0xff]
  %v135 = vld [vmem:[%s0 + $0x3c8] sm:$0xff]
  %v136 = vld [vmem:[%s0 + $0x3d0] sm:$0xff]
  %v137 = vld [vmem:[%s0 + $0x3d8] sm:$0xff]
  %v138 = vld [vmem:[%s0 + $0x3e0] sm:$0xff]
  %v139 = vld [vmem:[%s0 + $0x3e8] sm:$0xff]
  %v140 = vld [vmem:[%s0 + $0x3f0] sm:$0xff]
  %v141 = vld [vmem:[%s0 + $0x3f8] sm:$0xff]
  %v142 = vld [vmem:[%s0 + $0x400] sm:$0xff]
  %v143 = vld [vmem:[%s0 + $0x408] sm:$0xff]
  %v144 = vld [vmem:[%s0 + $0x410] sm:$0xff]
  %v145 = vld [vmem:[%s0 + $0x418] sm:$0xff]
  %v146 = vld [vmem:[%s0 + $0x420] sm:$0xff]
  %v147 = vld [vmem:[%s0 + $0x428] sm:$0xff]
  %v148 = vld [vmem:[%s0 + $0x430] sm:$0xff]
  %v149 = vld [vmem:[%s0 + $0x438] sm:$0xff]
  %v150 = vld [vmem:[%s0 + $0x440] sm:$0xff]
  %v151 = vld [vmem:[%s0 + $0x448] sm:$0xff]
  %v152 = vld [vmem:[%s0 + $0x450] sm:$0xff]
  %v153 = vld [vmem:[%s0 + $0x458] sm:$0xff]
  %v154 = vld [vmem:[%s0 + $0x460] sm:$0xff]
  %v155 = vld [vmem:[%s0 + $0x468] sm:$0xff]
  %v156 = vld [vmem:[%s0 + $0x470] sm:$0xff]
  %v157 = vld [vmem:[%s0 + $0x478] sm:$0xff]
  %v158 = vld [vmem:[%s0 + $0x480] sm:$0xff]
  %v159 = vld [vmem:[%s0 + $0x488] sm:$0xff]
  %v160 = vld [vmem:[%s0 + $0x490] sm:$0xff]
  %v161 = vld [vmem:[%s0 + $0x498] sm:$0xff]
  %v162 = vld [vmem:[%s0 + $0x4a0] sm:$0xff]
  %v163 = vld [vmem:[%s0 + $0x4a8] sm:$0xff]
  %v164 = vld [vmem:[%s0 + $0x4b0] sm:$0xff]
  %v165 = vld [vmem:[%s0 + $0x4b8] sm:$0xff]
  %v166 = vld [vmem:[%s0 + $0x4c0] sm:$0xff]
  %v167 = vld [vmem:[%s0 + $0x4c8] sm:$0xff]
  %v168 = vld [vmem:[%s0 + $0x4d0] sm:$0xff]
  %v169 = vld [vmem:[%s0 + $0x4d8] sm:$0xff]
  %v170 = vld [vmem:[%s0 + $0x4e0] sm:$0xff]
  %v171 = vld [vmem:[%s0 + $0x4e8] sm:$0xff]
  %v172 = vld [vmem:[%s0 + $0x4f0] sm:$0xff]
  %v173 = vld [vmem:[%s0 + $0x4f8] sm:$0xff]
  %v174 = vld [vmem:[%s0 + $0x500] sm:$0xff]
  %v175 = vld [vmem:[%s0 + $0x508] sm:$0xff]
  %v176 = vld [vmem:[%s0 + $0x510] sm:$0xff]
  %v177 = vld [vmem:[%s0 + $0x518] sm:$0xff]
  %v178 = vld [vmem:[%s0 + $0x520] sm:$0xff]
  %v179 = vld [vmem:[%s0 + $0x528] sm:$0xff]
  %v180 = vld [vmem:[%s0 + $0x530] sm:$0xff]
  %v181 = vld [vmem:[%s0 + $0x538] sm:$0xff]
  %v182 = vld [vmem:[%s0 + $0x540] sm:$0xff]
  %v183 = vld [vmem:[%s0 + $0x548] sm:$0xff]
  %v184 = vld [vmem:[%s0 + $0x550] sm:$0xff]
  %v185 = vld [vmem:[%s0 + $0x558] sm:$0xff]
  %v186 = vld [vmem:[%s0 + $0x560] sm:$0xff]
  %v187 = vld [vmem:[%s0 + $0x568] sm:$0xff]
  %v188 = vld [vmem:[%s0 + $0x570] sm:$0xff]
  %v189 = vld [vmem:[%s0 + $0x578] sm:$0xff]
  %v190 = vld [vmem:[%s0 + $0x580] sm:$0xff]
  %v191 = vld [vmem:[%s0 + $0x588] sm:$0xff]
  %v192 = vld [vmem:[%s0 + $0x590] sm:$0xff]
  %v193 = vld [vmem:[%s0 + $0x598] sm:$0xff]
  %v194 = vld [vmem:[%s0 + $0x5a0] sm:$0xff]
  %v195 = vld [vmem:[%s0 + $0x5a8] sm:$0xff]
  %v196 = vld [vmem:[%s0 + $0x5b0] sm:$0xff]
  %v197 = vld [vmem:[%s0 + $0x5b8] sm:$0xff]
  %v198 = vld [vmem:[%s0 + $0x5c0] sm:$0xff]
  %v199 = vld [vmem:[%s0 + $0x5c8] sm:$0xff]
  %v200 = vld [vmem:[%s0 + $0x5d0] sm:$0xff]
  %v201 = vld [vmem:[%s0 + $0x5d8] sm:$0xff]
  %v202 = vld [vmem:[%s0 + $0x5e0] sm:$0xff]
  %v203 = vld [vmem:[%s0 + $0x5e8] sm:$0xff]
  %v204 = vld [vmem:[%s0 + $0x5f0] sm:$0xff]
  %v205 = vld [vmem:[%s0 + $0x5f8] sm:$0xff]
  %v206 = vld [vmem:[%s0 + $0x600] sm:$0xff]
  %v207 = vld [vmem:[%s0 + $0x608] sm:$0xff]
  %v208 = vld [vmem:[%s0 + $0x610] sm:$0xff]
  %v209 = vld [vmem:[%s0 + $0x618] sm:$0xff]
  %v210 = vld [vmem:[%s0 + $0x620] sm:$0xff]
  %v211 = vld [vmem:[%s0 + $0x628] sm:$0xff]
  %v212 = vld [vmem:[%s0 + $0x630] sm:$0xff]
  %v213 = vld [vmem:[%s0 + $0x638] sm:$0xff]
  %v214 = vld [vmem:[%s0 + $0x640] sm:$0xff]
  %v215 = vld [vmem:[%s0 + $0x648] sm:$0xff]
  %v216 = vld [vmem:[%s0 + $0x650] sm:$0xff]
  %v217 = vld [vmem:[%s0 + $0x658] sm:$0xff]
  %v218 = vld [vmem:[%s0 + $0x660] sm:$0xff]
  %v219 = vld [vmem:[%s0 + $0x668] sm:$0xff]
  %v220 = vld [vmem:[%s0 + $0x670] sm:$0xff]
  %v221 = vld [vmem:[%s0 + $0x678] sm:$0xff]
  %v222 = vld [vmem:[%s0 + $0x680] sm:$0xff]
  %v223 = vld [vmem:[%s0 + $0x688] sm:$0xff]
  %v224 = vld [vmem:[%s0 + $0x690] sm:$0xff]
  %v225 = vld [vmem:[%s0 + $0x698] sm:$0xff]
  %v226 = vld [vmem:[%s0 + $0x6a0] sm:$0xff]
  %v227 = vld [vmem:[%s0 + $0x6a8] sm:$0xff]
  %v228 = vld [vmem:[%s0 + $0x6b0] sm:$0xff]
  %v229 = vld [vmem:[%s0 + $0x6b8] sm:$0xff]
  %v230 = vld [vmem:[%s0 + $0x6c0] sm:$0xff]
  %v231 = vld [vmem:[%s0 + $0x6c8] sm:$0xff]
  %v232 = vld [vmem:[%s0 + $0x6d0] sm:$0xff]
  %v233 = vld [vmem:[%s0 + $0x6d8] sm:$0xff]
  %v234 = vld [vmem:[%s0 + $0x6e0] sm:$0xff]
  %v235 = vld [vmem:[%s0 + $0x6e8] sm:$0xff]
  %v236 = vld [vmem:[%s0 + $0x6f0] sm:$0xff]
  %v237 = vld [vmem:[%s0 + $0x6f8] sm:$0xff]
  %v238 = vld [vmem:[%s0 + $0x700] sm:$0xff]
  %v239 = vld [vmem:[%s0 + $0x708] sm:$0xff]
  %v240 = vld [vmem:[%s0 + $0x710] sm:$0xff]
  %v241 = vld [vmem:[%s0 + $0x718] sm:$0xff]
  %v242 = vld [vmem:[%s0 + $0x720] sm:$0xff]
  %v243 = vld [vmem:[%s0 + $0x728] sm:$0xff]
  %v244 = vld [vmem:[%s0 + $0x730] sm:$0xff]
  %v245 = vld [vmem:[%s0 + $0x738] sm:$0xff]
  %v246 = vld [vmem:[%s0 + $0x740] sm:$0xff]
  %v247 = vld [vmem:[%s0 + $0x748] sm:$0xff]
  %v248 = vld [vmem:[%s0 + $0x750] sm:$0xff]
  %v249 = vld [vmem:[%s0 + $0x758] sm:$0xff]
  %v250 = vld [vmem:[%s0 + $0x760] sm:$0xff]
  %v251 = vld [vmem:[%s0 + $0x768] sm:$0xff]
  %v252 = vld [vmem:[%s0 + $0x770] sm:$0xff]
  %v253 = vld [vmem:[%s0 + $0x778] sm:$0xff]
  %v254 = vld [vmem:[%s0 + $0x780] sm:$0xff]
  %v255 = vld [vmem:[%s0 + $0x788] sm:$0xff]
  %v256 = vld [vmem:[%s0 + $0x790] sm:$0xff]
  %v257 = vld [vmem:[%s0 + $0x798] sm:$0xff]
  %v258 = vld [vmem:[%s0 + $0x7a0] sm:$0xff]
  %v259 = vld [vmem:[%s0 + $0x7a8] sm:$0xff]
  %v260 = vld [vmem:[%s0 + $0x7b0] sm:$0xff]
  %v261 = vld [vmem:[%s0 + $0x7b8] sm:$0xff]
  %v262 = vld [vmem:[%s0 + $0x7c0] sm:$0xff]
  %v263 = vld [vmem:[%s0 + $0x7c8] sm:$0xff]
  %v264 = vld [vmem:[%s0 + $0x7d0] sm:$0xff]
  %v265 = vld [vmem:[%s0 + $0x7d8] sm:$0xff]
  %v266 = vld [vmem:[%s0 + $0x7e0] sm:$0xff]
  %v267 = vld [vmem:[%s0 + $0x7e8] sm:$0xff]
  %v268 = vld [vmem:[%s0 + $0x7f0] sm:$0xff]
  %v269 = vld [vmem:[%s0 + $0x7f8] sm:$0xff]
  %v270 = vld [vmem:[%s0 + $0x800] sm:$0xff]
  %v271 = vld [vmem:[%s0 + $0x808] sm:$0xff]
  %v272 = vld [vmem:[%s0 + $0x810] sm:$0xff]
  %v273 = vld [vmem:[%s0 + $0x818] sm:$0xff]
  %v274 = vld [vmem:[%s0 + $0x820] sm:$0xff]
  %v275 = vld [vmem:[%s0 + $0x828] sm:$0xff]
  %v276 = vld [vmem:[%s0 + $0x830] sm:$0xff]
  %v277 = vld [vmem:[%s0 + $0x838] sm:$0xff]
  %v278 = vld [vmem:[%s0 + $0x840] sm:$0xff]
  %v279 = vld [vmem:[%s0 + $0x848] sm:$0xff]
  %v280 = vld [vmem:[%s0 + $0x850] sm:$0xff]
  %v281 = vld [vmem:[%s0 + $0x858] sm:$0xff]
  %v282 = vld [vmem:[%s0 + $0x860] sm:$0xff]
  %v283 = vld [vmem:[%s0 + $0x868] sm:$0xff]
  %v284 = vld [vmem:[%s0 + $0x870] sm:$0xff]
  %v285 = vld [vmem:[%s0 + $0x878] sm:$0xff]
  %v286 = vld [vmem:[%s0 + $0x880] sm:$0xff]
  %v287 = vld [vmem:[%s0 + $0x888] sm:$0xff]
  %v288 = vld [vmem:[%s0 + $0x890] sm:$0xff]
  %v289 = vld [vmem:[%s0 + $0x898] sm:$0xff]
  %v290 = vld [vmem:[%s0 + $0x8a0] sm:$0xff]
  %v291 = vld [vmem:[%s0 + $0x8a8] sm:$0xff]
  %v292 = vld [vmem:[%s0 + $0x8b0] sm:$0xff]
  %v293 = vld [vmem:[%s0 + $0x8b8] sm:$0xff]
  %v294 = vld [vmem:[%s0 + $0x8c0] sm:$0xff]
  %v295 = vld [vmem:[%s0 + $0x8c8] sm:$0xff]
  %v296 = vld [vmem:[%s0 + $0x8d0] sm:$0xff]
  %v297 = vld [vmem:[%s0 + $0x8d8] sm:$0xff]
  %v298 = vld [vmem:[%s0 + $0x8e0] sm:$0xff]
  %v299 = vld [vmem:[%s0 + $0x8e8] sm:$0xff]
  %v300 = vld [vmem:[%s0 + $0x8f0] sm:$0xff]
  %v301 = vld [vmem:[%s0 + $0x8f8] sm:$0xff]
  %v302 = vld [vmem:[%s0 + $0x900] sm:$0xff]
  %v303 = vld [vmem:[%s0 + $0x908] sm:$0xff]
  %v304 = vld [vmem:[%s0 + $0x910] sm:$0xff]
  %v305 = vld [vmem:[%s0 + $0x918] sm:$0xff]
  %v306 = vld [vmem:[%s0 + $0x920] sm:$0xff]
  %v307 = vld [vmem:[%s0 + $0x928] sm:$0xff]
  %v308 = vld [vmem:[%s0 + $0x930] sm:$0xff]
  %v309 = vld [vmem:[%s0 + $0x938] sm:$0xff]
  %v310 = vld [vmem:[%s0 + $0x940] sm:$0xff]
  %v311 = vld [vmem:[%s0 + $0x948] sm:$0xff]
  %v312 = vld [vmem:[%s0 + $0x950] sm:$0xff]
  %v313 = vld [vmem:[%s0 + $0x958] sm:$0xff]
  %v314 = vld [vmem:[%s0 + $0x960] sm:$0xff]
  %v315 = vld [vmem:[%s0 + $0x968] sm:$0xff]
  %v316 = vld [vmem:[%s0 + $0x970] sm:$0xff]
  %v317 = vld [vmem:[%s0 + $0x978] sm:$0xff]
  %v318 = vld [vmem:[%s0 + $0x980] sm:$0xff]
  %v319 = vld [vmem:[%s0 + $0x988] sm:$0xff]
  %v320 = vld [vmem:[%s0 + $0x990] sm:$0xff]
  %v321 = vld [vmem:[%s0 + $0x998] sm:$0xff]
  %v322 = vld [vmem:[%s0 + $0x9a0] sm:$0xff]
  %v323 = vld [vmem:[%s0 + $0x9a8] sm:$0xff]
  %v324 = vld [vmem:[%s0 + $0x9b0] sm:$0xff]
  %v325 = vld [vmem:[%s0 + $0x9b8] sm:$0xff]
  %v326 = vld [vmem:[%s0 + $0x9c0] sm:$0xff]
  %v327 = vld [vmem:[%s0 + $0x9c8] sm:$0xff]
  %v328 = vld [vmem:[%s0 + $0x9d0] sm:$0xff]
  %v329 = vld [vmem:[%s0 + $0x9d8] sm:$0xff]
  %v330 = vld [vmem:[%s0 + $0x9e0] sm:$0xff]
  %v331 = vld [vmem:[%s0 + $0x9e8] sm:$0xff]
  %v332 = vld [vmem:[%s0 + $0x9f0] sm:$0xff]
  %v333 = vld [vmem:[%s0 + $0x9f8] sm:$0xff]
  %v334 = vld [vmem:[%s0 + $0xa00] sm:$0xff]
  %v335 = vld [vmem:[%s0 + $0xa08] sm:$0xff]
  %v336 = vld [vmem:[%s0 + $0xa10] sm:$0xff]
  %v337 = vld [vmem:[%s0 + $0xa18] sm:$0xff]
  %v338 = vld [vmem:[%s0 + $0xa20] sm:$0xff]
  %v339 = vld [vmem:[%s0 + $0xa28] sm:$0xff]
  %v340 = vld [vmem:[%s0 + $0xa30] sm:$0xff]
  %v341 = vld [vmem:[%s0 + $0xa38] sm:$0xff]
  %v342 = vld [vmem:[%s0 + $0xa40] sm:$0xff]
  %v343 = vld [vmem:[%s0 + $0xa48] sm:$0xff]
  %v344 = vld [vmem:[%s0 + $0xa50] sm:$0xff]
  %v345 = vld [vmem:[%s0 + $0xa58] sm:$0xff]
  %v346 = vld [vmem:[%s0 + $0xa60] sm:$0xff]
  %v347 = vld [vmem:[%s0 + $0xa68] sm:$0xff]
  %v348 = vld [vmem:[%s0 + $0xa70] sm:$0xff]
  %v349 = vld [vmem:[%s0 + $0xa78] sm:$0xff]
  %v350 = vld [vmem:[%s0 + $0xa80] sm:$0xff]
  %v351 = vld [vmem:[%s0 + $0xa88] sm:$0xff]
  %v352 = vld [vmem:[%s0 + $0xa90] sm:$0xff]
  %v353 = vld [vmem:[%s0 + $0xa98] sm:$0xff]
  %v354 = vld [vmem:[%s0 + $0xaa0] sm:$0xff]
  %v355 = vld [vmem:[%s0 + $0xaa8] sm:$0xff]
  %v356 = vld [vmem:[%s0 + $0xab0] sm:$0xff]
  %v357 = vld [vmem:[%s0 + $0xab8] sm:$0xff]
  %v358 = vld [vmem:[%s0 + $0xac0] sm:$0xff]
  %v359 = vld [vmem:[%s0 + $0xac8] sm:$0xff]
  %v360 = vld [vmem:[%s0 + $0xad0] sm:$0xff]
  %v361 = vld [vmem:[%s0 + $0xad8] sm:$0xff]
  %v362 = vld [vmem:[%s0 + $0xae0] sm:$0xff]
  %v363 = vld [vmem:[%s0 + $0xae8] sm:$0xff]
  %v364 = vld [vmem:[%s0 + $0xaf0] sm:$0xff]
  %v365 = vld [vmem:[%s0 + $0xaf8] sm:$0xff]
  %v366 = vld [vmem:[%s0 + $0xb00] sm:$0xff]
  %v367 = vld [vmem:[%s0 + $0xb08] sm:$0xff]
  %v368 = vld [vmem:[%s0 + $0xb10] sm:$0xff]
  %v369 = vld [vmem:[%s0 + $0xb18] sm:$0xff]
  %v370 = vld [vmem:[%s0 + $0xb20] sm:$0xff]
  %v371 = vld [vmem:[%s0 + $0xb28] sm:$0xff]
  %v372 = vld [vmem:[%s0 + $0xb30] sm:$0xff]
  %v373 = vld [vmem:[%s0 + $0xb38] sm:$0xff]
  %v374 = vld [vmem:[%s0 + $0xb40] sm:$0xff]
  %v375 = vld [vmem:[%s0 + $0xb48] sm:$0xff]
  %v376 = vld [vmem:[%s0 + $0xb50] sm:$0xff]
  %v377 = vld [vmem:[%s0 + $0xb58] sm:$0xff]
  %v378 = vld [vmem:[%s0 + $0xb60] sm:$0xff]
  %v379 = vld [vmem:[%s0 + $0xb68] sm:$0xff]
  %v380 = vld [vmem:[%s0 + $0xb70] sm:$0xff]
  %v381 = vld [vmem:[%s0 + $0xb78] sm:$0xff]
  %v382 = vld [vmem:[%s0 + $0xb80] sm:$0xff]
  %v383 = vld [vmem:[%s0 + $0xb88] sm:$0xff]
  %v384 = vld [vmem:[%s0 + $0xb90] sm:$0xff]
  %v385 = vld [vmem:[%s0 + $0xb98] sm:$0xff]
  %v386 = vld [vmem:[%s0 + $0xba0] sm:$0xff]
  %v387 = vld [vmem:[%s0 + $0xba8] sm:$0xff]
  %v388 = vld [vmem:[%s0 + $0xbb0] sm:$0xff]
  %v389 = vld [vmem:[%s0 + $0xbb8] sm:$0xff]
  %v390 = vld [vmem:[%s0 + $0xbc0] sm:$0xff]
  %v391 = vld [vmem:[%s0 + $0xbc8] sm:$0xff]
  %v392 = vld [vmem:[%s0 + $0xbd0] sm:$0xff]
  %v393 = vld [vmem:[%s0 + $0xbd8] sm:$0xff]
  %v394 = vld [vmem:[%s0 + $0xbe0] sm:$0xff]
  %v395 = vld [vmem:[%s0 + $0xbe8] sm:$0xff]
  %v396 = vld [vmem:[%s0 + $0xbf0] sm:$0xff]
  %v397 = vld [vmem:[%s0 + $0xbf8] sm:$0xff]
  %v398 = vld [vmem:[%s0 + $0xc00] sm:$0xff]
  %v399 = vld [vmem:[%s0 + $0xc08] sm:$0xff]
  %v400 = vld [vmem:[%s0 + $0xc10] sm:$0xff]
  %v401 = vld [vmem:[%s0 + $0xc18] sm:$0xff]
  %v402 = vld [vmem:[%s0 + $0xc20] sm:$0xff]
  %v403 = vld [vmem:[%s0 + $0xc28] sm:$0xff]
  %v404 = vld [vmem:[%s0 + $0xc30] sm:$0xff]
  %v405 = vld [vmem:[%s0 + $0xc38] sm:$0xff]
  %v406 = vld [vmem:[%s0 + $0xc40] sm:$0xff]
  %v407 = vld [vmem:[%s0 + $0xc48] sm:$0xff]
  %v408 = vld [vmem:[%s0 + $0xc50] sm:$0xff]
  %v409 = vld [vmem:[%s0 + $0xc58] sm:$0xff]
  %v410 = vld [vmem:[%s0 + $0xc60] sm:$0xff]
  %v411 = vld [vmem:[%s0 + $0xc68] sm:$0xff]
  %v412 = vld [vmem:[%s0 + $0xc70] sm:$0xff]
  %v413 = vld [vmem:[%s0 + $0xc78] sm:$0xff]
  %v414 = vld [vmem:[%s0 + $0xc80] sm:$0xff]
  %v415 = vld [vmem:[%s0 + $0xc88] sm:$0xff]
  %v416 = vld [vmem:[%s0 + $0xc90] sm:$0xff]
  %v417 = vld [vmem:[%s0 + $0xc98] sm:$0xff]
  %v418 = vld [vmem:[%s0 + $0xca0] sm:$0xff]
  %v419 = vld [vmem:[%s0 + $0xca8] sm:$0xff]
  %v420 = vld [vmem:[%s0 + $0xcb0] sm:$0xff]
  %v421 = vld [vmem:[%s0 + $0xcb8] sm:$0xff]
  %v422 = vld [vmem:[%s0 + $0xcc0] sm:$0xff]
  %v423 = vld [vmem:[%s0 + $0xcc8] sm:$0xff]
  %v424 = vld [vmem:[%s0 + $0xcd0] sm:$0xff]
  %v425 = vld [vmem:[%s0 + $0xcd8] sm:$0xff]
  %v426 = vld [vmem:[%s0 + $0xce0] sm:$0xff]
  %v427 = vld [vmem:[%s0 + $0xce8] sm:$0xff]
  %v428 = vld [vmem:[%s0 + $0xcf0] sm:$0xff]
  %v429 = vld [vmem:[%s0 + $0xcf8] sm:$0xff]
  %v430 = vld [vmem:[%s0 + $0xd00] sm:$0xff]
  %v431 = vld [vmem:[%s0 + $0xd08] sm:$0xff]
  %v432 = vld [vmem:[%s0 + $0xd10] sm:$0xff]
  %v433 = vld [vmem:[%s0 + $0xd18] sm:$0xff]
  %v434 = vld [vmem:[%s0 + $0xd20] sm:$0xff]
  %v435 = vld [vmem:[%s0 + $0xd28] sm:$0xff]
  %v436 = vld [vmem:[%s0 + $0xd30] sm:$0xff]
  %v437 = vld [vmem:[%s0 + $0xd38] sm:$0xff]
  %v438 = vld [vmem:[%s0 + $0xd40] sm:$0xff]
  %v439 = vld [vmem:[%s0 + $0xd48] sm:$0xff]
  %v440 = vld [vmem:[%s0 + $0xd50] sm:$0xff]
  %v441 = vld [vmem:[%s0 + $0xd58] sm:$0xff]
  %v442 = vld [vmem:[%s0 + $0xd60] sm:$0xff]
  %v443 = vld [vmem:[%s0 + $0xd68] sm:$0xff]
  %v444 = vld [vmem:[%s0 + $0xd70] sm:$0xff]
  %v445 = vld [vmem:[%s0 + $0xd78] sm:$0xff]
  %v446 = vld [vmem:[%s0 + $0xd80] sm:$0xff]
  %v447 = vld [vmem:[%s0 + $0xd88] sm:$0xff]
  %v448 = vld [vmem:[%s0 + $0xd90] sm:$0xff]
  %v449 = vld [vmem:[%s0 + $0xd98] sm:$0xff]
  %v450 = vld [vmem:[%s0 + $0xda0] sm:$0xff]
  %v451 = vld [vmem:[%s0 + $0xda8] sm:$0xff]
  %v452 = vld [vmem:[%s0 + $0xdb0] sm:$0xff]
  %v453 = vld [vmem:[%s0 + $0xdb8] sm:$0xff]
  %v454 = vld [vmem:[%s0 + $0xdc0] sm:$0xff]
  %v455 = vld [vmem:[%s0 + $0xdc8] sm:$0xff]
  %v456 = vld [vmem:[%s0 + $0xdd0] sm:$0xff]
  %v457 = vld [vmem:[%s0 + $0xdd8] sm:$0xff]
  %v458 = vld [vmem:[%s1] sm:$0xff]
  %v459 = vld [vmem:[%s1 + $0x8] sm:$0xff]
  %v460 = vld [vmem:[%s1 + $0x10] sm:$0xff]
  %v461 = vld [vmem:[%s1 + $0x18] sm:$0xff]
  %vm462 = vcmask 261120
  %v464 = vsel %vm462, %v14, 0
  %v467 = vsel %vm462, %v15, 0
  %v470 = vsel %vm462, %v16, 0
  %v473 = vsel %vm462, %v17, 0
  %v476 = vsel %vm462, %v18, 0
  %v479 = vsel %vm462, %v19, 0
  %v482 = vsel %vm462, %v20, 0
  %v485 = vsel %vm462, %v21, 0
  %v488 = vsel %vm462, %v22, 0
  %v491 = vsel %vm462, %v23, 0
  %v494 = vsel %vm462, %v24, 0
  %v497 = vsel %vm462, %v25, 0
  %v500 = vsel %vm462, %v26, 0
  %v503 = vsel %vm462, %v27, 0
  %v506 = vsel %vm462, %v28, 0
  %v509 = vsel %vm462, %v29, 0
  %v512 = vsel %vm462, %v30, 0
  %v515 = vsel %vm462, %v31, 0
  %v518 = vsel %vm462, %v32, 0
  %v521 = vsel %vm462, %v33, 0
  %v524 = vsel %vm462, %v34, 0
  %v527 = vsel %vm462, %v35, 0
  %v530 = vsel %vm462, %v36, 0
  %v533 = vsel %vm462, %v37, 0
  %v536 = vsel %vm462, %v38, 0
  %v539 = vsel %vm462, %v39, 0
  %v542 = vsel %vm462, %v40, 0
  %v545 = vsel %vm462, %v41, 0
  %v548 = vsel %vm462, %v42, 0
  %v551 = vsel %vm462, %v43, 0
  %v554 = vsel %vm462, %v44, 0
  %v557 = vsel %vm462, %v45, 0
  %v560 = vsel %vm462, %v46, 0
  %v563 = vsel %vm462, %v47, 0
  %v566 = vsel %vm462, %v48, 0
  %v569 = vsel %vm462, %v49, 0
  %v572 = vsel %vm462, %v50, 0
  %v575 = vsel %vm462, %v51, 0
  %v578 = vsel %vm462, %v52, 0
  %v581 = vsel %vm462, %v53, 0
  %v584 = vsel %vm462, %v54, 0
  %v587 = vsel %vm462, %v55, 0
  %v590 = vsel %vm462, %v56, 0
  %v593 = vsel %vm462, %v57, 0
  %v596 = vsel %vm462, %v58, 0
  %v599 = vsel %vm462, %v59, 0
  %v602 = vsel %vm462, %v60, 0
  %v605 = vsel %vm462, %v61, 0
  %v608 = vsel %vm462, %v62, 0
  %v611 = vsel %vm462, %v63, 0
  %v614 = vsel %vm462, %v64, 0
  %v617 = vsel %vm462, %v65, 0
  %v620 = vsel %vm462, %v66, 0
  %v623 = vsel %vm462, %v67, 0
  %v626 = vsel %vm462, %v68, 0
  %v629 = vsel %vm462, %v69, 0
  %v632 = vsel %vm462, %v70, 0
  %v635 = vsel %vm462, %v71, 0
  %v638 = vsel %vm462, %v72, 0
  %v641 = vsel %vm462, %v73, 0
  %v644 = vsel %vm462, %v74, 0
  %v647 = vsel %vm462, %v75, 0
  %v650 = vsel %vm462, %v76, 0
  %v653 = vsel %vm462, %v77, 0
  %v656 = vsel %vm462, %v78, 0
  %v659 = vsel %vm462, %v79, 0
  %v662 = vsel %vm462, %v80, 0
  %v665 = vsel %vm462, %v81, 0
  %v668 = vsel %vm462, %v82, 0
  %v671 = vsel %vm462, %v83, 0
  %v674 = vsel %vm462, %v84, 0
  %v677 = vsel %vm462, %v85, 0
  %v680 = vsel %vm462, %v86, 0
  %v683 = vsel %vm462, %v87, 0
  %v686 = vsel %vm462, %v88, 0
  %v689 = vsel %vm462, %v89, 0
  %v692 = vsel %vm462, %v90, 0
  %v695 = vsel %vm462, %v91, 0
  %v698 = vsel %vm462, %v92, 0
  %v701 = vsel %vm462, %v93, 0
  %v704 = vsel %vm462, %v94, 0
  %v707 = vsel %vm462, %v95, 0
  %v710 = vsel %vm462, %v96, 0
  %v713 = vsel %vm462, %v97, 0
  %v716 = vsel %vm462, %v98, 0
  %v719 = vsel %vm462, %v99, 0
  %v722 = vsel %vm462, %v100, 0
  %v725 = vsel %vm462, %v101, 0
  %v728 = vsel %vm462, %v102, 0
  %v731 = vsel %vm462, %v103, 0
  %v734 = vsel %vm462, %v104, 0
  %v737 = vsel %vm462, %v105, 0
  %v740 = vsel %vm462, %v106, 0
  %v743 = vsel %vm462, %v107, 0
  %v746 = vsel %vm462, %v108, 0
  %v749 = vsel %vm462, %v109, 0
  %v752 = vsel %vm462, %v110, 0
  %v755 = vsel %vm462, %v111, 0
  %v758 = vsel %vm462, %v112, 0
  %v761 = vsel %vm462, %v113, 0
  %v764 = vsel %vm462, %v114, 0
  %v767 = vsel %vm462, %v115, 0
  %v770 = vsel %vm462, %v116, 0
  %v773 = vsel %vm462, %v117, 0
  %v776 = vsel %vm462, %v118, 0
  %v779 = vsel %vm462, %v119, 0
  %v782 = vsel %vm462, %v120, 0
  %v785 = vsel %vm462, %v121, 0
  %v788 = vsel %vm462, %v122, 0
  %v791 = vsel %vm462, %v123, 0
  %v794 = vsel %vm462, %v124, 0
  %v797 = vsel %vm462, %v125, 0
  %v800 = vsel %vm462, %v126, 0
  %v803 = vsel %vm462, %v127, 0
  %v806 = vsel %vm462, %v128, 0
  %v809 = vsel %vm462, %v129, 0
  %v812 = vsel %vm462, %v130, 0
  %v815 = vsel %vm462, %v131, 0
  %v818 = vsel %vm462, %v132, 0
  %v821 = vsel %vm462, %v133, 0
  %v824 = vsel %vm462, %v134, 0
  %v827 = vsel %vm462, %v135, 0
  %v830 = vsel %vm462, %v136, 0
  %v833 = vsel %vm462, %v137, 0
  %v836 = vsel %vm462, %v138, 0
  %v839 = vsel %vm462, %v139, 0
  %v842 = vsel %vm462, %v140, 0
  %v845 = vsel %vm462, %v141, 0
  %v848 = vsel %vm462, %v142, 0
  %v851 = vsel %vm462, %v143, 0
  %v854 = vsel %vm462, %v144, 0
  %v857 = vsel %vm462, %v145, 0
  %v860 = vsel %vm462, %v146, 0
  %v863 = vsel %vm462, %v147, 0
  %v866 = vsel %vm462, %v148, 0
  %v869 = vsel %vm462, %v149, 0
  %v872 = vsel %vm462, %v150, 0
  %v875 = vsel %vm462, %v151, 0
  %v878 = vsel %vm462, %v152, 0
  %v881 = vsel %vm462, %v153, 0
  %v884 = vsel %vm462, %v154, 0
  %v887 = vsel %vm462, %v155, 0
  %v890 = vsel %vm462, %v156, 0
  %v893 = vsel %vm462, %v157, 0
  %v896 = vsel %vm462, %v158, 0
  %v899 = vsel %vm462, %v159, 0
  %v902 = vsel %vm462, %v160, 0
  %v905 = vsel %vm462, %v161, 0
  %v908 = vsel %vm462, %v162, 0
  %v911 = vsel %vm462, %v163, 0
  %v914 = vsel %vm462, %v164, 0
  %v917 = vsel %vm462, %v165, 0
  %v920 = vsel %vm462, %v166, 0
  %v923 = vsel %vm462, %v167, 0
  %v926 = vsel %vm462, %v168, 0
  %v929 = vsel %vm462, %v169, 0
  %v932 = vsel %vm462, %v170, 0
  %v935 = vsel %vm462, %v171, 0
  %v938 = vsel %vm462, %v172, 0
  %v941 = vsel %vm462, %v173, 0
  %v944 = vsel %vm462, %v174, 0
  %v947 = vsel %vm462, %v175, 0
  %v950 = vsel %vm462, %v176, 0
  %v953 = vsel %vm462, %v177, 0
  %v956 = vsel %vm462, %v178, 0
  %v959 = vsel %vm462, %v179, 0
  %v962 = vsel %vm462, %v180, 0
  %v965 = vsel %vm462, %v181, 0
  %v968 = vsel %vm462, %v182, 0
  %v971 = vsel %vm462, %v183, 0
  %v974 = vsel %vm462, %v184, 0
  %v977 = vsel %vm462, %v185, 0
  %v980 = vsel %vm462, %v186, 0
  %v983 = vsel %vm462, %v187, 0
  %v986 = vsel %vm462, %v188, 0
  %v989 = vsel %vm462, %v189, 0
  %v992 = vsel %vm462, %v190, 0
  %v995 = vsel %vm462, %v191, 0
  %v998 = vsel %vm462, %v192, 0
  %v1001 = vsel %vm462, %v193, 0
  %v1004 = vsel %vm462, %v194, 0
  %v1007 = vsel %vm462, %v195, 0
  %v1010 = vsel %vm462, %v196, 0
  %v1013 = vsel %vm462, %v197, 0
  %v1016 = vsel %vm462, %v198, 0
  %v1019 = vsel %vm462, %v199, 0
  %v1022 = vsel %vm462, %v200, 0
  %v1025 = vsel %vm462, %v201, 0
  %v1028 = vsel %vm462, %v202, 0
  %v1031 = vsel %vm462, %v203, 0
  %v1034 = vsel %vm462, %v204, 0
  %v1037 = vsel %vm462, %v205, 0
  %v1040 = vsel %vm462, %v206, 0
  %v1043 = vsel %vm462, %v207, 0
  %v1046 = vsel %vm462, %v208, 0
  %v1049 = vsel %vm462, %v209, 0
  %v1052 = vsel %vm462, %v210, 0
  %v1055 = vsel %vm462, %v211, 0
  %v1058 = vsel %vm462, %v212, 0
  %v1061 = vsel %vm462, %v213, 0
  %v1064 = vsel %vm462, %v214, 0
  %v1067 = vsel %vm462, %v215, 0
  %v1070 = vsel %vm462, %v216, 0
  %v1073 = vsel %vm462, %v217, 0
  %v1076 = vsel %vm462, %v218, 0
  %v1079 = vsel %vm462, %v219, 0
  %v1082 = vsel %vm462, %v220, 0
  %v1085 = vsel %vm462, %v221, 0
  %v1088 = vsel %vm462, %v222, 0
  %v1091 = vsel %vm462, %v223, 0
  %v1094 = vsel %vm462, %v224, 0
  %v1097 = vsel %vm462, %v225, 0
  %v1100 = vsel %vm462, %v226, 0
  %v1103 = vsel %vm462, %v227, 0
  %v1106 = vsel %vm462, %v228, 0
  %v1109 = vsel %vm462, %v229, 0
  %v1112 = vsel %vm462, %v230, 0
  %v1115 = vsel %vm462, %v231, 0
  %v1118 = vsel %vm462, %v232, 0
  %v1121 = vsel %vm462, %v233, 0
  %v1124 = vsel %vm462, %v234, 0
  %v1127 = vsel %vm462, %v235, 0
  %v1130 = vsel %vm462, %v236, 0
  %v1133 = vsel %vm462, %v237, 0
  %v1136 = vsel %vm462, %v238, 0
  %v1139 = vsel %vm462, %v239, 0
  %v1142 = vsel %vm462, %v240, 0
  %v1145 = vsel %vm462, %v241, 0
  %v1148 = vsel %vm462, %v242, 0
  %v1151 = vsel %vm462, %v243, 0
  %v1154 = vsel %vm462, %v244, 0
  %v1157 = vsel %vm462, %v245, 0
  %v1160 = vsel %vm462, %v246, 0
  %v1163 = vsel %vm462, %v247, 0
  %v1166 = vsel %vm462, %v248, 0
  %v1169 = vsel %vm462, %v249, 0
  %v1172 = vsel %vm462, %v250, 0
  %v1175 = vsel %vm462, %v251, 0
  %v1178 = vsel %vm462, %v252, 0
  %v1181 = vsel %vm462, %v253, 0
  %v1184 = vsel %vm462, %v254, 0
  %v1187 = vsel %vm462, %v255, 0
  %v1190 = vsel %vm462, %v256, 0
  %v1193 = vsel %vm462, %v257, 0
  %v1196 = vsel %vm462, %v258, 0
  %v1199 = vsel %vm462, %v259, 0
  %v1202 = vsel %vm462, %v260, 0
  %v1205 = vsel %vm462, %v261, 0
  %v1208 = vsel %vm462, %v262, 0
  %v1211 = vsel %vm462, %v263, 0
  %v1214 = vsel %vm462, %v264, 0
  %v1217 = vsel %vm462, %v265, 0
  %v1220 = vsel %vm462, %v266, 0
  %v1223 = vsel %vm462, %v267, 0
  %v1226 = vsel %vm462, %v268, 0
  %v1229 = vsel %vm462, %v269, 0
  %v1232 = vsel %vm462, %v270, 0
  %v1235 = vsel %vm462, %v271, 0
  %v1238 = vsel %vm462, %v272, 0
  %v1241 = vsel %vm462, %v273, 0
  %v1244 = vsel %vm462, %v274, 0
  %v1247 = vsel %vm462, %v275, 0
  %v1250 = vsel %vm462, %v276, 0
  %v1253 = vsel %vm462, %v277, 0
  %v1256 = vsel %vm462, %v278, 0
  %v1259 = vsel %vm462, %v279, 0
  %v1262 = vsel %vm462, %v280, 0
  %v1265 = vsel %vm462, %v281, 0
  %v1268 = vsel %vm462, %v282, 0
  %v1271 = vsel %vm462, %v283, 0
  %v1274 = vsel %vm462, %v284, 0
  %v1277 = vsel %vm462, %v285, 0
  %v1280 = vsel %vm462, %v286, 0
  %v1283 = vsel %vm462, %v287, 0
  %v1286 = vsel %vm462, %v288, 0
  %v1289 = vsel %vm462, %v289, 0
  %v1292 = vsel %vm462, %v290, 0
  %v1295 = vsel %vm462, %v291, 0
  %v1298 = vsel %vm462, %v292, 0
  %v1301 = vsel %vm462, %v293, 0
  %v1304 = vsel %vm462, %v294, 0
  %v1307 = vsel %vm462, %v295, 0
  %v1310 = vsel %vm462, %v296, 0
  %v1313 = vsel %vm462, %v297, 0
  %v1316 = vsel %vm462, %v298, 0
  %v1319 = vsel %vm462, %v299, 0
  %v1322 = vsel %vm462, %v300, 0
  %v1325 = vsel %vm462, %v301, 0
  %v1328 = vsel %vm462, %v302, 0
  %v1331 = vsel %vm462, %v303, 0
  %v1334 = vsel %vm462, %v304, 0
  %v1337 = vsel %vm462, %v305, 0
  %v1340 = vsel %vm462, %v306, 0
  %v1343 = vsel %vm462, %v307, 0
  %v1346 = vsel %vm462, %v308, 0
  %v1349 = vsel %vm462, %v309, 0
  %v1352 = vsel %vm462, %v310, 0
  %v1355 = vsel %vm462, %v311, 0
  %v1358 = vsel %vm462, %v312, 0
  %v1361 = vsel %vm462, %v313, 0
  %v1364 = vsel %vm462, %v314, 0
  %v1367 = vsel %vm462, %v315, 0
  %v1370 = vsel %vm462, %v316, 0
  %v1373 = vsel %vm462, %v317, 0
  %v1376 = vsel %vm462, %v318, 0
  %v1379 = vsel %vm462, %v319, 0
  %v1382 = vsel %vm462, %v320, 0
  %v1385 = vsel %vm462, %v321, 0
  %v1388 = vsel %vm462, %v322, 0
  %v1391 = vsel %vm462, %v323, 0
  %v1394 = vsel %vm462, %v324, 0
  %v1397 = vsel %vm462, %v325, 0
  %v1400 = vsel %vm462, %v326, 0
  %v1403 = vsel %vm462, %v327, 0
  %v1406 = vsel %vm462, %v328, 0
  %v1409 = vsel %vm462, %v329, 0
  %v1412 = vsel %vm462, %v330, 0
  %v1415 = vsel %vm462, %v331, 0
  %v1418 = vsel %vm462, %v332, 0
  %v1421 = vsel %vm462, %v333, 0
  %v1424 = vsel %vm462, %v334, 0
  %v1427 = vsel %vm462, %v335, 0
  %v1430 = vsel %vm462, %v336, 0
  %v1433 = vsel %vm462, %v337, 0
  %v1436 = vsel %vm462, %v338, 0
  %v1439 = vsel %vm462, %v339, 0
  %v1442 = vsel %vm462, %v340, 0
  %v1445 = vsel %vm462, %v341, 0
  %v1448 = vsel %vm462, %v342, 0
  %v1451 = vsel %vm462, %v343, 0
  %v1454 = vsel %vm462, %v344, 0
  %v1457 = vsel %vm462, %v345, 0
  %v1460 = vsel %vm462, %v346, 0
  %v1463 = vsel %vm462, %v347, 0
  %v1466 = vsel %vm462, %v348, 0
  %v1469 = vsel %vm462, %v349, 0
  %v1472 = vsel %vm462, %v350, 0
  %v1475 = vsel %vm462, %v351, 0
  %v1478 = vsel %vm462, %v352, 0
  %v1481 = vsel %vm462, %v353, 0
  %v1484 = vsel %vm462, %v354, 0
  %v1487 = vsel %vm462, %v355, 0
  %v1490 = vsel %vm462, %v356, 0
  %v1493 = vsel %vm462, %v357, 0
  %v1496 = vsel %vm462, %v358, 0
  %v1499 = vsel %vm462, %v359, 0
  %v1502 = vsel %vm462, %v360, 0
  %v1505 = vsel %vm462, %v361, 0
  %v1508 = vsel %vm462, %v362, 0
  %v1511 = vsel %vm462, %v363, 0
  %v1514 = vsel %vm462, %v364, 0
  %v1517 = vsel %vm462, %v365, 0
  %v1520 = vsel %vm462, %v366, 0
  %v1523 = vsel %vm462, %v367, 0
  %v1526 = vsel %vm462, %v368, 0
  %v1529 = vsel %vm462, %v369, 0
  %v1532 = vsel %vm462, %v370, 0
  %v1535 = vsel %vm462, %v371, 0
  %v1538 = vsel %vm462, %v372, 0
  %v1541 = vsel %vm462, %v373, 0
  %v1544 = vsel %vm462, %v374, 0
  %v1547 = vsel %vm462, %v375, 0
  %v1550 = vsel %vm462, %v376, 0
  %v1553 = vsel %vm462, %v377, 0
  %v1556 = vsel %vm462, %v378, 0
  %v1559 = vsel %vm462, %v379, 0
  %v1562 = vsel %vm462, %v380, 0
  %v1565 = vsel %vm462, %v381, 0
  %v1568 = vsel %vm462, %v382, 0
  %v1571 = vsel %vm462, %v383, 0
  %v1574 = vsel %vm462, %v384, 0
  %v1577 = vsel %vm462, %v385, 0
  %v1580 = vsel %vm462, %v386, 0
  %v1583 = vsel %vm462, %v387, 0
  %v1586 = vsel %vm462, %v388, 0
  %v1589 = vsel %vm462, %v389, 0
  %v1592 = vsel %vm462, %v390, 0
  %v1595 = vsel %vm462, %v391, 0
  %v1598 = vsel %vm462, %v392, 0
  %v1601 = vsel %vm462, %v393, 0
  %v1604 = vsel %vm462, %v394, 0
  %v1607 = vsel %vm462, %v395, 0
  %v1610 = vsel %vm462, %v396, 0
  %v1613 = vsel %vm462, %v397, 0
  %v1616 = vsel %vm462, %v398, 0
  %v1619 = vsel %vm462, %v399, 0
  %v1622 = vsel %vm462, %v400, 0
  %v1625 = vsel %vm462, %v401, 0
  %v1628 = vsel %vm462, %v402, 0
  %v1631 = vsel %vm462, %v403, 0
  %v1634 = vsel %vm462, %v404, 0
  %v1637 = vsel %vm462, %v405, 0
  %v1640 = vsel %vm462, %v406, 0
  %v1643 = vsel %vm462, %v407, 0
  %v1646 = vsel %vm462, %v408, 0
  %v1649 = vsel %vm462, %v409, 0
  %v1652 = vsel %vm462, %v410, 0
  %v1655 = vsel %vm462, %v411, 0
  %v1658 = vsel %vm462, %v412, 0
  %v1661 = vsel %vm462, %v413, 0
  %v1664 = vsel %vm462, %v414, 0
  %v1667 = vsel %vm462, %v415, 0
  %v1670 = vsel %vm462, %v416, 0
  %v1673 = vsel %vm462, %v417, 0
  %v1676 = vsel %vm462, %v418, 0
  %v1679 = vsel %vm462, %v419, 0
  %v1682 = vsel %vm462, %v420, 0
  %v1685 = vsel %vm462, %v421, 0
  %v1688 = vsel %vm462, %v422, 0
  %v1691 = vsel %vm462, %v423, 0
  %v1694 = vsel %vm462, %v424, 0
  %v1697 = vsel %vm462, %v425, 0
  %v1700 = vsel %vm462, %v426, 0
  %v1703 = vsel %vm462, %v427, 0
  %v1706 = vsel %vm462, %v428, 0
  %v1709 = vsel %vm462, %v429, 0
  %v1712 = vsel %vm462, %v430, 0
  %v1715 = vsel %vm462, %v431, 0
  %v1718 = vsel %vm462, %v432, 0
  %v1721 = vsel %vm462, %v433, 0
  %v1724 = vsel %vm462, %v434, 0
  %v1727 = vsel %vm462, %v435, 0
  %v1730 = vsel %vm462, %v436, 0
  %v1733 = vsel %vm462, %v437, 0
  %v1736 = vsel %vm462, %v438, 0
  %v1739 = vsel %vm462, %v439, 0
  %v1742 = vsel %vm462, %v440, 0
  %v1745 = vsel %vm462, %v441, 0
  %v1748 = vsel %vm462, %v442, 0
  %v1751 = vsel %vm462, %v443, 0
  %v1754 = vsel %vm462, %v444, 0
  %v1757 = vsel %vm462, %v445, 0
  %v1760 = vsel %vm462, %v446, 0
  %v1763 = vsel %vm462, %v447, 0
  %v1766 = vsel %vm462, %v448, 0
  %v1769 = vsel %vm462, %v449, 0
  %v1772 = vsel %vm462, %v450, 0
  %v1775 = vsel %vm462, %v451, 0
  %v1778 = vsel %vm462, %v452, 0
  %v1781 = vsel %vm462, %v453, 0
  %v1784 = vsel %vm462, %v454, 0
  %v1787 = vsel %vm462, %v455, 0
  %v1790 = vsel %vm462, %v456, 0
  %v1793 = vsel %vm462, %v457, 0
  %1795 = vmatprep.subr.mxu0 0.0
  %1796 = vmatpush1.msra.mxu0 %v458
  %1797 = vmatprep.subr.mxu0 0.0
  %1798 = vmatpush1.msra.mxu0 %v459
  %1799 = vmatprep.subr.mxu0 0.0
  %1800 = vmatpush1.msra.mxu0 %v460
  %1801 = vmatprep.subr.mxu0 0.0
  %1802 = vmatpush1.msra.mxu0 %v461
  %1803 = vmatprep.subr.mxu0 0.0
  %1804 = vmatpush1.msra.mxu0 0.0
  %1805 = vmatprep.subr.mxu0 0.0
  %1806 = vmatpush1.msra.mxu0 0.0
  %1807 = vmatprep.subr.mxu0 0.0
  %1808 = vmatpush1.msra.mxu0 0.0
  %1809 = vmatprep.subr.mxu0 0.0
  %1810 = vmatpush1.msra.mxu0 0.0
  %1811 = vmatprep.subr.mxu0 0.0
  %1812 = vmatpush1.msra.mxu0 0.0
  %1813 = vmatprep.subr.mxu0 0.0
  %1814 = vmatpush1.msra.mxu0 0.0
  %1815 = vmatprep.subr.mxu0 0.0
  %1816 = vmatpush1.msra.mxu0 0.0
  %1817 = vmatprep.subr.mxu0 0.0
  %1818 = vmatpush1.msra.mxu0 0.0
  %1819 = vmatprep.subr.mxu0 0.0
  %1820 = vmatpush1.msra.mxu0 0.0
  %1821 = vmatprep.subr.mxu0 0.0
  %1822 = vmatpush1.msra.mxu0 0.0
  %1823 = vmatprep.subr.mxu0 0.0
  %1824 = vmatpush1.msra.mxu0 0.0
  %1825 = vmatprep.subr.mxu0 0.0
  %1826 = vmatpush1.msra.mxu0 0.0
  %1827 = vmatprep.subr.mxu0 0.0
  %1828 = vmatpush1.msra.mxu0 0.0
  %1829 = vmatprep.subr.mxu0 0.0
  %1830 = vmatpush1.msra.mxu0 0.0
  %1831 = vmatprep.subr.mxu0 0.0
  %1832 = vmatpush1.msra.mxu0 0.0
  %1833 = vmatprep.subr.mxu0 0.0
  %1834 = vmatpush1.msra.mxu0 0.0
  %1835 = vmatprep.subr.mxu0 0.0
  %1836 = vmatpush1.msra.mxu0 0.0
  %1837 = vmatprep.subr.mxu0 0.0
  %1838 = vmatpush1.msra.mxu0 0.0
  %1839 = vmatprep.subr.mxu0 0.0
  %1840 = vmatpush1.msra.mxu0 0.0
  %1841 = vmatprep.subr.mxu0 0.0
  %1842 = vmatpush1.msra.mxu0 0.0
  %1843 = vmatprep.subr.mxu0 0.0
  %1844 = vmatpush1.msra.mxu0 0.0
  %1845 = vmatprep.subr.mxu0 0.0
  %1846 = vmatpush1.msra.mxu0 0.0
  %1847 = vmatprep.subr.mxu0 0.0
  %1848 = vmatpush1.msra.mxu0 0.0
  %1849 = vmatprep.subr.mxu0 0.0
  %1850 = vmatpush1.msra.mxu0 0.0
  %1851 = vmatprep.subr.mxu0 0.0
  %1852 = vmatpush1.msra.mxu0 0.0
  %1853 = vmatprep.subr.mxu0 0.0
  %1854 = vmatpush1.msra.mxu0 0.0
  %1855 = vmatprep.subr.mxu0 0.0
  %1856 = vmatpush1.msra.mxu0 0.0
  %1857 = vmatprep.subr.mxu0 0.0
  %1858 = vmatpush1.msra.mxu0 0.0
  %1859 = vmatprep.mubr.f32.mxu0 0.0
  %1860 = vmatmul.mubr.f32.gmra.mrb[0].mxu0 %v464
  %v1861 = vpop.f32.mrb[0].mxu0
  %v1862 = vadd.f32 0.0, %v1861
  %v1863 = vpop.f32.mrb[0].mxu0
  %1864 = vmatprep.mubr.f32.mxu0 0.0
  %1865 = vmatmul.mubr.f32.gmra.mrb[0].mxu0 %v467
  %v1866 = vpop.f32.mrb[0].mxu0
  %v1867 = vadd.f32 0.0, %v1866
  %v1868 = vpop.f32.mrb[0].mxu0
  %1869 = vmatprep.mubr.f32.mxu0 0.0
  %1870 = vmatmul.mubr.f32.gmra.mrb[0].mxu0 %v470
  %v1871 = vpop.f32.mrb[0].mxu0
  %v1872 = vadd.f32 0.0, %v1871
  %v1873 = vpop.f32.mrb[0].mxu0
  %1874 = vmatprep.mubr.f32.mxu0 0.0
  %1875 = vmatmul.mubr.f32.gmra.mrb[0].mxu0 %v473
  %v1876 = vpop.f32.mrb[0].mxu0
  %v1877 = vadd.f32 0.0, %v1876
  %v1878 = vpop.f32.mrb[0].mxu0
  %1879 = vmatprep.mubr.f32.mxu0 0.0
  %1880 = vmatmul.mubr.f32.gmra.mrb[0].mxu0 %v476
  %v1881 = vpop.f32.mrb[0].mxu0
  %v1882 = vadd.f32 0.0, %v1881
  %v1883 = vpop.f32.mrb[0].mxu0
  %1884 = vmatprep.mubr.f32.mxu0 0.0
  %1885 = vmatmul.mubr.f32.gmra.mrb[0].mxu0 %v479
  %v1886 = vpop.f32.mrb[0].mxu0
  %v1887 = vadd.f32 0.0, %v1886
  %v1888 = vpop.f32.mrb[0].mxu0
  %1889 = vmatprep.mubr.f32.mxu0 0.0
  %1890 = vmatmul.mubr.f32.gmra.mrb[0].mxu0 %v482
  %v1891 = vpop.f32.mrb[0].mxu0
  %v1892 = vadd.f32 0.0, %v1891
  %v1893 = vpop.f32.mrb[0].mxu0
  %1894 = vmatprep.mubr.f32.mxu0 0.0
  %1895 = vmatmul.mubr.f32.gmra.mrb[0].mxu0 %v485
  %v1896 = vpop.f32.mrb[0].mxu0
  %v1897 = vadd.f32 0.0, %v1896
  %v1898 = vpop.f32.mrb[0].mxu0
  %1899 = vmatprep.mubr.f32.mxu0 0.0
  %1900 = vmatmul.mubr.f32.gmra.mrb[0].mxu0 %v488
  %v1901 = vpop.f32.mrb[0].mxu0
  %v1902 = vadd.f32 0.0, %v1901
  %v1903 = vpop.f32.mrb[0].mxu0
  %1904 = vmatprep.mubr.f32.mxu0 0.0
  %1905 = vmatmul.mubr.f32.gmra.mrb[0].mxu0 %v491
  %v1906 = vpop.f32.mrb[0].mxu0
  %v1907 = vadd.f32 0.0, %v1906
  %v1908 = vpop.f32.mrb[0].mxu0
  %1909 = vmatprep.mubr.f32.mxu0 0.0
  %1910 = vmatmul.mubr.f32.gmra.mrb[0].mxu0 %v494
  %v1911 = vpop.f32.mrb[0].mxu0
  %v1912 = vadd.f32 0.0, %v1911
  %v1913 = vpop.f32.mrb[0].mxu0
  %1914 = vmatprep.mubr.f32.mxu0 0.0
  %1915 = vmatmul.mubr.f32.gmra.mrb[0].mxu0 %v497
  %v1916 = vpop.f32.mrb[0].mxu0
  %v1917 = vadd.f32 0.0, %v1916
  %v1918 = vpop.f32.mrb[0].mxu0
  %1919 = vmatprep.mubr.f32.mxu0 0.0
  %1920 = vmatmul.mubr.f32.gmra.mrb[0].mxu0 %v500
  %v1921 = vpop.f32.mrb[0].mxu0
  %v1922 = vadd.f32 0.0, %v1921
  %v1923 = vpop.f32.mrb[0].mxu0
  %1924 = vmatprep.mubr.f32.mxu0 0.0
  %1925 = vmatmul.mubr.f32.gmra.mrb[0].mxu0 %v503
  %v1926 = vpop.f32.mrb[0].mxu0
  %v1927 = vadd.f32 0.0, %v1926
  %v1928 = vpop.f32.mrb[0].mxu0
  %1929 = vmatprep.mubr.f32.mxu0 0.0
  %1930 = vmatmul.mubr.f32.gmra.mrb[0].mxu0 %v506
  %v1931 = vpop.f32.mrb[0].mxu0
  %v1932 = vadd.f32 0.0, %v1931
  %v1933 = vpop.f32.mrb[0].mxu0
  %1934 = vmatprep.mubr.f32.mxu0 0.0
  %1935 = vmatmul.mubr.f32.gmra.mrb[0].mxu0 %v509
  %v1936 = vpop.f32.mrb[0].mxu0
  %v1937 = vadd.f32 0.0, %v1936
  %v1938 = vpop.f32.mrb[0].mxu0
  %1939 = vmatprep.mubr.f32.mxu0 0.0
  %1940 = vmatmul.mubr.f32.gmra.mrb[0].mxu0 %v512
  %v1941 = vpop.f32.mrb[0].mxu0
  %v1942 = vadd.f32 0.0, %v1941
  %v1943 = vpop.f32.mrb[0].mxu0
  %1944 = vmatprep.mubr.f32.mxu0 0.0
  %1945 = vmatmul.mubr.f32.gmra.mrb[0].mxu0 %v515
  %v1946 = vpop.f32.mrb[0].mxu0
  %v1947 = vadd.f32 0.0, %v1946
  %v1948 = vpop.f32.mrb[0].mxu0
  %1949 = vmatprep.mubr.f32.mxu0 0.0
  %1950 = vmatmul.mubr.f32.gmra.mrb[0].mxu0 %v518
  %v1951 = vpop.f32.mrb[0].mxu0
  %v1952 = vadd.f32 0.0, %v1951
  %v1953 = vpop.f32.mrb[0].mxu0
  %1954 = vmatprep.mubr.f32.mxu0 0.0
  %1955 = vmatmul.mubr.f32.gmra.mrb[0].mxu0 %v521
  %v1956 = vpop.f32.mrb[0].mxu0
  %v1957 = vadd.f32 0.0, %v1956
  %v1958 = vpop.f32.mrb[0].mxu0
  %1959 = vmatprep.mubr.f32.mxu0 0.0
  %1960 = vmatmul.mubr.f32.gmra.mrb[0].mxu0 %v524
  %v1961 = vpop.f32.mrb[0].mxu0
  %v1962 = vadd.f32 0.0, %v1961
  %v1963 = vpop.f32.mrb[0].mxu0
  %1964 = vmatprep.mubr.f32.mxu0 0.0
  %1965 = vmatmul.mubr.f32.gmra.mrb[0].mxu0 %v527
  %v1966 = vpop.f32.mrb[0].mxu0
  %v1967 = vadd.f32 0.0, %v1966
  %v1968 = vpop.f32.mrb[0].mxu0
  %1969 = vmatprep.mubr.f32.mxu0 0.0
  %1970 = vmatmul.mubr.f32.gmra.mrb[0].mxu0 %v530
  %v1971 = vpop.f32.mrb[0].mxu0
  %v1972 = vadd.f32 0.0, %v1971
  %v1973 = vpop.f32.mrb[0].mxu0
  %1974 = vmatprep.mubr.f32.mxu0 0.0
  %1975 = vmatmul.mubr.f32.gmra.mrb[0].mxu0 %v533
  %v1976 = vpop.f32.mrb[0].mxu0
  %v1977 = vadd.f32 0.0, %v1976
  %v1978 = vpop.f32.mrb[0].mxu0
  %1979 = vmatprep.mubr.f32.mxu0 0.0
  %1980 = vmatmul.mubr.f32.gmra.mrb[0].mxu0 %v536
  %v1981 = vpop.f32.mrb[0].mxu0
  %v1982 = vadd.f32 0.0, %v1981
  %v1983 = vpop.f32.mrb[0].mxu0
  %1984 = vmatprep.mubr.f32.mxu0 0.0
  %1985 = vmatmul.mubr.f32.gmra.mrb[0].mxu0 %v539
  %v1986 = vpop.f32.mrb[0].mxu0
  %v1987 = vadd.f32 0.0, %v1986
  %v1988 = vpop.f32.mrb[0].mxu0
  %1989 = vmatprep.mubr.f32.mxu0 0.0
  %1990 = vmatmul.mubr.f32.gmra.mrb[0].mxu0 %v542
  %v1991 = vpop.f32.mrb[0].mxu0
  %v1992 = vadd.f32 0.0, %v1991
  %v1993 = vpop.f32.mrb[0].mxu0
  %1994 = vmatprep.mubr.f32.mxu0 0.0
  %1995 = vmatmul.mubr.f32.gmra.mrb[0].mxu0 %v545
  %v1996 = vpop.f32.mrb[0].mxu0
  %v1997 = vadd.f32 0.0, %v1996
  %v1998 = vpop.f32.mrb[0].mxu0
  %1999 = vmatprep.mubr.f32.mxu0 0.0
  %2000 = vmatmul.mubr.f32.gmra.mrb[0].mxu0 %v548
  %v2001 = vpop.f32.mrb[0].mxu0
  %v2002 = vadd.f32 0.0, %v2001
  %v2003 = vpop.f32.mrb[0].mxu0
  %2004 = vmatprep.mubr.f32.mxu0 0.0
  %2005 = vmatmul.mubr.f32.gmra.mrb[0].mxu0 %v551
  %v2006 = vpop.f32.mrb[0].mxu0
  %v2007 = vadd.f32 0.0, %v2006
  %v2008 = vpop.f32.mrb[0].mxu0
  %2009 = vmatprep.mubr.f32.mxu0 0.0
  %2010 = vmatmul.mubr.f32.gmra.mrb[0].mxu0 %v554
  %v2011 = vpop.f32.mrb[0].mxu0
  %v2012 = vadd.f32 0.0, %v2011
  %v2013 = vpop.f32.mrb[0].mxu0
  %2014 = vmatprep.mubr.f32.mxu0 0.0
  %2015 = vmatmul.mubr.f32.gmra.mrb[0].mxu0 %v557
  %v2016 = vpop.f32.mrb[0].mxu0
  %v2017 = vadd.f32 0.0, %v2016
  %v2018 = vpop.f32.mrb[0].mxu0
  %2019 = vmatprep.mubr.f32.mxu0 0.0
  %2020 = vmatmul.mubr.f32.gmra.mrb[0].mxu0 %v560
  %v2021 = vpop.f32.mrb[0].mxu0
  %v2022 = vadd.f32 0.0, %v2021
  %v2023 = vpop.f32.mrb[0].mxu0
  %2024 = vmatprep.mubr.f32.mxu0 0.0
  %2025 = vmatmul.mubr.f32.gmra.mrb[0].mxu0 %v563
  %v2026 = vpop.f32.mrb[0].mxu0
  %v2027 = vadd.f32 0.0, %v2026
  %v2028 = vpop.f32.mrb[0].mxu0
  %2029 = vmatprep.mubr.f32.mxu0 0.0
  %2030 = vmatmul.mubr.f32.gmra.mrb[0].mxu0 %v566
  %v2031 = vpop.f32.mrb[0].mxu0
  %v2032 = vadd.f32 0.0, %v2031
  %v2033 = vpop.f32.mrb[0].mxu0
  %2034 = vmatprep.mubr.f32.mxu0 0.0
  %2035 = vmatmul.mubr.f32.gmra.mrb[0].mxu0 %v569
  %v2036 = vpop.f32.mrb[0].mxu0
  %v2037 = vadd.f32 0.0, %v2036
  %v2038 = vpop.f32.mrb[0].mxu0
  %2039 = vmatprep.mubr.f32.mxu0 0.0
  %2040 = vmatmul.mubr.f32.gmra.mrb[0].mxu0 %v572
  %v2041 = vpop.f32.mrb[0].mxu0
  %v2042 = vadd.f32 0.0, %v2041
  %v2043 = vpop.f32.mrb[0].mxu0
  %2044 = vmatprep.mubr.f32.mxu0 0.0
  %2045 = vmatmul.mubr.f32.gmra.mrb[0].mxu0 %v575
  %v2046 = vpop.f32.mrb[0].mxu0
  %v2047 = vadd.f32 0.0, %v2046
  %v2048 = vpop.f32.mrb[0].mxu0
  %2049 = vmatprep.mubr.f32.mxu0 0.0
  %2050 = vmatmul.mubr.f32.gmra.mrb[0].mxu0 %v578
  %v2051 = vpop.f32.mrb[0].mxu0
  %v2052 = vadd.f32 0.0, %v2051
  %v2053 = vpop.f32.mrb[0].mxu0
  %2054 = vmatprep.mubr.f32.mxu0 0.0
  %2055 = vmatmul.mubr.f32.gmra.mrb[0].mxu0 %v581
  %v2056 = vpop.f32.mrb[0].mxu0
  %v2057 = vadd.f32 0.0, %v2056
  %v2058 = vpop.f32.mrb[0].mxu0
  %2059 = vmatprep.mubr.f32.mxu0 0.0
  %2060 = vmatmul.mubr.f32.gmra.mrb[0].mxu0 %v584
  %v2061 = vpop.f32.mrb[0].mxu0
  %v2062 = vadd.f32 0.0, %v2061
  %v2063 = vpop.f32.mrb[0].mxu0
  %2064 = vmatprep.mubr.f32.mxu0 0.0
  %2065 = vmatmul.mubr.f32.gmra.mrb[0].mxu0 %v587
  %v2066 = vpop.f32.mrb[0].mxu0
  %v2067 = vadd.f32 0.0, %v2066
  %v2068 = vpop.f32.mrb[0].mxu0
  %2069 = vmatprep.mubr.f32.mxu0 0.0
  %2070 = vmatmul.mubr.f32.gmra.mrb[0].mxu0 %v590
  %v2071 = vpop.f32.mrb[0].mxu0
  %v2072 = vadd.f32 0.0, %v2071
  %v2073 = vpop.f32.mrb[0].mxu0
  %2074 = vmatprep.mubr.f32.mxu0 0.0
  %2075 = vmatmul.mubr.f32.gmra.mrb[0].mxu0 %v593
  %v2076 = vpop.f32.mrb[0].mxu0
  %v2077 = vadd.f32 0.0, %v2076
  %v2078 = vpop.f32.mrb[0].mxu0
  %2079 = vmatprep.mubr.f32.mxu0 0.0
  %2080 = vmatmul.mubr.f32.gmra.mrb[0].mxu0 %v596
  %v2081 = vpop.f32.mrb[0].mxu0
  %v2082 = vadd.f32 0.0, %v2081
  %v2083 = vpop.f32.mrb[0].mxu0
  %2084 = vmatprep.mubr.f32.mxu0 0.0
  %2085 = vmatmul.mubr.f32.gmra.mrb[0].mxu0 %v599
  %v2086 = vpop.f32.mrb[0].mxu0
  %v2087 = vadd.f32 0.0, %v2086
  %v2088 = vpop.f32.mrb[0].mxu0
  %2089 = vmatprep.mubr.f32.mxu0 0.0
  %2090 = vmatmul.mubr.f32.gmra.mrb[0].mxu0 %v602
  %v2091 = vpop.f32.mrb[0].mxu0
  %v2092 = vadd.f32 0.0, %v2091
  %v2093 = vpop.f32.mrb[0].mxu0
  %2094 = vmatprep.mubr.f32.mxu0 0.0
  %2095 = vmatmul.mubr.f32.gmra.mrb[0].mxu0 %v605
  %v2096 = vpop.f32.mrb[0].mxu0
  %v2097 = vadd.f32 0.0, %v2096
  %v2098 = vpop.f32.mrb[0].mxu0
  %2099 = vmatprep.mubr.f32.mxu0 0.0
  %2100 = vmatmul.mubr.f32.gmra.mrb[0].mxu0 %v608
  %v2101 = vpop.f32.mrb[0].mxu0
  %v2102 = vadd.f32 0.0, %v2101
  %v2103 = vpop.f32.mrb[0].mxu0
  %2104 = vmatprep.mubr.f32.mxu0 0.0
  %2105 = vmatmul.mubr.f32.gmra.mrb[0].mxu0 %v611
  %v2106 = vpop.f32.mrb[0].mxu0
  %v2107 = vadd.f32 0.0, %v2106
  %v2108 = vpop.f32.mrb[0].mxu0
  %2109 = vmatprep.mubr.f32.mxu0 0.0
  %2110 = vmatmul.mubr.f32.gmra.mrb[0].mxu0 %v614
  %v2111 = vpop.f32.mrb[0].mxu0
  %v2112 = vadd.f32 0.0, %v2111
  %v2113 = vpop.f32.mrb[0].mxu0
  %2114 = vmatprep.mubr.f32.mxu0 0.0
  %2115 = vmatmul.mubr.f32.gmra.mrb[0].mxu0 %v617
  %v2116 = vpop.f32.mrb[0].mxu0
  %v2117 = vadd.f32 0.0, %v2116
  %v2118 = vpop.f32.mrb[0].mxu0
  %2119 = vmatprep.mubr.f32.mxu0 0.0
  %2120 = vmatmul.mubr.f32.gmra.mrb[0].mxu0 %v620
  %v2121 = vpop.f32.mrb[0].mxu0
  %v2122 = vadd.f32 0.0, %v2121
  %v2123 = vpop.f32.mrb[0].mxu0
  %2124 = vmatprep.mubr.f32.mxu0 0.0
  %2125 = vmatmul.mubr.f32.gmra.mrb[0].mxu0 %v623
  %v2126 = vpop.f32.mrb[0].mxu0
  %v2127 = vadd.f32 0.0, %v2126
  %v2128 = vpop.f32.mrb[0].mxu0
  %2129 = vmatprep.mubr.f32.mxu0 0.0
  %2130 = vmatmul.mubr.f32.gmra.mrb[0].mxu0 %v626
  %v2131 = vpop.f32.mrb[0].mxu0
  %v2132 = vadd.f32 0.0, %v2131
  %v2133 = vpop.f32.mrb[0].mxu0
  %2134 = vmatprep.mubr.f32.mxu0 0.0
  %2135 = vmatmul.mubr.f32.gmra.mrb[0].mxu0 %v629
  %v2136 = vpop.f32.mrb[0].mxu0
  %v2137 = vadd.f32 0.0, %v2136
  %v2138 = vpop.f32.mrb[0].mxu0
  %2139 = vmatprep.mubr.f32.mxu0 0.0
  %2140 = vmatmul.mubr.f32.gmra.mrb[0].mxu0 %v632
  %v2141 = vpop.f32.mrb[0].mxu0
  %v2142 = vadd.f32 0.0, %v2141
  %v2143 = vpop.f32.mrb[0].mxu0
  %2144 = vmatprep.mubr.f32.mxu0 0.0
  %2145 = vmatmul.mubr.f32.gmra.mrb[0].mxu0 %v635
  %v2146 = vpop.f32.mrb[0].mxu0
  %v2147 = vadd.f32 0.0, %v2146
  %v2148 = vpop.f32.mrb[0].mxu0
  %2149 = vmatprep.mubr.f32.mxu0 0.0
  %2150 = vmatmul.mubr.f32.gmra.mrb[0].mxu0 %v638
  %v2151 = vpop.f32.mrb[0].mxu0
  %v2152 = vadd.f32 0.0, %v2151
  %v2153 = vpop.f32.mrb[0].mxu0
  %2154 = vmatprep.mubr.f32.mxu0 0.0
  %2155 = vmatmul.mubr.f32.gmra.mrb[0].mxu0 %v641
  %v2156 = vpop.f32.mrb[0].mxu0
  %v2157 = vadd.f32 0.0, %v2156
  %v2158 = vpop.f32.mrb[0].mxu0
  %2159 = vmatprep.mubr.f32.mxu0 0.0
  %2160 = vmatmul.mubr.f32.gmra.mrb[0].mxu0 %v644
  %v2161 = vpop.f32.mrb[0].mxu0
  %v2162 = vadd.f32 0.0, %v2161
  %v2163 = vpop.f32.mrb[0].mxu0
  %2164 = vmatprep.mubr.f32.mxu0 0.0
  %2165 = vmatmul.mubr.f32.gmra.mrb[0].mxu0 %v647
  %v2166 = vpop.f32.mrb[0].mxu0
  %v2167 = vadd.f32 0.0, %v2166
  %v2168 = vpop.f32.mrb[0].mxu0
  %2169 = vmatprep.mubr.f32.mxu0 0.0
  %2170 = vmatmul.mubr.f32.gmra.mrb[0].mxu0 %v650
  %v2171 = vpop.f32.mrb[0].mxu0
  %v2172 = vadd.f32 0.0, %v2171
  %v2173 = vpop.f32.mrb[0].mxu0
  %2174 = vmatprep.mubr.f32.mxu0 0.0
  %2175 = vmatmul.mubr.f32.gmra.mrb[0].mxu0 %v653
  %v2176 = vpop.f32.mrb[0].mxu0
  %v2177 = vadd.f32 0.0, %v2176
  %v2178 = vpop.f32.mrb[0].mxu0
  %2179 = vmatprep.mubr.f32.mxu0 0.0
  %2180 = vmatmul.mubr.f32.gmra.mrb[0].mxu0 %v656
  %v2181 = vpop.f32.mrb[0].mxu0
  %v2182 = vadd.f32 0.0, %v2181
  %v2183 = vpop.f32.mrb[0].mxu0
  %2184 = vmatprep.mubr.f32.mxu0 0.0
  %2185 = vmatmul.mubr.f32.gmra.mrb[0].mxu0 %v659
  %v2186 = vpop.f32.mrb[0].mxu0
  %v2187 = vadd.f32 0.0, %v2186
  %v2188 = vpop.f32.mrb[0].mxu0
  %2189 = vmatprep.mubr.f32.mxu0 0.0
  %2190 = vmatmul.mubr.f32.gmra.mrb[0].mxu0 %v662
  %v2191 = vpop.f32.mrb[0].mxu0
  %v2192 = vadd.f32 0.0, %v2191
  %v2193 = vpop.f32.mrb[0].mxu0
  %2194 = vmatprep.mubr.f32.mxu0 0.0
  %2195 = vmatmul.mubr.f32.gmra.mrb[0].mxu0 %v665
  %v2196 = vpop.f32.mrb[0].mxu0
  %v2197 = vadd.f32 0.0, %v2196
  %v2198 = vpop.f32.mrb[0].mxu0
  %2199 = vmatprep.mubr.f32.mxu0 0.0
  %2200 = vmatmul.mubr.f32.gmra.mrb[0].mxu0 %v668
  %v2201 = vpop.f32.mrb[0].mxu0
  %v2202 = vadd.f32 0.0, %v2201
  %v2203 = vpop.f32.mrb[0].mxu0
  %2204 = vmatprep.mubr.f32.mxu0 0.0
  %2205 = vmatmul.mubr.f32.gmra.mrb[0].mxu0 %v671
  %v2206 = vpop.f32.mrb[0].mxu0
  %v2207 = vadd.f32 0.0, %v2206
  %v2208 = vpop.f32.mrb[0].mxu0
  %2209 = vmatprep.mubr.f32.mxu0 0.0
  %2210 = vmatmul.mubr.f32.gmra.mrb[0].mxu0 %v674
  %v2211 = vpop.f32.mrb[0].mxu0
  %v2212 = vadd.f32 0.0, %v2211
  %v2213 = vpop.f32.mrb[0].mxu0
  %2214 = vmatprep.mubr.f32.mxu0 0.0
  %2215 = vmatmul.mubr.f32.gmra.mrb[0].mxu0 %v677
  %v2216 = vpop.f32.mrb[0].mxu0
  %v2217 = vadd.f32 0.0, %v2216
  %v2218 = vpop.f32.mrb[0].mxu0
  %2219 = vmatprep.mubr.f32.mxu0 0.0
  %2220 = vmatmul.mubr.f32.gmra.mrb[0].mxu0 %v680
  %v2221 = vpop.f32.mrb[0].mxu0
  %v2222 = vadd.f32 0.0, %v2221
  %v2223 = vpop.f32.mrb[0].mxu0
  %2224 = vmatprep.mubr.f32.mxu0 0.0
  %2225 = vmatmul.mubr.f32.gmra.mrb[0].mxu0 %v683
  %v2226 = vpop.f32.mrb[0].mxu0
  %v2227 = vadd.f32 0.0, %v2226
  %v2228 = vpop.f32.mrb[0].mxu0
  %2229 = vmatprep.mubr.f32.mxu0 0.0
  %2230 = vmatmul.mubr.f32.gmra.mrb[0].mxu0 %v686
  %v2231 = vpop.f32.mrb[0].mxu0
  %v2232 = vadd.f32 0.0, %v2231
  %v2233 = vpop.f32.mrb[0].mxu0
  %2234 = vmatprep.mubr.f32.mxu0 0.0
  %2235 = vmatmul.mubr.f32.gmra.mrb[0].mxu0 %v689
  %v2236 = vpop.f32.mrb[0].mxu0
  %v2237 = vadd.f32 0.0, %v2236
  %v2238 = vpop.f32.mrb[0].mxu0
  %2239 = vmatprep.mubr.f32.mxu0 0.0
  %2240 = vmatmul.mubr.f32.gmra.mrb[0].mxu0 %v692
  %v2241 = vpop.f32.mrb[0].mxu0
  %v2242 = vadd.f32 0.0, %v2241
  %v2243 = vpop.f32.mrb[0].mxu0
  %2244 = vmatprep.mubr.f32.mxu0 0.0
  %2245 = vmatmul.mubr.f32.gmra.mrb[0].mxu0 %v695
  %v2246 = vpop.f32.mrb[0].mxu0
  %v2247 = vadd.f32 0.0, %v2246
  %v2248 = vpop.f32.mrb[0].mxu0
  %2249 = vmatprep.mubr.f32.mxu0 0.0
  %2250 = vmatmul.mubr.f32.gmra.mrb[0].mxu0 %v698
  %v2251 = vpop.f32.mrb[0].mxu0
  %v2252 = vadd.f32 0.0, %v2251
  %v2253 = vpop.f32.mrb[0].mxu0
  %2254 = vmatprep.mubr.f32.mxu0 0.0
  %2255 = vmatmul.mubr.f32.gmra.mrb[0].mxu0 %v701
  %v2256 = vpop.f32.mrb[0].mxu0
  %v2257 = vadd.f32 0.0, %v2256
  %v2258 = vpop.f32.mrb[0].mxu0
  %2259 = vmatprep.mubr.f32.mxu0 0.0
  %2260 = vmatmul.mubr.f32.gmra.mrb[0].mxu0 %v704
  %v2261 = vpop.f32.mrb[0].mxu0
  %v2262 = vadd.f32 0.0, %v2261
  %v2263 = vpop.f32.mrb[0].mxu0
  %2264 = vmatprep.mubr.f32.mxu0 0.0
  %2265 = vmatmul.mubr.f32.gmra.mrb[0].mxu0 %v707
  %v2266 = vpop.f32.mrb[0].mxu0
  %v2267 = vadd.f32 0.0, %v2266
  %v2268 = vpop.f32.mrb[0].mxu0
  %2269 = vmatprep.mubr.f32.mxu0 0.0
  %2270 = vmatmul.mubr.f32.gmra.mrb[0].mxu0 %v710
  %v2271 = vpop.f32.mrb[0].mxu0
  %v2272 = vadd.f32 0.0, %v2271
  %v2273 = vpop.f32.mrb[0].mxu0
  %2274 = vmatprep.mubr.f32.mxu0 0.0
  %2275 = vmatmul.mubr.f32.gmra.mrb[0].mxu0 %v713
  %v2276 = vpop.f32.mrb[0].mxu0
  %v2277 = vadd.f32 0.0, %v2276
  %v2278 = vpop.f32.mrb[0].mxu0
  %2279 = vmatprep.mubr.f32.mxu0 0.0
  %2280 = vmatmul.mubr.f32.gmra.mrb[0].mxu0 %v716
  %v2281 = vpop.f32.mrb[0].mxu0
  %v2282 = vadd.f32 0.0, %v2281
  %v2283 = vpop.f32.mrb[0].mxu0
  %2284 = vmatprep.mubr.f32.mxu0 0.0
  %2285 = vmatmul.mubr.f32.gmra.mrb[0].mxu0 %v719
  %v2286 = vpop.f32.mrb[0].mxu0
  %v2287 = vadd.f32 0.0, %v2286
  %v2288 = vpop.f32.mrb[0].mxu0
  %2289 = vmatprep.mubr.f32.mxu0 0.0
  %2290 = vmatmul.mubr.f32.gmra.mrb[0].mxu0 %v722
  %v2291 = vpop.f32.mrb[0].mxu0
  %v2292 = vadd.f32 0.0, %v2291
  %v2293 = vpop.f32.mrb[0].mxu0
  %2294 = vmatprep.mubr.f32.mxu0 0.0
  %2295 = vmatmul.mubr.f32.gmra.mrb[0].mxu0 %v725
  %v2296 = vpop.f32.mrb[0].mxu0
  %v2297 = vadd.f32 0.0, %v2296
  %v2298 = vpop.f32.mrb[0].mxu0
  %2299 = vmatprep.mubr.f32.mxu0 0.0
  %2300 = vmatmul.mubr.f32.gmra.mrb[0].mxu0 %v728
  %v2301 = vpop.f32.mrb[0].mxu0
  %v2302 = vadd.f32 0.0, %v2301
  %v2303 = vpop.f32.mrb[0].mxu0
  %2304 = vmatprep.mubr.f32.mxu0 0.0
  %2305 = vmatmul.mubr.f32.gmra.mrb[0].mxu0 %v731
  %v2306 = vpop.f32.mrb[0].mxu0
  %v2307 = vadd.f32 0.0, %v2306
  %v2308 = vpop.f32.mrb[0].mxu0
  %2309 = vmatprep.mubr.f32.mxu0 0.0
  %2310 = vmatmul.mubr.f32.gmra.mrb[0].mxu0 %v734
  %v2311 = vpop.f32.mrb[0].mxu0
  %v2312 = vadd.f32 0.0, %v2311
  %v2313 = vpop.f32.mrb[0].mxu0
  %2314 = vmatprep.mubr.f32.mxu0 0.0
  %2315 = vmatmul.mubr.f32.gmra.mrb[0].mxu0 %v737
  %v2316 = vpop.f32.mrb[0].mxu0
  %v2317 = vadd.f32 0.0, %v2316
  %v2318 = vpop.f32.mrb[0].mxu0
  %2319 = vmatprep.mubr.f32.mxu0 0.0
  %2320 = vmatmul.mubr.f32.gmra.mrb[0].mxu0 %v740
  %v2321 = vpop.f32.mrb[0].mxu0
  %v2322 = vadd.f32 0.0, %v2321
  %v2323 = vpop.f32.mrb[0].mxu0
  %2324 = vmatprep.mubr.f32.mxu0 0.0
  %2325 = vmatmul.mubr.f32.gmra.mrb[0].mxu0 %v743
  %v2326 = vpop.f32.mrb[0].mxu0
  %v2327 = vadd.f32 0.0, %v2326
  %v2328 = vpop.f32.mrb[0].mxu0
  %2329 = vmatprep.mubr.f32.mxu0 0.0
  %2330 = vmatmul.mubr.f32.gmra.mrb[0].mxu0 %v746
  %v2331 = vpop.f32.mrb[0].mxu0
  %v2332 = vadd.f32 0.0, %v2331
  %v2333 = vpop.f32.mrb[0].mxu0
  %2334 = vmatprep.mubr.f32.mxu0 0.0
  %2335 = vmatmul.mubr.f32.gmra.mrb[0].mxu0 %v749
  %v2336 = vpop.f32.mrb[0].mxu0
  %v2337 = vadd.f32 0.0, %v2336
  %v2338 = vpop.f32.mrb[0].mxu0
  %2339 = vmatprep.mubr.f32.mxu0 0.0
  %2340 = vmatmul.mubr.f32.gmra.mrb[0].mxu0 %v752
  %v2341 = vpop.f32.mrb[0].mxu0
  %v2342 = vadd.f32 0.0, %v2341
  %v2343 = vpop.f32.mrb[0].mxu0
  %2344 = vmatprep.mubr.f32.mxu0 0.0
  %2345 = vmatmul.mubr.f32.gmra.mrb[0].mxu0 %v755
  %v2346 = vpop.f32.mrb[0].mxu0
  %v2347 = vadd.f32 0.0, %v2346
  %v2348 = vpop.f32.mrb[0].mxu0
  %2349 = vmatprep.mubr.f32.mxu0 0.0
  %2350 = vmatmul.mubr.f32.gmra.mrb[0].mxu0 %v758
  %v2351 = vpop.f32.mrb[0].mxu0
  %v2352 = vadd.f32 0.0, %v2351
  %v2353 = vpop.f32.mrb[0].mxu0
  %2354 = vmatprep.mubr.f32.mxu0 0.0
  %2355 = vmatmul.mubr.f32.gmra.mrb[0].mxu0 %v761
  %v2356 = vpop.f32.mrb[0].mxu0
  %v2357 = vadd.f32 0.0, %v2356
  %v2358 = vpop.f32.mrb[0].mxu0
  %2359 = vmatprep.mubr.f32.mxu0 0.0
  %2360 = vmatmul.mubr.f32.gmra.mrb[0].mxu0 %v764
  %v2361 = vpop.f32.mrb[0].mxu0
  %v2362 = vadd.f32 0.0, %v2361
  %v2363 = vpop.f32.mrb[0].mxu0
  %2364 = vmatprep.mubr.f32.mxu0 0.0
  %2365 = vmatmul.mubr.f32.gmra.mrb[0].mxu0 %v767
  %v2366 = vpop.f32.mrb[0].mxu0
  %v2367 = vadd.f32 0.0, %v2366
  %v2368 = vpop.f32.mrb[0].mxu0
  %2369 = vmatprep.mubr.f32.mxu0 0.0
  %2370 = vmatmul.mubr.f32.gmra.mrb[0].mxu0 %v770
  %v2371 = vpop.f32.mrb[0].mxu0
  %v2372 = vadd.f32 0.0, %v2371
  %v2373 = vpop.f32.mrb[0].mxu0
  %2374 = vmatprep.mubr.f32.mxu0 0.0
  %2375 = vmatmul.mubr.f32.gmra.mrb[0].mxu0 %v773
  %v2376 = vpop.f32.mrb[0].mxu0
  %v2377 = vadd.f32 0.0, %v2376
  %v2378 = vpop.f32.mrb[0].mxu0
  %2379 = vmatprep.mubr.f32.mxu0 0.0
  %2380 = vmatmul.mubr.f32.gmra.mrb[0].mxu0 %v776
  %v2381 = vpop.f32.mrb[0].mxu0
  %v2382 = vadd.f32 0.0, %v2381
  %v2383 = vpop.f32.mrb[0].mxu0
  %2384 = vmatprep.mubr.f32.mxu0 0.0
  %2385 = vmatmul.mubr.f32.gmra.mrb[0].mxu0 %v779
  %v2386 = vpop.f32.mrb[0].mxu0
  %v2387 = vadd.f32 0.0, %v2386
  %v2388 = vpop.f32.mrb[0].mxu0
  %2389 = vmatprep.mubr.f32.mxu0 0.0
  %2390 = vmatmul.mubr.f32.gmra.mrb[0].mxu0 %v782
  %v2391 = vpop.f32.mrb[0].mxu0
  %v2392 = vadd.f32 0.0, %v2391
  %v2393 = vpop.f32.mrb[0].mxu0
  %2394 = vmatprep.mubr.f32.mxu0 0.0
  %2395 = vmatmul.mubr.f32.gmra.mrb[0].mxu0 %v785
  %v2396 = vpop.f32.mrb[0].mxu0
  %v2397 = vadd.f32 0.0, %v2396
  %v2398 = vpop.f32.mrb[0].mxu0
  %2399 = vmatprep.mubr.f32.mxu0 0.0
  %2400 = vmatmul.mubr.f32.gmra.mrb[0].mxu0 %v788
  %v2401 = vpop.f32.mrb[0].mxu0
  %v2402 = vadd.f32 0.0, %v2401
  %v2403 = vpop.f32.mrb[0].mxu0
  %2404 = vmatprep.mubr.f32.mxu0 0.0
  %2405 = vmatmul.mubr.f32.gmra.mrb[0].mxu0 %v791
  %v2406 = vpop.f32.mrb[0].mxu0
  %v2407 = vadd.f32 0.0, %v2406
  %v2408 = vpop.f32.mrb[0].mxu0
  %2409 = vmatprep.mubr.f32.mxu0 0.0
  %2410 = vmatmul.mubr.f32.gmra.mrb[0].mxu0 %v794
  %v2411 = vpop.f32.mrb[0].mxu0
  %v2412 = vadd.f32 0.0, %v2411
  %v2413 = vpop.f32.mrb[0].mxu0
  %2414 = vmatprep.mubr.f32.mxu0 0.0
  %2415 = vmatmul.mubr.f32.gmra.mrb[0].mxu0 %v797
  %v2416 = vpop.f32.mrb[0].mxu0
  %v2417 = vadd.f32 0.0, %v2416
  %v2418 = vpop.f32.mrb[0].mxu0
  %2419 = vmatprep.mubr.f32.mxu0 0.0
  %2420 = vmatmul.mubr.f32.gmra.mrb[0].mxu0 %v800
  %v2421 = vpop.f32.mrb[0].mxu0
  %v2422 = vadd.f32 0.0, %v2421
  %v2423 = vpop.f32.mrb[0].mxu0
  %2424 = vmatprep.mubr.f32.mxu0 0.0
  %2425 = vmatmul.mubr.f32.gmra.mrb[0].mxu0 %v803
  %v2426 = vpop.f32.mrb[0].mxu0
  %v2427 = vadd.f32 0.0, %v2426
  %v2428 = vpop.f32.mrb[0].mxu0
  %2429 = vmatprep.mubr.f32.mxu0 0.0
  %2430 = vmatmul.mubr.f32.gmra.mrb[0].mxu0 %v806
  %v2431 = vpop.f32.mrb[0].mxu0
  %v2432 = vadd.f32 0.0, %v2431
  %v2433 = vpop.f32.mrb[0].mxu0
  %2434 = vmatprep.mubr.f32.mxu0 0.0
  %2435 = vmatmul.mubr.f32.gmra.mrb[0].mxu0 %v809
  %v2436 = vpop.f32.mrb[0].mxu0
  %v2437 = vadd.f32 0.0, %v2436
  %v2438 = vpop.f32.mrb[0].mxu0
  %2439 = vmatprep.mubr.f32.mxu0 0.0
  %2440 = vmatmul.mubr.f32.gmra.mrb[0].mxu0 %v812
  %v2441 = vpop.f32.mrb[0].mxu0
  %v2442 = vadd.f32 0.0, %v2441
  %v2443 = vpop.f32.mrb[0].mxu0
  %2444 = vmatprep.mubr.f32.mxu0 0.0
  %2445 = vmatmul.mubr.f32.gmra.mrb[0].mxu0 %v815
  %v2446 = vpop.f32.mrb[0].mxu0
  %v2447 = vadd.f32 0.0, %v2446
  %v2448 = vpop.f32.mrb[0].mxu0
  %2449 = vmatprep.mubr.f32.mxu0 0.0
  %2450 = vmatmul.mubr.f32.gmra.mrb[0].mxu0 %v818
  %v2451 = vpop.f32.mrb[0].mxu0
  %v2452 = vadd.f32 0.0, %v2451
  %v2453 = vpop.f32.mrb[0].mxu0
  %2454 = vmatprep.mubr.f32.mxu0 0.0
  %2455 = vmatmul.mubr.f32.gmra.mrb[0].mxu0 %v821
  %v2456 = vpop.f32.mrb[0].mxu0
  %v2457 = vadd.f32 0.0, %v2456
  %v2458 = vpop.f32.mrb[0].mxu0
  %2459 = vmatprep.mubr.f32.mxu0 0.0
  %2460 = vmatmul.mubr.f32.gmra.mrb[0].mxu0 %v824
  %v2461 = vpop.f32.mrb[0].mxu0
  %v2462 = vadd.f32 0.0, %v2461
  %v2463 = vpop.f32.mrb[0].mxu0
  %2464 = vmatprep.mubr.f32.mxu0 0.0
  %2465 = vmatmul.mubr.f32.gmra.mrb[0].mxu0 %v827
  %v2466 = vpop.f32.mrb[0].mxu0
  %v2467 = vadd.f32 0.0, %v2466
  %v2468 = vpop.f32.mrb[0].mxu0
  %2469 = vmatprep.mubr.f32.mxu0 0.0
  %2470 = vmatmul.mubr.f32.gmra.mrb[0].mxu0 %v830
  %v2471 = vpop.f32.mrb[0].mxu0
  %v2472 = vadd.f32 0.0, %v2471
  %v2473 = vpop.f32.mrb[0].mxu0
  %2474 = vmatprep.mubr.f32.mxu0 0.0
  %2475 = vmatmul.mubr.f32.gmra.mrb[0].mxu0 %v833
  %v2476 = vpop.f32.mrb[0].mxu0
  %v2477 = vadd.f32 0.0, %v2476
  %v2478 = vpop.f32.mrb[0].mxu0
  %2479 = vmatprep.mubr.f32.mxu0 0.0
  %2480 = vmatmul.mubr.f32.gmra.mrb[0].mxu0 %v836
  %v2481 = vpop.f32.mrb[0].mxu0
  %v2482 = vadd.f32 0.0, %v2481
  %v2483 = vpop.f32.mrb[0].mxu0
  %2484 = vmatprep.mubr.f32.mxu0 0.0
  %2485 = vmatmul.mubr.f32.gmra.mrb[0].mxu0 %v839
  %v2486 = vpop.f32.mrb[0].mxu0
  %v2487 = vadd.f32 0.0, %v2486
  %v2488 = vpop.f32.mrb[0].mxu0
  %2489 = vmatprep.mubr.f32.mxu0 0.0
  %2490 = vmatmul.mubr.f32.gmra.mrb[0].mxu0 %v842
  %v2491 = vpop.f32.mrb[0].mxu0
  %v2492 = vadd.f32 0.0, %v2491
  %v2493 = vpop.f32.mrb[0].mxu0
  %2494 = vmatprep.mubr.f32.mxu0 0.0
  %2495 = vmatmul.mubr.f32.gmra.mrb[0].mxu0 %v845
  %v2496 = vpop.f32.mrb[0].mxu0
  %v2497 = vadd.f32 0.0, %v2496
  %v2498 = vpop.f32.mrb[0].mxu0
  %2499 = vmatprep.mubr.f32.mxu0 0.0
  %2500 = vmatmul.mubr.f32.gmra.mrb[0].mxu0 %v848
  %v2501 = vpop.f32.mrb[0].mxu0
  %v2502 = vadd.f32 0.0, %v2501
  %v2503 = vpop.f32.mrb[0].mxu0
  %2504 = vmatprep.mubr.f32.mxu0 0.0
  %2505 = vmatmul.mubr.f32.gmra.mrb[0].mxu0 %v851
  %v2506 = vpop.f32.mrb[0].mxu0
  %v2507 = vadd.f32 0.0, %v2506
  %v2508 = vpop.f32.mrb[0].mxu0
  %2509 = vmatprep.mubr.f32.mxu0 0.0
  %2510 = vmatmul.mubr.f32.gmra.mrb[0].mxu0 %v854
  %v2511 = vpop.f32.mrb[0].mxu0
  %v2512 = vadd.f32 0.0, %v2511
  %v2513 = vpop.f32.mrb[0].mxu0
  %2514 = vmatprep.mubr.f32.mxu0 0.0
  %2515 = vmatmul.mubr.f32.gmra.mrb[0].mxu0 %v857
  %v2516 = vpop.f32.mrb[0].mxu0
  %v2517 = vadd.f32 0.0, %v2516
  %v2518 = vpop.f32.mrb[0].mxu0
  %2519 = vmatprep.mubr.f32.mxu0 0.0
  %2520 = vmatmul.mubr.f32.gmra.mrb[0].mxu0 %v860
  %v2521 = vpop.f32.mrb[0].mxu0
  %v2522 = vadd.f32 0.0, %v2521
  %v2523 = vpop.f32.mrb[0].mxu0
  %2524 = vmatprep.mubr.f32.mxu0 0.0
  %2525 = vmatmul.mubr.f32.gmra.mrb[0].mxu0 %v863
  %v2526 = vpop.f32.mrb[0].mxu0
  %v2527 = vadd.f32 0.0, %v2526
  %v2528 = vpop.f32.mrb[0].mxu0
  %2529 = vmatprep.mubr.f32.mxu0 0.0
  %2530 = vmatmul.mubr.f32.gmra.mrb[0].mxu0 %v866
  %v2531 = vpop.f32.mrb[0].mxu0
  %v2532 = vadd.f32 0.0, %v2531
  %v2533 = vpop.f32.mrb[0].mxu0
  %2534 = vmatprep.mubr.f32.mxu0 0.0
  %2535 = vmatmul.mubr.f32.gmra.mrb[0].mxu0 %v869
  %v2536 = vpop.f32.mrb[0].mxu0
  %v2537 = vadd.f32 0.0, %v2536
  %v2538 = vpop.f32.mrb[0].mxu0
  %2539 = vmatprep.mubr.f32.mxu0 0.0
  %2540 = vmatmul.mubr.f32.gmra.mrb[0].mxu0 %v872
  %v2541 = vpop.f32.mrb[0].mxu0
  %v2542 = vadd.f32 0.0, %v2541
  %v2543 = vpop.f32.mrb[0].mxu0
  %2544 = vmatprep.mubr.f32.mxu0 0.0
  %2545 = vmatmul.mubr.f32.gmra.mrb[0].mxu0 %v875
  %v2546 = vpop.f32.mrb[0].mxu0
  %v2547 = vadd.f32 0.0, %v2546
  %v2548 = vpop.f32.mrb[0].mxu0
  %2549 = vmatprep.mubr.f32.mxu0 0.0
  %2550 = vmatmul.mubr.f32.gmra.mrb[0].mxu0 %v878
  %v2551 = vpop.f32.mrb[0].mxu0
  %v2552 = vadd.f32 0.0, %v2551
  %v2553 = vpop.f32.mrb[0].mxu0
  %2554 = vmatprep.mubr.f32.mxu0 0.0
  %2555 = vmatmul.mubr.f32.gmra.mrb[0].mxu0 %v881
  %v2556 = vpop.f32.mrb[0].mxu0
  %v2557 = vadd.f32 0.0, %v2556
  %v2558 = vpop.f32.mrb[0].mxu0
  %2559 = vmatprep.mubr.f32.mxu0 0.0
  %2560 = vmatmul.mubr.f32.gmra.mrb[0].mxu0 %v884
  %v2561 = vpop.f32.mrb[0].mxu0
  %v2562 = vadd.f32 0.0, %v2561
  %v2563 = vpop.f32.mrb[0].mxu0
  %2564 = vmatprep.mubr.f32.mxu0 0.0
  %2565 = vmatmul.mubr.f32.gmra.mrb[0].mxu0 %v887
  %v2566 = vpop.f32.mrb[0].mxu0
  %v2567 = vadd.f32 0.0, %v2566
  %v2568 = vpop.f32.mrb[0].mxu0
  %2569 = vmatprep.mubr.f32.mxu0 0.0
  %2570 = vmatmul.mubr.f32.gmra.mrb[0].mxu0 %v890
  %v2571 = vpop.f32.mrb[0].mxu0
  %v2572 = vadd.f32 0.0, %v2571
  %v2573 = vpop.f32.mrb[0].mxu0
  %2574 = vmatprep.mubr.f32.mxu0 0.0
  %2575 = vmatmul.mubr.f32.gmra.mrb[0].mxu0 %v893
  %v2576 = vpop.f32.mrb[0].mxu0
  %v2577 = vadd.f32 0.0, %v2576
  %v2578 = vpop.f32.mrb[0].mxu0
  %2579 = vmatprep.mubr.f32.mxu0 0.0
  %2580 = vmatmul.mubr.f32.gmra.mrb[0].mxu0 %v896
  %v2581 = vpop.f32.mrb[0].mxu0
  %v2582 = vadd.f32 0.0, %v2581
  %v2583 = vpop.f32.mrb[0].mxu0
  %2584 = vmatprep.mubr.f32.mxu0 0.0
  %2585 = vmatmul.mubr.f32.gmra.mrb[0].mxu0 %v899
  %v2586 = vpop.f32.mrb[0].mxu0
  %v2587 = vadd.f32 0.0, %v2586
  %v2588 = vpop.f32.mrb[0].mxu0
  %2589 = vmatprep.mubr.f32.mxu0 0.0
  %2590 = vmatmul.mubr.f32.gmra.mrb[0].mxu0 %v902
  %v2591 = vpop.f32.mrb[0].mxu0
  %v2592 = vadd.f32 0.0, %v2591
  %v2593 = vpop.f32.mrb[0].mxu0
  %2594 = vmatprep.mubr.f32.mxu0 0.0
  %2595 = vmatmul.mubr.f32.gmra.mrb[0].mxu0 %v905
  %v2596 = vpop.f32.mrb[0].mxu0
  %v2597 = vadd.f32 0.0, %v2596
  %v2598 = vpop.f32.mrb[0].mxu0
  %2599 = vmatprep.mubr.f32.mxu0 0.0
  %2600 = vmatmul.mubr.f32.gmra.mrb[0].mxu0 %v908
  %v2601 = vpop.f32.mrb[0].mxu0
  %v2602 = vadd.f32 0.0, %v2601
  %v2603 = vpop.f32.mrb[0].mxu0
  %2604 = vmatprep.mubr.f32.mxu0 0.0
  %2605 = vmatmul.mubr.f32.gmra.mrb[0].mxu0 %v911
  %v2606 = vpop.f32.mrb[0].mxu0
  %v2607 = vadd.f32 0.0, %v2606
  %v2608 = vpop.f32.mrb[0].mxu0
  %2609 = vmatprep.mubr.f32.mxu0 0.0
  %2610 = vmatmul.mubr.f32.gmra.mrb[0].mxu0 %v914
  %v2611 = vpop.f32.mrb[0].mxu0
  %v2612 = vadd.f32 0.0, %v2611
  %v2613 = vpop.f32.mrb[0].mxu0
  %2614 = vmatprep.mubr.f32.mxu0 0.0
  %2615 = vmatmul.mubr.f32.gmra.mrb[0].mxu0 %v917
  %v2616 = vpop.f32.mrb[0].mxu0
  %v2617 = vadd.f32 0.0, %v2616
  %v2618 = vpop.f32.mrb[0].mxu0
  %2619 = vmatprep.mubr.f32.mxu0 0.0
  %2620 = vmatmul.mubr.f32.gmra.mrb[0].mxu0 %v920
  %v2621 = vpop.f32.mrb[0].mxu0
  %v2622 = vadd.f32 0.0, %v2621
  %v2623 = vpop.f32.mrb[0].mxu0
  %2624 = vmatprep.mubr.f32.mxu0 0.0
  %2625 = vmatmul.mubr.f32.gmra.mrb[0].mxu0 %v923
  %v2626 = vpop.f32.mrb[0].mxu0
  %v2627 = vadd.f32 0.0, %v2626
  %v2628 = vpop.f32.mrb[0].mxu0
  %2629 = vmatprep.mubr.f32.mxu0 0.0
  %2630 = vmatmul.mubr.f32.gmra.mrb[0].mxu0 %v926
  %v2631 = vpop.f32.mrb[0].mxu0
  %v2632 = vadd.f32 0.0, %v2631
  %v2633 = vpop.f32.mrb[0].mxu0
  %2634 = vmatprep.mubr.f32.mxu0 0.0
  %2635 = vmatmul.mubr.f32.gmra.mrb[0].mxu0 %v929
  %v2636 = vpop.f32.mrb[0].mxu0
  %v2637 = vadd.f32 0.0, %v2636
  %v2638 = vpop.f32.mrb[0].mxu0
  %2639 = vmatprep.mubr.f32.mxu0 0.0
  %2640 = vmatmul.mubr.f32.gmra.mrb[0].mxu0 %v932
  %v2641 = vpop.f32.mrb[0].mxu0
  %v2642 = vadd.f32 0.0, %v2641
  %v2643 = vpop.f32.mrb[0].mxu0
  %2644 = vmatprep.mubr.f32.mxu0 0.0
  %2645 = vmatmul.mubr.f32.gmra.mrb[0].mxu0 %v935
  %v2646 = vpop.f32.mrb[0].mxu0
  %v2647 = vadd.f32 0.0, %v2646
  %v2648 = vpop.f32.mrb[0].mxu0
  %2649 = vmatprep.mubr.f32.mxu0 0.0
  %2650 = vmatmul.mubr.f32.gmra.mrb[0].mxu0 %v938
  %v2651 = vpop.f32.mrb[0].mxu0
  %v2652 = vadd.f32 0.0, %v2651
  %v2653 = vpop.f32.mrb[0].mxu0
  %2654 = vmatprep.mubr.f32.mxu0 0.0
  %2655 = vmatmul.mubr.f32.gmra.mrb[0].mxu0 %v941
  %v2656 = vpop.f32.mrb[0].mxu0
  %v2657 = vadd.f32 0.0, %v2656
  %v2658 = vpop.f32.mrb[0].mxu0
  %2659 = vmatprep.mubr.f32.mxu0 0.0
  %2660 = vmatmul.mubr.f32.gmra.mrb[0].mxu0 %v944
  %v2661 = vpop.f32.mrb[0].mxu0
  %v2662 = vadd.f32 0.0, %v2661
  %v2663 = vpop.f32.mrb[0].mxu0
  %2664 = vmatprep.mubr.f32.mxu0 0.0
  %2665 = vmatmul.mubr.f32.gmra.mrb[0].mxu0 %v947
  %v2666 = vpop.f32.mrb[0].mxu0
  %v2667 = vadd.f32 0.0, %v2666
  %v2668 = vpop.f32.mrb[0].mxu0
  %2669 = vmatprep.mubr.f32.mxu0 0.0
  %2670 = vmatmul.mubr.f32.gmra.mrb[0].mxu0 %v950
  %v2671 = vpop.f32.mrb[0].mxu0
  %v2672 = vadd.f32 0.0, %v2671
  %v2673 = vpop.f32.mrb[0].mxu0
  %2674 = vmatprep.mubr.f32.mxu0 0.0
  %2675 = vmatmul.mubr.f32.gmra.mrb[0].mxu0 %v953
  %v2676 = vpop.f32.mrb[0].mxu0
  %v2677 = vadd.f32 0.0, %v2676
  %v2678 = vpop.f32.mrb[0].mxu0
  %2679 = vmatprep.mubr.f32.mxu0 0.0
  %2680 = vmatmul.mubr.f32.gmra.mrb[0].mxu0 %v956
  %v2681 = vpop.f32.mrb[0].mxu0
  %v2682 = vadd.f32 0.0, %v2681
  %v2683 = vpop.f32.mrb[0].mxu0
  %2684 = vmatprep.mubr.f32.mxu0 0.0
  %2685 = vmatmul.mubr.f32.gmra.mrb[0].mxu0 %v959
  %v2686 = vpop.f32.mrb[0].mxu0
  %v2687 = vadd.f32 0.0, %v2686
  %v2688 = vpop.f32.mrb[0].mxu0
  %2689 = vmatprep.mubr.f32.mxu0 0.0
  %2690 = vmatmul.mubr.f32.gmra.mrb[0].mxu0 %v962
  %v2691 = vpop.f32.mrb[0].mxu0
  %v2692 = vadd.f32 0.0, %v2691
  %v2693 = vpop.f32.mrb[0].mxu0
  %2694 = vmatprep.mubr.f32.mxu0 0.0
  %2695 = vmatmul.mubr.f32.gmra.mrb[0].mxu0 %v965
  %v2696 = vpop.f32.mrb[0].mxu0
  %v2697 = vadd.f32 0.0, %v2696
  %v2698 = vpop.f32.mrb[0].mxu0
  %2699 = vmatprep.mubr.f32.mxu0 0.0
  %2700 = vmatmul.mubr.f32.gmra.mrb[0].mxu0 %v968
  %v2701 = vpop.f32.mrb[0].mxu0
  %v2702 = vadd.f32 0.0, %v2701
  %v2703 = vpop.f32.mrb[0].mxu0
  %2704 = vmatprep.mubr.f32.mxu0 0.0
  %2705 = vmatmul.mubr.f32.gmra.mrb[0].mxu0 %v971
  %v2706 = vpop.f32.mrb[0].mxu0
  %v2707 = vadd.f32 0.0, %v2706
  %v2708 = vpop.f32.mrb[0].mxu0
  %2709 = vmatprep.mubr.f32.mxu0 0.0
  %2710 = vmatmul.mubr.f32.gmra.mrb[0].mxu0 %v974
  %v2711 = vpop.f32.mrb[0].mxu0
  %v2712 = vadd.f32 0.0, %v2711
  %v2713 = vpop.f32.mrb[0].mxu0
  %2714 = vmatprep.mubr.f32.mxu0 0.0
  %2715 = vmatmul.mubr.f32.gmra.mrb[0].mxu0 %v977
  %v2716 = vpop.f32.mrb[0].mxu0
  %v2717 = vadd.f32 0.0, %v2716
  %v2718 = vpop.f32.mrb[0].mxu0
  %2719 = vmatprep.mubr.f32.mxu0 0.0
  %2720 = vmatmul.mubr.f32.gmra.mrb[0].mxu0 %v980
  %v2721 = vpop.f32.mrb[0].mxu0
  %v2722 = vadd.f32 0.0, %v2721
  %v2723 = vpop.f32.mrb[0].mxu0
  %2724 = vmatprep.mubr.f32.mxu0 0.0
  %2725 = vmatmul.mubr.f32.gmra.mrb[0].mxu0 %v983
  %v2726 = vpop.f32.mrb[0].mxu0
  %v2727 = vadd.f32 0.0, %v2726
  %v2728 = vpop.f32.mrb[0].mxu0
  %2729 = vmatprep.mubr.f32.mxu0 0.0
  %2730 = vmatmul.mubr.f32.gmra.mrb[0].mxu0 %v986
  %v2731 = vpop.f32.mrb[0].mxu0
  %v2732 = vadd.f32 0.0, %v2731
  %v2733 = vpop.f32.mrb[0].mxu0
  %2734 = vmatprep.mubr.f32.mxu0 0.0
  %2735 = vmatmul.mubr.f32.gmra.mrb[0].mxu0 %v989
  %v2736 = vpop.f32.mrb[0].mxu0
  %v2737 = vadd.f32 0.0, %v2736
  %v2738 = vpop.f32.mrb[0].mxu0
  %2739 = vmatprep.mubr.f32.mxu0 0.0
  %2740 = vmatmul.mubr.f32.gmra.mrb[0].mxu0 %v992
  %v2741 = vpop.f32.mrb[0].mxu0
  %v2742 = vadd.f32 0.0, %v2741
  %v2743 = vpop.f32.mrb[0].mxu0
  %2744 = vmatprep.mubr.f32.mxu0 0.0
  %2745 = vmatmul.mubr.f32.gmra.mrb[0].mxu0 %v995
  %v2746 = vpop.f32.mrb[0].mxu0
  %v2747 = vadd.f32 0.0, %v2746
  %v2748 = vpop.f32.mrb[0].mxu0
  %2749 = vmatprep.mubr.f32.mxu0 0.0
  %2750 = vmatmul.mubr.f32.gmra.mrb[0].mxu0 %v998
  %v2751 = vpop.f32.mrb[0].mxu0
  %v2752 = vadd.f32 0.0, %v2751
  %v2753 = vpop.f32.mrb[0].mxu0
  %2754 = vmatprep.mubr.f32.mxu0 0.0
  %2755 = vmatmul.mubr.f32.gmra.mrb[0].mxu0 %v1001
  %v2756 = vpop.f32.mrb[0].mxu0
  %v2757 = vadd.f32 0.0, %v2756
  %v2758 = vpop.f32.mrb[0].mxu0
  %2759 = vmatprep.mubr.f32.mxu0 0.0
  %2760 = vmatmul.mubr.f32.gmra.mrb[0].mxu0 %v1004
  %v2761 = vpop.f32.mrb[0].mxu0
  %v2762 = vadd.f32 0.0, %v2761
  %v2763 = vpop.f32.mrb[0].mxu0
  %2764 = vmatprep.mubr.f32.mxu0 0.0
  %2765 = vmatmul.mubr.f32.gmra.mrb[0].mxu0 %v1007
  %v2766 = vpop.f32.mrb[0].mxu0
  %v2767 = vadd.f32 0.0, %v2766
  %v2768 = vpop.f32.mrb[0].mxu0
  %2769 = vmatprep.mubr.f32.mxu0 0.0
  %2770 = vmatmul.mubr.f32.gmra.mrb[0].mxu0 %v1010
  %v2771 = vpop.f32.mrb[0].mxu0
  %v2772 = vadd.f32 0.0, %v2771
  %v2773 = vpop.f32.mrb[0].mxu0
  %2774 = vmatprep.mubr.f32.mxu0 0.0
  %2775 = vmatmul.mubr.f32.gmra.mrb[0].mxu0 %v1013
  %v2776 = vpop.f32.mrb[0].mxu0
  %v2777 = vadd.f32 0.0, %v2776
  %v2778 = vpop.f32.mrb[0].mxu0
  %2779 = vmatprep.mubr.f32.mxu0 0.0
  %2780 = vmatmul.mubr.f32.gmra.mrb[0].mxu0 %v1016
  %v2781 = vpop.f32.mrb[0].mxu0
  %v2782 = vadd.f32 0.0, %v2781
  %v2783 = vpop.f32.mrb[0].mxu0
  %2784 = vmatprep.mubr.f32.mxu0 0.0
  %2785 = vmatmul.mubr.f32.gmra.mrb[0].mxu0 %v1019
  %v2786 = vpop.f32.mrb[0].mxu0
  %v2787 = vadd.f32 0.0, %v2786
  %v2788 = vpop.f32.mrb[0].mxu0
  %2789 = vmatprep.mubr.f32.mxu0 0.0
  %2790 = vmatmul.mubr.f32.gmra.mrb[0].mxu0 %v1022
  %v2791 = vpop.f32.mrb[0].mxu0
  %v2792 = vadd.f32 0.0, %v2791
  %v2793 = vpop.f32.mrb[0].mxu0
  %2794 = vmatprep.mubr.f32.mxu0 0.0
  %2795 = vmatmul.mubr.f32.gmra.mrb[0].mxu0 %v1025
  %v2796 = vpop.f32.mrb[0].mxu0
  %v2797 = vadd.f32 0.0, %v2796
  %v2798 = vpop.f32.mrb[0].mxu0
  %2799 = vmatprep.mubr.f32.mxu0 0.0
  %2800 = vmatmul.mubr.f32.gmra.mrb[0].mxu0 %v1028
  %v2801 = vpop.f32.mrb[0].mxu0
  %v2802 = vadd.f32 0.0, %v2801
  %v2803 = vpop.f32.mrb[0].mxu0
  %2804 = vmatprep.mubr.f32.mxu0 0.0
  %2805 = vmatmul.mubr.f32.gmra.mrb[0].mxu0 %v1031
  %v2806 = vpop.f32.mrb[0].mxu0
  %v2807 = vadd.f32 0.0, %v2806
  %v2808 = vpop.f32.mrb[0].mxu0
  %2809 = vmatprep.mubr.f32.mxu0 0.0
  %2810 = vmatmul.mubr.f32.gmra.mrb[0].mxu0 %v1034
  %v2811 = vpop.f32.mrb[0].mxu0
  %v2812 = vadd.f32 0.0, %v2811
  %v2813 = vpop.f32.mrb[0].mxu0
  %2814 = vmatprep.mubr.f32.mxu0 0.0
  %2815 = vmatmul.mubr.f32.gmra.mrb[0].mxu0 %v1037
  %v2816 = vpop.f32.mrb[0].mxu0
  %v2817 = vadd.f32 0.0, %v2816
  %v2818 = vpop.f32.mrb[0].mxu0
  %2819 = vmatprep.mubr.f32.mxu0 0.0
  %2820 = vmatmul.mubr.f32.gmra.mrb[0].mxu0 %v1040
  %v2821 = vpop.f32.mrb[0].mxu0
  %v2822 = vadd.f32 0.0, %v2821
  %v2823 = vpop.f32.mrb[0].mxu0
  %2824 = vmatprep.mubr.f32.mxu0 0.0
  %2825 = vmatmul.mubr.f32.gmra.mrb[0].mxu0 %v1043
  %v2826 = vpop.f32.mrb[0].mxu0
  %v2827 = vadd.f32 0.0, %v2826
  %v2828 = vpop.f32.mrb[0].mxu0
  %2829 = vmatprep.mubr.f32.mxu0 0.0
  %2830 = vmatmul.mubr.f32.gmra.mrb[0].mxu0 %v1046
  %v2831 = vpop.f32.mrb[0].mxu0
  %v2832 = vadd.f32 0.0, %v2831
  %v2833 = vpop.f32.mrb[0].mxu0
  %2834 = vmatprep.mubr.f32.mxu0 0.0
  %2835 = vmatmul.mubr.f32.gmra.mrb[0].mxu0 %v1049
  %v2836 = vpop.f32.mrb[0].mxu0
  %v2837 = vadd.f32 0.0, %v2836
  %v2838 = vpop.f32.mrb[0].mxu0
  %2839 = vmatprep.mubr.f32.mxu0 0.0
  %2840 = vmatmul.mubr.f32.gmra.mrb[0].mxu0 %v1052
  %v2841 = vpop.f32.mrb[0].mxu0
  %v2842 = vadd.f32 0.0, %v2841
  %v2843 = vpop.f32.mrb[0].mxu0
  %2844 = vmatprep.mubr.f32.mxu0 0.0
  %2845 = vmatmul.mubr.f32.gmra.mrb[0].mxu0 %v1055
  %v2846 = vpop.f32.mrb[0].mxu0
  %v2847 = vadd.f32 0.0, %v2846
  %v2848 = vpop.f32.mrb[0].mxu0
  %2849 = vmatprep.mubr.f32.mxu0 0.0
  %2850 = vmatmul.mubr.f32.gmra.mrb[0].mxu0 %v1058
  %v2851 = vpop.f32.mrb[0].mxu0
  %v2852 = vadd.f32 0.0, %v2851
  %v2853 = vpop.f32.mrb[0].mxu0
  %2854 = vmatprep.mubr.f32.mxu0 0.0
  %2855 = vmatmul.mubr.f32.gmra.mrb[0].mxu0 %v1061
  %v2856 = vpop.f32.mrb[0].mxu0
  %v2857 = vadd.f32 0.0, %v2856
  %v2858 = vpop.f32.mrb[0].mxu0
  %2859 = vmatprep.mubr.f32.mxu0 0.0
  %2860 = vmatmul.mubr.f32.gmra.mrb[0].mxu0 %v1064
  %v2861 = vpop.f32.mrb[0].mxu0
  %v2862 = vadd.f32 0.0, %v2861
  %v2863 = vpop.f32.mrb[0].mxu0
  %2864 = vmatprep.mubr.f32.mxu0 0.0
  %2865 = vmatmul.mubr.f32.gmra.mrb[0].mxu0 %v1067
  %v2866 = vpop.f32.mrb[0].mxu0
  %v2867 = vadd.f32 0.0, %v2866
  %v2868 = vpop.f32.mrb[0].mxu0
  %2869 = vmatprep.mubr.f32.mxu0 0.0
  %2870 = vmatmul.mubr.f32.gmra.mrb[0].mxu0 %v1070
  %v2871 = vpop.f32.mrb[0].mxu0
  %v2872 = vadd.f32 0.0, %v2871
  %v2873 = vpop.f32.mrb[0].mxu0
  %2874 = vmatprep.mubr.f32.mxu0 0.0
  %2875 = vmatmul.mubr.f32.gmra.mrb[0].mxu0 %v1073
  %v2876 = vpop.f32.mrb[0].mxu0
  %v2877 = vadd.f32 0.0, %v2876
  %v2878 = vpop.f32.mrb[0].mxu0
  %2879 = vmatprep.mubr.f32.mxu0 0.0
  %2880 = vmatmul.mubr.f32.gmra.mrb[0].mxu0 %v1076
  %v2881 = vpop.f32.mrb[0].mxu0
  %v2882 = vadd.f32 0.0, %v2881
  %v2883 = vpop.f32.mrb[0].mxu0
  %2884 = vmatprep.mubr.f32.mxu0 0.0
  %2885 = vmatmul.mubr.f32.gmra.mrb[0].mxu0 %v1079
  %v2886 = vpop.f32.mrb[0].mxu0
  %v2887 = vadd.f32 0.0, %v2886
  %v2888 = vpop.f32.mrb[0].mxu0
  %2889 = vmatprep.mubr.f32.mxu0 0.0
  %2890 = vmatmul.mubr.f32.gmra.mrb[0].mxu0 %v1082
  %v2891 = vpop.f32.mrb[0].mxu0
  %v2892 = vadd.f32 0.0, %v2891
  %v2893 = vpop.f32.mrb[0].mxu0
  %2894 = vmatprep.mubr.f32.mxu0 0.0
  %2895 = vmatmul.mubr.f32.gmra.mrb[0].mxu0 %v1085
  %v2896 = vpop.f32.mrb[0].mxu0
  %v2897 = vadd.f32 0.0, %v2896
  %v2898 = vpop.f32.mrb[0].mxu0
  %2899 = vmatprep.mubr.f32.mxu0 0.0
  %2900 = vmatmul.mubr.f32.gmra.mrb[0].mxu0 %v1088
  %v2901 = vpop.f32.mrb[0].mxu0
  %v2902 = vadd.f32 0.0, %v2901
  %v2903 = vpop.f32.mrb[0].mxu0
  %2904 = vmatprep.mubr.f32.mxu0 0.0
  %2905 = vmatmul.mubr.f32.gmra.mrb[0].mxu0 %v1091
  %v2906 = vpop.f32.mrb[0].mxu0
  %v2907 = vadd.f32 0.0, %v2906
  %v2908 = vpop.f32.mrb[0].mxu0
  %2909 = vmatprep.mubr.f32.mxu0 0.0
  %2910 = vmatmul.mubr.f32.gmra.mrb[0].mxu0 %v1094
  %v2911 = vpop.f32.mrb[0].mxu0
  %v2912 = vadd.f32 0.0, %v2911
  %v2913 = vpop.f32.mrb[0].mxu0
  %2914 = vmatprep.mubr.f32.mxu0 0.0
  %2915 = vmatmul.mubr.f32.gmra.mrb[0].mxu0 %v1097
  %v2916 = vpop.f32.mrb[0].mxu0
  %v2917 = vadd.f32 0.0, %v2916
  %v2918 = vpop.f32.mrb[0].mxu0
  %2919 = vmatprep.mubr.f32.mxu0 0.0
  %2920 = vmatmul.mubr.f32.gmra.mrb[0].mxu0 %v1100
  %v2921 = vpop.f32.mrb[0].mxu0
  %v2922 = vadd.f32 0.0, %v2921
  %v2923 = vpop.f32.mrb[0].mxu0
  %2924 = vmatprep.mubr.f32.mxu0 0.0
  %2925 = vmatmul.mubr.f32.gmra.mrb[0].mxu0 %v1103
  %v2926 = vpop.f32.mrb[0].mxu0
  %v2927 = vadd.f32 0.0, %v2926
  %v2928 = vpop.f32.mrb[0].mxu0
  %2929 = vmatprep.mubr.f32.mxu0 0.0
  %2930 = vmatmul.mubr.f32.gmra.mrb[0].mxu0 %v1106
  %v2931 = vpop.f32.mrb[0].mxu0
  %v2932 = vadd.f32 0.0, %v2931
  %v2933 = vpop.f32.mrb[0].mxu0
  %2934 = vmatprep.mubr.f32.mxu0 0.0
  %2935 = vmatmul.mubr.f32.gmra.mrb[0].mxu0 %v1109
  %v2936 = vpop.f32.mrb[0].mxu0
  %v2937 = vadd.f32 0.0, %v2936
  %v2938 = vpop.f32.mrb[0].mxu0
  %2939 = vmatprep.mubr.f32.mxu0 0.0
  %2940 = vmatmul.mubr.f32.gmra.mrb[0].mxu0 %v1112
  %v2941 = vpop.f32.mrb[0].mxu0
  %v2942 = vadd.f32 0.0, %v2941
  %v2943 = vpop.f32.mrb[0].mxu0
  %2944 = vmatprep.mubr.f32.mxu0 0.0
  %2945 = vmatmul.mubr.f32.gmra.mrb[0].mxu0 %v1115
  %v2946 = vpop.f32.mrb[0].mxu0
  %v2947 = vadd.f32 0.0, %v2946
  %v2948 = vpop.f32.mrb[0].mxu0
  %2949 = vmatprep.mubr.f32.mxu0 0.0
  %2950 = vmatmul.mubr.f32.gmra.mrb[0].mxu0 %v1118
  %v2951 = vpop.f32.mrb[0].mxu0
  %v2952 = vadd.f32 0.0, %v2951
  %v2953 = vpop.f32.mrb[0].mxu0
  %2954 = vmatprep.mubr.f32.mxu0 0.0
  %2955 = vmatmul.mubr.f32.gmra.mrb[0].mxu0 %v1121
  %v2956 = vpop.f32.mrb[0].mxu0
  %v2957 = vadd.f32 0.0, %v2956
  %v2958 = vpop.f32.mrb[0].mxu0
  %2959 = vmatprep.mubr.f32.mxu0 0.0
  %2960 = vmatmul.mubr.f32.gmra.mrb[0].mxu0 %v1124
  %v2961 = vpop.f32.mrb[0].mxu0
  %v2962 = vadd.f32 0.0, %v2961
  %v2963 = vpop.f32.mrb[0].mxu0
  %2964 = vmatprep.mubr.f32.mxu0 0.0
  %2965 = vmatmul.mubr.f32.gmra.mrb[0].mxu0 %v1127
  %v2966 = vpop.f32.mrb[0].mxu0
  %v2967 = vadd.f32 0.0, %v2966
  %v2968 = vpop.f32.mrb[0].mxu0
  %2969 = vmatprep.mubr.f32.mxu0 0.0
  %2970 = vmatmul.mubr.f32.gmra.mrb[0].mxu0 %v1130
  %v2971 = vpop.f32.mrb[0].mxu0
  %v2972 = vadd.f32 0.0, %v2971
  %v2973 = vpop.f32.mrb[0].mxu0
  %2974 = vmatprep.mubr.f32.mxu0 0.0
  %2975 = vmatmul.mubr.f32.gmra.mrb[0].mxu0 %v1133
  %v2976 = vpop.f32.mrb[0].mxu0
  %v2977 = vadd.f32 0.0, %v2976
  %v2978 = vpop.f32.mrb[0].mxu0
  %2979 = vmatprep.mubr.f32.mxu0 0.0
  %2980 = vmatmul.mubr.f32.gmra.mrb[0].mxu0 %v1136
  %v2981 = vpop.f32.mrb[0].mxu0
  %v2982 = vadd.f32 0.0, %v2981
  %v2983 = vpop.f32.mrb[0].mxu0
  %2984 = vmatprep.mubr.f32.mxu0 0.0
  %2985 = vmatmul.mubr.f32.gmra.mrb[0].mxu0 %v1139
  %v2986 = vpop.f32.mrb[0].mxu0
  %v2987 = vadd.f32 0.0, %v2986
  %v2988 = vpop.f32.mrb[0].mxu0
  %2989 = vmatprep.mubr.f32.mxu0 0.0
  %2990 = vmatmul.mubr.f32.gmra.mrb[0].mxu0 %v1142
  %v2991 = vpop.f32.mrb[0].mxu0
  %v2992 = vadd.f32 0.0, %v2991
  %v2993 = vpop.f32.mrb[0].mxu0
  %2994 = vmatprep.mubr.f32.mxu0 0.0
  %2995 = vmatmul.mubr.f32.gmra.mrb[0].mxu0 %v1145
  %v2996 = vpop.f32.mrb[0].mxu0
  %v2997 = vadd.f32 0.0, %v2996
  %v2998 = vpop.f32.mrb[0].mxu0
  %2999 = vmatprep.mubr.f32.mxu0 0.0
  %3000 = vmatmul.mubr.f32.gmra.mrb[0].mxu0 %v1148
  %v3001 = vpop.f32.mrb[0].mxu0
  %v3002 = vadd.f32 0.0, %v3001
  %v3003 = vpop.f32.mrb[0].mxu0
  %3004 = vmatprep.mubr.f32.mxu0 0.0
  %3005 = vmatmul.mubr.f32.gmra.mrb[0].mxu0 %v1151
  %v3006 = vpop.f32.mrb[0].mxu0
  %v3007 = vadd.f32 0.0, %v3006
  %v3008 = vpop.f32.mrb[0].mxu0
  %3009 = vmatprep.mubr.f32.mxu0 0.0
  %3010 = vmatmul.mubr.f32.gmra.mrb[0].mxu0 %v1154
  %v3011 = vpop.f32.mrb[0].mxu0
  %v3012 = vadd.f32 0.0, %v3011
  %v3013 = vpop.f32.mrb[0].mxu0
  %3014 = vmatprep.mubr.f32.mxu0 0.0
  %3015 = vmatmul.mubr.f32.gmra.mrb[0].mxu0 %v1157
  %v3016 = vpop.f32.mrb[0].mxu0
  %v3017 = vadd.f32 0.0, %v3016
  %v3018 = vpop.f32.mrb[0].mxu0
  %3019 = vmatprep.mubr.f32.mxu0 0.0
  %3020 = vmatmul.mubr.f32.gmra.mrb[0].mxu0 %v1160
  %v3021 = vpop.f32.mrb[0].mxu0
  %v3022 = vadd.f32 0.0, %v3021
  %v3023 = vpop.f32.mrb[0].mxu0
  %3024 = vmatprep.mubr.f32.mxu0 0.0
  %3025 = vmatmul.mubr.f32.gmra.mrb[0].mxu0 %v1163
  %v3026 = vpop.f32.mrb[0].mxu0
  %v3027 = vadd.f32 0.0, %v3026
  %v3028 = vpop.f32.mrb[0].mxu0
  %3029 = vmatprep.mubr.f32.mxu0 0.0
  %3030 = vmatmul.mubr.f32.gmra.mrb[0].mxu0 %v1166
  %v3031 = vpop.f32.mrb[0].mxu0
  %v3032 = vadd.f32 0.0, %v3031
  %v3033 = vpop.f32.mrb[0].mxu0
  %3034 = vmatprep.mubr.f32.mxu0 0.0
  %3035 = vmatmul.mubr.f32.gmra.mrb[0].mxu0 %v1169
  %v3036 = vpop.f32.mrb[0].mxu0
  %v3037 = vadd.f32 0.0, %v3036
  %v3038 = vpop.f32.mrb[0].mxu0
  %3039 = vmatprep.mubr.f32.mxu0 0.0
  %3040 = vmatmul.mubr.f32.gmra.mrb[0].mxu0 %v1172
  %v3041 = vpop.f32.mrb[0].mxu0
  %v3042 = vadd.f32 0.0, %v3041
  %v3043 = vpop.f32.mrb[0].mxu0
  %3044 = vmatprep.mubr.f32.mxu0 0.0
  %3045 = vmatmul.mubr.f32.gmra.mrb[0].mxu0 %v1175
  %v3046 = vpop.f32.mrb[0].mxu0
  %v3047 = vadd.f32 0.0, %v3046
  %v3048 = vpop.f32.mrb[0].mxu0
  %3049 = vmatprep.mubr.f32.mxu0 0.0
  %3050 = vmatmul.mubr.f32.gmra.mrb[0].mxu0 %v1178
  %v3051 = vpop.f32.mrb[0].mxu0
  %v3052 = vadd.f32 0.0, %v3051
  %v3053 = vpop.f32.mrb[0].mxu0
  %3054 = vmatprep.mubr.f32.mxu0 0.0
  %3055 = vmatmul.mubr.f32.gmra.mrb[0].mxu0 %v1181
  %v3056 = vpop.f32.mrb[0].mxu0
  %v3057 = vadd.f32 0.0, %v3056
  %v3058 = vpop.f32.mrb[0].mxu0
  %3059 = vmatprep.mubr.f32.mxu0 0.0
  %3060 = vmatmul.mubr.f32.gmra.mrb[0].mxu0 %v1184
  %v3061 = vpop.f32.mrb[0].mxu0
  %v3062 = vadd.f32 0.0, %v3061
  %v3063 = vpop.f32.mrb[0].mxu0
  %3064 = vmatprep.mubr.f32.mxu0 0.0
  %3065 = vmatmul.mubr.f32.gmra.mrb[0].mxu0 %v1187
  %v3066 = vpop.f32.mrb[0].mxu0
  %v3067 = vadd.f32 0.0, %v3066
  %v3068 = vpop.f32.mrb[0].mxu0
  %3069 = vmatprep.mubr.f32.mxu0 0.0
  %3070 = vmatmul.mubr.f32.gmra.mrb[0].mxu0 %v1190
  %v3071 = vpop.f32.mrb[0].mxu0
  %v3072 = vadd.f32 0.0, %v3071
  %v3073 = vpop.f32.mrb[0].mxu0
  %3074 = vmatprep.mubr.f32.mxu0 0.0
  %3075 = vmatmul.mubr.f32.gmra.mrb[0].mxu0 %v1193
  %v3076 = vpop.f32.mrb[0].mxu0
  %v3077 = vadd.f32 0.0, %v3076
  %v3078 = vpop.f32.mrb[0].mxu0
  %3079 = vmatprep.mubr.f32.mxu0 0.0
  %3080 = vmatmul.mubr.f32.gmra.mrb[0].mxu0 %v1196
  %v3081 = vpop.f32.mrb[0].mxu0
  %v3082 = vadd.f32 0.0, %v3081
  %v3083 = vpop.f32.mrb[0].mxu0
  %3084 = vmatprep.mubr.f32.mxu0 0.0
  %3085 = vmatmul.mubr.f32.gmra.mrb[0].mxu0 %v1199
  %v3086 = vpop.f32.mrb[0].mxu0
  %v3087 = vadd.f32 0.0, %v3086
  %v3088 = vpop.f32.mrb[0].mxu0
  %3089 = vmatprep.mubr.f32.mxu0 0.0
  %3090 = vmatmul.mubr.f32.gmra.mrb[0].mxu0 %v1202
  %v3091 = vpop.f32.mrb[0].mxu0
  %v3092 = vadd.f32 0.0, %v3091
  %v3093 = vpop.f32.mrb[0].mxu0
  %3094 = vmatprep.mubr.f32.mxu0 0.0
  %3095 = vmatmul.mubr.f32.gmra.mrb[0].mxu0 %v1205
  %v3096 = vpop.f32.mrb[0].mxu0
  %v3097 = vadd.f32 0.0, %v3096
  %v3098 = vpop.f32.mrb[0].mxu0
  %3099 = vmatprep.mubr.f32.mxu0 0.0
  %3100 = vmatmul.mubr.f32.gmra.mrb[0].mxu0 %v1208
  %v3101 = vpop.f32.mrb[0].mxu0
  %v3102 = vadd.f32 0.0, %v3101
  %v3103 = vpop.f32.mrb[0].mxu0
  %3104 = vmatprep.mubr.f32.mxu0 0.0
  %3105 = vmatmul.mubr.f32.gmra.mrb[0].mxu0 %v1211
  %v3106 = vpop.f32.mrb[0].mxu0
  %v3107 = vadd.f32 0.0, %v3106
  %v3108 = vpop.f32.mrb[0].mxu0
  %3109 = vmatprep.mubr.f32.mxu0 0.0
  %3110 = vmatmul.mubr.f32.gmra.mrb[0].mxu0 %v1214
  %v3111 = vpop.f32.mrb[0].mxu0
  %v3112 = vadd.f32 0.0, %v3111
  %v3113 = vpop.f32.mrb[0].mxu0
  %3114 = vmatprep.mubr.f32.mxu0 0.0
  %3115 = vmatmul.mubr.f32.gmra.mrb[0].mxu0 %v1217
  %v3116 = vpop.f32.mrb[0].mxu0
  %v3117 = vadd.f32 0.0, %v3116
  %v3118 = vpop.f32.mrb[0].mxu0
  %3119 = vmatprep.mubr.f32.mxu0 0.0
  %3120 = vmatmul.mubr.f32.gmra.mrb[0].mxu0 %v1220
  %v3121 = vpop.f32.mrb[0].mxu0
  %v3122 = vadd.f32 0.0, %v3121
  %v3123 = vpop.f32.mrb[0].mxu0
  %3124 = vmatprep.mubr.f32.mxu0 0.0
  %3125 = vmatmul.mubr.f32.gmra.mrb[0].mxu0 %v1223
  %v3126 = vpop.f32.mrb[0].mxu0
  %v3127 = vadd.f32 0.0, %v3126
  %v3128 = vpop.f32.mrb[0].mxu0
  %3129 = vmatprep.mubr.f32.mxu0 0.0
  %3130 = vmatmul.mubr.f32.gmra.mrb[0].mxu0 %v1226
  %v3131 = vpop.f32.mrb[0].mxu0
  %v3132 = vadd.f32 0.0, %v3131
  %v3133 = vpop.f32.mrb[0].mxu0
  %3134 = vmatprep.mubr.f32.mxu0 0.0
  %3135 = vmatmul.mubr.f32.gmra.mrb[0].mxu0 %v1229
  %v3136 = vpop.f32.mrb[0].mxu0
  %v3137 = vadd.f32 0.0, %v3136
  %v3138 = vpop.f32.mrb[0].mxu0
  %3139 = vmatprep.mubr.f32.mxu0 0.0
  %3140 = vmatmul.mubr.f32.gmra.mrb[0].mxu0 %v1232
  %v3141 = vpop.f32.mrb[0].mxu0
  %v3142 = vadd.f32 0.0, %v3141
  %v3143 = vpop.f32.mrb[0].mxu0
  %3144 = vmatprep.mubr.f32.mxu0 0.0
  %3145 = vmatmul.mubr.f32.gmra.mrb[0].mxu0 %v1235
  %v3146 = vpop.f32.mrb[0].mxu0
  %v3147 = vadd.f32 0.0, %v3146
  %v3148 = vpop.f32.mrb[0].mxu0
  %3149 = vmatprep.mubr.f32.mxu0 0.0
  %3150 = vmatmul.mubr.f32.gmra.mrb[0].mxu0 %v1238
  %v3151 = vpop.f32.mrb[0].mxu0
  %v3152 = vadd.f32 0.0, %v3151
  %v3153 = vpop.f32.mrb[0].mxu0
  %3154 = vmatprep.mubr.f32.mxu0 0.0
  %3155 = vmatmul.mubr.f32.gmra.mrb[0].mxu0 %v1241
  %v3156 = vpop.f32.mrb[0].mxu0
  %v3157 = vadd.f32 0.0, %v3156
  %v3158 = vpop.f32.mrb[0].mxu0
  %3159 = vmatprep.mubr.f32.mxu0 0.0
  %3160 = vmatmul.mubr.f32.gmra.mrb[0].mxu0 %v1244
  %v3161 = vpop.f32.mrb[0].mxu0
  %v3162 = vadd.f32 0.0, %v3161
  %v3163 = vpop.f32.mrb[0].mxu0
  %3164 = vmatprep.mubr.f32.mxu0 0.0
  %3165 = vmatmul.mubr.f32.gmra.mrb[0].mxu0 %v1247
  %v3166 = vpop.f32.mrb[0].mxu0
  %v3167 = vadd.f32 0.0, %v3166
  %v3168 = vpop.f32.mrb[0].mxu0
  %3169 = vmatprep.mubr.f32.mxu0 0.0
  %3170 = vmatmul.mubr.f32.gmra.mrb[0].mxu0 %v1250
  %v3171 = vpop.f32.mrb[0].mxu0
  %v3172 = vadd.f32 0.0, %v3171
  %v3173 = vpop.f32.mrb[0].mxu0
  %3174 = vmatprep.mubr.f32.mxu0 0.0
  %3175 = vmatmul.mubr.f32.gmra.mrb[0].mxu0 %v1253
  %v3176 = vpop.f32.mrb[0].mxu0
  %v3177 = vadd.f32 0.0, %v3176
  %v3178 = vpop.f32.mrb[0].mxu0
  %3179 = vmatprep.mubr.f32.mxu0 0.0
  %3180 = vmatmul.mubr.f32.gmra.mrb[0].mxu0 %v1256
  %v3181 = vpop.f32.mrb[0].mxu0
  %v3182 = vadd.f32 0.0, %v3181
  %v3183 = vpop.f32.mrb[0].mxu0
  %3184 = vmatprep.mubr.f32.mxu0 0.0
  %3185 = vmatmul.mubr.f32.gmra.mrb[0].mxu0 %v1259
  %v3186 = vpop.f32.mrb[0].mxu0
  %v3187 = vadd.f32 0.0, %v3186
  %v3188 = vpop.f32.mrb[0].mxu0
  %3189 = vmatprep.mubr.f32.mxu0 0.0
  %3190 = vmatmul.mubr.f32.gmra.mrb[0].mxu0 %v1262
  %v3191 = vpop.f32.mrb[0].mxu0
  %v3192 = vadd.f32 0.0, %v3191
  %v3193 = vpop.f32.mrb[0].mxu0
  %3194 = vmatprep.mubr.f32.mxu0 0.0
  %3195 = vmatmul.mubr.f32.gmra.mrb[0].mxu0 %v1265
  %v3196 = vpop.f32.mrb[0].mxu0
  %v3197 = vadd.f32 0.0, %v3196
  %v3198 = vpop.f32.mrb[0].mxu0
  %3199 = vmatprep.mubr.f32.mxu0 0.0
  %3200 = vmatmul.mubr.f32.gmra.mrb[0].mxu0 %v1268
  %v3201 = vpop.f32.mrb[0].mxu0
  %v3202 = vadd.f32 0.0, %v3201
  %v3203 = vpop.f32.mrb[0].mxu0
  %3204 = vmatprep.mubr.f32.mxu0 0.0
  %3205 = vmatmul.mubr.f32.gmra.mrb[0].mxu0 %v1271
  %v3206 = vpop.f32.mrb[0].mxu0
  %v3207 = vadd.f32 0.0, %v3206
  %v3208 = vpop.f32.mrb[0].mxu0
  %3209 = vmatprep.mubr.f32.mxu0 0.0
  %3210 = vmatmul.mubr.f32.gmra.mrb[0].mxu0 %v1274
  %v3211 = vpop.f32.mrb[0].mxu0
  %v3212 = vadd.f32 0.0, %v3211
  %v3213 = vpop.f32.mrb[0].mxu0
  %3214 = vmatprep.mubr.f32.mxu0 0.0
  %3215 = vmatmul.mubr.f32.gmra.mrb[0].mxu0 %v1277
  %v3216 = vpop.f32.mrb[0].mxu0
  %v3217 = vadd.f32 0.0, %v3216
  %v3218 = vpop.f32.mrb[0].mxu0
  %3219 = vmatprep.mubr.f32.mxu0 0.0
  %3220 = vmatmul.mubr.f32.gmra.mrb[0].mxu0 %v1280
  %v3221 = vpop.f32.mrb[0].mxu0
  %v3222 = vadd.f32 0.0, %v3221
  %v3223 = vpop.f32.mrb[0].mxu0
  %3224 = vmatprep.mubr.f32.mxu0 0.0
  %3225 = vmatmul.mubr.f32.gmra.mrb[0].mxu0 %v1283
  %v3226 = vpop.f32.mrb[0].mxu0
  %v3227 = vadd.f32 0.0, %v3226
  %v3228 = vpop.f32.mrb[0].mxu0
  %3229 = vmatprep.mubr.f32.mxu0 0.0
  %3230 = vmatmul.mubr.f32.gmra.mrb[0].mxu0 %v1286
  %v3231 = vpop.f32.mrb[0].mxu0
  %v3232 = vadd.f32 0.0, %v3231
  %v3233 = vpop.f32.mrb[0].mxu0
  %3234 = vmatprep.mubr.f32.mxu0 0.0
  %3235 = vmatmul.mubr.f32.gmra.mrb[0].mxu0 %v1289
  %v3236 = vpop.f32.mrb[0].mxu0
  %v3237 = vadd.f32 0.0, %v3236
  %v3238 = vpop.f32.mrb[0].mxu0
  %3239 = vmatprep.mubr.f32.mxu0 0.0
  %3240 = vmatmul.mubr.f32.gmra.mrb[0].mxu0 %v1292
  %v3241 = vpop.f32.mrb[0].mxu0
  %v3242 = vadd.f32 0.0, %v3241
  %v3243 = vpop.f32.mrb[0].mxu0
  %3244 = vmatprep.mubr.f32.mxu0 0.0
  %3245 = vmatmul.mubr.f32.gmra.mrb[0].mxu0 %v1295
  %v3246 = vpop.f32.mrb[0].mxu0
  %v3247 = vadd.f32 0.0, %v3246
  %v3248 = vpop.f32.mrb[0].mxu0
  %3249 = vmatprep.mubr.f32.mxu0 0.0
  %3250 = vmatmul.mubr.f32.gmra.mrb[0].mxu0 %v1298
  %v3251 = vpop.f32.mrb[0].mxu0
  %v3252 = vadd.f32 0.0, %v3251
  %v3253 = vpop.f32.mrb[0].mxu0
  %3254 = vmatprep.mubr.f32.mxu0 0.0
  %3255 = vmatmul.mubr.f32.gmra.mrb[0].mxu0 %v1301
  %v3256 = vpop.f32.mrb[0].mxu0
  %v3257 = vadd.f32 0.0, %v3256
  %v3258 = vpop.f32.mrb[0].mxu0
  %3259 = vmatprep.mubr.f32.mxu0 0.0
  %3260 = vmatmul.mubr.f32.gmra.mrb[0].mxu0 %v1304
  %v3261 = vpop.f32.mrb[0].mxu0
  %v3262 = vadd.f32 0.0, %v3261
  %v3263 = vpop.f32.mrb[0].mxu0
  %3264 = vmatprep.mubr.f32.mxu0 0.0
  %3265 = vmatmul.mubr.f32.gmra.mrb[0].mxu0 %v1307
  %v3266 = vpop.f32.mrb[0].mxu0
  %v3267 = vadd.f32 0.0, %v3266
  %v3268 = vpop.f32.mrb[0].mxu0
  %3269 = vmatprep.mubr.f32.mxu0 0.0
  %3270 = vmatmul.mubr.f32.gmra.mrb[0].mxu0 %v1310
  %v3271 = vpop.f32.mrb[0].mxu0
  %v3272 = vadd.f32 0.0, %v3271
  %v3273 = vpop.f32.mrb[0].mxu0
  %3274 = vmatprep.mubr.f32.mxu0 0.0
  %3275 = vmatmul.mubr.f32.gmra.mrb[0].mxu0 %v1313
  %v3276 = vpop.f32.mrb[0].mxu0
  %v3277 = vadd.f32 0.0, %v3276
  %v3278 = vpop.f32.mrb[0].mxu0
  %3279 = vmatprep.mubr.f32.mxu0 0.0
  %3280 = vmatmul.mubr.f32.gmra.mrb[0].mxu0 %v1316
  %v3281 = vpop.f32.mrb[0].mxu0
  %v3282 = vadd.f32 0.0, %v3281
  %v3283 = vpop.f32.mrb[0].mxu0
  %3284 = vmatprep.mubr.f32.mxu0 0.0
  %3285 = vmatmul.mubr.f32.gmra.mrb[0].mxu0 %v1319
  %v3286 = vpop.f32.mrb[0].mxu0
  %v3287 = vadd.f32 0.0, %v3286
  %v3288 = vpop.f32.mrb[0].mxu0
  %3289 = vmatprep.mubr.f32.mxu0 0.0
  %3290 = vmatmul.mubr.f32.gmra.mrb[0].mxu0 %v1322
  %v3291 = vpop.f32.mrb[0].mxu0
  %v3292 = vadd.f32 0.0, %v3291
  %v3293 = vpop.f32.mrb[0].mxu0
  %3294 = vmatprep.mubr.f32.mxu0 0.0
  %3295 = vmatmul.mubr.f32.gmra.mrb[0].mxu0 %v1325
  %v3296 = vpop.f32.mrb[0].mxu0
  %v3297 = vadd.f32 0.0, %v3296
  %v3298 = vpop.f32.mrb[0].mxu0
  %3299 = vmatprep.mubr.f32.mxu0 0.0
  %3300 = vmatmul.mubr.f32.gmra.mrb[0].mxu0 %v1328
  %v3301 = vpop.f32.mrb[0].mxu0
  %v3302 = vadd.f32 0.0, %v3301
  %v3303 = vpop.f32.mrb[0].mxu0
  %3304 = vmatprep.mubr.f32.mxu0 0.0
  %3305 = vmatmul.mubr.f32.gmra.mrb[0].mxu0 %v1331
  %v3306 = vpop.f32.mrb[0].mxu0
  %v3307 = vadd.f32 0.0, %v3306
  %v3308 = vpop.f32.mrb[0].mxu0
  %3309 = vmatprep.mubr.f32.mxu0 0.0
  %3310 = vmatmul.mubr.f32.gmra.mrb[0].mxu0 %v1334
  %v3311 = vpop.f32.mrb[0].mxu0
  %v3312 = vadd.f32 0.0, %v3311
  %v3313 = vpop.f32.mrb[0].mxu0
  %3314 = vmatprep.mubr.f32.mxu0 0.0
  %3315 = vmatmul.mubr.f32.gmra.mrb[0].mxu0 %v1337
  %v3316 = vpop.f32.mrb[0].mxu0
  %v3317 = vadd.f32 0.0, %v3316
  %v3318 = vpop.f32.mrb[0].mxu0
  %3319 = vmatprep.mubr.f32.mxu0 0.0
  %3320 = vmatmul.mubr.f32.gmra.mrb[0].mxu0 %v1340
  %v3321 = vpop.f32.mrb[0].mxu0
  %v3322 = vadd.f32 0.0, %v3321
  %v3323 = vpop.f32.mrb[0].mxu0
  %3324 = vmatprep.mubr.f32.mxu0 0.0
  %3325 = vmatmul.mubr.f32.gmra.mrb[0].mxu0 %v1343
  %v3326 = vpop.f32.mrb[0].mxu0
  %v3327 = vadd.f32 0.0, %v3326
  %v3328 = vpop.f32.mrb[0].mxu0
  %3329 = vmatprep.mubr.f32.mxu0 0.0
  %3330 = vmatmul.mubr.f32.gmra.mrb[0].mxu0 %v1346
  %v3331 = vpop.f32.mrb[0].mxu0
  %v3332 = vadd.f32 0.0, %v3331
  %v3333 = vpop.f32.mrb[0].mxu0
  %3334 = vmatprep.mubr.f32.mxu0 0.0
  %3335 = vmatmul.mubr.f32.gmra.mrb[0].mxu0 %v1349
  %v3336 = vpop.f32.mrb[0].mxu0
  %v3337 = vadd.f32 0.0, %v3336
  %v3338 = vpop.f32.mrb[0].mxu0
  %3339 = vmatprep.mubr.f32.mxu0 0.0
  %3340 = vmatmul.mubr.f32.gmra.mrb[0].mxu0 %v1352
  %v3341 = vpop.f32.mrb[0].mxu0
  %v3342 = vadd.f32 0.0, %v3341
  %v3343 = vpop.f32.mrb[0].mxu0
  %3344 = vmatprep.mubr.f32.mxu0 0.0
  %3345 = vmatmul.mubr.f32.gmra.mrb[0].mxu0 %v1355
  %v3346 = vpop.f32.mrb[0].mxu0
  %v3347 = vadd.f32 0.0, %v3346
  %v3348 = vpop.f32.mrb[0].mxu0
  %3349 = vmatprep.mubr.f32.mxu0 0.0
  %3350 = vmatmul.mubr.f32.gmra.mrb[0].mxu0 %v1358
  %v3351 = vpop.f32.mrb[0].mxu0
  %v3352 = vadd.f32 0.0, %v3351
  %v3353 = vpop.f32.mrb[0].mxu0
  %3354 = vmatprep.mubr.f32.mxu0 0.0
  %3355 = vmatmul.mubr.f32.gmra.mrb[0].mxu0 %v1361
  %v3356 = vpop.f32.mrb[0].mxu0
  %v3357 = vadd.f32 0.0, %v3356
  %v3358 = vpop.f32.mrb[0].mxu0
  %3359 = vmatprep.mubr.f32.mxu0 0.0
  %3360 = vmatmul.mubr.f32.gmra.mrb[0].mxu0 %v1364
  %v3361 = vpop.f32.mrb[0].mxu0
  %v3362 = vadd.f32 0.0, %v3361
  %v3363 = vpop.f32.mrb[0].mxu0
  %3364 = vmatprep.mubr.f32.mxu0 0.0
  %3365 = vmatmul.mubr.f32.gmra.mrb[0].mxu0 %v1367
  %v3366 = vpop.f32.mrb[0].mxu0
  %v3367 = vadd.f32 0.0, %v3366
  %v3368 = vpop.f32.mrb[0].mxu0
  %3369 = vmatprep.mubr.f32.mxu0 0.0
  %3370 = vmatmul.mubr.f32.gmra.mrb[0].mxu0 %v1370
  %v3371 = vpop.f32.mrb[0].mxu0
  %v3372 = vadd.f32 0.0, %v3371
  %v3373 = vpop.f32.mrb[0].mxu0
  %3374 = vmatprep.mubr.f32.mxu0 0.0
  %3375 = vmatmul.mubr.f32.gmra.mrb[0].mxu0 %v1373
  %v3376 = vpop.f32.mrb[0].mxu0
  %v3377 = vadd.f32 0.0, %v3376
  %v3378 = vpop.f32.mrb[0].mxu0
  %3379 = vmatprep.mubr.f32.mxu0 0.0
  %3380 = vmatmul.mubr.f32.gmra.mrb[0].mxu0 %v1376
  %v3381 = vpop.f32.mrb[0].mxu0
  %v3382 = vadd.f32 0.0, %v3381
  %v3383 = vpop.f32.mrb[0].mxu0
  %3384 = vmatprep.mubr.f32.mxu0 0.0
  %3385 = vmatmul.mubr.f32.gmra.mrb[0].mxu0 %v1379
  %v3386 = vpop.f32.mrb[0].mxu0
  %v3387 = vadd.f32 0.0, %v3386
  %v3388 = vpop.f32.mrb[0].mxu0
  %3389 = vmatprep.mubr.f32.mxu0 0.0
  %3390 = vmatmul.mubr.f32.gmra.mrb[0].mxu0 %v1382
  %v3391 = vpop.f32.mrb[0].mxu0
  %v3392 = vadd.f32 0.0, %v3391
  %v3393 = vpop.f32.mrb[0].mxu0
  %3394 = vmatprep.mubr.f32.mxu0 0.0
  %3395 = vmatmul.mubr.f32.gmra.mrb[0].mxu0 %v1385
  %v3396 = vpop.f32.mrb[0].mxu0
  %v3397 = vadd.f32 0.0, %v3396
  %v3398 = vpop.f32.mrb[0].mxu0
  %3399 = vmatprep.mubr.f32.mxu0 0.0
  %3400 = vmatmul.mubr.f32.gmra.mrb[0].mxu0 %v1388
  %v3401 = vpop.f32.mrb[0].mxu0
  %v3402 = vadd.f32 0.0, %v3401
  %v3403 = vpop.f32.mrb[0].mxu0
  %3404 = vmatprep.mubr.f32.mxu0 0.0
  %3405 = vmatmul.mubr.f32.gmra.mrb[0].mxu0 %v1391
  %v3406 = vpop.f32.mrb[0].mxu0
  %v3407 = vadd.f32 0.0, %v3406
  %v3408 = vpop.f32.mrb[0].mxu0
  %3409 = vmatprep.mubr.f32.mxu0 0.0
  %3410 = vmatmul.mubr.f32.gmra.mrb[0].mxu0 %v1394
  %v3411 = vpop.f32.mrb[0].mxu0
  %v3412 = vadd.f32 0.0, %v3411
  %v3413 = vpop.f32.mrb[0].mxu0
  %3414 = vmatprep.mubr.f32.mxu0 0.0
  %3415 = vmatmul.mubr.f32.gmra.mrb[0].mxu0 %v1397
  %v3416 = vpop.f32.mrb[0].mxu0
  %v3417 = vadd.f32 0.0, %v3416
  %v3418 = vpop.f32.mrb[0].mxu0
  %3419 = vmatprep.mubr.f32.mxu0 0.0
  %3420 = vmatmul.mubr.f32.gmra.mrb[0].mxu0 %v1400
  %v3421 = vpop.f32.mrb[0].mxu0
  %v3422 = vadd.f32 0.0, %v3421
  %v3423 = vpop.f32.mrb[0].mxu0
  %3424 = vmatprep.mubr.f32.mxu0 0.0
  %3425 = vmatmul.mubr.f32.gmra.mrb[0].mxu0 %v1403
  %v3426 = vpop.f32.mrb[0].mxu0
  %v3427 = vadd.f32 0.0, %v3426
  %v3428 = vpop.f32.mrb[0].mxu0
  %3429 = vmatprep.mubr.f32.mxu0 0.0
  %3430 = vmatmul.mubr.f32.gmra.mrb[0].mxu0 %v1406
  %v3431 = vpop.f32.mrb[0].mxu0
  %v3432 = vadd.f32 0.0, %v3431
  %v3433 = vpop.f32.mrb[0].mxu0
  %3434 = vmatprep.mubr.f32.mxu0 0.0
  %3435 = vmatmul.mubr.f32.gmra.mrb[0].mxu0 %v1409
  %v3436 = vpop.f32.mrb[0].mxu0
  %v3437 = vadd.f32 0.0, %v3436
  %v3438 = vpop.f32.mrb[0].mxu0
  %3439 = vmatprep.mubr.f32.mxu0 0.0
  %3440 = vmatmul.mubr.f32.gmra.mrb[0].mxu0 %v1412
  %v3441 = vpop.f32.mrb[0].mxu0
  %v3442 = vadd.f32 0.0, %v3441
  %v3443 = vpop.f32.mrb[0].mxu0
  %3444 = vmatprep.mubr.f32.mxu0 0.0
  %3445 = vmatmul.mubr.f32.gmra.mrb[0].mxu0 %v1415
  %v3446 = vpop.f32.mrb[0].mxu0
  %v3447 = vadd.f32 0.0, %v3446
  %v3448 = vpop.f32.mrb[0].mxu0
  %3449 = vmatprep.mubr.f32.mxu0 0.0
  %3450 = vmatmul.mubr.f32.gmra.mrb[0].mxu0 %v1418
  %v3451 = vpop.f32.mrb[0].mxu0
  %v3452 = vadd.f32 0.0, %v3451
  %v3453 = vpop.f32.mrb[0].mxu0
  %3454 = vmatprep.mubr.f32.mxu0 0.0
  %3455 = vmatmul.mubr.f32.gmra.mrb[0].mxu0 %v1421
  %v3456 = vpop.f32.mrb[0].mxu0
  %v3457 = vadd.f32 0.0, %v3456
  %v3458 = vpop.f32.mrb[0].mxu0
  %3459 = vmatprep.mubr.f32.mxu0 0.0
  %3460 = vmatmul.mubr.f32.gmra.mrb[0].mxu0 %v1424
  %v3461 = vpop.f32.mrb[0].mxu0
  %v3462 = vadd.f32 0.0, %v3461
  %v3463 = vpop.f32.mrb[0].mxu0
  %3464 = vmatprep.mubr.f32.mxu0 0.0
  %3465 = vmatmul.mubr.f32.gmra.mrb[0].mxu0 %v1427
  %v3466 = vpop.f32.mrb[0].mxu0
  %v3467 = vadd.f32 0.0, %v3466
  %v3468 = vpop.f32.mrb[0].mxu0
  %3469 = vmatprep.mubr.f32.mxu0 0.0
  %3470 = vmatmul.mubr.f32.gmra.mrb[0].mxu0 %v1430
  %v3471 = vpop.f32.mrb[0].mxu0
  %v3472 = vadd.f32 0.0, %v3471
  %v3473 = vpop.f32.mrb[0].mxu0
  %3474 = vmatprep.mubr.f32.mxu0 0.0
  %3475 = vmatmul.mubr.f32.gmra.mrb[0].mxu0 %v1433
  %v3476 = vpop.f32.mrb[0].mxu0
  %v3477 = vadd.f32 0.0, %v3476
  %v3478 = vpop.f32.mrb[0].mxu0
  %3479 = vmatprep.mubr.f32.mxu0 0.0
  %3480 = vmatmul.mubr.f32.gmra.mrb[0].mxu0 %v1436
  %v3481 = vpop.f32.mrb[0].mxu0
  %v3482 = vadd.f32 0.0, %v3481
  %v3483 = vpop.f32.mrb[0].mxu0
  %3484 = vmatprep.mubr.f32.mxu0 0.0
  %3485 = vmatmul.mubr.f32.gmra.mrb[0].mxu0 %v1439
  %v3486 = vpop.f32.mrb[0].mxu0
  %v3487 = vadd.f32 0.0, %v3486
  %v3488 = vpop.f32.mrb[0].mxu0
  %3489 = vmatprep.mubr.f32.mxu0 0.0
  %3490 = vmatmul.mubr.f32.gmra.mrb[0].mxu0 %v1442
  %v3491 = vpop.f32.mrb[0].mxu0
  %v3492 = vadd.f32 0.0, %v3491
  %v3493 = vpop.f32.mrb[0].mxu0
  %3494 = vmatprep.mubr.f32.mxu0 0.0
  %3495 = vmatmul.mubr.f32.gmra.mrb[0].mxu0 %v1445
  %v3496 = vpop.f32.mrb[0].mxu0
  %v3497 = vadd.f32 0.0, %v3496
  %v3498 = vpop.f32.mrb[0].mxu0
  %3499 = vmatprep.mubr.f32.mxu0 0.0
  %3500 = vmatmul.mubr.f32.gmra.mrb[0].mxu0 %v1448
  %v3501 = vpop.f32.mrb[0].mxu0
  %v3502 = vadd.f32 0.0, %v3501
  %v3503 = vpop.f32.mrb[0].mxu0
  %3504 = vmatprep.mubr.f32.mxu0 0.0
  %3505 = vmatmul.mubr.f32.gmra.mrb[0].mxu0 %v1451
  %v3506 = vpop.f32.mrb[0].mxu0
  %v3507 = vadd.f32 0.0, %v3506
  %v3508 = vpop.f32.mrb[0].mxu0
  %3509 = vmatprep.mubr.f32.mxu0 0.0
  %3510 = vmatmul.mubr.f32.gmra.mrb[0].mxu0 %v1454
  %v3511 = vpop.f32.mrb[0].mxu0
  %v3512 = vadd.f32 0.0, %v3511
  %v3513 = vpop.f32.mrb[0].mxu0
  %3514 = vmatprep.mubr.f32.mxu0 0.0
  %3515 = vmatmul.mubr.f32.gmra.mrb[0].mxu0 %v1457
  %v3516 = vpop.f32.mrb[0].mxu0
  %v3517 = vadd.f32 0.0, %v3516
  %v3518 = vpop.f32.mrb[0].mxu0
  %3519 = vmatprep.mubr.f32.mxu0 0.0
  %3520 = vmatmul.mubr.f32.gmra.mrb[0].mxu0 %v1460
  %v3521 = vpop.f32.mrb[0].mxu0
  %v3522 = vadd.f32 0.0, %v3521
  %v3523 = vpop.f32.mrb[0].mxu0
  %3524 = vmatprep.mubr.f32.mxu0 0.0
  %3525 = vmatmul.mubr.f32.gmra.mrb[0].mxu0 %v1463
  %v3526 = vpop.f32.mrb[0].mxu0
  %v3527 = vadd.f32 0.0, %v3526
  %v3528 = vpop.f32.mrb[0].mxu0
  %3529 = vmatprep.mubr.f32.mxu0 0.0
  %3530 = vmatmul.mubr.f32.gmra.mrb[0].mxu0 %v1466
  %v3531 = vpop.f32.mrb[0].mxu0
  %v3532 = vadd.f32 0.0, %v3531
  %v3533 = vpop.f32.mrb[0].mxu0
  %3534 = vmatprep.mubr.f32.mxu0 0.0
  %3535 = vmatmul.mubr.f32.gmra.mrb[0].mxu0 %v1469
  %v3536 = vpop.f32.mrb[0].mxu0
  %v3537 = vadd.f32 0.0, %v3536
  %v3538 = vpop.f32.mrb[0].mxu0
  %3539 = vmatprep.mubr.f32.mxu0 0.0
  %3540 = vmatmul.mubr.f32.gmra.mrb[0].mxu0 %v1472
  %v3541 = vpop.f32.mrb[0].mxu0
  %v3542 = vadd.f32 0.0, %v3541
  %v3543 = vpop.f32.mrb[0].mxu0
  %3544 = vmatprep.mubr.f32.mxu0 0.0
  %3545 = vmatmul.mubr.f32.gmra.mrb[0].mxu0 %v1475
  %v3546 = vpop.f32.mrb[0].mxu0
  %v3547 = vadd.f32 0.0, %v3546
  %v3548 = vpop.f32.mrb[0].mxu0
  %3549 = vmatprep.mubr.f32.mxu0 0.0
  %3550 = vmatmul.mubr.f32.gmra.mrb[0].mxu0 %v1478
  %v3551 = vpop.f32.mrb[0].mxu0
  %v3552 = vadd.f32 0.0, %v3551
  %v3553 = vpop.f32.mrb[0].mxu0
  %3554 = vmatprep.mubr.f32.mxu0 0.0
  %3555 = vmatmul.mubr.f32.gmra.mrb[0].mxu0 %v1481
  %v3556 = vpop.f32.mrb[0].mxu0
  %v3557 = vadd.f32 0.0, %v3556
  %v3558 = vpop.f32.mrb[0].mxu0
  %3559 = vmatprep.mubr.f32.mxu0 0.0
  %3560 = vmatmul.mubr.f32.gmra.mrb[0].mxu0 %v1484
  %v3561 = vpop.f32.mrb[0].mxu0
  %v3562 = vadd.f32 0.0, %v3561
  %v3563 = vpop.f32.mrb[0].mxu0
  %3564 = vmatprep.mubr.f32.mxu0 0.0
  %3565 = vmatmul.mubr.f32.gmra.mrb[0].mxu0 %v1487
  %v3566 = vpop.f32.mrb[0].mxu0
  %v3567 = vadd.f32 0.0, %v3566
  %v3568 = vpop.f32.mrb[0].mxu0
  %3569 = vmatprep.mubr.f32.mxu0 0.0
  %3570 = vmatmul.mubr.f32.gmra.mrb[0].mxu0 %v1490
  %v3571 = vpop.f32.mrb[0].mxu0
  %v3572 = vadd.f32 0.0, %v3571
  %v3573 = vpop.f32.mrb[0].mxu0
  %3574 = vmatprep.mubr.f32.mxu0 0.0
  %3575 = vmatmul.mubr.f32.gmra.mrb[0].mxu0 %v1493
  %v3576 = vpop.f32.mrb[0].mxu0
  %v3577 = vadd.f32 0.0, %v3576
  %v3578 = vpop.f32.mrb[0].mxu0
  %3579 = vmatprep.mubr.f32.mxu0 0.0
  %3580 = vmatmul.mubr.f32.gmra.mrb[0].mxu0 %v1496
  %v3581 = vpop.f32.mrb[0].mxu0
  %v3582 = vadd.f32 0.0, %v3581
  %v3583 = vpop.f32.mrb[0].mxu0
  %3584 = vmatprep.mubr.f32.mxu0 0.0
  %3585 = vmatmul.mubr.f32.gmra.mrb[0].mxu0 %v1499
  %v3586 = vpop.f32.mrb[0].mxu0
  %v3587 = vadd.f32 0.0, %v3586
  %v3588 = vpop.f32.mrb[0].mxu0
  %3589 = vmatprep.mubr.f32.mxu0 0.0
  %3590 = vmatmul.mubr.f32.gmra.mrb[0].mxu0 %v1502
  %v3591 = vpop.f32.mrb[0].mxu0
  %v3592 = vadd.f32 0.0, %v3591
  %v3593 = vpop.f32.mrb[0].mxu0
  %3594 = vmatprep.mubr.f32.mxu0 0.0
  %3595 = vmatmul.mubr.f32.gmra.mrb[0].mxu0 %v1505
  %v3596 = vpop.f32.mrb[0].mxu0
  %v3597 = vadd.f32 0.0, %v3596
  %v3598 = vpop.f32.mrb[0].mxu0
  %3599 = vmatprep.mubr.f32.mxu0 0.0
  %3600 = vmatmul.mubr.f32.gmra.mrb[0].mxu0 %v1508
  %v3601 = vpop.f32.mrb[0].mxu0
  %v3602 = vadd.f32 0.0, %v3601
  %v3603 = vpop.f32.mrb[0].mxu0
  %3604 = vmatprep.mubr.f32.mxu0 0.0
  %3605 = vmatmul.mubr.f32.gmra.mrb[0].mxu0 %v1511
  %v3606 = vpop.f32.mrb[0].mxu0
  %v3607 = vadd.f32 0.0, %v3606
  %v3608 = vpop.f32.mrb[0].mxu0
  %3609 = vmatprep.mubr.f32.mxu0 0.0
  %3610 = vmatmul.mubr.f32.gmra.mrb[0].mxu0 %v1514
  %v3611 = vpop.f32.mrb[0].mxu0
  %v3612 = vadd.f32 0.0, %v3611
  %v3613 = vpop.f32.mrb[0].mxu0
  %3614 = vmatprep.mubr.f32.mxu0 0.0
  %3615 = vmatmul.mubr.f32.gmra.mrb[0].mxu0 %v1517
  %v3616 = vpop.f32.mrb[0].mxu0
  %v3617 = vadd.f32 0.0, %v3616
  %v3618 = vpop.f32.mrb[0].mxu0
  %3619 = vmatprep.mubr.f32.mxu0 0.0
  %3620 = vmatmul.mubr.f32.gmra.mrb[0].mxu0 %v1520
  %v3621 = vpop.f32.mrb[0].mxu0
  %v3622 = vadd.f32 0.0, %v3621
  %v3623 = vpop.f32.mrb[0].mxu0
  %3624 = vmatprep.mubr.f32.mxu0 0.0
  %3625 = vmatmul.mubr.f32.gmra.mrb[0].mxu0 %v1523
  %v3626 = vpop.f32.mrb[0].mxu0
  %v3627 = vadd.f32 0.0, %v3626
  %v3628 = vpop.f32.mrb[0].mxu0
  %3629 = vmatprep.mubr.f32.mxu0 0.0
  %3630 = vmatmul.mubr.f32.gmra.mrb[0].mxu0 %v1526
  %v3631 = vpop.f32.mrb[0].mxu0
  %v3632 = vadd.f32 0.0, %v3631
  %v3633 = vpop.f32.mrb[0].mxu0
  %3634 = vmatprep.mubr.f32.mxu0 0.0
  %3635 = vmatmul.mubr.f32.gmra.mrb[0].mxu0 %v1529
  %v3636 = vpop.f32.mrb[0].mxu0
  %v3637 = vadd.f32 0.0, %v3636
  %v3638 = vpop.f32.mrb[0].mxu0
  %3639 = vmatprep.mubr.f32.mxu0 0.0
  %3640 = vmatmul.mubr.f32.gmra.mrb[0].mxu0 %v1532
  %v3641 = vpop.f32.mrb[0].mxu0
  %v3642 = vadd.f32 0.0, %v3641
  %v3643 = vpop.f32.mrb[0].mxu0
  %3644 = vmatprep.mubr.f32.mxu0 0.0
  %3645 = vmatmul.mubr.f32.gmra.mrb[0].mxu0 %v1535
  %v3646 = vpop.f32.mrb[0].mxu0
  %v3647 = vadd.f32 0.0, %v3646
  %v3648 = vpop.f32.mrb[0].mxu0
  %3649 = vmatprep.mubr.f32.mxu0 0.0
  %3650 = vmatmul.mubr.f32.gmra.mrb[0].mxu0 %v1538
  %v3651 = vpop.f32.mrb[0].mxu0
  %v3652 = vadd.f32 0.0, %v3651
  %v3653 = vpop.f32.mrb[0].mxu0
  %3654 = vmatprep.mubr.f32.mxu0 0.0
  %3655 = vmatmul.mubr.f32.gmra.mrb[0].mxu0 %v1541
  %v3656 = vpop.f32.mrb[0].mxu0
  %v3657 = vadd.f32 0.0, %v3656
  %v3658 = vpop.f32.mrb[0].mxu0
  %3659 = vmatprep.mubr.f32.mxu0 0.0
  %3660 = vmatmul.mubr.f32.gmra.mrb[0].mxu0 %v1544
  %v3661 = vpop.f32.mrb[0].mxu0
  %v3662 = vadd.f32 0.0, %v3661
  %v3663 = vpop.f32.mrb[0].mxu0
  %3664 = vmatprep.mubr.f32.mxu0 0.0
  %3665 = vmatmul.mubr.f32.gmra.mrb[0].mxu0 %v1547
  %v3666 = vpop.f32.mrb[0].mxu0
  %v3667 = vadd.f32 0.0, %v3666
  %v3668 = vpop.f32.mrb[0].mxu0
  %3669 = vmatprep.mubr.f32.mxu0 0.0
  %3670 = vmatmul.mubr.f32.gmra.mrb[0].mxu0 %v1550
  %v3671 = vpop.f32.mrb[0].mxu0
  %v3672 = vadd.f32 0.0, %v3671
  %v3673 = vpop.f32.mrb[0].mxu0
  %3674 = vmatprep.mubr.f32.mxu0 0.0
  %3675 = vmatmul.mubr.f32.gmra.mrb[0].mxu0 %v1553
  %v3676 = vpop.f32.mrb[0].mxu0
  %v3677 = vadd.f32 0.0, %v3676
  %v3678 = vpop.f32.mrb[0].mxu0
  %3679 = vmatprep.mubr.f32.mxu0 0.0
  %3680 = vmatmul.mubr.f32.gmra.mrb[0].mxu0 %v1556
  %v3681 = vpop.f32.mrb[0].mxu0
  %v3682 = vadd.f32 0.0, %v3681
  %v3683 = vpop.f32.mrb[0].mxu0
  %3684 = vmatprep.mubr.f32.mxu0 0.0
  %3685 = vmatmul.mubr.f32.gmra.mrb[0].mxu0 %v1559
  %v3686 = vpop.f32.mrb[0].mxu0
  %v3687 = vadd.f32 0.0, %v3686
  %v3688 = vpop.f32.mrb[0].mxu0
  %3689 = vmatprep.mubr.f32.mxu0 0.0
  %3690 = vmatmul.mubr.f32.gmra.mrb[0].mxu0 %v1562
  %v3691 = vpop.f32.mrb[0].mxu0
  %v3692 = vadd.f32 0.0, %v3691
  %v3693 = vpop.f32.mrb[0].mxu0
  %3694 = vmatprep.mubr.f32.mxu0 0.0
  %3695 = vmatmul.mubr.f32.gmra.mrb[0].mxu0 %v1565
  %v3696 = vpop.f32.mrb[0].mxu0
  %v3697 = vadd.f32 0.0, %v3696
  %v3698 = vpop.f32.mrb[0].mxu0
  %3699 = vmatprep.mubr.f32.mxu0 0.0
  %3700 = vmatmul.mubr.f32.gmra.mrb[0].mxu0 %v1568
  %v3701 = vpop.f32.mrb[0].mxu0
  %v3702 = vadd.f32 0.0, %v3701
  %v3703 = vpop.f32.mrb[0].mxu0
  %3704 = vmatprep.mubr.f32.mxu0 0.0
  %3705 = vmatmul.mubr.f32.gmra.mrb[0].mxu0 %v1571
  %v3706 = vpop.f32.mrb[0].mxu0
  %v3707 = vadd.f32 0.0, %v3706
  %v3708 = vpop.f32.mrb[0].mxu0
  %3709 = vmatprep.mubr.f32.mxu0 0.0
  %3710 = vmatmul.mubr.f32.gmra.mrb[0].mxu0 %v1574
  %v3711 = vpop.f32.mrb[0].mxu0
  %v3712 = vadd.f32 0.0, %v3711
  %v3713 = vpop.f32.mrb[0].mxu0
  %3714 = vmatprep.mubr.f32.mxu0 0.0
  %3715 = vmatmul.mubr.f32.gmra.mrb[0].mxu0 %v1577
  %v3716 = vpop.f32.mrb[0].mxu0
  %v3717 = vadd.f32 0.0, %v3716
  %v3718 = vpop.f32.mrb[0].mxu0
  %3719 = vmatprep.mubr.f32.mxu0 0.0
  %3720 = vmatmul.mubr.f32.gmra.mrb[0].mxu0 %v1580
  %v3721 = vpop.f32.mrb[0].mxu0
  %v3722 = vadd.f32 0.0, %v3721
  %v3723 = vpop.f32.mrb[0].mxu0
  %3724 = vmatprep.mubr.f32.mxu0 0.0
  %3725 = vmatmul.mubr.f32.gmra.mrb[0].mxu0 %v1583
  %v3726 = vpop.f32.mrb[0].mxu0
  %v3727 = vadd.f32 0.0, %v3726
  %v3728 = vpop.f32.mrb[0].mxu0
  %3729 = vmatprep.mubr.f32.mxu0 0.0
  %3730 = vmatmul.mubr.f32.gmra.mrb[0].mxu0 %v1586
  %v3731 = vpop.f32.mrb[0].mxu0
  %v3732 = vadd.f32 0.0, %v3731
  %v3733 = vpop.f32.mrb[0].mxu0
  %3734 = vmatprep.mubr.f32.mxu0 0.0
  %3735 = vmatmul.mubr.f32.gmra.mrb[0].mxu0 %v1589
  %v3736 = vpop.f32.mrb[0].mxu0
  %v3737 = vadd.f32 0.0, %v3736
  %v3738 = vpop.f32.mrb[0].mxu0
  %3739 = vmatprep.mubr.f32.mxu0 0.0
  %3740 = vmatmul.mubr.f32.gmra.mrb[0].mxu0 %v1592
  %v3741 = vpop.f32.mrb[0].mxu0
  %v3742 = vadd.f32 0.0, %v3741
  %v3743 = vpop.f32.mrb[0].mxu0
  %3744 = vmatprep.mubr.f32.mxu0 0.0
  %3745 = vmatmul.mubr.f32.gmra.mrb[0].mxu0 %v1595
  %v3746 = vpop.f32.mrb[0].mxu0
  %v3747 = vadd.f32 0.0, %v3746
  %v3748 = vpop.f32.mrb[0].mxu0
  %3749 = vmatprep.mubr.f32.mxu0 0.0
  %3750 = vmatmul.mubr.f32.gmra.mrb[0].mxu0 %v1598
  %v3751 = vpop.f32.mrb[0].mxu0
  %v3752 = vadd.f32 0.0, %v3751
  %v3753 = vpop.f32.mrb[0].mxu0
  %3754 = vmatprep.mubr.f32.mxu0 0.0
  %3755 = vmatmul.mubr.f32.gmra.mrb[0].mxu0 %v1601
  %v3756 = vpop.f32.mrb[0].mxu0
  %v3757 = vadd.f32 0.0, %v3756
  %v3758 = vpop.f32.mrb[0].mxu0
  %3759 = vmatprep.mubr.f32.mxu0 0.0
  %3760 = vmatmul.mubr.f32.gmra.mrb[0].mxu0 %v1604
  %v3761 = vpop.f32.mrb[0].mxu0
  %v3762 = vadd.f32 0.0, %v3761
  %v3763 = vpop.f32.mrb[0].mxu0
  %3764 = vmatprep.mubr.f32.mxu0 0.0
  %3765 = vmatmul.mubr.f32.gmra.mrb[0].mxu0 %v1607
  %v3766 = vpop.f32.mrb[0].mxu0
  %v3767 = vadd.f32 0.0, %v3766
  %v3768 = vpop.f32.mrb[0].mxu0
  %3769 = vmatprep.mubr.f32.mxu0 0.0
  %3770 = vmatmul.mubr.f32.gmra.mrb[0].mxu0 %v1610
  %v3771 = vpop.f32.mrb[0].mxu0
  %v3772 = vadd.f32 0.0, %v3771
  %v3773 = vpop.f32.mrb[0].mxu0
  %3774 = vmatprep.mubr.f32.mxu0 0.0
  %3775 = vmatmul.mubr.f32.gmra.mrb[0].mxu0 %v1613
  %v3776 = vpop.f32.mrb[0].mxu0
  %v3777 = vadd.f32 0.0, %v3776
  %v3778 = vpop.f32.mrb[0].mxu0
  %3779 = vmatprep.mubr.f32.mxu0 0.0
  %3780 = vmatmul.mubr.f32.gmra.mrb[0].mxu0 %v1616
  %v3781 = vpop.f32.mrb[0].mxu0
  %v3782 = vadd.f32 0.0, %v3781
  %v3783 = vpop.f32.mrb[0].mxu0
  %3784 = vmatprep.mubr.f32.mxu0 0.0
  %3785 = vmatmul.mubr.f32.gmra.mrb[0].mxu0 %v1619
  %v3786 = vpop.f32.mrb[0].mxu0
  %v3787 = vadd.f32 0.0, %v3786
  %v3788 = vpop.f32.mrb[0].mxu0
  %3789 = vmatprep.mubr.f32.mxu0 0.0
  %3790 = vmatmul.mubr.f32.gmra.mrb[0].mxu0 %v1622
  %v3791 = vpop.f32.mrb[0].mxu0
  %v3792 = vadd.f32 0.0, %v3791
  %v3793 = vpop.f32.mrb[0].mxu0
  %3794 = vmatprep.mubr.f32.mxu0 0.0
  %3795 = vmatmul.mubr.f32.gmra.mrb[0].mxu0 %v1625
  %v3796 = vpop.f32.mrb[0].mxu0
  %v3797 = vadd.f32 0.0, %v3796
  %v3798 = vpop.f32.mrb[0].mxu0
  %3799 = vmatprep.mubr.f32.mxu0 0.0
  %3800 = vmatmul.mubr.f32.gmra.mrb[0].mxu0 %v1628
  %v3801 = vpop.f32.mrb[0].mxu0
  %v3802 = vadd.f32 0.0, %v3801
  %v3803 = vpop.f32.mrb[0].mxu0
  %3804 = vmatprep.mubr.f32.mxu0 0.0
  %3805 = vmatmul.mubr.f32.gmra.mrb[0].mxu0 %v1631
  %v3806 = vpop.f32.mrb[0].mxu0
  %v3807 = vadd.f32 0.0, %v3806
  %v3808 = vpop.f32.mrb[0].mxu0
  %3809 = vmatprep.mubr.f32.mxu0 0.0
  %3810 = vmatmul.mubr.f32.gmra.mrb[0].mxu0 %v1634
  %v3811 = vpop.f32.mrb[0].mxu0
  %v3812 = vadd.f32 0.0, %v3811
  %v3813 = vpop.f32.mrb[0].mxu0
  %3814 = vmatprep.mubr.f32.mxu0 0.0
  %3815 = vmatmul.mubr.f32.gmra.mrb[0].mxu0 %v1637
  %v3816 = vpop.f32.mrb[0].mxu0
  %v3817 = vadd.f32 0.0, %v3816
  %v3818 = vpop.f32.mrb[0].mxu0
  %3819 = vmatprep.mubr.f32.mxu0 0.0
  %3820 = vmatmul.mubr.f32.gmra.mrb[0].mxu0 %v1640
  %v3821 = vpop.f32.mrb[0].mxu0
  %v3822 = vadd.f32 0.0, %v3821
  %v3823 = vpop.f32.mrb[0].mxu0
  %3824 = vmatprep.mubr.f32.mxu0 0.0
  %3825 = vmatmul.mubr.f32.gmra.mrb[0].mxu0 %v1643
  %v3826 = vpop.f32.mrb[0].mxu0
  %v3827 = vadd.f32 0.0, %v3826
  %v3828 = vpop.f32.mrb[0].mxu0
  %3829 = vmatprep.mubr.f32.mxu0 0.0
  %3830 = vmatmul.mubr.f32.gmra.mrb[0].mxu0 %v1646
  %v3831 = vpop.f32.mrb[0].mxu0
  %v3832 = vadd.f32 0.0, %v3831
  %v3833 = vpop.f32.mrb[0].mxu0
  %3834 = vmatprep.mubr.f32.mxu0 0.0
  %3835 = vmatmul.mubr.f32.gmra.mrb[0].mxu0 %v1649
  %v3836 = vpop.f32.mrb[0].mxu0
  %v3837 = vadd.f32 0.0, %v3836
  %v3838 = vpop.f32.mrb[0].mxu0
  %3839 = vmatprep.mubr.f32.mxu0 0.0
  %3840 = vmatmul.mubr.f32.gmra.mrb[0].mxu0 %v1652
  %v3841 = vpop.f32.mrb[0].mxu0
  %v3842 = vadd.f32 0.0, %v3841
  %v3843 = vpop.f32.mrb[0].mxu0
  %3844 = vmatprep.mubr.f32.mxu0 0.0
  %3845 = vmatmul.mubr.f32.gmra.mrb[0].mxu0 %v1655
  %v3846 = vpop.f32.mrb[0].mxu0
  %v3847 = vadd.f32 0.0, %v3846
  %v3848 = vpop.f32.mrb[0].mxu0
  %3849 = vmatprep.mubr.f32.mxu0 0.0
  %3850 = vmatmul.mubr.f32.gmra.mrb[0].mxu0 %v1658
  %v3851 = vpop.f32.mrb[0].mxu0
  %v3852 = vadd.f32 0.0, %v3851
  %v3853 = vpop.f32.mrb[0].mxu0
  %3854 = vmatprep.mubr.f32.mxu0 0.0
  %3855 = vmatmul.mubr.f32.gmra.mrb[0].mxu0 %v1661
  %v3856 = vpop.f32.mrb[0].mxu0
  %v3857 = vadd.f32 0.0, %v3856
  %v3858 = vpop.f32.mrb[0].mxu0
  %3859 = vmatprep.mubr.f32.mxu0 0.0
  %3860 = vmatmul.mubr.f32.gmra.mrb[0].mxu0 %v1664
  %v3861 = vpop.f32.mrb[0].mxu0
  %v3862 = vadd.f32 0.0, %v3861
  %v3863 = vpop.f32.mrb[0].mxu0
  %3864 = vmatprep.mubr.f32.mxu0 0.0
  %3865 = vmatmul.mubr.f32.gmra.mrb[0].mxu0 %v1667
  %v3866 = vpop.f32.mrb[0].mxu0
  %v3867 = vadd.f32 0.0, %v3866
  %v3868 = vpop.f32.mrb[0].mxu0
  %3869 = vmatprep.mubr.f32.mxu0 0.0
  %3870 = vmatmul.mubr.f32.gmra.mrb[0].mxu0 %v1670
  %v3871 = vpop.f32.mrb[0].mxu0
  %v3872 = vadd.f32 0.0, %v3871
  %v3873 = vpop.f32.mrb[0].mxu0
  %3874 = vmatprep.mubr.f32.mxu0 0.0
  %3875 = vmatmul.mubr.f32.gmra.mrb[0].mxu0 %v1673
  %v3876 = vpop.f32.mrb[0].mxu0
  %v3877 = vadd.f32 0.0, %v3876
  %v3878 = vpop.f32.mrb[0].mxu0
  %3879 = vmatprep.mubr.f32.mxu0 0.0
  %3880 = vmatmul.mubr.f32.gmra.mrb[0].mxu0 %v1676
  %v3881 = vpop.f32.mrb[0].mxu0
  %v3882 = vadd.f32 0.0, %v3881
  %v3883 = vpop.f32.mrb[0].mxu0
  %3884 = vmatprep.mubr.f32.mxu0 0.0
  %3885 = vmatmul.mubr.f32.gmra.mrb[0].mxu0 %v1679
  %v3886 = vpop.f32.mrb[0].mxu0
  %v3887 = vadd.f32 0.0, %v3886
  %v3888 = vpop.f32.mrb[0].mxu0
  %3889 = vmatprep.mubr.f32.mxu0 0.0
  %3890 = vmatmul.mubr.f32.gmra.mrb[0].mxu0 %v1682
  %v3891 = vpop.f32.mrb[0].mxu0
  %v3892 = vadd.f32 0.0, %v3891
  %v3893 = vpop.f32.mrb[0].mxu0
  %3894 = vmatprep.mubr.f32.mxu0 0.0
  %3895 = vmatmul.mubr.f32.gmra.mrb[0].mxu0 %v1685
  %v3896 = vpop.f32.mrb[0].mxu0
  %v3897 = vadd.f32 0.0, %v3896
  %v3898 = vpop.f32.mrb[0].mxu0
  %3899 = vmatprep.mubr.f32.mxu0 0.0
  %3900 = vmatmul.mubr.f32.gmra.mrb[0].mxu0 %v1688
  %v3901 = vpop.f32.mrb[0].mxu0
  %v3902 = vadd.f32 0.0, %v3901
  %v3903 = vpop.f32.mrb[0].mxu0
  %3904 = vmatprep.mubr.f32.mxu0 0.0
  %3905 = vmatmul.mubr.f32.gmra.mrb[0].mxu0 %v1691
  %v3906 = vpop.f32.mrb[0].mxu0
  %v3907 = vadd.f32 0.0, %v3906
  %v3908 = vpop.f32.mrb[0].mxu0
  %3909 = vmatprep.mubr.f32.mxu0 0.0
  %3910 = vmatmul.mubr.f32.gmra.mrb[0].mxu0 %v1694
  %v3911 = vpop.f32.mrb[0].mxu0
  %v3912 = vadd.f32 0.0, %v3911
  %v3913 = vpop.f32.mrb[0].mxu0
  %3914 = vmatprep.mubr.f32.mxu0 0.0
  %3915 = vmatmul.mubr.f32.gmra.mrb[0].mxu0 %v1697
  %v3916 = vpop.f32.mrb[0].mxu0
  %v3917 = vadd.f32 0.0, %v3916
  %v3918 = vpop.f32.mrb[0].mxu0
  %3919 = vmatprep.mubr.f32.mxu0 0.0
  %3920 = vmatmul.mubr.f32.gmra.mrb[0].mxu0 %v1700
  %v3921 = vpop.f32.mrb[0].mxu0
  %v3922 = vadd.f32 0.0, %v3921
  %v3923 = vpop.f32.mrb[0].mxu0
  %3924 = vmatprep.mubr.f32.mxu0 0.0
  %3925 = vmatmul.mubr.f32.gmra.mrb[0].mxu0 %v1703
  %v3926 = vpop.f32.mrb[0].mxu0
  %v3927 = vadd.f32 0.0, %v3926
  %v3928 = vpop.f32.mrb[0].mxu0
  %3929 = vmatprep.mubr.f32.mxu0 0.0
  %3930 = vmatmul.mubr.f32.gmra.mrb[0].mxu0 %v1706
  %v3931 = vpop.f32.mrb[0].mxu0
  %v3932 = vadd.f32 0.0, %v3931
  %v3933 = vpop.f32.mrb[0].mxu0
  %3934 = vmatprep.mubr.f32.mxu0 0.0
  %3935 = vmatmul.mubr.f32.gmra.mrb[0].mxu0 %v1709
  %v3936 = vpop.f32.mrb[0].mxu0
  %v3937 = vadd.f32 0.0, %v3936
  %v3938 = vpop.f32.mrb[0].mxu0
  %3939 = vmatprep.mubr.f32.mxu0 0.0
  %3940 = vmatmul.mubr.f32.gmra.mrb[0].mxu0 %v1712
  %v3941 = vpop.f32.mrb[0].mxu0
  %v3942 = vadd.f32 0.0, %v3941
  %v3943 = vpop.f32.mrb[0].mxu0
  %3944 = vmatprep.mubr.f32.mxu0 0.0
  %3945 = vmatmul.mubr.f32.gmra.mrb[0].mxu0 %v1715
  %v3946 = vpop.f32.mrb[0].mxu0
  %v3947 = vadd.f32 0.0, %v3946
  %v3948 = vpop.f32.mrb[0].mxu0
  %3949 = vmatprep.mubr.f32.mxu0 0.0
  %3950 = vmatmul.mubr.f32.gmra.mrb[0].mxu0 %v1718
  %v3951 = vpop.f32.mrb[0].mxu0
  %v3952 = vadd.f32 0.0, %v3951
  %v3953 = vpop.f32.mrb[0].mxu0
  %3954 = vmatprep.mubr.f32.mxu0 0.0
  %3955 = vmatmul.mubr.f32.gmra.mrb[0].mxu0 %v1721
  %v3956 = vpop.f32.mrb[0].mxu0
  %v3957 = vadd.f32 0.0, %v3956
  %v3958 = vpop.f32.mrb[0].mxu0
  %3959 = vmatprep.mubr.f32.mxu0 0.0
  %3960 = vmatmul.mubr.f32.gmra.mrb[0].mxu0 %v1724
  %v3961 = vpop.f32.mrb[0].mxu0
  %v3962 = vadd.f32 0.0, %v3961
  %v3963 = vpop.f32.mrb[0].mxu0
  %3964 = vmatprep.mubr.f32.mxu0 0.0
  %3965 = vmatmul.mubr.f32.gmra.mrb[0].mxu0 %v1727
  %v3966 = vpop.f32.mrb[0].mxu0
  %v3967 = vadd.f32 0.0, %v3966
  %v3968 = vpop.f32.mrb[0].mxu0
  %3969 = vmatprep.mubr.f32.mxu0 0.0
  %3970 = vmatmul.mubr.f32.gmra.mrb[0].mxu0 %v1730
  %v3971 = vpop.f32.mrb[0].mxu0
  %v3972 = vadd.f32 0.0, %v3971
  %v3973 = vpop.f32.mrb[0].mxu0
  %3974 = vmatprep.mubr.f32.mxu0 0.0
  %3975 = vmatmul.mubr.f32.gmra.mrb[0].mxu0 %v1733
  %v3976 = vpop.f32.mrb[0].mxu0
  %v3977 = vadd.f32 0.0, %v3976
  %v3978 = vpop.f32.mrb[0].mxu0
  %3979 = vmatprep.mubr.f32.mxu0 0.0
  %3980 = vmatmul.mubr.f32.gmra.mrb[0].mxu0 %v1736
  %v3981 = vpop.f32.mrb[0].mxu0
  %v3982 = vadd.f32 0.0, %v3981
  %v3983 = vpop.f32.mrb[0].mxu0
  %3984 = vmatprep.mubr.f32.mxu0 0.0
  %3985 = vmatmul.mubr.f32.gmra.mrb[0].mxu0 %v1739
  %v3986 = vpop.f32.mrb[0].mxu0
  %v3987 = vadd.f32 0.0, %v3986
  %v3988 = vpop.f32.mrb[0].mxu0
  %3989 = vmatprep.mubr.f32.mxu0 0.0
  %3990 = vmatmul.mubr.f32.gmra.mrb[0].mxu0 %v1742
  %v3991 = vpop.f32.mrb[0].mxu0
  %v3992 = vadd.f32 0.0, %v3991
  %v3993 = vpop.f32.mrb[0].mxu0
  %3994 = vmatprep.mubr.f32.mxu0 0.0
  %3995 = vmatmul.mubr.f32.gmra.mrb[0].mxu0 %v1745
  %v3996 = vpop.f32.mrb[0].mxu0
  %v3997 = vadd.f32 0.0, %v3996
  %v3998 = vpop.f32.mrb[0].mxu0
  %3999 = vmatprep.mubr.f32.mxu0 0.0
  %4000 = vmatmul.mubr.f32.gmra.mrb[0].mxu0 %v1748
  %v4001 = vpop.f32.mrb[0].mxu0
  %v4002 = vadd.f32 0.0, %v4001
  %v4003 = vpop.f32.mrb[0].mxu0
  %4004 = vmatprep.mubr.f32.mxu0 0.0
  %4005 = vmatmul.mubr.f32.gmra.mrb[0].mxu0 %v1751
  %v4006 = vpop.f32.mrb[0].mxu0
  %v4007 = vadd.f32 0.0, %v4006
  %v4008 = vpop.f32.mrb[0].mxu0
  %4009 = vmatprep.mubr.f32.mxu0 0.0
  %4010 = vmatmul.mubr.f32.gmra.mrb[0].mxu0 %v1754
  %v4011 = vpop.f32.mrb[0].mxu0
  %v4012 = vadd.f32 0.0, %v4011
  %v4013 = vpop.f32.mrb[0].mxu0
  %4014 = vmatprep.mubr.f32.mxu0 0.0
  %4015 = vmatmul.mubr.f32.gmra.mrb[0].mxu0 %v1757
  %v4016 = vpop.f32.mrb[0].mxu0
  %v4017 = vadd.f32 0.0, %v4016
  %v4018 = vpop.f32.mrb[0].mxu0
  %4019 = vmatprep.mubr.f32.mxu0 0.0
  %4020 = vmatmul.mubr.f32.gmra.mrb[0].mxu0 %v1760
  %v4021 = vpop.f32.mrb[0].mxu0
  %v4022 = vadd.f32 0.0, %v4021
  %v4023 = vpop.f32.mrb[0].mxu0
  %4024 = vmatprep.mubr.f32.mxu0 0.0
  %4025 = vmatmul.mubr.f32.gmra.mrb[0].mxu0 %v1763
  %v4026 = vpop.f32.mrb[0].mxu0
  %v4027 = vadd.f32 0.0, %v4026
  %v4028 = vpop.f32.mrb[0].mxu0
  %4029 = vmatprep.mubr.f32.mxu0 0.0
  %4030 = vmatmul.mubr.f32.gmra.mrb[0].mxu0 %v1766
  %v4031 = vpop.f32.mrb[0].mxu0
  %v4032 = vadd.f32 0.0, %v4031
  %v4033 = vpop.f32.mrb[0].mxu0
  %4034 = vmatprep.mubr.f32.mxu0 0.0
  %4035 = vmatmul.mubr.f32.gmra.mrb[0].mxu0 %v1769
  %v4036 = vpop.f32.mrb[0].mxu0
  %v4037 = vadd.f32 0.0, %v4036
  %v4038 = vpop.f32.mrb[0].mxu0
  %4039 = vmatprep.mubr.f32.mxu0 0.0
  %4040 = vmatmul.mubr.f32.gmra.mrb[0].mxu0 %v1772
  %v4041 = vpop.f32.mrb[0].mxu0
  %v4042 = vadd.f32 0.0, %v4041
  %v4043 = vpop.f32.mrb[0].mxu0
  %4044 = vmatprep.mubr.f32.mxu0 0.0
  %4045 = vmatmul.mubr.f32.gmra.mrb[0].mxu0 %v1775
  %v4046 = vpop.f32.mrb[0].mxu0
  %v4047 = vadd.f32 0.0, %v4046
  %v4048 = vpop.f32.mrb[0].mxu0
  %4049 = vmatprep.mubr.f32.mxu0 0.0
  %4050 = vmatmul.mubr.f32.gmra.mrb[0].mxu0 %v1778
  %v4051 = vpop.f32.mrb[0].mxu0
  %v4052 = vadd.f32 0.0, %v4051
  %v4053 = vpop.f32.mrb[0].mxu0
  %4054 = vmatprep.mubr.f32.mxu0 0.0
  %4055 = vmatmul.mubr.f32.gmra.mrb[0].mxu0 %v1781
  %v4056 = vpop.f32.mrb[0].mxu0
  %v4057 = vadd.f32 0.0, %v4056
  %v4058 = vpop.f32.mrb[0].mxu0
  %4059 = vmatprep.mubr.f32.mxu0 0.0
  %4060 = vmatmul.mubr.f32.gmra.mrb[0].mxu0 %v1784
  %v4061 = vpop.f32.mrb[0].mxu0
  %v4062 = vadd.f32 0.0, %v4061
  %v4063 = vpop.f32.mrb[0].mxu0
  %4064 = vmatprep.mubr.f32.mxu0 0.0
  %4065 = vmatmul.mubr.f32.gmra.mrb[0].mxu0 %v1787
  %v4066 = vpop.f32.mrb[0].mxu0
  %v4067 = vadd.f32 0.0, %v4066
  %v4068 = vpop.f32.mrb[0].mxu0
  %4069 = vmatprep.mubr.f32.mxu0 0.0
  %4070 = vmatmul.mubr.f32.gmra.mrb[0].mxu0 %v1790
  %v4071 = vpop.f32.mrb[0].mxu0
  %v4072 = vadd.f32 0.0, %v4071
  %v4073 = vpop.f32.mrb[0].mxu0
  %4074 = vmatprep.mubr.f32.mxu0 0.0
  %4075 = vmatmul.mubr.f32.gmra.mrb[0].mxu0 %v1793
  %v4076 = vpop.f32.mrb[0].mxu0
  %v4077 = vadd.f32 0.0, %v4076
  %v4078 = vpop.f32.mrb[0].mxu0
  %4079 = vdwg.mxu0
  %v4080 = vmax.f32 %v1862, %v2417
  %v4081 = vmax.f32 %v1867, %v2422
  %v4082 = vmax.f32 %v1872, %v2427
  %v4083 = vmax.f32 %v1877, %v2432
  %v4084 = vmax.f32 %v1882, %v2437
  %v4085 = vmax.f32 %v1887, %v2442
  %v4086 = vmax.f32 %v1892, %v2447
  %v4087 = vmax.f32 %v1897, %v2452
  %v4088 = vmax.f32 %v1902, %v2457
  %v4089 = vmax.f32 %v1907, %v2462
  %v4090 = vmax.f32 %v1912, %v2467
  %v4091 = vmax.f32 %v1917, %v2472
  %v4092 = vmax.f32 %v1922, %v2477
  %v4093 = vmax.f32 %v1927, %v2482
  %v4094 = vmax.f32 %v1932, %v2487
  %v4095 = vmax.f32 %v1937, %v2492
  %v4096 = vmax.f32 %v1942, %v2497
  %v4097 = vmax.f32 %v1947, %v2502
  %v4098 = vmax.f32 %v1952, %v2507
  %v4099 = vmax.f32 %v1957, %v2512
  %v4100 = vmax.f32 %v1962, %v2517
  %v4101 = vmax.f32 %v1967, %v2522
  %v4102 = vmax.f32 %v1972, %v2527
  %v4103 = vmax.f32 %v1977, %v2532
  %v4104 = vmax.f32 %v1982, %v2537
  %v4105 = vmax.f32 %v1987, %v2542
  %v4106 = vmax.f32 %v1992, %v2547
  %v4107 = vmax.f32 %v1997, %v2552
  %v4108 = vmax.f32 %v2002, %v2557
  %v4109 = vmax.f32 %v2007, %v2562
  %v4110 = vmax.f32 %v2012, %v2567
  %v4111 = vmax.f32 %v2017, %v2572
  %v4112 = vmax.f32 %v2022, %v2577
  %v4113 = vmax.f32 %v2027, %v2582
  %v4114 = vmax.f32 %v2032, %v2587
  %v4115 = vmax.f32 %v2037, %v2592
  %v4116 = vmax.f32 %v2042, %v2597
  %v4117 = vmax.f32 %v2047, %v2602
  %v4118 = vmax.f32 %v2052, %v2607
  %v4119 = vmax.f32 %v2057, %v2612
  %v4120 = vmax.f32 %v2062, %v2617
  %v4121 = vmax.f32 %v2067, %v2622
  %v4122 = vmax.f32 %v2072, %v2627
  %v4123 = vmax.f32 %v2077, %v2632
  %v4124 = vmax.f32 %v2082, %v2637
  %v4125 = vmax.f32 %v2087, %v2642
  %v4126 = vmax.f32 %v2092, %v2647
  %v4127 = vmax.f32 %v2097, %v2652
  %v4128 = vmax.f32 %v2102, %v2657
  %v4129 = vmax.f32 %v2107, %v2662
  %v4130 = vmax.f32 %v2112, %v2667
  %v4131 = vmax.f32 %v2117, %v2672
  %v4132 = vmax.f32 %v2122, %v2677
  %v4133 = vmax.f32 %v2127, %v2682
  %v4134 = vmax.f32 %v2132, %v2687
  %v4135 = vmax.f32 %v2137, %v2692
  %v4136 = vmax.f32 %v2142, %v2697
  %v4137 = vmax.f32 %v2147, %v2702
  %v4138 = vmax.f32 %v2152, %v2707
  %v4139 = vmax.f32 %v2157, %v2712
  %v4140 = vmax.f32 %v2162, %v2717
  %v4141 = vmax.f32 %v2167, %v2722
  %v4142 = vmax.f32 %v2172, %v2727
  %v4143 = vmax.f32 %v2177, %v2732
  %v4144 = vmax.f32 %v2182, %v2737
  %v4145 = vmax.f32 %v2187, %v2742
  %v4146 = vmax.f32 %v2192, %v2747
  %v4147 = vmax.f32 %v2197, %v2752
  %v4148 = vmax.f32 %v2202, %v2757
  %v4149 = vmax.f32 %v2207, %v2762
  %v4150 = vmax.f32 %v2212, %v2767
  %v4151 = vmax.f32 %v2217, %v2772
  %v4152 = vmax.f32 %v2222, %v2777
  %v4153 = vmax.f32 %v2227, %v2782
  %v4154 = vmax.f32 %v2232, %v2787
  %v4155 = vmax.f32 %v2237, %v2792
  %v4156 = vmax.f32 %v2242, %v2797
  %v4157 = vmax.f32 %v2247, %v2802
  %v4158 = vmax.f32 %v2252, %v2807
  %v4159 = vmax.f32 %v2257, %v2812
  %v4160 = vmax.f32 %v2262, %v2817
  %v4161 = vmax.f32 %v2267, %v2822
  %v4162 = vmax.f32 %v2272, %v2827
  %v4163 = vmax.f32 %v2277, %v2832
  %v4164 = vmax.f32 %v2282, %v2837
  %v4165 = vmax.f32 %v2287, %v2842
  %v4166 = vmax.f32 %v2292, %v2847
  %v4167 = vmax.f32 %v2297, %v2852
  %v4168 = vmax.f32 %v2302, %v2857
  %v4169 = vmax.f32 %v2307, %v2862
  %v4170 = vmax.f32 %v2312, %v2867
  %v4171 = vmax.f32 %v2317, %v2872
  %v4172 = vmax.f32 %v2322, %v2877
  %v4173 = vmax.f32 %v2327, %v2882
  %v4174 = vmax.f32 %v2332, %v2887
  %v4175 = vmax.f32 %v2337, %v2892
  %v4176 = vmax.f32 %v2342, %v2897
  %v4177 = vmax.f32 %v2347, %v2902
  %v4178 = vmax.f32 %v2352, %v2907
  %v4179 = vmax.f32 %v2357, %v2912
  %v4180 = vmax.f32 %v2362, %v2917
  %v4181 = vmax.f32 %v2367, %v2922
  %v4182 = vmax.f32 %v2372, %v2927
  %v4183 = vmax.f32 %v2377, %v2932
  %v4184 = vmax.f32 %v2382, %v2937
  %v4185 = vmax.f32 %v2387, %v2942
  %v4186 = vmax.f32 %v2392, %v2947
  %v4187 = vmax.f32 %v2397, %v2952
  %v4188 = vmax.f32 %v2402, %v2957
  %v4189 = vmax.f32 %v2407, %v2962
  %v4190 = vmax.f32 %v2412, %v2967
  %v4191 = vmax.f32 %v2972, %v3527
  %v4192 = vmax.f32 %v2977, %v3532
  %v4193 = vmax.f32 %v2982, %v3537
  %v4194 = vmax.f32 %v2987, %v3542
  %v4195 = vmax.f32 %v2992, %v3547
  %v4196 = vmax.f32 %v2997, %v3552
  %v4197 = vmax.f32 %v3002, %v3557
  %v4198 = vmax.f32 %v3007, %v3562
  %v4199 = vmax.f32 %v3012, %v3567
  %v4200 = vmax.f32 %v3017, %v3572
  %v4201 = vmax.f32 %v3022, %v3577
  %v4202 = vmax.f32 %v3027, %v3582
  %v4203 = vmax.f32 %v3032, %v3587
  %v4204 = vmax.f32 %v3037, %v3592
  %v4205 = vmax.f32 %v3042, %v3597
  %v4206 = vmax.f32 %v3047, %v3602
  %v4207 = vmax.f32 %v3052, %v3607
  %v4208 = vmax.f32 %v3057, %v3612
  %v4209 = vmax.f32 %v3062, %v3617
  %v4210 = vmax.f32 %v3067, %v3622
  %v4211 = vmax.f32 %v3072, %v3627
  %v4212 = vmax.f32 %v3077, %v3632
  %v4213 = vmax.f32 %v3082, %v3637
  %v4214 = vmax.f32 %v3087, %v3642
  %v4215 = vmax.f32 %v3092, %v3647
  %v4216 = vmax.f32 %v3097, %v3652
  %v4217 = vmax.f32 %v3102, %v3657
  %v4218 = vmax.f32 %v3107, %v3662
  %v4219 = vmax.f32 %v3112, %v3667
  %v4220 = vmax.f32 %v3117, %v3672
  %v4221 = vmax.f32 %v3122, %v3677
  %v4222 = vmax.f32 %v3127, %v3682
  %v4223 = vmax.f32 %v3132, %v3687
  %v4224 = vmax.f32 %v3137, %v3692
  %v4225 = vmax.f32 %v3142, %v3697
  %v4226 = vmax.f32 %v3147, %v3702
  %v4227 = vmax.f32 %v3152, %v3707
  %v4228 = vmax.f32 %v3157, %v3712
  %v4229 = vmax.f32 %v3162, %v3717
  %v4230 = vmax.f32 %v3167, %v3722
  %v4231 = vmax.f32 %v3172, %v3727
  %v4232 = vmax.f32 %v3177, %v3732
  %v4233 = vmax.f32 %v3182, %v3737
  %v4234 = vmax.f32 %v3187, %v3742
  %v4235 = vmax.f32 %v3192, %v3747
  %v4236 = vmax.f32 %v3197, %v3752
  %v4237 = vmax.f32 %v3202, %v3757
  %v4238 = vmax.f32 %v3207, %v3762
  %v4239 = vmax.f32 %v3212, %v3767
  %v4240 = vmax.f32 %v3217, %v3772
  %v4241 = vmax.f32 %v3222, %v3777
  %v4242 = vmax.f32 %v3227, %v3782
  %v4243 = vmax.f32 %v3232, %v3787
  %v4244 = vmax.f32 %v3237, %v3792
  %v4245 = vmax.f32 %v3242, %v3797
  %v4246 = vmax.f32 %v3247, %v3802
  %v4247 = vmax.f32 %v3252, %v3807
  %v4248 = vmax.f32 %v3257, %v3812
  %v4249 = vmax.f32 %v3262, %v3817
  %v4250 = vmax.f32 %v3267, %v3822
  %v4251 = vmax.f32 %v3272, %v3827
  %v4252 = vmax.f32 %v3277, %v3832
  %v4253 = vmax.f32 %v3282, %v3837
  %v4254 = vmax.f32 %v3287, %v3842
  %v4255 = vmax.f32 %v3292, %v3847
  %v4256 = vmax.f32 %v3297, %v3852
  %v4257 = vmax.f32 %v3302, %v3857
  %v4258 = vmax.f32 %v3307, %v3862
  %v4259 = vmax.f32 %v3312, %v3867
  %v4260 = vmax.f32 %v3317, %v3872
  %v4261 = vmax.f32 %v3322, %v3877
  %v4262 = vmax.f32 %v3327, %v3882
  %v4263 = vmax.f32 %v3332, %v3887
  %v4264 = vmax.f32 %v3337, %v3892
  %v4265 = vmax.f32 %v3342, %v3897
  %v4266 = vmax.f32 %v3347, %v3902
  %v4267 = vmax.f32 %v3352, %v3907
  %v4268 = vmax.f32 %v3357, %v3912
  %v4269 = vmax.f32 %v3362, %v3917
  %v4270 = vmax.f32 %v3367, %v3922
  %v4271 = vmax.f32 %v3372, %v3927
  %v4272 = vmax.f32 %v3377, %v3932
  %v4273 = vmax.f32 %v3382, %v3937
  %v4274 = vmax.f32 %v3387, %v3942
  %v4275 = vmax.f32 %v3392, %v3947
  %v4276 = vmax.f32 %v3397, %v3952
  %v4277 = vmax.f32 %v3402, %v3957
  %v4278 = vmax.f32 %v3407, %v3962
  %v4279 = vmax.f32 %v3412, %v3967
  %v4280 = vmax.f32 %v3417, %v3972
  %v4281 = vmax.f32 %v3422, %v3977
  %v4282 = vmax.f32 %v3427, %v3982
  %v4283 = vmax.f32 %v3432, %v3987
  %v4284 = vmax.f32 %v3437, %v3992
  %v4285 = vmax.f32 %v3442, %v3997
  %v4286 = vmax.f32 %v3447, %v4002
  %v4287 = vmax.f32 %v3452, %v4007
  %v4288 = vmax.f32 %v3457, %v4012
  %v4289 = vmax.f32 %v3462, %v4017
  %v4290 = vmax.f32 %v3467, %v4022
  %v4291 = vmax.f32 %v3472, %v4027
  %v4292 = vmax.f32 %v3477, %v4032
  %v4293 = vmax.f32 %v3482, %v4037
  %v4294 = vmax.f32 %v3487, %v4042
  %v4295 = vmax.f32 %v3492, %v4047
  %v4296 = vmax.f32 %v3497, %v4052
  %v4297 = vmax.f32 %v3502, %v4057
  %v4298 = vmax.f32 %v3507, %v4062
  %v4299 = vmax.f32 %v3512, %v4067
  %v4300 = vmax.f32 %v3517, %v4072
  %v4301 = vmax.f32 %v3522, %v4077
  %v4302 = vmax.f32 %v4080, %v4191
  %v4303 = vmax.f32 %v4081, %v4192
  %v4304 = vmax.f32 %v4082, %v4193
  %v4305 = vmax.f32 %v4083, %v4194
  %v4306 = vmax.f32 %v4084, %v4195
  %v4307 = vmax.f32 %v4085, %v4196
  %v4308 = vmax.f32 %v4086, %v4197
  %v4309 = vmax.f32 %v4087, %v4198
  %v4310 = vmax.f32 %v4088, %v4199
  %v4311 = vmax.f32 %v4089, %v4200
  %v4312 = vmax.f32 %v4090, %v4201
  %v4313 = vmax.f32 %v4091, %v4202
  %v4314 = vmax.f32 %v4092, %v4203
  %v4315 = vmax.f32 %v4093, %v4204
  %v4316 = vmax.f32 %v4094, %v4205
  %v4317 = vmax.f32 %v4095, %v4206
  %v4318 = vmax.f32 %v4096, %v4207
  %v4319 = vmax.f32 %v4097, %v4208
  %v4320 = vmax.f32 %v4098, %v4209
  %v4321 = vmax.f32 %v4099, %v4210
  %v4322 = vmax.f32 %v4100, %v4211
  %v4323 = vmax.f32 %v4101, %v4212
  %v4324 = vmax.f32 %v4102, %v4213
  %v4325 = vmax.f32 %v4103, %v4214
  %v4326 = vmax.f32 %v4104, %v4215
  %v4327 = vmax.f32 %v4105, %v4216
  %v4328 = vmax.f32 %v4106, %v4217
  %v4329 = vmax.f32 %v4107, %v4218
  %v4330 = vmax.f32 %v4108, %v4219
  %v4331 = vmax.f32 %v4109, %v4220
  %v4332 = vmax.f32 %v4110, %v4221
  %v4333 = vmax.f32 %v4111, %v4222
  %v4334 = vmax.f32 %v4112, %v4223
  %v4335 = vmax.f32 %v4113, %v4224
  %v4336 = vmax.f32 %v4114, %v4225
  %v4337 = vmax.f32 %v4115, %v4226
  %v4338 = vmax.f32 %v4116, %v4227
  %v4339 = vmax.f32 %v4117, %v4228
  %v4340 = vmax.f32 %v4118, %v4229
  %v4341 = vmax.f32 %v4119, %v4230
  %v4342 = vmax.f32 %v4120, %v4231
  %v4343 = vmax.f32 %v4121, %v4232
  %v4344 = vmax.f32 %v4122, %v4233
  %v4345 = vmax.f32 %v4123, %v4234
  %v4346 = vmax.f32 %v4124, %v4235
  %v4347 = vmax.f32 %v4125, %v4236
  %v4348 = vmax.f32 %v4126, %v4237
  %v4349 = vmax.f32 %v4127, %v4238
  %v4350 = vmax.f32 %v4128, %v4239
  %v4351 = vmax.f32 %v4129, %v4240
  %v4352 = vmax.f32 %v4130, %v4241
  %v4353 = vmax.f32 %v4131, %v4242
  %v4354 = vmax.f32 %v4132, %v4243
  %v4355 = vmax.f32 %v4133, %v4244
  %v4356 = vmax.f32 %v4134, %v4245
  %v4357 = vmax.f32 %v4135, %v4246
  %v4358 = vmax.f32 %v4136, %v4247
  %v4359 = vmax.f32 %v4137, %v4248
  %v4360 = vmax.f32 %v4138, %v4249
  %v4361 = vmax.f32 %v4139, %v4250
  %v4362 = vmax.f32 %v4140, %v4251
  %v4363 = vmax.f32 %v4141, %v4252
  %v4364 = vmax.f32 %v4142, %v4253
  %v4365 = vmax.f32 %v4143, %v4254
  %v4366 = vmax.f32 %v4144, %v4255
  %v4367 = vmax.f32 %v4145, %v4256
  %v4368 = vmax.f32 %v4146, %v4257
  %v4369 = vmax.f32 %v4147, %v4258
  %v4370 = vmax.f32 %v4148, %v4259
  %v4371 = vmax.f32 %v4149, %v4260
  %v4372 = vmax.f32 %v4150, %v4261
  %v4373 = vmax.f32 %v4151, %v4262
  %v4374 = vmax.f32 %v4152, %v4263
  %v4375 = vmax.f32 %v4153, %v4264
  %v4376 = vmax.f32 %v4154, %v4265
  %v4377 = vmax.f32 %v4155, %v4266
  %v4378 = vmax.f32 %v4156, %v4267
  %v4379 = vmax.f32 %v4157, %v4268
  %v4380 = vmax.f32 %v4158, %v4269
  %v4381 = vmax.f32 %v4159, %v4270
  %v4382 = vmax.f32 %v4160, %v4271
  %v4383 = vmax.f32 %v4161, %v4272
  %v4384 = vmax.f32 %v4162, %v4273
  %v4385 = vmax.f32 %v4163, %v4274
  %v4386 = vmax.f32 %v4164, %v4275
  %v4387 = vmax.f32 %v4165, %v4276
  %v4388 = vmax.f32 %v4166, %v4277
  %v4389 = vmax.f32 %v4167, %v4278
  %v4390 = vmax.f32 %v4168, %v4279
  %v4391 = vmax.f32 %v4169, %v4280
  %v4392 = vmax.f32 %v4170, %v4281
  %v4393 = vmax.f32 %v4171, %v4282
  %v4394 = vmax.f32 %v4172, %v4283
  %v4395 = vmax.f32 %v4173, %v4284
  %v4396 = vmax.f32 %v4174, %v4285
  %v4397 = vmax.f32 %v4175, %v4286
  %v4398 = vmax.f32 %v4176, %v4287
  %v4399 = vmax.f32 %v4177, %v4288
  %v4400 = vmax.f32 %v4178, %v4289
  %v4401 = vmax.f32 %v4179, %v4290
  %v4402 = vmax.f32 %v4180, %v4291
  %v4403 = vmax.f32 %v4181, %v4292
  %v4404 = vmax.f32 %v4182, %v4293
  %v4405 = vmax.f32 %v4183, %v4294
  %v4406 = vmax.f32 %v4184, %v4295
  %v4407 = vmax.f32 %v4185, %v4296
  %v4408 = vmax.f32 %v4186, %v4297
  %v4409 = vmax.f32 %v4187, %v4298
  %v4410 = vmax.f32 %v4188, %v4299
  %v4411 = vmax.f32 %v4189, %v4300
  %v4412 = vmax.f32 %v4190, %v4301
  %v4413 = vld [vmem:[%s2] sm:$0x1]
  %v4415 = vlaneseq
  %v4416 = vshrl.u32 %v4415, 7
  %v4417 = vsub.s32 0, %v4416
  %v4418 = vrot.slane %v4413, %v4417
  %v4420 = vadd.f32 %v4302, %v4418
  %v4421 = vadd.f32 %v4303, %v4418
  %v4422 = vadd.f32 %v4304, %v4418
  %v4423 = vadd.f32 %v4305, %v4418
  %v4424 = vadd.f32 %v4306, %v4418
  %v4425 = vadd.f32 %v4307, %v4418
  %v4426 = vadd.f32 %v4308, %v4418
  %v4427 = vadd.f32 %v4309, %v4418
  %v4428 = vadd.f32 %v4310, %v4418
  %v4429 = vadd.f32 %v4311, %v4418
  %v4430 = vadd.f32 %v4312, %v4418
  %v4431 = vadd.f32 %v4313, %v4418
  %v4432 = vadd.f32 %v4314, %v4418
  %v4433 = vadd.f32 %v4315, %v4418
  %v4434 = vadd.f32 %v4316, %v4418
  %v4435 = vadd.f32 %v4317, %v4418
  %v4436 = vadd.f32 %v4318, %v4418
  %v4437 = vadd.f32 %v4319, %v4418
  %v4438 = vadd.f32 %v4320, %v4418
  %v4439 = vadd.f32 %v4321, %v4418
  %v4440 = vadd.f32 %v4322, %v4418
  %v4441 = vadd.f32 %v4323, %v4418
  %v4442 = vadd.f32 %v4324, %v4418
  %v4443 = vadd.f32 %v4325, %v4418
  %v4444 = vadd.f32 %v4326, %v4418
  %v4445 = vadd.f32 %v4327, %v4418
  %v4446 = vadd.f32 %v4328, %v4418
  %v4447 = vadd.f32 %v4329, %v4418
  %v4448 = vadd.f32 %v4330, %v4418
  %v4449 = vadd.f32 %v4331, %v4418
  %v4450 = vadd.f32 %v4332, %v4418
  %v4451 = vadd.f32 %v4333, %v4418
  %v4452 = vadd.f32 %v4334, %v4418
  %v4453 = vadd.f32 %v4335, %v4418
  %v4454 = vadd.f32 %v4336, %v4418
  %v4455 = vadd.f32 %v4337, %v4418
  %v4456 = vadd.f32 %v4338, %v4418
  %v4457 = vadd.f32 %v4339, %v4418
  %v4458 = vadd.f32 %v4340, %v4418
  %v4459 = vadd.f32 %v4341, %v4418
  %v4460 = vadd.f32 %v4342, %v4418
  %v4461 = vadd.f32 %v4343, %v4418
  %v4462 = vadd.f32 %v4344, %v4418
  %v4463 = vadd.f32 %v4345, %v4418
  %v4464 = vadd.f32 %v4346, %v4418
  %v4465 = vadd.f32 %v4347, %v4418
  %v4466 = vadd.f32 %v4348, %v4418
  %v4467 = vadd.f32 %v4349, %v4418
  %v4468 = vadd.f32 %v4350, %v4418
  %v4469 = vadd.f32 %v4351, %v4418
  %v4470 = vadd.f32 %v4352, %v4418
  %v4471 = vadd.f32 %v4353, %v4418
  %v4472 = vadd.f32 %v4354, %v4418
  %v4473 = vadd.f32 %v4355, %v4418
  %v4474 = vadd.f32 %v4356, %v4418
  %v4475 = vadd.f32 %v4357, %v4418
  %v4476 = vadd.f32 %v4358, %v4418
  %v4477 = vadd.f32 %v4359, %v4418
  %v4478 = vadd.f32 %v4360, %v4418
  %v4479 = vadd.f32 %v4361, %v4418
  %v4480 = vadd.f32 %v4362, %v4418
  %v4481 = vadd.f32 %v4363, %v4418
  %v4482 = vadd.f32 %v4364, %v4418
  %v4483 = vadd.f32 %v4365, %v4418
  %v4484 = vadd.f32 %v4366, %v4418
  %v4485 = vadd.f32 %v4367, %v4418
  %v4486 = vadd.f32 %v4368, %v4418
  %v4487 = vadd.f32 %v4369, %v4418
  %v4488 = vadd.f32 %v4370, %v4418
  %v4489 = vadd.f32 %v4371, %v4418
  %v4490 = vadd.f32 %v4372, %v4418
  %v4491 = vadd.f32 %v4373, %v4418
  %v4492 = vadd.f32 %v4374, %v4418
  %v4493 = vadd.f32 %v4375, %v4418
  %v4494 = vadd.f32 %v4376, %v4418
  %v4495 = vadd.f32 %v4377, %v4418
  %v4496 = vadd.f32 %v4378, %v4418
  %v4497 = vadd.f32 %v4379, %v4418
  %v4498 = vadd.f32 %v4380, %v4418
  %v4499 = vadd.f32 %v4381, %v4418
  %v4500 = vadd.f32 %v4382, %v4418
  %v4501 = vadd.f32 %v4383, %v4418
  %v4502 = vadd.f32 %v4384, %v4418
  %v4503 = vadd.f32 %v4385, %v4418
  %v4504 = vadd.f32 %v4386, %v4418
  %v4505 = vadd.f32 %v4387, %v4418
  %v4506 = vadd.f32 %v4388, %v4418
  %v4507 = vadd.f32 %v4389, %v4418
  %v4508 = vadd.f32 %v4390, %v4418
  %v4509 = vadd.f32 %v4391, %v4418
  %v4510 = vadd.f32 %v4392, %v4418
  %v4511 = vadd.f32 %v4393, %v4418
  %v4512 = vadd.f32 %v4394, %v4418
  %v4513 = vadd.f32 %v4395, %v4418
  %v4514 = vadd.f32 %v4396, %v4418
  %v4515 = vadd.f32 %v4397, %v4418
  %v4516 = vadd.f32 %v4398, %v4418
  %v4517 = vadd.f32 %v4399, %v4418
  %v4518 = vadd.f32 %v4400, %v4418
  %v4519 = vadd.f32 %v4401, %v4418
  %v4520 = vadd.f32 %v4402, %v4418
  %v4521 = vadd.f32 %v4403, %v4418
  %v4522 = vadd.f32 %v4404, %v4418
  %v4523 = vadd.f32 %v4405, %v4418
  %v4524 = vadd.f32 %v4406, %v4418
  %v4525 = vadd.f32 %v4407, %v4418
  %v4526 = vadd.f32 %v4408, %v4418
  %v4527 = vadd.f32 %v4409, %v4418
  %v4528 = vadd.f32 %v4410, %v4418
  %v4529 = vadd.f32 %v4411, %v4418
  %v4530 = vadd.f32 %v4412, %v4418
  %vm4531 = vcmp.gt.f32.partialorder %v4420, 0.0
  %vm4532 = vcmp.gt.f32.partialorder %v4421, 0.0
  %vm4533 = vcmp.gt.f32.partialorder %v4422, 0.0
  %vm4534 = vcmp.gt.f32.partialorder %v4423, 0.0
  %vm4535 = vcmp.gt.f32.partialorder %v4424, 0.0
  %vm4536 = vcmp.gt.f32.partialorder %v4425, 0.0
  %vm4537 = vcmp.gt.f32.partialorder %v4426, 0.0
  %vm4538 = vcmp.gt.f32.partialorder %v4427, 0.0
  %vm4539 = vcmp.gt.f32.partialorder %v4428, 0.0
  %vm4540 = vcmp.gt.f32.partialorder %v4429, 0.0
  %vm4541 = vcmp.gt.f32.partialorder %v4430, 0.0
  %vm4542 = vcmp.gt.f32.partialorder %v4431, 0.0
  %vm4543 = vcmp.gt.f32.partialorder %v4432, 0.0
  %vm4544 = vcmp.gt.f32.partialorder %v4433, 0.0
  %vm4545 = vcmp.gt.f32.partialorder %v4434, 0.0
  %vm4546 = vcmp.gt.f32.partialorder %v4435, 0.0
  %vm4547 = vcmp.gt.f32.partialorder %v4436, 0.0
  %vm4548 = vcmp.gt.f32.partialorder %v4437, 0.0
  %vm4549 = vcmp.gt.f32.partialorder %v4438, 0.0
  %vm4550 = vcmp.gt.f32.partialorder %v4439, 0.0
  %vm4551 = vcmp.gt.f32.partialorder %v4440, 0.0
  %vm4552 = vcmp.gt.f32.partialorder %v4441, 0.0
  %vm4553 = vcmp.gt.f32.partialorder %v4442, 0.0
  %vm4554 = vcmp.gt.f32.partialorder %v4443, 0.0
  %vm4555 = vcmp.gt.f32.partialorder %v4444, 0.0
  %vm4556 = vcmp.gt.f32.partialorder %v4445, 0.0
  %vm4557 = vcmp.gt.f32.partialorder %v4446, 0.0
  %vm4558 = vcmp.gt.f32.partialorder %v4447, 0.0
  %vm4559 = vcmp.gt.f32.partialorder %v4448, 0.0
  %vm4560 = vcmp.gt.f32.partialorder %v4449, 0.0
  %vm4561 = vcmp.gt.f32.partialorder %v4450, 0.0
  %vm4562 = vcmp.gt.f32.partialorder %v4451, 0.0
  %vm4563 = vcmp.gt.f32.partialorder %v4452, 0.0
  %vm4564 = vcmp.gt.f32.partialorder %v4453, 0.0
  %vm4565 = vcmp.gt.f32.partialorder %v4454, 0.0
  %vm4566 = vcmp.gt.f32.partialorder %v4455, 0.0
  %vm4567 = vcmp.gt.f32.partialorder %v4456, 0.0
  %vm4568 = vcmp.gt.f32.partialorder %v4457, 0.0
  %vm4569 = vcmp.gt.f32.partialorder %v4458, 0.0
  %vm4570 = vcmp.gt.f32.partialorder %v4459, 0.0
  %vm4571 = vcmp.gt.f32.partialorder %v4460, 0.0
  %vm4572 = vcmp.gt.f32.partialorder %v4461, 0.0
  %vm4573 = vcmp.gt.f32.partialorder %v4462, 0.0
  %vm4574 = vcmp.gt.f32.partialorder %v4463, 0.0
  %vm4575 = vcmp.gt.f32.partialorder %v4464, 0.0
  %vm4576 = vcmp.gt.f32.partialorder %v4465, 0.0
  %vm4577 = vcmp.gt.f32.partialorder %v4466, 0.0
  %vm4578 = vcmp.gt.f32.partialorder %v4467, 0.0
  %vm4579 = vcmp.gt.f32.partialorder %v4468, 0.0
  %vm4580 = vcmp.gt.f32.partialorder %v4469, 0.0
  %vm4581 = vcmp.gt.f32.partialorder %v4470, 0.0
  %vm4582 = vcmp.gt.f32.partialorder %v4471, 0.0
  %vm4583 = vcmp.gt.f32.partialorder %v4472, 0.0
  %vm4584 = vcmp.gt.f32.partialorder %v4473, 0.0
  %vm4585 = vcmp.gt.f32.partialorder %v4474, 0.0
  %vm4586 = vcmp.gt.f32.partialorder %v4475, 0.0
  %vm4587 = vcmp.gt.f32.partialorder %v4476, 0.0
  %vm4588 = vcmp.gt.f32.partialorder %v4477, 0.0
  %vm4589 = vcmp.gt.f32.partialorder %v4478, 0.0
  %vm4590 = vcmp.gt.f32.partialorder %v4479, 0.0
  %vm4591 = vcmp.gt.f32.partialorder %v4480, 0.0
  %vm4592 = vcmp.gt.f32.partialorder %v4481, 0.0
  %vm4593 = vcmp.gt.f32.partialorder %v4482, 0.0
  %vm4594 = vcmp.gt.f32.partialorder %v4483, 0.0
  %vm4595 = vcmp.gt.f32.partialorder %v4484, 0.0
  %vm4596 = vcmp.gt.f32.partialorder %v4485, 0.0
  %vm4597 = vcmp.gt.f32.partialorder %v4486, 0.0
  %vm4598 = vcmp.gt.f32.partialorder %v4487, 0.0
  %vm4599 = vcmp.gt.f32.partialorder %v4488, 0.0
  %vm4600 = vcmp.gt.f32.partialorder %v4489, 0.0
  %vm4601 = vcmp.gt.f32.partialorder %v4490, 0.0
  %vm4602 = vcmp.gt.f32.partialorder %v4491, 0.0
  %vm4603 = vcmp.gt.f32.partialorder %v4492, 0.0
  %vm4604 = vcmp.gt.f32.partialorder %v4493, 0.0
  %vm4605 = vcmp.gt.f32.partialorder %v4494, 0.0
  %vm4606 = vcmp.gt.f32.partialorder %v4495, 0.0
  %vm4607 = vcmp.gt.f32.partialorder %v4496, 0.0
  %vm4608 = vcmp.gt.f32.partialorder %v4497, 0.0
  %vm4609 = vcmp.gt.f32.partialorder %v4498, 0.0
  %vm4610 = vcmp.gt.f32.partialorder %v4499, 0.0
  %vm4611 = vcmp.gt.f32.partialorder %v4500, 0.0
  %vm4612 = vcmp.gt.f32.partialorder %v4501, 0.0
  %vm4613 = vcmp.gt.f32.partialorder %v4502, 0.0
  %vm4614 = vcmp.gt.f32.partialorder %v4503, 0.0
  %vm4615 = vcmp.gt.f32.partialorder %v4504, 0.0
  %vm4616 = vcmp.gt.f32.partialorder %v4505, 0.0
  %vm4617 = vcmp.gt.f32.partialorder %v4506, 0.0
  %vm4618 = vcmp.gt.f32.partialorder %v4507, 0.0
  %vm4619 = vcmp.gt.f32.partialorder %v4508, 0.0
  %vm4620 = vcmp.gt.f32.partialorder %v4509, 0.0
  %vm4621 = vcmp.gt.f32.partialorder %v4510, 0.0
  %vm4622 = vcmp.gt.f32.partialorder %v4511, 0.0
  %vm4623 = vcmp.gt.f32.partialorder %v4512, 0.0
  %vm4624 = vcmp.gt.f32.partialorder %v4513, 0.0
  %vm4625 = vcmp.gt.f32.partialorder %v4514, 0.0
  %vm4626 = vcmp.gt.f32.partialorder %v4515, 0.0
  %vm4627 = vcmp.gt.f32.partialorder %v4516, 0.0
  %vm4628 = vcmp.gt.f32.partialorder %v4517, 0.0
  %vm4629 = vcmp.gt.f32.partialorder %v4518, 0.0
  %vm4630 = vcmp.gt.f32.partialorder %v4519, 0.0
  %vm4631 = vcmp.gt.f32.partialorder %v4520, 0.0
  %vm4632 = vcmp.gt.f32.partialorder %v4521, 0.0
  %vm4633 = vcmp.gt.f32.partialorder %v4522, 0.0
  %vm4634 = vcmp.gt.f32.partialorder %v4523, 0.0
  %vm4635 = vcmp.gt.f32.partialorder %v4524, 0.0
  %vm4636 = vcmp.gt.f32.partialorder %v4525, 0.0
  %vm4637 = vcmp.gt.f32.partialorder %v4526, 0.0
  %vm4638 = vcmp.gt.f32.partialorder %v4527, 0.0
  %vm4639 = vcmp.gt.f32.partialorder %v4528, 0.0
  %vm4640 = vcmp.gt.f32.partialorder %v4529, 0.0
  %vm4641 = vcmp.gt.f32.partialorder %v4530, 0.0
  %v4642 = vmul.f32 %v4420, 0.01
  %v4643 = vmul.f32 %v4421, 0.01
  %v4644 = vmul.f32 %v4422, 0.01
  %v4645 = vmul.f32 %v4423, 0.01
  %v4646 = vmul.f32 %v4424, 0.01
  %v4647 = vmul.f32 %v4425, 0.01
  %v4648 = vmul.f32 %v4426, 0.01
  %v4649 = vmul.f32 %v4427, 0.01
  %v4650 = vmul.f32 %v4428, 0.01
  %v4651 = vmul.f32 %v4429, 0.01
  %v4652 = vmul.f32 %v4430, 0.01
  %v4653 = vmul.f32 %v4431, 0.01
  %v4654 = vmul.f32 %v4432, 0.01
  %v4655 = vmul.f32 %v4433, 0.01
  %v4656 = vmul.f32 %v4434, 0.01
  %v4657 = vmul.f32 %v4435, 0.01
  %v4658 = vmul.f32 %v4436, 0.01
  %v4659 = vmul.f32 %v4437, 0.01
  %v4660 = vmul.f32 %v4438, 0.01
  %v4661 = vmul.f32 %v4439, 0.01
  %v4662 = vmul.f32 %v4440, 0.01
  %v4663 = vmul.f32 %v4441, 0.01
  %v4664 = vmul.f32 %v4442, 0.01
  %v4665 = vmul.f32 %v4443, 0.01
  %v4666 = vmul.f32 %v4444, 0.01
  %v4667 = vmul.f32 %v4445, 0.01
  %v4668 = vmul.f32 %v4446, 0.01
  %v4669 = vmul.f32 %v4447, 0.01
  %v4670 = vmul.f32 %v4448, 0.01
  %v4671 = vmul.f32 %v4449, 0.01
  %v4672 = vmul.f32 %v4450, 0.01
  %v4673 = vmul.f32 %v4451, 0.01
  %v4674 = vmul.f32 %v4452, 0.01
  %v4675 = vmul.f32 %v4453, 0.01
  %v4676 = vmul.f32 %v4454, 0.01
  %v4677 = vmul.f32 %v4455, 0.01
  %v4678 = vmul.f32 %v4456, 0.01
  %v4679 = vmul.f32 %v4457, 0.01
  %v4680 = vmul.f32 %v4458, 0.01
  %v4681 = vmul.f32 %v4459, 0.01
  %v4682 = vmul.f32 %v4460, 0.01
  %v4683 = vmul.f32 %v4461, 0.01
  %v4684 = vmul.f32 %v4462, 0.01
  %v4685 = vmul.f32 %v4463, 0.01
  %v4686 = vmul.f32 %v4464, 0.01
  %v4687 = vmul.f32 %v4465, 0.01
  %v4688 = vmul.f32 %v4466, 0.01
  %v4689 = vmul.f32 %v4467, 0.01
  %v4690 = vmul.f32 %v4468, 0.01
  %v4691 = vmul.f32 %v4469, 0.01
  %v4692 = vmul.f32 %v4470, 0.01
  %v4693 = vmul.f32 %v4471, 0.01
  %v4694 = vmul.f32 %v4472, 0.01
  %v4695 = vmul.f32 %v4473, 0.01
  %v4696 = vmul.f32 %v4474, 0.01
  %v4697 = vmul.f32 %v4475, 0.01
  %v4698 = vmul.f32 %v4476, 0.01
  %v4699 = vmul.f32 %v4477, 0.01
  %v4700 = vmul.f32 %v4478, 0.01
  %v4701 = vmul.f32 %v4479, 0.01
  %v4702 = vmul.f32 %v4480, 0.01
  %v4703 = vmul.f32 %v4481, 0.01
  %v4704 = vmul.f32 %v4482, 0.01
  %v4705 = vmul.f32 %v4483, 0.01
  %v4706 = vmul.f32 %v4484, 0.01
  %v4707 = vmul.f32 %v4485, 0.01
  %v4708 = vmul.f32 %v4486, 0.01
  %v4709 = vmul.f32 %v4487, 0.01
  %v4710 = vmul.f32 %v4488, 0.01
  %v4711 = vmul.f32 %v4489, 0.01
  %v4712 = vmul.f32 %v4490, 0.01
  %v4713 = vmul.f32 %v4491, 0.01
  %v4714 = vmul.f32 %v4492, 0.01
  %v4715 = vmul.f32 %v4493, 0.01
  %v4716 = vmul.f32 %v4494, 0.01
  %v4717 = vmul.f32 %v4495, 0.01
  %v4718 = vmul.f32 %v4496, 0.01
  %v4719 = vmul.f32 %v4497, 0.01
  %v4720 = vmul.f32 %v4498, 0.01
  %v4721 = vmul.f32 %v4499, 0.01
  %v4722 = vmul.f32 %v4500, 0.01
  %v4723 = vmul.f32 %v4501, 0.01
  %v4724 = vmul.f32 %v4502, 0.01
  %v4725 = vmul.f32 %v4503, 0.01
  %v4726 = vmul.f32 %v4504, 0.01
  %v4727 = vmul.f32 %v4505, 0.01
  %v4728 = vmul.f32 %v4506, 0.01
  %v4729 = vmul.f32 %v4507, 0.01
  %v4730 = vmul.f32 %v4508, 0.01
  %v4731 = vmul.f32 %v4509, 0.01
  %v4732 = vmul.f32 %v4510, 0.01
  %v4733 = vmul.f32 %v4511, 0.01
  %v4734 = vmul.f32 %v4512, 0.01
  %v4735 = vmul.f32 %v4513, 0.01
  %v4736 = vmul.f32 %v4514, 0.01
  %v4737 = vmul.f32 %v4515, 0.01
  %v4738 = vmul.f32 %v4516, 0.01
  %v4739 = vmul.f32 %v4517, 0.01
  %v4740 = vmul.f32 %v4518, 0.01
  %v4741 = vmul.f32 %v4519, 0.01
  %v4742 = vmul.f32 %v4520, 0.01
  %v4743 = vmul.f32 %v4521, 0.01
  %v4744 = vmul.f32 %v4522, 0.01
  %v4745 = vmul.f32 %v4523, 0.01
  %v4746 = vmul.f32 %v4524, 0.01
  %v4747 = vmul.f32 %v4525, 0.01
  %v4748 = vmul.f32 %v4526, 0.01
  %v4749 = vmul.f32 %v4527, 0.01
  %v4750 = vmul.f32 %v4528, 0.01
  %v4751 = vmul.f32 %v4529, 0.01
  %v4752 = vmul.f32 %v4530, 0.01
  %v4753 = vsel %vm4531, %v4420, %v4642
  %v4754 = vsel %vm4532, %v4421, %v4643
  %v4755 = vsel %vm4533, %v4422, %v4644
  %v4756 = vsel %vm4534, %v4423, %v4645
  %v4757 = vsel %vm4535, %v4424, %v4646
  %v4758 = vsel %vm4536, %v4425, %v4647
  %v4759 = vsel %vm4537, %v4426, %v4648
  %v4760 = vsel %vm4538, %v4427, %v4649
  %v4761 = vsel %vm4539, %v4428, %v4650
  %v4762 = vsel %vm4540, %v4429, %v4651
  %v4763 = vsel %vm4541, %v4430, %v4652
  %v4764 = vsel %vm4542, %v4431, %v4653
  %v4765 = vsel %vm4543, %v4432, %v4654
  %v4766 = vsel %vm4544, %v4433, %v4655
  %v4767 = vsel %vm4545, %v4434, %v4656
  %v4768 = vsel %vm4546, %v4435, %v4657
  %v4769 = vsel %vm4547, %v4436, %v4658
  %v4770 = vsel %vm4548, %v4437, %v4659
  %v4771 = vsel %vm4549, %v4438, %v4660
  %v4772 = vsel %vm4550, %v4439, %v4661
  %v4773 = vsel %vm4551, %v4440, %v4662
  %v4774 = vsel %vm4552, %v4441, %v4663
  %v4775 = vsel %vm4553, %v4442, %v4664
  %v4776 = vsel %vm4554, %v4443, %v4665
  %v4777 = vsel %vm4555, %v4444, %v4666
  %v4778 = vsel %vm4556, %v4445, %v4667
  %v4779 = vsel %vm4557, %v4446, %v4668
  %v4780 = vsel %vm4558, %v4447, %v4669
  %v4781 = vsel %vm4559, %v4448, %v4670
  %v4782 = vsel %vm4560, %v4449, %v4671
  %v4783 = vsel %vm4561, %v4450, %v4672
  %v4784 = vsel %vm4562, %v4451, %v4673
  %v4785 = vsel %vm4563, %v4452, %v4674
  %v4786 = vsel %vm4564, %v4453, %v4675
  %v4787 = vsel %vm4565, %v4454, %v4676
  %v4788 = vsel %vm4566, %v4455, %v4677
  %v4789 = vsel %vm4567, %v4456, %v4678
  %v4790 = vsel %vm4568, %v4457, %v4679
  %v4791 = vsel %vm4569, %v4458, %v4680
  %v4792 = vsel %vm4570, %v4459, %v4681
  %v4793 = vsel %vm4571, %v4460, %v4682
  %v4794 = vsel %vm4572, %v4461, %v4683
  %v4795 = vsel %vm4573, %v4462, %v4684
  %v4796 = vsel %vm4574, %v4463, %v4685
  %v4797 = vsel %vm4575, %v4464, %v4686
  %v4798 = vsel %vm4576, %v4465, %v4687
  %v4799 = vsel %vm4577, %v4466, %v4688
  %v4800 = vsel %vm4578, %v4467, %v4689
  %v4801 = vsel %vm4579, %v4468, %v4690
  %v4802 = vsel %vm4580, %v4469, %v4691
  %v4803 = vsel %vm4581, %v4470, %v4692
  %v4804 = vsel %vm4582, %v4471, %v4693
  %v4805 = vsel %vm4583, %v4472, %v4694
  %v4806 = vsel %vm4584, %v4473, %v4695
  %v4807 = vsel %vm4585, %v4474, %v4696
  %v4808 = vsel %vm4586, %v4475, %v4697
  %v4809 = vsel %vm4587, %v4476, %v4698
  %v4810 = vsel %vm4588, %v4477, %v4699
  %v4811 = vsel %vm4589, %v4478, %v4700
  %v4812 = vsel %vm4590, %v4479, %v4701
  %v4813 = vsel %vm4591, %v4480, %v4702
  %v4814 = vsel %vm4592, %v4481, %v4703
  %v4815 = vsel %vm4593, %v4482, %v4704
  %v4816 = vsel %vm4594, %v4483, %v4705
  %v4817 = vsel %vm4595, %v4484, %v4706
  %v4818 = vsel %vm4596, %v4485, %v4707
  %v4819 = vsel %vm4597, %v4486, %v4708
  %v4820 = vsel %vm4598, %v4487, %v4709
  %v4821 = vsel %vm4599, %v4488, %v4710
  %v4822 = vsel %vm4600, %v4489, %v4711
  %v4823 = vsel %vm4601, %v4490, %v4712
  %v4824 = vsel %vm4602, %v4491, %v4713
  %v4825 = vsel %vm4603, %v4492, %v4714
  %v4826 = vsel %vm4604, %v4493, %v4715
  %v4827 = vsel %vm4605, %v4494, %v4716
  %v4828 = vsel %vm4606, %v4495, %v4717
  %v4829 = vsel %vm4607, %v4496, %v4718
  %v4830 = vsel %vm4608, %v4497, %v4719
  %v4831 = vsel %vm4609, %v4498, %v4720
  %v4832 = vsel %vm4610, %v4499, %v4721
  %v4833 = vsel %vm4611, %v4500, %v4722
  %v4834 = vsel %vm4612, %v4501, %v4723
  %v4835 = vsel %vm4613, %v4502, %v4724
  %v4836 = vsel %vm4614, %v4503, %v4725
  %v4837 = vsel %vm4615, %v4504, %v4726
  %v4838 = vsel %vm4616, %v4505, %v4727
  %v4839 = vsel %vm4617, %v4506, %v4728
  %v4840 = vsel %vm4618, %v4507, %v4729
  %v4841 = vsel %vm4619, %v4508, %v4730
  %v4842 = vsel %vm4620, %v4509, %v4731
  %v4843 = vsel %vm4621, %v4510, %v4732
  %v4844 = vsel %vm4622, %v4511, %v4733
  %v4845 = vsel %vm4623, %v4512, %v4734
  %v4846 = vsel %vm4624, %v4513, %v4735
  %v4847 = vsel %vm4625, %v4514, %v4736
  %v4848 = vsel %vm4626, %v4515, %v4737
  %v4849 = vsel %vm4627, %v4516, %v4738
  %v4850 = vsel %vm4628, %v4517, %v4739
  %v4851 = vsel %vm4629, %v4518, %v4740
  %v4852 = vsel %vm4630, %v4519, %v4741
  %v4853 = vsel %vm4631, %v4520, %v4742
  %v4854 = vsel %vm4632, %v4521, %v4743
  %v4855 = vsel %vm4633, %v4522, %v4744
  %v4856 = vsel %vm4634, %v4523, %v4745
  %v4857 = vsel %vm4635, %v4524, %v4746
  %v4858 = vsel %vm4636, %v4525, %v4747
  %v4859 = vsel %vm4637, %v4526, %v4748
  %v4860 = vsel %vm4638, %v4527, %v4749
  %v4861 = vsel %vm4639, %v4528, %v4750
  %v4862 = vsel %vm4640, %v4529, %v4751
  %v4863 = vsel %vm4641, %v4530, %v4752
  %vm4864 = vcmask 523264
  %4865 = vst.msk [vmem:[%s3] sm:$0xff] %vm4864, %v4753
  %4866 = vst.msk [vmem:[%s3 + $0x8] sm:$0xff] %vm4864, %v4754
  %4867 = vst.msk [vmem:[%s3 + $0x10] sm:$0xff] %vm4864, %v4755
  %4868 = vst.msk [vmem:[%s3 + $0x18] sm:$0xff] %vm4864, %v4756
  %4869 = vst.msk [vmem:[%s3 + $0x20] sm:$0xff] %vm4864, %v4757
  %4870 = vst.msk [vmem:[%s3 + $0x28] sm:$0xff] %vm4864, %v4758
  %4871 = vst.msk [vmem:[%s3 + $0x30] sm:$0xff] %vm4864, %v4759
  %4872 = vst.msk [vmem:[%s3 + $0x38] sm:$0xff] %vm4864, %v4760
  %4873 = vst.msk [vmem:[%s3 + $0x40] sm:$0xff] %vm4864, %v4761
  %4874 = vst.msk [vmem:[%s3 + $0x48] sm:$0xff] %vm4864, %v4762
  %4875 = vst.msk [vmem:[%s3 + $0x50] sm:$0xff] %vm4864, %v4763
  %4876 = vst.msk [vmem:[%s3 + $0x58] sm:$0xff] %vm4864, %v4764
  %4877 = vst.msk [vmem:[%s3 + $0x60] sm:$0xff] %vm4864, %v4765
  %4878 = vst.msk [vmem:[%s3 + $0x68] sm:$0xff] %vm4864, %v4766
  %4879 = vst.msk [vmem:[%s3 + $0x70] sm:$0xff] %vm4864, %v4767
  %4880 = vst.msk [vmem:[%s3 + $0x78] sm:$0xff] %vm4864, %v4768
  %4881 = vst.msk [vmem:[%s3 + $0x80] sm:$0xff] %vm4864, %v4769
  %4882 = vst.msk [vmem:[%s3 + $0x88] sm:$0xff] %vm4864, %v4770
  %4883 = vst.msk [vmem:[%s3 + $0x90] sm:$0xff] %vm4864, %v4771
  %4884 = vst.msk [vmem:[%s3 + $0x98] sm:$0xff] %vm4864, %v4772
  %4885 = vst.msk [vmem:[%s3 + $0xa0] sm:$0xff] %vm4864, %v4773
  %4886 = vst.msk [vmem:[%s3 + $0xa8] sm:$0xff] %vm4864, %v4774
  %4887 = vst.msk [vmem:[%s3 + $0xb0] sm:$0xff] %vm4864, %v4775
  %4888 = vst.msk [vmem:[%s3 + $0xb8] sm:$0xff] %vm4864, %v4776
  %4889 = vst.msk [vmem:[%s3 + $0xc0] sm:$0xff] %vm4864, %v4777
  %4890 = vst.msk [vmem:[%s3 + $0xc8] sm:$0xff] %vm4864, %v4778
  %4891 = vst.msk [vmem:[%s3 + $0xd0] sm:$0xff] %vm4864, %v4779
  %4892 = vst.msk [vmem:[%s3 + $0xd8] sm:$0xff] %vm4864, %v4780
  %4893 = vst.msk [vmem:[%s3 + $0xe0] sm:$0xff] %vm4864, %v4781
  %4894 = vst.msk [vmem:[%s3 + $0xe8] sm:$0xff] %vm4864, %v4782
  %4895 = vst.msk [vmem:[%s3 + $0xf0] sm:$0xff] %vm4864, %v4783
  %4896 = vst.msk [vmem:[%s3 + $0xf8] sm:$0xff] %vm4864, %v4784
  %4897 = vst.msk [vmem:[%s3 + $0x100] sm:$0xff] %vm4864, %v4785
  %4898 = vst.msk [vmem:[%s3 + $0x108] sm:$0xff] %vm4864, %v4786
  %4899 = vst.msk [vmem:[%s3 + $0x110] sm:$0xff] %vm4864, %v4787
  %4900 = vst.msk [vmem:[%s3 + $0x118] sm:$0xff] %vm4864, %v4788
  %4901 = vst.msk [vmem:[%s3 + $0x120] sm:$0xff] %vm4864, %v4789
  %4902 = vst.msk [vmem:[%s3 + $0x128] sm:$0xff] %vm4864, %v4790
  %4903 = vst.msk [vmem:[%s3 + $0x130] sm:$0xff] %vm4864, %v4791
  %4904 = vst.msk [vmem:[%s3 + $0x138] sm:$0xff] %vm4864, %v4792
  %4905 = vst.msk [vmem:[%s3 + $0x140] sm:$0xff] %vm4864, %v4793
  %4906 = vst.msk [vmem:[%s3 + $0x148] sm:$0xff] %vm4864, %v4794
  %4907 = vst.msk [vmem:[%s3 + $0x150] sm:$0xff] %vm4864, %v4795
  %4908 = vst.msk [vmem:[%s3 + $0x158] sm:$0xff] %vm4864, %v4796
  %4909 = vst.msk [vmem:[%s3 + $0x160] sm:$0xff] %vm4864, %v4797
  %4910 = vst.msk [vmem:[%s3 + $0x168] sm:$0xff] %vm4864, %v4798
  %4911 = vst.msk [vmem:[%s3 + $0x170] sm:$0xff] %vm4864, %v4799
  %4912 = vst.msk [vmem:[%s3 + $0x178] sm:$0xff] %vm4864, %v4800
  %4913 = vst.msk [vmem:[%s3 + $0x180] sm:$0xff] %vm4864, %v4801
  %4914 = vst.msk [vmem:[%s3 + $0x188] sm:$0xff] %vm4864, %v4802
  %4915 = vst.msk [vmem:[%s3 + $0x190] sm:$0xff] %vm4864, %v4803
  %4916 = vst.msk [vmem:[%s3 + $0x198] sm:$0xff] %vm4864, %v4804
  %4917 = vst.msk [vmem:[%s3 + $0x1a0] sm:$0xff] %vm4864, %v4805
  %4918 = vst.msk [vmem:[%s3 + $0x1a8] sm:$0xff] %vm4864, %v4806
  %4919 = vst.msk [vmem:[%s3 + $0x1b0] sm:$0xff] %vm4864, %v4807
  %4920 = vst.msk [vmem:[%s3 + $0x1b8] sm:$0xff] %vm4864, %v4808
  %4921 = vst.msk [vmem:[%s3 + $0x1c0] sm:$0xff] %vm4864, %v4809
  %4922 = vst.msk [vmem:[%s3 + $0x1c8] sm:$0xff] %vm4864, %v4810
  %4923 = vst.msk [vmem:[%s3 + $0x1d0] sm:$0xff] %vm4864, %v4811
  %4924 = vst.msk [vmem:[%s3 + $0x1d8] sm:$0xff] %vm4864, %v4812
  %4925 = vst.msk [vmem:[%s3 + $0x1e0] sm:$0xff] %vm4864, %v4813
  %4926 = vst.msk [vmem:[%s3 + $0x1e8] sm:$0xff] %vm4864, %v4814
  %4927 = vst.msk [vmem:[%s3 + $0x1f0] sm:$0xff] %vm4864, %v4815
  %4928 = vst.msk [vmem:[%s3 + $0x1f8] sm:$0xff] %vm4864, %v4816
  %4929 = vst.msk [vmem:[%s3 + $0x200] sm:$0xff] %vm4864, %v4817
  %4930 = vst.msk [vmem:[%s3 + $0x208] sm:$0xff] %vm4864, %v4818
  %4931 = vst.msk [vmem:[%s3 + $0x210] sm:$0xff] %vm4864, %v4819
  %4932 = vst.msk [vmem:[%s3 + $0x218] sm:$0xff] %vm4864, %v4820
  %4933 = vst.msk [vmem:[%s3 + $0x220] sm:$0xff] %vm4864, %v4821
  %4934 = vst.msk [vmem:[%s3 + $0x228] sm:$0xff] %vm4864, %v4822
  %4935 = vst.msk [vmem:[%s3 + $0x230] sm:$0xff] %vm4864, %v4823
  %4936 = vst.msk [vmem:[%s3 + $0x238] sm:$0xff] %vm4864, %v4824
  %4937 = vst.msk [vmem:[%s3 + $0x240] sm:$0xff] %vm4864, %v4825
  %4938 = vst.msk [vmem:[%s3 + $0x248] sm:$0xff] %vm4864, %v4826
  %4939 = vst.msk [vmem:[%s3 + $0x250] sm:$0xff] %vm4864, %v4827
  %4940 = vst.msk [vmem:[%s3 + $0x258] sm:$0xff] %vm4864, %v4828
  %4941 = vst.msk [vmem:[%s3 + $0x260] sm:$0xff] %vm4864, %v4829
  %4942 = vst.msk [vmem:[%s3 + $0x268] sm:$0xff] %vm4864, %v4830
  %4943 = vst.msk [vmem:[%s3 + $0x270] sm:$0xff] %vm4864, %v4831
  %4944 = vst.msk [vmem:[%s3 + $0x278] sm:$0xff] %vm4864, %v4832
  %4945 = vst.msk [vmem:[%s3 + $0x280] sm:$0xff] %vm4864, %v4833
  %4946 = vst.msk [vmem:[%s3 + $0x288] sm:$0xff] %vm4864, %v4834
  %4947 = vst.msk [vmem:[%s3 + $0x290] sm:$0xff] %vm4864, %v4835
  %4948 = vst.msk [vmem:[%s3 + $0x298] sm:$0xff] %vm4864, %v4836
  %4949 = vst.msk [vmem:[%s3 + $0x2a0] sm:$0xff] %vm4864, %v4837
  %4950 = vst.msk [vmem:[%s3 + $0x2a8] sm:$0xff] %vm4864, %v4838
  %4951 = vst.msk [vmem:[%s3 + $0x2b0] sm:$0xff] %vm4864, %v4839
  %4952 = vst.msk [vmem:[%s3 + $0x2b8] sm:$0xff] %vm4864, %v4840
  %4953 = vst.msk [vmem:[%s3 + $0x2c0] sm:$0xff] %vm4864, %v4841
  %4954 = vst.msk [vmem:[%s3 + $0x2c8] sm:$0xff] %vm4864, %v4842
  %4955 = vst.msk [vmem:[%s3 + $0x2d0] sm:$0xff] %vm4864, %v4843
  %4956 = vst.msk [vmem:[%s3 + $0x2d8] sm:$0xff] %vm4864, %v4844
  %4957 = vst.msk [vmem:[%s3 + $0x2e0] sm:$0xff] %vm4864, %v4845
  %4958 = vst.msk [vmem:[%s3 + $0x2e8] sm:$0xff] %vm4864, %v4846
  %4959 = vst.msk [vmem:[%s3 + $0x2f0] sm:$0xff] %vm4864, %v4847
  %4960 = vst.msk [vmem:[%s3 + $0x2f8] sm:$0xff] %vm4864, %v4848
  %4961 = vst.msk [vmem:[%s3 + $0x300] sm:$0xff] %vm4864, %v4849
  %4962 = vst.msk [vmem:[%s3 + $0x308] sm:$0xff] %vm4864, %v4850
  %4963 = vst.msk [vmem:[%s3 + $0x310] sm:$0xff] %vm4864, %v4851
  %4964 = vst.msk [vmem:[%s3 + $0x318] sm:$0xff] %vm4864, %v4852
  %4965 = vst.msk [vmem:[%s3 + $0x320] sm:$0xff] %vm4864, %v4853
  %4966 = vst.msk [vmem:[%s3 + $0x328] sm:$0xff] %vm4864, %v4854
  %4967 = vst.msk [vmem:[%s3 + $0x330] sm:$0xff] %vm4864, %v4855
  %4968 = vst.msk [vmem:[%s3 + $0x338] sm:$0xff] %vm4864, %v4856
  %4969 = vst.msk [vmem:[%s3 + $0x340] sm:$0xff] %vm4864, %v4857
  %4970 = vst.msk [vmem:[%s3 + $0x348] sm:$0xff] %vm4864, %v4858
  %4971 = vst.msk [vmem:[%s3 + $0x350] sm:$0xff] %vm4864, %v4859
  %4972 = vst.msk [vmem:[%s3 + $0x358] sm:$0xff] %vm4864, %v4860
  %4973 = vst.msk [vmem:[%s3 + $0x360] sm:$0xff] %vm4864, %v4861
  %4974 = vst.msk [vmem:[%s3 + $0x368] sm:$0xff] %vm4864, %v4862
  %4975 = vst.msk [vmem:[%s3 + $0x370] sm:$0xff] %vm4864, %v4863
  // Predicated region
  $region14: #{cnn_forward.2} parent=0 // pred_check
    _
  $region15: #{cnn_forward.2} parent=0 // pred_check_branch
    %4977 = sbr.rel (0) target = $region17
  $region16: #{cnn_forward.2} parent=0 // pred_region
    _
  $region17: #{cnn_forward.2} parent=0 // pred_fallthru
    _
  // Predicated region
  $region18: #{cnn_forward.2} parent=0 // pred_check
    _
  $region19: #{cnn_forward.2} parent=0 // pred_check_branch
    %4979 = sbr.rel (0) target = $region21
  $region20: #{cnn_forward.2} parent=0 // pred_region
    _
  $region21: #{cnn_forward.2} parent=0 // pred_fallthru
    _

// kernel: cnn_forward.3
$region0: #{cnn_forward.3}
  #allocation0 [shape = 'u32[]', space=smem, size = 0x4, offset = 0x4, fixed_abs, tag = 'smem constant byte address 0x4 - core index']
  #allocation1 [shape = 'u32[144,128]{1,0:T(1,128)}', space=vmem, size = 0x12000, scoped, tag = 'internal scratch']
  %s0 = inlined_call_operand.vmem [shape: f32[96,1600], index: 0, kind: input, shape index: {}]
  %s1 = inlined_call_operand.vmem [shape: f32[1600,128], index: 1, kind: input, shape index: {}]
  %s2 = inlined_call_operand.vmem [shape: f32[1,128], index: 2, kind: input, shape index: {}]
  %s3 = inlined_call_operand.vmem [shape: f32[72,24], index: 3, kind: input, shape index: {}]
  %s4 = inlined_call_operand.vmem [shape: f32[1152,256], index: 4, kind: input, shape index: {}]
  %s5 = inlined_call_operand.vmem [shape: f32[1,256], index: 5, kind: input, shape index: {}]
  %s6 = inlined_call_operand.vmem [shape: f32[256,256], index: 6, kind: input, shape index: {}]
  %s7 = inlined_call_operand.vmem [shape: f32[1,256], index: 7, kind: input, shape index: {}]
  %s8 = inlined_call_operand.hbm [shape: f32[2,256], index: 8, kind: output, shape index: {}]
  %s9 = sld [smem:[#allocation0]]
  $region42: #{cnn_forward.3} parent=0
    _
  %s11 = ssub.s32 1, %s9
  %s12 = scalar_select 0, %s11, %s9
  $region1: #{cnn_forward.3} parent=0
    #allocation2 [shape = 'u8[2048]{0}', space=vmem, size = 0x800, scoped, tag = 'output window, operand 0, single buffered']
    #allocation3 [shape = 's32[1]{0}', space=sflag, size = 0x4, scoped, tag = 'scoped memory for cnn_forward.3']
    %13 = vsyncpa [#allocation3], 0
    // Predicated region
    $region2: #{cnn_forward.3} parent=1 // pred_check
      _
    $region3: #{cnn_forward.3} parent=1 // pred_check_branch
      %15 = sbr.rel (0) target = $region5
    $region4: #{cnn_forward.3} parent=1 // pred_region
      _
    $region5: #{cnn_forward.3} parent=1 // pred_fallthru
      _
    // Predicated region
    $region6: #{cnn_forward.3} parent=1 // pred_check
      _
    $region7: #{cnn_forward.3} parent=1 // pred_check_branch
      %17 = sbr.rel (0) target = $region9
    $region8: #{cnn_forward.3} parent=1 // pred_region
      _
    $region9: #{cnn_forward.3} parent=1 // pred_fallthru
      _
    // Predicated region
    $region10: #{cnn_forward.3} parent=1 // pred_check
      _
    $region11: #{cnn_forward.3} parent=1 // pred_check_branch
      %19 = sbr.rel (0) target = $region13
    $region12: #{cnn_forward.3} parent=1 // pred_region
      _
    $region13: #{cnn_forward.3} parent=1 // pred_fallthru
      _
    // Predicated region
    $region14: #{cnn_forward.3} parent=1 // pred_check
      _
    $region15: #{cnn_forward.3} parent=1 // pred_check_branch
      %21 = sbr.rel (0) target = $region17
    $region16: #{cnn_forward.3} parent=1 // pred_region
      _
    $region17: #{cnn_forward.3} parent=1 // pred_fallthru
      _
    // Predicated region
    $region18: #{cnn_forward.3} parent=1 // pred_check
      _
    $region19: #{cnn_forward.3} parent=1 // pred_check_branch
      %23 = sbr.rel (0) target = $region21
    $region20: #{cnn_forward.3} parent=1 // pred_region
      _
    $region21: #{cnn_forward.3} parent=1 // pred_fallthru
      _
    // Predicated region
    $region22: #{cnn_forward.3} parent=1 // pred_check
      _
    $region23: #{cnn_forward.3} parent=1 // pred_check_branch
      %25 = sbr.rel (0) target = $region25
    $region24: #{cnn_forward.3} parent=1 // pred_region
      _
    $region25: #{cnn_forward.3} parent=1 // pred_fallthru
      _
    // Predicated region
    $region26: #{cnn_forward.3} parent=1 // pred_check
      _
    $region27: #{cnn_forward.3} parent=1 // pred_check_branch
      %27 = sbr.rel (0) target = $region29
    $region28: #{cnn_forward.3} parent=1 // pred_region
      _
    $region29: #{cnn_forward.3} parent=1 // pred_fallthru
      _
    // Predicated region
    $region30: #{cnn_forward.3} parent=1 // pred_check
      _
    $region31: #{cnn_forward.3} parent=1 // pred_check_branch
      %29 = sbr.rel (0) target = $region33
    $region32: #{cnn_forward.3} parent=1 // pred_region
      _
    $region33: #{cnn_forward.3} parent=1 // pred_fallthru
      _
    %v30 = vld [vmem:[%s0] sm:$0xff]
    %v31 = vld [vmem:[%s0 + $0x8] sm:$0xff]
    %v32 = vld [vmem:[%s0 + $0x10] sm:$0xff]
    %v33 = vld [vmem:[%s0 + $0x18] sm:$0xff]
    %v34 = vld [vmem:[%s0 + $0x20] sm:$0xff]
    %v35 = vld [vmem:[%s0 + $0x28] sm:$0xff]
    %v36 = vld [vmem:[%s0 + $0x30] sm:$0xff]
    %v37 = vld [vmem:[%s0 + $0x38] sm:$0xff]
    %v38 = vld [vmem:[%s0 + $0x40] sm:$0xff]
    %v39 = vld [vmem:[%s0 + $0x48] sm:$0xff]
    %v40 = vld [vmem:[%s0 + $0x50] sm:$0xff]
    %v41 = vld [vmem:[%s0 + $0x58] sm:$0xff]
    %v42 = vld [vmem:[%s0 + $0x60] sm:$0xff]
    %v43 = vld [vmem:[%s0 + $0x68] sm:$0xff]
    %v44 = vld [vmem:[%s0 + $0x70] sm:$0xff]
    %v45 = vld [vmem:[%s0 + $0x78] sm:$0xff]
    %v46 = vld [vmem:[%s0 + $0x80] sm:$0xff]
    %v47 = vld [vmem:[%s0 + $0x88] sm:$0xff]
    %v48 = vld [vmem:[%s0 + $0x90] sm:$0xff]
    %v49 = vld [vmem:[%s0 + $0x98] sm:$0xff]
    %v50 = vld [vmem:[%s0 + $0xa0] sm:$0xff]
    %v51 = vld [vmem:[%s0 + $0xa8] sm:$0xff]
    %v52 = vld [vmem:[%s0 + $0xb0] sm:$0xff]
    %v53 = vld [vmem:[%s0 + $0xb8] sm:$0xff]
    %v54 = vld [vmem:[%s0 + $0xc0] sm:$0xff]
    %v55 = vld [vmem:[%s0 + $0xc8] sm:$0xff]
    %v56 = vld [vmem:[%s0 + $0xd0] sm:$0xff]
    %v57 = vld [vmem:[%s0 + $0xd8] sm:$0xff]
    %v58 = vld [vmem:[%s0 + $0xe0] sm:$0xff]
    %v59 = vld [vmem:[%s0 + $0xe8] sm:$0xff]
    %v60 = vld [vmem:[%s0 + $0xf0] sm:$0xff]
    %v61 = vld [vmem:[%s0 + $0xf8] sm:$0xff]
    %v62 = vld [vmem:[%s0 + $0x100] sm:$0xff]
    %v63 = vld [vmem:[%s0 + $0x108] sm:$0xff]
    %v64 = vld [vmem:[%s0 + $0x110] sm:$0xff]
    %v65 = vld [vmem:[%s0 + $0x118] sm:$0xff]
    %v66 = vld [vmem:[%s0 + $0x120] sm:$0xff]
    %v67 = vld [vmem:[%s0 + $0x128] sm:$0xff]
    %v68 = vld [vmem:[%s0 + $0x130] sm:$0xff]
    %v69 = vld [vmem:[%s0 + $0x138] sm:$0xff]
    %v70 = vld [vmem:[%s0 + $0x140] sm:$0xff]
    %v71 = vld [vmem:[%s0 + $0x148] sm:$0xff]
    %v72 = vld [vmem:[%s0 + $0x150] sm:$0xff]
    %v73 = vld [vmem:[%s0 + $0x158] sm:$0xff]
    %v74 = vld [vmem:[%s0 + $0x160] sm:$0xff]
    %v75 = vld [vmem:[%s0 + $0x168] sm:$0xff]
    %v76 = vld [vmem:[%s0 + $0x170] sm:$0xff]
    %v77 = vld [vmem:[%s0 + $0x178] sm:$0xff]
    %v78 = vld [vmem:[%s0 + $0x180] sm:$0xff]
    %v79 = vld [vmem:[%s0 + $0x188] sm:$0xff]
    %v80 = vld [vmem:[%s0 + $0x190] sm:$0xff]
    %v81 = vld [vmem:[%s0 + $0x198] sm:$0xff]
    %v82 = vld [vmem:[%s0 + $0x1a0] sm:$0xff]
    %v83 = vld [vmem:[%s0 + $0x1a8] sm:$0xff]
    %v84 = vld [vmem:[%s0 + $0x1b0] sm:$0xff]
    %v85 = vld [vmem:[%s0 + $0x1b8] sm:$0xff]
    %v86 = vld [vmem:[%s0 + $0x1c0] sm:$0xff]
    %v87 = vld [vmem:[%s0 + $0x1c8] sm:$0xff]
    %v88 = vld [vmem:[%s0 + $0x1d0] sm:$0xff]
    %v89 = vld [vmem:[%s0 + $0x1d8] sm:$0xff]
    %v90 = vld [vmem:[%s0 + $0x1e0] sm:$0xff]
    %v91 = vld [vmem:[%s0 + $0x1e8] sm:$0xff]
    %v92 = vld [vmem:[%s0 + $0x1f0] sm:$0xff]
    %v93 = vld [vmem:[%s0 + $0x1f8] sm:$0xff]
    %v94 = vld [vmem:[%s0 + $0x200] sm:$0xff]
    %v95 = vld [vmem:[%s0 + $0x208] sm:$0xff]
    %v96 = vld [vmem:[%s0 + $0x210] sm:$0xff]
    %v97 = vld [vmem:[%s0 + $0x218] sm:$0xff]
    %v98 = vld [vmem:[%s0 + $0x220] sm:$0xff]
    %v99 = vld [vmem:[%s0 + $0x228] sm:$0xff]
    %v100 = vld [vmem:[%s0 + $0x230] sm:$0xff]
    %v101 = vld [vmem:[%s0 + $0x238] sm:$0xff]
    %v102 = vld [vmem:[%s0 + $0x240] sm:$0xff]
    %v103 = vld [vmem:[%s0 + $0x248] sm:$0xff]
    %v104 = vld [vmem:[%s0 + $0x250] sm:$0xff]
    %v105 = vld [vmem:[%s0 + $0x258] sm:$0xff]
    %v106 = vld [vmem:[%s0 + $0x260] sm:$0xff]
    %v107 = vld [vmem:[%s0 + $0x268] sm:$0xff]
    %v108 = vld [vmem:[%s0 + $0x270] sm:$0xff]
    %v109 = vld [vmem:[%s0 + $0x278] sm:$0xff]
    %v110 = vld [vmem:[%s0 + $0x280] sm:$0xff]
    %v111 = vld [vmem:[%s0 + $0x288] sm:$0xff]
    %v112 = vld [vmem:[%s0 + $0x290] sm:$0xff]
    %v113 = vld [vmem:[%s0 + $0x298] sm:$0xff]
    %v114 = vld [vmem:[%s0 + $0x2a0] sm:$0xff]
    %v115 = vld [vmem:[%s0 + $0x2a8] sm:$0xff]
    %v116 = vld [vmem:[%s0 + $0x2b0] sm:$0xff]
    %v117 = vld [vmem:[%s0 + $0x2b8] sm:$0xff]
    %v118 = vld [vmem:[%s0 + $0x2c0] sm:$0xff]
    %v119 = vld [vmem:[%s0 + $0x2c8] sm:$0xff]
    %v120 = vld [vmem:[%s0 + $0x2d0] sm:$0xff]
    %v121 = vld [vmem:[%s0 + $0x2d8] sm:$0xff]
    %v122 = vld [vmem:[%s0 + $0x2e0] sm:$0xff]
    %v123 = vld [vmem:[%s0 + $0x2e8] sm:$0xff]
    %v124 = vld [vmem:[%s0 + $0x2f0] sm:$0xff]
    %v125 = vld [vmem:[%s0 + $0x2f8] sm:$0xff]
    %v126 = vld [vmem:[%s0 + $0x300] sm:$0xff]
    %v127 = vld [vmem:[%s0 + $0x308] sm:$0xff]
    %v128 = vld [vmem:[%s0 + $0x310] sm:$0xff]
    %v129 = vld [vmem:[%s0 + $0x318] sm:$0xff]
    %v130 = vld [vmem:[%s0 + $0x320] sm:$0xff]
    %v131 = vld [vmem:[%s0 + $0x328] sm:$0xff]
    %v132 = vld [vmem:[%s0 + $0x330] sm:$0xff]
    %v133 = vld [vmem:[%s0 + $0x338] sm:$0xff]
    %v134 = vld [vmem:[%s0 + $0x340] sm:$0xff]
    %v135 = vld [vmem:[%s0 + $0x348] sm:$0xff]
    %v136 = vld [vmem:[%s0 + $0x350] sm:$0xff]
    %v137 = vld [vmem:[%s0 + $0x358] sm:$0xff]
    %v138 = vld [vmem:[%s0 + $0x360] sm:$0xff]
    %v139 = vld [vmem:[%s0 + $0x368] sm:$0xff]
    %v140 = vld [vmem:[%s0 + $0x370] sm:$0xff]
    %v141 = vld [vmem:[%s0 + $0x378] sm:$0xff]
    %v142 = vld [vmem:[%s0 + $0x380] sm:$0xff]
    %v143 = vld [vmem:[%s0 + $0x388] sm:$0xff]
    %v144 = vld [vmem:[%s0 + $0x390] sm:$0xff]
    %v145 = vld [vmem:[%s0 + $0x398] sm:$0xff]
    %v146 = vld [vmem:[%s0 + $0x3a0] sm:$0xff]
    %v147 = vld [vmem:[%s0 + $0x3a8] sm:$0xff]
    %v148 = vld [vmem:[%s0 + $0x3b0] sm:$0xff]
    %v149 = vld [vmem:[%s0 + $0x3b8] sm:$0xff]
    %v150 = vld [vmem:[%s0 + $0x3c0] sm:$0xff]
    %v151 = vld [vmem:[%s0 + $0x3c8] sm:$0xff]
    %v152 = vld [vmem:[%s0 + $0x3d0] sm:$0xff]
    %v153 = vld [vmem:[%s0 + $0x3d8] sm:$0xff]
    %v154 = vld [vmem:[%s0 + $0x3e0] sm:$0xff]
    %v155 = vld [vmem:[%s0 + $0x3e8] sm:$0xff]
    %v156 = vld [vmem:[%s0 + $0x3f0] sm:$0xff]
    %v157 = vld [vmem:[%s0 + $0x3f8] sm:$0xff]
    %v158 = vld [vmem:[%s0 + $0x400] sm:$0xff]
    %v159 = vld [vmem:[%s0 + $0x408] sm:$0xff]
    %v160 = vld [vmem:[%s0 + $0x410] sm:$0xff]
    %v161 = vld [vmem:[%s0 + $0x418] sm:$0xff]
    %v162 = vld [vmem:[%s0 + $0x420] sm:$0xff]
    %v163 = vld [vmem:[%s0 + $0x428] sm:$0xff]
    %v164 = vld [vmem:[%s0 + $0x430] sm:$0xff]
    %v165 = vld [vmem:[%s0 + $0x438] sm:$0xff]
    %v166 = vld [vmem:[%s0 + $0x440] sm:$0xff]
    %v167 = vld [vmem:[%s0 + $0x448] sm:$0xff]
    %v168 = vld [vmem:[%s0 + $0x450] sm:$0xff]
    %v169 = vld [vmem:[%s0 + $0x458] sm:$0xff]
    %v170 = vld [vmem:[%s0 + $0x460] sm:$0xff]
    %v171 = vld [vmem:[%s0 + $0x468] sm:$0xff]
    %v172 = vld [vmem:[%s0 + $0x470] sm:$0xff]
    %v173 = vld [vmem:[%s0 + $0x478] sm:$0xff]
    %v174 = vld [vmem:[%s0 + $0x480] sm:$0xff]
    %v175 = vld [vmem:[%s0 + $0x488] sm:$0xff]
    %v176 = vld [vmem:[%s0 + $0x490] sm:$0xff]
    %v177 = vld [vmem:[%s0 + $0x498] sm:$0xff]
    %v178 = vld [vmem:[%s0 + $0x4a0] sm:$0xff]
    %v179 = vld [vmem:[%s0 + $0x4a8] sm:$0xff]
    %v180 = vld [vmem:[%s0 + $0x4b0] sm:$0xff]
    %v181 = vld [vmem:[%s0 + $0x4b8] sm:$0xff]
    %v182 = vld [vmem:[%s0 + $0x4c0] sm:$0xff]
    %v183 = vld [vmem:[%s0 + $0x4c8] sm:$0xff]
    %v184 = vld [vmem:[%s0 + $0x4d0] sm:$0xff]
    %v185 = vld [vmem:[%s0 + $0x4d8] sm:$0xff]
    %v186 = vld [vmem:[%s1] sm:$0xff]
    %v187 = vld [vmem:[%s1 + $0x8] sm:$0xff]
    %v188 = vld [vmem:[%s1 + $0x10] sm:$0xff]
    %v189 = vld [vmem:[%s1 + $0x18] sm:$0xff]
    %v190 = vld [vmem:[%s1 + $0x20] sm:$0xff]
    %v191 = vld [vmem:[%s1 + $0x28] sm:$0xff]
    %v192 = vld [vmem:[%s1 + $0x30] sm:$0xff]
    %v193 = vld [vmem:[%s1 + $0x38] sm:$0xff]
    %v194 = vld [vmem:[%s1 + $0x40] sm:$0xff]
    %v195 = vld [vmem:[%s1 + $0x48] sm:$0xff]
    %v196 = vld [vmem:[%s1 + $0x50] sm:$0xff]
    %v197 = vld [vmem:[%s1 + $0x58] sm:$0xff]
    %v198 = vld [vmem:[%s1 + $0x60] sm:$0xff]
    %v199 = vld [vmem:[%s1 + $0x68] sm:$0xff]
    %v200 = vld [vmem:[%s1 + $0x70] sm:$0xff]
    %v201 = vld [vmem:[%s1 + $0x78] sm:$0xff]
    %v202 = vld [vmem:[%s1 + $0x80] sm:$0xff]
    %v203 = vld [vmem:[%s1 + $0x88] sm:$0xff]
    %v204 = vld [vmem:[%s1 + $0x90] sm:$0xff]
    %v205 = vld [vmem:[%s1 + $0x98] sm:$0xff]
    %v206 = vld [vmem:[%s1 + $0xa0] sm:$0xff]
    %v207 = vld [vmem:[%s1 + $0xa8] sm:$0xff]
    %v208 = vld [vmem:[%s1 + $0xb0] sm:$0xff]
    %v209 = vld [vmem:[%s1 + $0xb8] sm:$0xff]
    %v210 = vld [vmem:[%s1 + $0xc0] sm:$0xff]
    %v211 = vld [vmem:[%s1 + $0xc8] sm:$0xff]
    %v212 = vld [vmem:[%s1 + $0xd0] sm:$0xff]
    %v213 = vld [vmem:[%s1 + $0xd8] sm:$0xff]
    %v214 = vld [vmem:[%s1 + $0xe0] sm:$0xff]
    %v215 = vld [vmem:[%s1 + $0xe8] sm:$0xff]
    %v216 = vld [vmem:[%s1 + $0xf0] sm:$0xff]
    %v217 = vld [vmem:[%s1 + $0xf8] sm:$0xff]
    %v218 = vld [vmem:[%s1 + $0x100] sm:$0xff]
    %v219 = vld [vmem:[%s1 + $0x108] sm:$0xff]
    %v220 = vld [vmem:[%s1 + $0x110] sm:$0xff]
    %v221 = vld [vmem:[%s1 + $0x118] sm:$0xff]
    %v222 = vld [vmem:[%s1 + $0x120] sm:$0xff]
    %v223 = vld [vmem:[%s1 + $0x128] sm:$0xff]
    %v224 = vld [vmem:[%s1 + $0x130] sm:$0xff]
    %v225 = vld [vmem:[%s1 + $0x138] sm:$0xff]
    %v226 = vld [vmem:[%s1 + $0x140] sm:$0xff]
    %v227 = vld [vmem:[%s1 + $0x148] sm:$0xff]
    %v228 = vld [vmem:[%s1 + $0x150] sm:$0xff]
    %v229 = vld [vmem:[%s1 + $0x158] sm:$0xff]
    %v230 = vld [vmem:[%s1 + $0x160] sm:$0xff]
    %v231 = vld [vmem:[%s1 + $0x168] sm:$0xff]
    %v232 = vld [vmem:[%s1 + $0x170] sm:$0xff]
    %v233 = vld [vmem:[%s1 + $0x178] sm:$0xff]
    %v234 = vld [vmem:[%s1 + $0x180] sm:$0xff]
    %v235 = vld [vmem:[%s1 + $0x188] sm:$0xff]
    %v236 = vld [vmem:[%s1 + $0x190] sm:$0xff]
    %v237 = vld [vmem:[%s1 + $0x198] sm:$0xff]
    %v238 = vld [vmem:[%s1 + $0x1a0] sm:$0xff]
    %v239 = vld [vmem:[%s1 + $0x1a8] sm:$0xff]
    %v240 = vld [vmem:[%s1 + $0x1b0] sm:$0xff]
    %v241 = vld [vmem:[%s1 + $0x1b8] sm:$0xff]
    %v242 = vld [vmem:[%s1 + $0x1c0] sm:$0xff]
    %v243 = vld [vmem:[%s1 + $0x1c8] sm:$0xff]
    %v244 = vld [vmem:[%s1 + $0x1d0] sm:$0xff]
    %v245 = vld [vmem:[%s1 + $0x1d8] sm:$0xff]
    %v246 = vld [vmem:[%s1 + $0x1e0] sm:$0xff]
    %v247 = vld [vmem:[%s1 + $0x1e8] sm:$0xff]
    %v248 = vld [vmem:[%s1 + $0x1f0] sm:$0xff]
    %v249 = vld [vmem:[%s1 + $0x1f8] sm:$0xff]
    %v250 = vld [vmem:[%s1 + $0x200] sm:$0xff]
    %v251 = vld [vmem:[%s1 + $0x208] sm:$0xff]
    %v252 = vld [vmem:[%s1 + $0x210] sm:$0xff]
    %v253 = vld [vmem:[%s1 + $0x218] sm:$0xff]
    %v254 = vld [vmem:[%s1 + $0x220] sm:$0xff]
    %v255 = vld [vmem:[%s1 + $0x228] sm:$0xff]
    %v256 = vld [vmem:[%s1 + $0x230] sm:$0xff]
    %v257 = vld [vmem:[%s1 + $0x238] sm:$0xff]
    %v258 = vld [vmem:[%s1 + $0x240] sm:$0xff]
    %v259 = vld [vmem:[%s1 + $0x248] sm:$0xff]
    %v260 = vld [vmem:[%s1 + $0x250] sm:$0xff]
    %v261 = vld [vmem:[%s1 + $0x258] sm:$0xff]
    %v262 = vld [vmem:[%s1 + $0x260] sm:$0xff]
    %v263 = vld [vmem:[%s1 + $0x268] sm:$0xff]
    %v264 = vld [vmem:[%s1 + $0x270] sm:$0xff]
    %v265 = vld [vmem:[%s1 + $0x278] sm:$0xff]
    %v266 = vld [vmem:[%s1 + $0x280] sm:$0xff]
    %v267 = vld [vmem:[%s1 + $0x288] sm:$0xff]
    %v268 = vld [vmem:[%s1 + $0x290] sm:$0xff]
    %v269 = vld [vmem:[%s1 + $0x298] sm:$0xff]
    %v270 = vld [vmem:[%s1 + $0x2a0] sm:$0xff]
    %v271 = vld [vmem:[%s1 + $0x2a8] sm:$0xff]
    %v272 = vld [vmem:[%s1 + $0x2b0] sm:$0xff]
    %v273 = vld [vmem:[%s1 + $0x2b8] sm:$0xff]
    %v274 = vld [vmem:[%s1 + $0x2c0] sm:$0xff]
    %v275 = vld [vmem:[%s1 + $0x2c8] sm:$0xff]
    %v276 = vld [vmem:[%s1 + $0x2d0] sm:$0xff]
    %v277 = vld [vmem:[%s1 + $0x2d8] sm:$0xff]
    %v278 = vld [vmem:[%s1 + $0x2e0] sm:$0xff]
    %v279 = vld [vmem:[%s1 + $0x2e8] sm:$0xff]
    %v280 = vld [vmem:[%s1 + $0x2f0] sm:$0xff]
    %v281 = vld [vmem:[%s1 + $0x2f8] sm:$0xff]
    %v282 = vld [vmem:[%s1 + $0x300] sm:$0xff]
    %v283 = vld [vmem:[%s1 + $0x308] sm:$0xff]
    %v284 = vld [vmem:[%s1 + $0x310] sm:$0xff]
    %v285 = vld [vmem:[%s1 + $0x318] sm:$0xff]
    %v286 = vld [vmem:[%s1 + $0x320] sm:$0xff]
    %v287 = vld [vmem:[%s1 + $0x328] sm:$0xff]
    %v288 = vld [vmem:[%s1 + $0x330] sm:$0xff]
    %v289 = vld [vmem:[%s1 + $0x338] sm:$0xff]
    %v290 = vld [vmem:[%s1 + $0x340] sm:$0xff]
    %v291 = vld [vmem:[%s1 + $0x348] sm:$0xff]
    %v292 = vld [vmem:[%s1 + $0x350] sm:$0xff]
    %v293 = vld [vmem:[%s1 + $0x358] sm:$0xff]
    %v294 = vld [vmem:[%s1 + $0x360] sm:$0xff]
    %v295 = vld [vmem:[%s1 + $0x368] sm:$0xff]
    %v296 = vld [vmem:[%s1 + $0x370] sm:$0xff]
    %v297 = vld [vmem:[%s1 + $0x378] sm:$0xff]
    %v298 = vld [vmem:[%s1 + $0x380] sm:$0xff]
    %v299 = vld [vmem:[%s1 + $0x388] sm:$0xff]
    %v300 = vld [vmem:[%s1 + $0x390] sm:$0xff]
    %v301 = vld [vmem:[%s1 + $0x398] sm:$0xff]
    %v302 = vld [vmem:[%s1 + $0x3a0] sm:$0xff]
    %v303 = vld [vmem:[%s1 + $0x3a8] sm:$0xff]
    %v304 = vld [vmem:[%s1 + $0x3b0] sm:$0xff]
    %v305 = vld [vmem:[%s1 + $0x3b8] sm:$0xff]
    %v306 = vld [vmem:[%s1 + $0x3c0] sm:$0xff]
    %v307 = vld [vmem:[%s1 + $0x3c8] sm:$0xff]
    %v308 = vld [vmem:[%s1 + $0x3d0] sm:$0xff]
    %v309 = vld [vmem:[%s1 + $0x3d8] sm:$0xff]
    %v310 = vld [vmem:[%s1 + $0x3e0] sm:$0xff]
    %v311 = vld [vmem:[%s1 + $0x3e8] sm:$0xff]
    %v312 = vld [vmem:[%s1 + $0x3f0] sm:$0xff]
    %v313 = vld [vmem:[%s1 + $0x3f8] sm:$0xff]
    %v314 = vld [vmem:[%s1 + $0x400] sm:$0xff]
    %v315 = vld [vmem:[%s1 + $0x408] sm:$0xff]
    %v316 = vld [vmem:[%s1 + $0x410] sm:$0xff]
    %v317 = vld [vmem:[%s1 + $0x418] sm:$0xff]
    %v318 = vld [vmem:[%s1 + $0x420] sm:$0xff]
    %v319 = vld [vmem:[%s1 + $0x428] sm:$0xff]
    %v320 = vld [vmem:[%s1 + $0x430] sm:$0xff]
    %v321 = vld [vmem:[%s1 + $0x438] sm:$0xff]
    %v322 = vld [vmem:[%s1 + $0x440] sm:$0xff]
    %v323 = vld [vmem:[%s1 + $0x448] sm:$0xff]
    %v324 = vld [vmem:[%s1 + $0x450] sm:$0xff]
    %v325 = vld [vmem:[%s1 + $0x458] sm:$0xff]
    %v326 = vld [vmem:[%s1 + $0x460] sm:$0xff]
    %v327 = vld [vmem:[%s1 + $0x468] sm:$0xff]
    %v328 = vld [vmem:[%s1 + $0x470] sm:$0xff]
    %v329 = vld [vmem:[%s1 + $0x478] sm:$0xff]
    %v330 = vld [vmem:[%s1 + $0x480] sm:$0xff]
    %v331 = vld [vmem:[%s1 + $0x488] sm:$0xff]
    %v332 = vld [vmem:[%s1 + $0x490] sm:$0xff]
    %v333 = vld [vmem:[%s1 + $0x498] sm:$0xff]
    %v334 = vld [vmem:[%s1 + $0x4a0] sm:$0xff]
    %v335 = vld [vmem:[%s1 + $0x4a8] sm:$0xff]
    %v336 = vld [vmem:[%s1 + $0x4b0] sm:$0xff]
    %v337 = vld [vmem:[%s1 + $0x4b8] sm:$0xff]
    %v338 = vld [vmem:[%s1 + $0x4c0] sm:$0xff]
    %v339 = vld [vmem:[%s1 + $0x4c8] sm:$0xff]
    %v340 = vld [vmem:[%s1 + $0x4d0] sm:$0xff]
    %v341 = vld [vmem:[%s1 + $0x4d8] sm:$0xff]
    %v342 = vld [vmem:[%s1 + $0x4e0] sm:$0xff]
    %v343 = vld [vmem:[%s1 + $0x4e8] sm:$0xff]
    %v344 = vld [vmem:[%s1 + $0x4f0] sm:$0xff]
    %v345 = vld [vmem:[%s1 + $0x4f8] sm:$0xff]
    %v346 = vld [vmem:[%s1 + $0x500] sm:$0xff]
    %v347 = vld [vmem:[%s1 + $0x508] sm:$0xff]
    %v348 = vld [vmem:[%s1 + $0x510] sm:$0xff]
    %v349 = vld [vmem:[%s1 + $0x518] sm:$0xff]
    %v350 = vld [vmem:[%s1 + $0x520] sm:$0xff]
    %v351 = vld [vmem:[%s1 + $0x528] sm:$0xff]
    %v352 = vld [vmem:[%s1 + $0x530] sm:$0xff]
    %v353 = vld [vmem:[%s1 + $0x538] sm:$0xff]
    %v354 = vld [vmem:[%s1 + $0x540] sm:$0xff]
    %v355 = vld [vmem:[%s1 + $0x548] sm:$0xff]
    %v356 = vld [vmem:[%s1 + $0x550] sm:$0xff]
    %v357 = vld [vmem:[%s1 + $0x558] sm:$0xff]
    %v358 = vld [vmem:[%s1 + $0x560] sm:$0xff]
    %v359 = vld [vmem:[%s1 + $0x568] sm:$0xff]
    %v360 = vld [vmem:[%s1 + $0x570] sm:$0xff]
    %v361 = vld [vmem:[%s1 + $0x578] sm:$0xff]
    %v362 = vld [vmem:[%s1 + $0x580] sm:$0xff]
    %v363 = vld [vmem:[%s1 + $0x588] sm:$0xff]
    %v364 = vld [vmem:[%s1 + $0x590] sm:$0xff]
    %v365 = vld [vmem:[%s1 + $0x598] sm:$0xff]
    %v366 = vld [vmem:[%s1 + $0x5a0] sm:$0xff]
    %v367 = vld [vmem:[%s1 + $0x5a8] sm:$0xff]
    %v368 = vld [vmem:[%s1 + $0x5b0] sm:$0xff]
    %v369 = vld [vmem:[%s1 + $0x5b8] sm:$0xff]
    %v370 = vld [vmem:[%s1 + $0x5c0] sm:$0xff]
    %v371 = vld [vmem:[%s1 + $0x5c8] sm:$0xff]
    %v372 = vld [vmem:[%s1 + $0x5d0] sm:$0xff]
    %v373 = vld [vmem:[%s1 + $0x5d8] sm:$0xff]
    %v374 = vld [vmem:[%s1 + $0x5e0] sm:$0xff]
    %v375 = vld [vmem:[%s1 + $0x5e8] sm:$0xff]
    %v376 = vld [vmem:[%s1 + $0x5f0] sm:$0xff]
    %v377 = vld [vmem:[%s1 + $0x5f8] sm:$0xff]
    %v378 = vld [vmem:[%s1 + $0x600] sm:$0xff]
    %v379 = vld [vmem:[%s1 + $0x608] sm:$0xff]
    %v380 = vld [vmem:[%s1 + $0x610] sm:$0xff]
    %v381 = vld [vmem:[%s1 + $0x618] sm:$0xff]
    %v382 = vld [vmem:[%s1 + $0x620] sm:$0xff]
    %v383 = vld [vmem:[%s1 + $0x628] sm:$0xff]
    %v384 = vld [vmem:[%s1 + $0x630] sm:$0xff]
    %v385 = vld [vmem:[%s1 + $0x638] sm:$0xff]
    %vm386 = vcmask 523264
    %v388 = vsel %vm386, %v42, 0
    %v391 = vsel %vm386, %v55, 0
    %v394 = vsel %vm386, %v68, 0
    %v397 = vsel %vm386, %v81, 0
    %v400 = vsel %vm386, %v94, 0
    %v403 = vsel %vm386, %v107, 0
    %v406 = vsel %vm386, %v120, 0
    %v409 = vsel %vm386, %v133, 0
    %v412 = vsel %vm386, %v146, 0
    %v415 = vsel %vm386, %v159, 0
    %v418 = vsel %vm386, %v172, 0
    %v421 = vsel %vm386, %v185, 0
    %423 = vmatprep.subr.mxu0 0.0
    %424 = vmatpush1.msra.mxu0 %v186
    %425 = vmatprep.subr.mxu0 0.0
    %426 = vmatpush1.msra.mxu0 %v187
    %427 = vmatprep.subr.mxu0 0.0
    %428 = vmatpush1.msra.mxu0 %v188
    %429 = vmatprep.subr.mxu0 0.0
    %430 = vmatpush1.msra.mxu0 %v189
    %431 = vmatprep.subr.mxu0 0.0
    %432 = vmatpush1.msra.mxu0 %v190
    %433 = vmatprep.subr.mxu0 0.0
    %434 = vmatpush1.msra.mxu0 %v191
    %435 = vmatprep.subr.mxu0 0.0
    %436 = vmatpush1.msra.mxu0 %v192
    %437 = vmatprep.subr.mxu0 0.0
    %438 = vmatpush1.msra.mxu0 %v193
    %439 = vmatprep.subr.mxu0 0.0
    %440 = vmatpush1.msra.mxu0 %v194
    %441 = vmatprep.subr.mxu0 0.0
    %442 = vmatpush1.msra.mxu0 %v195
    %443 = vmatprep.subr.mxu0 0.0
    %444 = vmatpush1.msra.mxu0 %v196
    %445 = vmatprep.subr.mxu0 0.0
    %446 = vmatpush1.msra.mxu0 %v197
    %447 = vmatprep.subr.mxu0 0.0
    %448 = vmatpush1.msra.mxu0 %v198
    %449 = vmatprep.subr.mxu0 0.0
    %450 = vmatpush1.msra.mxu0 %v199
    %451 = vmatprep.subr.mxu0 0.0
    %452 = vmatpush1.msra.mxu0 %v200
    %453 = vmatprep.subr.mxu0 0.0
    %454 = vmatpush1.msra.mxu0 %v201
    %455 = vmatprep.subr.mxu0 0.0
    %456 = vmatpush1.msra.mxu0 %v202
    %457 = vmatprep.subr.mxu0 0.0
    %458 = vmatpush1.msra.mxu0 %v203
    %459 = vmatprep.subr.mxu0 0.0
    %460 = vmatpush1.msra.mxu0 %v204
    %461 = vmatprep.subr.mxu0 0.0
    %462 = vmatpush1.msra.mxu0 %v205
    %463 = vmatprep.subr.mxu0 0.0
    %464 = vmatpush1.msra.mxu0 %v206
    %465 = vmatprep.subr.mxu0 0.0
    %466 = vmatpush1.msra.mxu0 %v207
    %467 = vmatprep.subr.mxu0 0.0
    %468 = vmatpush1.msra.mxu0 %v208
    %469 = vmatprep.subr.mxu0 0.0
    %470 = vmatpush1.msra.mxu0 %v209
    %471 = vmatprep.subr.mxu0 0.0
    %472 = vmatpush1.msra.mxu0 %v210
    %473 = vmatprep.subr.mxu0 0.0
    %474 = vmatpush1.msra.mxu0 %v211
    %475 = vmatprep.subr.mxu0 0.0
    %476 = vmatpush1.msra.mxu0 %v212
    %477 = vmatprep.subr.mxu0 0.0
    %478 = vmatpush1.msra.mxu0 %v213
    %479 = vmatprep.subr.mxu0 0.0
    %480 = vmatpush1.msra.mxu0 %v214
    %481 = vmatprep.subr.mxu0 0.0
    %482 = vmatpush1.msra.mxu0 %v215
    %483 = vmatprep.subr.mxu0 0.0
    %484 = vmatpush1.msra.mxu0 %v216
    %485 = vmatprep.subr.mxu0 0.0
    %486 = vmatpush1.msra.mxu0 %v217
    %487 = vmatprep.mubr.f32.mxu0 %v31
    %488 = vmatmul.mubr.f32.gmra.mrb[0].mxu0 %v30
    %v489 = vpop.f32.mrb[0].mxu0
    %v490 = vadd.f32 0.0, %v489
    %v491 = vpop.f32.mrb[0].mxu0
    %492 = vmatprep.mubr.f32.mxu0 %v44
    %493 = vmatmul.mubr.f32.gmra.mrb[0].mxu0 %v43
    %v494 = vpop.f32.mrb[0].mxu0
    %v495 = vadd.f32 0.0, %v494
    %v496 = vpop.f32.mrb[0].mxu0
    %497 = vmatprep.mubr.f32.mxu0 %v57
    %498 = vmatmul.mubr.f32.gmra.mrb[0].mxu0 %v56
    %v499 = vpop.f32.mrb[0].mxu0
    %v500 = vadd.f32 0.0, %v499
    %v501 = vpop.f32.mrb[0].mxu0
    %502 = vmatprep.mubr.f32.mxu0 %v70
    %503 = vmatmul.mubr.f32.gmra.mrb[0].mxu0 %v69
    %v504 = vpop.f32.mrb[0].mxu0
    %v505 = vadd.f32 0.0, %v504
    %v506 = vpop.f32.mrb[0].mxu0
    %507 = vmatprep.mubr.f32.mxu0 %v83
    %508 = vmatmul.mubr.f32.gmra.mrb[0].mxu0 %v82
    %v509 = vpop.f32.mrb[0].mxu0
    %v510 = vadd.f32 0.0, %v509
    %v511 = vpop.f32.mrb[0].mxu0
    %512 = vmatprep.mubr.f32.mxu0 %v96
    %513 = vmatmul.mubr.f32.gmra.mrb[0].mxu0 %v95
    %v514 = vpop.f32.mrb[0].mxu0
    %v515 = vadd.f32 0.0, %v514
    %v516 = vpop.f32.mrb[0].mxu0
    %517 = vmatprep.mubr.f32.mxu0 %v109
    %518 = vmatmul.mubr.f32.gmra.mrb[0].mxu0 %v108
    %v519 = vpop.f32.mrb[0].mxu0
    %v520 = vadd.f32 0.0, %v519
    %v521 = vpop.f32.mrb[0].mxu0
    %522 = vmatprep.mubr.f32.mxu0 %v122
    %523 = vmatmul.mubr.f32.gmra.mrb[0].mxu0 %v121
    %v524 = vpop.f32.mrb[0].mxu0
    %v525 = vadd.f32 0.0, %v524
    %v526 = vpop.f32.mrb[0].mxu0
    %527 = vmatprep.mubr.f32.mxu0 %v135
    %528 = vmatmul.mubr.f32.gmra.mrb[0].mxu0 %v134
    %v529 = vpop.f32.mrb[0].mxu0
    %v530 = vadd.f32 0.0, %v529
    %v531 = vpop.f32.mrb[0].mxu0
    %532 = vmatprep.mubr.f32.mxu0 %v148
    %533 = vmatmul.mubr.f32.gmra.mrb[0].mxu0 %v147
    %v534 = vpop.f32.mrb[0].mxu0
    %v535 = vadd.f32 0.0, %v534
    %v536 = vpop.f32.mrb[0].mxu0
    %537 = vmatprep.mubr.f32.mxu0 %v161
    %538 = vmatmul.mubr.f32.gmra.mrb[0].mxu0 %v160
    %v539 = vpop.f32.mrb[0].mxu0
    %v540 = vadd.f32 0.0, %v539
    %v541 = vpop.f32.mrb[0].mxu0
    %542 = vmatprep.mubr.f32.mxu0 %v174
    %543 = vmatmul.mubr.f32.gmra.mrb[0].mxu0 %v173
    %v544 = vpop.f32.mrb[0].mxu0
    %v545 = vadd.f32 0.0, %v544
    %v546 = vpop.f32.mrb[0].mxu0
    %547 = vdwg.mxu0
    %548 = vmatprep.subr.mxu0 0.0
    %549 = vmatpush1.msra.mxu0 %v218
    %550 = vmatprep.subr.mxu0 0.0
    %551 = vmatpush1.msra.mxu0 %v219
    %552 = vmatprep.subr.mxu0 0.0
    %553 = vmatpush1.msra.mxu0 %v220
    %554 = vmatprep.subr.mxu0 0.0
    %555 = vmatpush1.msra.mxu0 %v221
    %556 = vmatprep.subr.mxu0 0.0
    %557 = vmatpush1.msra.mxu0 %v222
    %558 = vmatprep.subr.mxu0 0.0
    %559 = vmatpush1.msra.mxu0 %v223
    %560 = vmatprep.subr.mxu0 0.0
    %561 = vmatpush1.msra.mxu0 %v224
    %562 = vmatprep.subr.mxu0 0.0
    %563 = vmatpush1.msra.mxu0 %v225
    %564 = vmatprep.subr.mxu0 0.0
    %565 = vmatpush1.msra.mxu0 %v226
    %566 = vmatprep.subr.mxu0 0.0
    %567 = vmatpush1.msra.mxu0 %v227
    %568 = vmatprep.subr.mxu0 0.0
    %569 = vmatpush1.msra.mxu0 %v228
    %570 = vmatprep.subr.mxu0 0.0
    %571 = vmatpush1.msra.mxu0 %v229
    %572 = vmatprep.subr.mxu0 0.0
    %573 = vmatpush1.msra.mxu0 %v230
    %574 = vmatprep.subr.mxu0 0.0
    %575 = vmatpush1.msra.mxu0 %v231
    %576 = vmatprep.subr.mxu0 0.0
    %577 = vmatpush1.msra.mxu0 %v232
    %578 = vmatprep.subr.mxu0 0.0
    %579 = vmatpush1.msra.mxu0 %v233
    %580 = vmatprep.subr.mxu0 0.0
    %581 = vmatpush1.msra.mxu0 %v234
    %582 = vmatprep.subr.mxu0 0.0
    %583 = vmatpush1.msra.mxu0 %v235
    %584 = vmatprep.subr.mxu0 0.0
    %585 = vmatpush1.msra.mxu0 %v236
    %586 = vmatprep.subr.mxu0 0.0
    %587 = vmatpush1.msra.mxu0 %v237
    %588 = vmatprep.subr.mxu0 0.0
    %589 = vmatpush1.msra.mxu0 %v238
    %590 = vmatprep.subr.mxu0 0.0
    %591 = vmatpush1.msra.mxu0 %v239
    %592 = vmatprep.subr.mxu0 0.0
    %593 = vmatpush1.msra.mxu0 %v240
    %594 = vmatprep.subr.mxu0 0.0
    %595 = vmatpush1.msra.mxu0 %v241
    %596 = vmatprep.subr.mxu0 0.0
    %597 = vmatpush1.msra.mxu0 %v242
    %598 = vmatprep.subr.mxu0 0.0
    %599 = vmatpush1.msra.mxu0 %v243
    %600 = vmatprep.subr.mxu0 0.0
    %601 = vmatpush1.msra.mxu0 %v244
    %602 = vmatprep.subr.mxu0 0.0
    %603 = vmatpush1.msra.mxu0 %v245
    %604 = vmatprep.subr.mxu0 0.0
    %605 = vmatpush1.msra.mxu0 %v246
    %606 = vmatprep.subr.mxu0 0.0
    %607 = vmatpush1.msra.mxu0 %v247
    %608 = vmatprep.subr.mxu0 0.0
    %609 = vmatpush1.msra.mxu0 %v248
    %610 = vmatprep.subr.mxu0 0.0
    %611 = vmatpush1.msra.mxu0 %v249
    %612 = vmatprep.mubr.f32.mxu0 %v33
    %613 = vmatmul.mubr.f32.gmra.mrb[0].mxu0 %v32
    %v614 = vpop.f32.mrb[0].mxu0
    %v615 = vadd.f32 %v490, %v614
    %v616 = vpop.f32.mrb[0].mxu0
    %617 = vmatprep.mubr.f32.mxu0 %v46
    %618 = vmatmul.mubr.f32.gmra.mrb[0].mxu0 %v45
    %v619 = vpop.f32.mrb[0].mxu0
    %v620 = vadd.f32 %v495, %v619
    %v621 = vpop.f32.mrb[0].mxu0
    %622 = vmatprep.mubr.f32.mxu0 %v59
    %623 = vmatmul.mubr.f32.gmra.mrb[0].mxu0 %v58
    %v624 = vpop.f32.mrb[0].mxu0
    %v625 = vadd.f32 %v500, %v624
    %v626 = vpop.f32.mrb[0].mxu0
    %627 = vmatprep.mubr.f32.mxu0 %v72
    %628 = vmatmul.mubr.f32.gmra.mrb[0].mxu0 %v71
    %v629 = vpop.f32.mrb[0].mxu0
    %v630 = vadd.f32 %v505, %v629
    %v631 = vpop.f32.mrb[0].mxu0
    %632 = vmatprep.mubr.f32.mxu0 %v85
    %633 = vmatmul.mubr.f32.gmra.mrb[0].mxu0 %v84
    %v634 = vpop.f32.mrb[0].mxu0
    %v635 = vadd.f32 %v510, %v634
    %v636 = vpop.f32.mrb[0].mxu0
    %637 = vmatprep.mubr.f32.mxu0 %v98
    %638 = vmatmul.mubr.f32.gmra.mrb[0].mxu0 %v97
    %v639 = vpop.f32.mrb[0].mxu0
    %v640 = vadd.f32 %v515, %v639
    %v641 = vpop.f32.mrb[0].mxu0
    %642 = vmatprep.mubr.f32.mxu0 %v111
    %643 = vmatmul.mubr.f32.gmra.mrb[0].mxu0 %v110
    %v644 = vpop.f32.mrb[0].mxu0
    %v645 = vadd.f32 %v520, %v644
    %v646 = vpop.f32.mrb[0].mxu0
    %647 = vmatprep.mubr.f32.mxu0 %v124
    %648 = vmatmul.mubr.f32.gmra.mrb[0].mxu0 %v123
    %v649 = vpop.f32.mrb[0].mxu0
    %v650 = vadd.f32 %v525, %v649
    %v651 = vpop.f32.mrb[0].mxu0
    %652 = vmatprep.mubr.f32.mxu0 %v137
    %653 = vmatmul.mubr.f32.gmra.mrb[0].mxu0 %v136
    %v654 = vpop.f32.mrb[0].mxu0
    %v655 = vadd.f32 %v530, %v654
    %v656 = vpop.f32.mrb[0].mxu0
    %657 = vmatprep.mubr.f32.mxu0 %v150
    %658 = vmatmul.mubr.f32.gmra.mrb[0].mxu0 %v149
    %v659 = vpop.f32.mrb[0].mxu0
    %v660 = vadd.f32 %v535, %v659
    %v661 = vpop.f32.mrb[0].mxu0
    %662 = vmatprep.mubr.f32.mxu0 %v163
    %663 = vmatmul.mubr.f32.gmra.mrb[0].mxu0 %v162
    %v664 = vpop.f32.mrb[0].mxu0
    %v665 = vadd.f32 %v540, %v664
    %v666 = vpop.f32.mrb[0].mxu0
    %667 = vmatprep.mubr.f32.mxu0 %v176
    %668 = vmatmul.mubr.f32.gmra.mrb[0].mxu0 %v175
    %v669 = vpop.f32.mrb[0].mxu0
    %v670 = vadd.f32 %v545, %v669
    %v671 = vpop.f32.mrb[0].mxu0
    %672 = vdwg.mxu0
    %673 = vmatprep.subr.mxu0 0.0
    %674 = vmatpush1.msra.mxu0 %v250
    %675 = vmatprep.subr.mxu0 0.0
    %676 = vmatpush1.msra.mxu0 %v251
    %677 = vmatprep.subr.mxu0 0.0
    %678 = vmatpush1.msra.mxu0 %v252
    %679 = vmatprep.subr.mxu0 0.0
    %680 = vmatpush1.msra.mxu0 %v253
    %681 = vmatprep.subr.mxu0 0.0
    %682 = vmatpush1.msra.mxu0 %v254
    %683 = vmatprep.subr.mxu0 0.0
    %684 = vmatpush1.msra.mxu0 %v255
    %685 = vmatprep.subr.mxu0 0.0
    %686 = vmatpush1.msra.mxu0 %v256
    %687 = vmatprep.subr.mxu0 0.0
    %688 = vmatpush1.msra.mxu0 %v257
    %689 = vmatprep.subr.mxu0 0.0
    %690 = vmatpush1.msra.mxu0 %v258
    %691 = vmatprep.subr.mxu0 0.0
    %692 = vmatpush1.msra.mxu0 %v259
    %693 = vmatprep.subr.mxu0 0.0
    %694 = vmatpush1.msra.mxu0 %v260
    %695 = vmatprep.subr.mxu0 0.0
    %696 = vmatpush1.msra.mxu0 %v261
    %697 = vmatprep.subr.mxu0 0.0
    %698 = vmatpush1.msra.mxu0 %v262
    %699 = vmatprep.subr.mxu0 0.0
    %700 = vmatpush1.msra.mxu0 %v263
    %701 = vmatprep.subr.mxu0 0.0
    %702 = vmatpush1.msra.mxu0 %v264
    %703 = vmatprep.subr.mxu0 0.0
    %704 = vmatpush1.msra.mxu0 %v265
    %705 = vmatprep.subr.mxu0 0.0
    %706 = vmatpush1.msra.mxu0 %v266
    %707 = vmatprep.subr.mxu0 0.0
    %708 = vmatpush1.msra.mxu0 %v267
    %709 = vmatprep.subr.mxu0 0.0
    %710 = vmatpush1.msra.mxu0 %v268
    %711 = vmatprep.subr.mxu0 0.0
    %712 = vmatpush1.msra.mxu0 %v269
    %713 = vmatprep.subr.mxu0 0.0
    %714 = vmatpush1.msra.mxu0 %v270
    %715 = vmatprep.subr.mxu0 0.0
    %716 = vmatpush1.msra.mxu0 %v271
    %717 = vmatprep.subr.mxu0 0.0
    %718 = vmatpush1.msra.mxu0 %v272
    %719 = vmatprep.subr.mxu0 0.0
    %720 = vmatpush1.msra.mxu0 %v273
    %721 = vmatprep.subr.mxu0 0.0
    %722 = vmatpush1.msra.mxu0 %v274
    %723 = vmatprep.subr.mxu0 0.0
    %724 = vmatpush1.msra.mxu0 %v275
    %725 = vmatprep.subr.mxu0 0.0
    %726 = vmatpush1.msra.mxu0 %v276
    %727 = vmatprep.subr.mxu0 0.0
    %728 = vmatpush1.msra.mxu0 %v277
    %729 = vmatprep.subr.mxu0 0.0
    %730 = vmatpush1.msra.mxu0 %v278
    %731 = vmatprep.subr.mxu0 0.0
    %732 = vmatpush1.msra.mxu0 %v279
    %733 = vmatprep.subr.mxu0 0.0
    %734 = vmatpush1.msra.mxu0 %v280
    %735 = vmatprep.subr.mxu0 0.0
    %736 = vmatpush1.msra.mxu0 %v281
    %737 = vmatprep.mubr.f32.mxu0 %v35
    %738 = vmatmul.mubr.f32.gmra.mrb[0].mxu0 %v34
    %v739 = vpop.f32.mrb[0].mxu0
    %v740 = vadd.f32 %v615, %v739
    %v741 = vpop.f32.mrb[0].mxu0
    %742 = vmatprep.mubr.f32.mxu0 %v48
    %743 = vmatmul.mubr.f32.gmra.mrb[0].mxu0 %v47
    %v744 = vpop.f32.mrb[0].mxu0
    %v745 = vadd.f32 %v620, %v744
    %v746 = vpop.f32.mrb[0].mxu0
    %747 = vmatprep.mubr.f32.mxu0 %v61
    %748 = vmatmul.mubr.f32.gmra.mrb[0].mxu0 %v60
    %v749 = vpop.f32.mrb[0].mxu0
    %v750 = vadd.f32 %v625, %v749
    %v751 = vpop.f32.mrb[0].mxu0
    %752 = vmatprep.mubr.f32.mxu0 %v74
    %753 = vmatmul.mubr.f32.gmra.mrb[0].mxu0 %v73
    %v754 = vpop.f32.mrb[0].mxu0
    %v755 = vadd.f32 %v630, %v754
    %v756 = vpop.f32.mrb[0].mxu0
    %757 = vmatprep.mubr.f32.mxu0 %v87
    %758 = vmatmul.mubr.f32.gmra.mrb[0].mxu0 %v86
    %v759 = vpop.f32.mrb[0].mxu0
    %v760 = vadd.f32 %v635, %v759
    %v761 = vpop.f32.mrb[0].mxu0
    %762 = vmatprep.mubr.f32.mxu0 %v100
    %763 = vmatmul.mubr.f32.gmra.mrb[0].mxu0 %v99
    %v764 = vpop.f32.mrb[0].mxu0
    %v765 = vadd.f32 %v640, %v764
    %v766 = vpop.f32.mrb[0].mxu0
    %767 = vmatprep.mubr.f32.mxu0 %v113
    %768 = vmatmul.mubr.f32.gmra.mrb[0].mxu0 %v112
    %v769 = vpop.f32.mrb[0].mxu0
    %v770 = vadd.f32 %v645, %v769
    %v771 = vpop.f32.mrb[0].mxu0
    %772 = vmatprep.mubr.f32.mxu0 %v126
    %773 = vmatmul.mubr.f32.gmra.mrb[0].mxu0 %v125
    %v774 = vpop.f32.mrb[0].mxu0
    %v775 = vadd.f32 %v650, %v774
    %v776 = vpop.f32.mrb[0].mxu0
    %777 = vmatprep.mubr.f32.mxu0 %v139
    %778 = vmatmul.mubr.f32.gmra.mrb[0].mxu0 %v138
    %v779 = vpop.f32.mrb[0].mxu0
    %v780 = vadd.f32 %v655, %v779
    %v781 = vpop.f32.mrb[0].mxu0
    %782 = vmatprep.mubr.f32.mxu0 %v152
    %783 = vmatmul.mubr.f32.gmra.mrb[0].mxu0 %v151
    %v784 = vpop.f32.mrb[0].mxu0
    %v785 = vadd.f32 %v660, %v784
    %v786 = vpop.f32.mrb[0].mxu0
    %787 = vmatprep.mubr.f32.mxu0 %v165
    %788 = vmatmul.mubr.f32.gmra.mrb[0].mxu0 %v164
    %v789 = vpop.f32.mrb[0].mxu0
    %v790 = vadd.f32 %v665, %v789
    %v791 = vpop.f32.mrb[0].mxu0
    %792 = vmatprep.mubr.f32.mxu0 %v178
    %793 = vmatmul.mubr.f32.gmra.mrb[0].mxu0 %v177
    %v794 = vpop.f32.mrb[0].mxu0
    %v795 = vadd.f32 %v670, %v794
    %v796 = vpop.f32.mrb[0].mxu0
    %797 = vdwg.mxu0
    %798 = vmatprep.subr.mxu0 0.0
    %799 = vmatpush1.msra.mxu0 %v282
    %800 = vmatprep.subr.mxu0 0.0
    %801 = vmatpush1.msra.mxu0 %v283
    %802 = vmatprep.subr.mxu0 0.0
    %803 = vmatpush1.msra.mxu0 %v284
    %804 = vmatprep.subr.mxu0 0.0
    %805 = vmatpush1.msra.mxu0 %v285
    %806 = vmatprep.subr.mxu0 0.0
    %807 = vmatpush1.msra.mxu0 %v286
    %808 = vmatprep.subr.mxu0 0.0
    %809 = vmatpush1.msra.mxu0 %v287
    %810 = vmatprep.subr.mxu0 0.0
    %811 = vmatpush1.msra.mxu0 %v288
    %812 = vmatprep.subr.mxu0 0.0
    %813 = vmatpush1.msra.mxu0 %v289
    %814 = vmatprep.subr.mxu0 0.0
    %815 = vmatpush1.msra.mxu0 %v290
    %816 = vmatprep.subr.mxu0 0.0
    %817 = vmatpush1.msra.mxu0 %v291
    %818 = vmatprep.subr.mxu0 0.0
    %819 = vmatpush1.msra.mxu0 %v292
    %820 = vmatprep.subr.mxu0 0.0
    %821 = vmatpush1.msra.mxu0 %v293
    %822 = vmatprep.subr.mxu0 0.0
    %823 = vmatpush1.msra.mxu0 %v294
    %824 = vmatprep.subr.mxu0 0.0
    %825 = vmatpush1.msra.mxu0 %v295
    %826 = vmatprep.subr.mxu0 0.0
    %827 = vmatpush1.msra.mxu0 %v296
    %828 = vmatprep.subr.mxu0 0.0
    %829 = vmatpush1.msra.mxu0 %v297
    %830 = vmatprep.subr.mxu0 0.0
    %831 = vmatpush1.msra.mxu0 %v298
    %832 = vmatprep.subr.mxu0 0.0
    %833 = vmatpush1.msra.mxu0 %v299
    %834 = vmatprep.subr.mxu0 0.0
    %835 = vmatpush1.msra.mxu0 %v300
    %836 = vmatprep.subr.mxu0 0.0
    %837 = vmatpush1.msra.mxu0 %v301
    %838 = vmatprep.subr.mxu0 0.0
    %839 = vmatpush1.msra.mxu0 %v302
    %840 = vmatprep.subr.mxu0 0.0
    %841 = vmatpush1.msra.mxu0 %v303
    %842 = vmatprep.subr.mxu0 0.0
    %843 = vmatpush1.msra.mxu0 %v304
    %844 = vmatprep.subr.mxu0 0.0
    %845 = vmatpush1.msra.mxu0 %v305
    %846 = vmatprep.subr.mxu0 0.0
    %847 = vmatpush1.msra.mxu0 %v306
    %848 = vmatprep.subr.mxu0 0.0
    %849 = vmatpush1.msra.mxu0 %v307
    %850 = vmatprep.subr.mxu0 0.0
    %851 = vmatpush1.msra.mxu0 %v308
    %852 = vmatprep.subr.mxu0 0.0
    %853 = vmatpush1.msra.mxu0 %v309
    %854 = vmatprep.subr.mxu0 0.0
    %855 = vmatpush1.msra.mxu0 %v310
    %856 = vmatprep.subr.mxu0 0.0
    %857 = vmatpush1.msra.mxu0 %v311
    %858 = vmatprep.subr.mxu0 0.0
    %859 = vmatpush1.msra.mxu0 %v312
    %860 = vmatprep.subr.mxu0 0.0
    %861 = vmatpush1.msra.mxu0 %v313
    %862 = vmatprep.mubr.f32.mxu0 %v37
    %863 = vmatmul.mubr.f32.gmra.mrb[0].mxu0 %v36
    %v864 = vpop.f32.mrb[0].mxu0
    %v865 = vadd.f32 %v740, %v864
    %v866 = vpop.f32.mrb[0].mxu0
    %867 = vmatprep.mubr.f32.mxu0 %v50
    %868 = vmatmul.mubr.f32.gmra.mrb[0].mxu0 %v49
    %v869 = vpop.f32.mrb[0].mxu0
    %v870 = vadd.f32 %v745, %v869
    %v871 = vpop.f32.mrb[0].mxu0
    %872 = vmatprep.mubr.f32.mxu0 %v63
    %873 = vmatmul.mubr.f32.gmra.mrb[0].mxu0 %v62
    %v874 = vpop.f32.mrb[0].mxu0
    %v875 = vadd.f32 %v750, %v874
    %v876 = vpop.f32.mrb[0].mxu0
    %877 = vmatprep.mubr.f32.mxu0 %v76
    %878 = vmatmul.mubr.f32.gmra.mrb[0].mxu0 %v75
    %v879 = vpop.f32.mrb[0].mxu0
    %v880 = vadd.f32 %v755, %v879
    %v881 = vpop.f32.mrb[0].mxu0
    %882 = vmatprep.mubr.f32.mxu0 %v89
    %883 = vmatmul.mubr.f32.gmra.mrb[0].mxu0 %v88
    %v884 = vpop.f32.mrb[0].mxu0
    %v885 = vadd.f32 %v760, %v884
    %v886 = vpop.f32.mrb[0].mxu0
    %887 = vmatprep.mubr.f32.mxu0 %v102
    %888 = vmatmul.mubr.f32.gmra.mrb[0].mxu0 %v101
    %v889 = vpop.f32.mrb[0].mxu0
    %v890 = vadd.f32 %v765, %v889
    %v891 = vpop.f32.mrb[0].mxu0
    %892 = vmatprep.mubr.f32.mxu0 %v115
    %893 = vmatmul.mubr.f32.gmra.mrb[0].mxu0 %v114
    %v894 = vpop.f32.mrb[0].mxu0
    %v895 = vadd.f32 %v770, %v894
    %v896 = vpop.f32.mrb[0].mxu0
    %897 = vmatprep.mubr.f32.mxu0 %v128
    %898 = vmatmul.mubr.f32.gmra.mrb[0].mxu0 %v127
    %v899 = vpop.f32.mrb[0].mxu0
    %v900 = vadd.f32 %v775, %v899
    %v901 = vpop.f32.mrb[0].mxu0
    %902 = vmatprep.mubr.f32.mxu0 %v141
    %903 = vmatmul.mubr.f32.gmra.mrb[0].mxu0 %v140
    %v904 = vpop.f32.mrb[0].mxu0
    %v905 = vadd.f32 %v780, %v904
    %v906 = vpop.f32.mrb[0].mxu0
    %907 = vmatprep.mubr.f32.mxu0 %v154
    %908 = vmatmul.mubr.f32.gmra.mrb[0].mxu0 %v153
    %v909 = vpop.f32.mrb[0].mxu0
    %v910 = vadd.f32 %v785, %v909
    %v911 = vpop.f32.mrb[0].mxu0
    %912 = vmatprep.mubr.f32.mxu0 %v167
    %913 = vmatmul.mubr.f32.gmra.mrb[0].mxu0 %v166
    %v914 = vpop.f32.mrb[0].mxu0
    %v915 = vadd.f32 %v790, %v914
    %v916 = vpop.f32.mrb[0].mxu0
    %917 = vmatprep.mubr.f32.mxu0 %v180
    %918 = vmatmul.mubr.f32.gmra.mrb[0].mxu0 %v179
    %v919 = vpop.f32.mrb[0].mxu0
    %v920 = vadd.f32 %v795, %v919
    %v921 = vpop.f32.mrb[0].mxu0
    %922 = vdwg.mxu0
    %923 = vmatprep.subr.mxu0 0.0
    %924 = vmatpush1.msra.mxu0 %v314
    %925 = vmatprep.subr.mxu0 0.0
    %926 = vmatpush1.msra.mxu0 %v315
    %927 = vmatprep.subr.mxu0 0.0
    %928 = vmatpush1.msra.mxu0 %v316
    %929 = vmatprep.subr.mxu0 0.0
    %930 = vmatpush1.msra.mxu0 %v317
    %931 = vmatprep.subr.mxu0 0.0
    %932 = vmatpush1.msra.mxu0 %v318
    %933 = vmatprep.subr.mxu0 0.0
    %934 = vmatpush1.msra.mxu0 %v319
    %935 = vmatprep.subr.mxu0 0.0
    %936 = vmatpush1.msra.mxu0 %v320
    %937 = vmatprep.subr.mxu0 0.0
    %938 = vmatpush1.msra.mxu0 %v321
    %939 = vmatprep.subr.mxu0 0.0
    %940 = vmatpush1.msra.mxu0 %v322
    %941 = vmatprep.subr.mxu0 0.0
    %942 = vmatpush1.msra.mxu0 %v323
    %943 = vmatprep.subr.mxu0 0.0
    %944 = vmatpush1.msra.mxu0 %v324
    %945 = vmatprep.subr.mxu0 0.0
    %946 = vmatpush1.msra.mxu0 %v325
    %947 = vmatprep.subr.mxu0 0.0
    %948 = vmatpush1.msra.mxu0 %v326
    %949 = vmatprep.subr.mxu0 0.0
    %950 = vmatpush1.msra.mxu0 %v327
    %951 = vmatprep.subr.mxu0 0.0
    %952 = vmatpush1.msra.mxu0 %v328
    %953 = vmatprep.subr.mxu0 0.0
    %954 = vmatpush1.msra.mxu0 %v329
    %955 = vmatprep.subr.mxu0 0.0
    %956 = vmatpush1.msra.mxu0 %v330
    %957 = vmatprep.subr.mxu0 0.0
    %958 = vmatpush1.msra.mxu0 %v331
    %959 = vmatprep.subr.mxu0 0.0
    %960 = vmatpush1.msra.mxu0 %v332
    %961 = vmatprep.subr.mxu0 0.0
    %962 = vmatpush1.msra.mxu0 %v333
    %963 = vmatprep.subr.mxu0 0.0
    %964 = vmatpush1.msra.mxu0 %v334
    %965 = vmatprep.subr.mxu0 0.0
    %966 = vmatpush1.msra.mxu0 %v335
    %967 = vmatprep.subr.mxu0 0.0
    %968 = vmatpush1.msra.mxu0 %v336
    %969 = vmatprep.subr.mxu0 0.0
    %970 = vmatpush1.msra.mxu0 %v337
    %971 = vmatprep.subr.mxu0 0.0
    %972 = vmatpush1.msra.mxu0 %v338
    %973 = vmatprep.subr.mxu0 0.0
    %974 = vmatpush1.msra.mxu0 %v339
    %975 = vmatprep.subr.mxu0 0.0
    %976 = vmatpush1.msra.mxu0 %v340
    %977 = vmatprep.subr.mxu0 0.0
    %978 = vmatpush1.msra.mxu0 %v341
    %979 = vmatprep.subr.mxu0 0.0
    %980 = vmatpush1.msra.mxu0 %v342
    %981 = vmatprep.subr.mxu0 0.0
    %982 = vmatpush1.msra.mxu0 %v343
    %983 = vmatprep.subr.mxu0 0.0
    %984 = vmatpush1.msra.mxu0 %v344
    %985 = vmatprep.subr.mxu0 0.0
    %986 = vmatpush1.msra.mxu0 %v345
    %987 = vmatprep.mubr.f32.mxu0 %v39
    %988 = vmatmul.mubr.f32.gmra.mrb[0].mxu0 %v38
    %v989 = vpop.f32.mrb[0].mxu0
    %v990 = vadd.f32 %v865, %v989
    %v991 = vpop.f32.mrb[0].mxu0
    %992 = vmatprep.mubr.f32.mxu0 %v52
    %993 = vmatmul.mubr.f32.gmra.mrb[0].mxu0 %v51
    %v994 = vpop.f32.mrb[0].mxu0
    %v995 = vadd.f32 %v870, %v994
    %v996 = vpop.f32.mrb[0].mxu0
    %997 = vmatprep.mubr.f32.mxu0 %v65
    %998 = vmatmul.mubr.f32.gmra.mrb[0].mxu0 %v64
    %v999 = vpop.f32.mrb[0].mxu0
    %v1000 = vadd.f32 %v875, %v999
    %v1001 = vpop.f32.mrb[0].mxu0
    %1002 = vmatprep.mubr.f32.mxu0 %v78
    %1003 = vmatmul.mubr.f32.gmra.mrb[0].mxu0 %v77
    %v1004 = vpop.f32.mrb[0].mxu0
    %v1005 = vadd.f32 %v880, %v1004
    %v1006 = vpop.f32.mrb[0].mxu0
    %1007 = vmatprep.mubr.f32.mxu0 %v91
    %1008 = vmatmul.mubr.f32.gmra.mrb[0].mxu0 %v90
    %v1009 = vpop.f32.mrb[0].mxu0
    %v1010 = vadd.f32 %v885, %v1009
    %v1011 = vpop.f32.mrb[0].mxu0
    %1012 = vmatprep.mubr.f32.mxu0 %v104
    %1013 = vmatmul.mubr.f32.gmra.mrb[0].mxu0 %v103
    %v1014 = vpop.f32.mrb[0].mxu0
    %v1015 = vadd.f32 %v890, %v1014
    %v1016 = vpop.f32.mrb[0].mxu0
    %1017 = vmatprep.mubr.f32.mxu0 %v117
    %1018 = vmatmul.mubr.f32.gmra.mrb[0].mxu0 %v116
    %v1019 = vpop.f32.mrb[0].mxu0
    %v1020 = vadd.f32 %v895, %v1019
    %v1021 = vpop.f32.mrb[0].mxu0
    %1022 = vmatprep.mubr.f32.mxu0 %v130
    %1023 = vmatmul.mubr.f32.gmra.mrb[0].mxu0 %v129
    %v1024 = vpop.f32.mrb[0].mxu0
    %v1025 = vadd.f32 %v900, %v1024
    %v1026 = vpop.f32.mrb[0].mxu0
    %1027 = vmatprep.mubr.f32.mxu0 %v143
    %1028 = vmatmul.mubr.f32.gmra.mrb[0].mxu0 %v142
    %v1029 = vpop.f32.mrb[0].mxu0
    %v1030 = vadd.f32 %v905, %v1029
    %v1031 = vpop.f32.mrb[0].mxu0
    %1032 = vmatprep.mubr.f32.mxu0 %v156
    %1033 = vmatmul.mubr.f32.gmra.mrb[0].mxu0 %v155
    %v1034 = vpop.f32.mrb[0].mxu0
    %v1035 = vadd.f32 %v910, %v1034
    %v1036 = vpop.f32.mrb[0].mxu0
    %1037 = vmatprep.mubr.f32.mxu0 %v169
    %1038 = vmatmul.mubr.f32.gmra.mrb[0].mxu0 %v168
    %v1039 = vpop.f32.mrb[0].mxu0
    %v1040 = vadd.f32 %v915, %v1039
    %v1041 = vpop.f32.mrb[0].mxu0
    %1042 = vmatprep.mubr.f32.mxu0 %v182
    %1043 = vmatmul.mubr.f32.gmra.mrb[0].mxu0 %v181
    %v1044 = vpop.f32.mrb[0].mxu0
    %v1045 = vadd.f32 %v920, %v1044
    %v1046 = vpop.f32.mrb[0].mxu0
    %1047 = vdwg.mxu0
    %1048 = vmatprep.subr.mxu0 0.0
    %1049 = vmatpush1.msra.mxu0 %v346
    %1050 = vmatprep.subr.mxu0 0.0
    %1051 = vmatpush1.msra.mxu0 %v347
    %1052 = vmatprep.subr.mxu0 0.0
    %1053 = vmatpush1.msra.mxu0 %v348
    %1054 = vmatprep.subr.mxu0 0.0
    %1055 = vmatpush1.msra.mxu0 %v349
    %1056 = vmatprep.subr.mxu0 0.0
    %1057 = vmatpush1.msra.mxu0 %v350
    %1058 = vmatprep.subr.mxu0 0.0
    %1059 = vmatpush1.msra.mxu0 %v351
    %1060 = vmatprep.subr.mxu0 0.0
    %1061 = vmatpush1.msra.mxu0 %v352
    %1062 = vmatprep.subr.mxu0 0.0
    %1063 = vmatpush1.msra.mxu0 %v353
    %1064 = vmatprep.subr.mxu0 0.0
    %1065 = vmatpush1.msra.mxu0 %v354
    %1066 = vmatprep.subr.mxu0 0.0
    %1067 = vmatpush1.msra.mxu0 %v355
    %1068 = vmatprep.subr.mxu0 0.0
    %1069 = vmatpush1.msra.mxu0 %v356
    %1070 = vmatprep.subr.mxu0 0.0
    %1071 = vmatpush1.msra.mxu0 %v357
    %1072 = vmatprep.subr.mxu0 0.0
    %1073 = vmatpush1.msra.mxu0 %v358
    %1074 = vmatprep.subr.mxu0 0.0
    %1075 = vmatpush1.msra.mxu0 %v359
    %1076 = vmatprep.subr.mxu0 0.0
    %1077 = vmatpush1.msra.mxu0 %v360
    %1078 = vmatprep.subr.mxu0 0.0
    %1079 = vmatpush1.msra.mxu0 %v361
    %1080 = vmatprep.subr.mxu0 0.0
    %1081 = vmatpush1.msra.mxu0 %v362
    %1082 = vmatprep.subr.mxu0 0.0
    %1083 = vmatpush1.msra.mxu0 %v363
    %1084 = vmatprep.subr.mxu0 0.0
    %1085 = vmatpush1.msra.mxu0 %v364
    %1086 = vmatprep.subr.mxu0 0.0
    %1087 = vmatpush1.msra.mxu0 %v365
    %1088 = vmatprep.subr.mxu0 0.0
    %1089 = vmatpush1.msra.mxu0 %v366
    %1090 = vmatprep.subr.mxu0 0.0
    %1091 = vmatpush1.msra.mxu0 %v367
    %1092 = vmatprep.subr.mxu0 0.0
    %1093 = vmatpush1.msra.mxu0 %v368
    %1094 = vmatprep.subr.mxu0 0.0
    %1095 = vmatpush1.msra.mxu0 %v369
    %1096 = vmatprep.subr.mxu0 0.0
    %1097 = vmatpush1.msra.mxu0 %v370
    %1098 = vmatprep.subr.mxu0 0.0
    %1099 = vmatpush1.msra.mxu0 %v371
    %1100 = vmatprep.subr.mxu0 0.0
    %1101 = vmatpush1.msra.mxu0 %v372
    %1102 = vmatprep.subr.mxu0 0.0
    %1103 = vmatpush1.msra.mxu0 %v373
    %1104 = vmatprep.subr.mxu0 0.0
    %1105 = vmatpush1.msra.mxu0 %v374
    %1106 = vmatprep.subr.mxu0 0.0
    %1107 = vmatpush1.msra.mxu0 %v375
    %1108 = vmatprep.subr.mxu0 0.0
    %1109 = vmatpush1.msra.mxu0 %v376
    %1110 = vmatprep.subr.mxu0 0.0
    %1111 = vmatpush1.msra.mxu0 %v377
    %1112 = vmatprep.mubr.f32.mxu0 %v41
    %1113 = vmatmul.mubr.f32.gmra.mrb[0].mxu0 %v40
    %v1114 = vpop.f32.mrb[0].mxu0
    %v1115 = vadd.f32 %v990, %v1114
    %v1116 = vpop.f32.mrb[0].mxu0
    %1117 = vmatprep.mubr.f32.mxu0 %v54
    %1118 = vmatmul.mubr.f32.gmra.mrb[0].mxu0 %v53
    %v1119 = vpop.f32.mrb[0].mxu0
    %v1120 = vadd.f32 %v995, %v1119
    %v1121 = vpop.f32.mrb[0].mxu0
    %1122 = vmatprep.mubr.f32.mxu0 %v67
    %1123 = vmatmul.mubr.f32.gmra.mrb[0].mxu0 %v66
    %v1124 = vpop.f32.mrb[0].mxu0
    %v1125 = vadd.f32 %v1000, %v1124
    %v1126 = vpop.f32.mrb[0].mxu0
    %1127 = vmatprep.mubr.f32.mxu0 %v80
    %1128 = vmatmul.mubr.f32.gmra.mrb[0].mxu0 %v79
    %v1129 = vpop.f32.mrb[0].mxu0
    %v1130 = vadd.f32 %v1005, %v1129
    %v1131 = vpop.f32.mrb[0].mxu0
    %1132 = vmatprep.mubr.f32.mxu0 %v93
    %1133 = vmatmul.mubr.f32.gmra.mrb[0].mxu0 %v92
    %v1134 = vpop.f32.mrb[0].mxu0
    %v1135 = vadd.f32 %v1010, %v1134
    %v1136 = vpop.f32.mrb[0].mxu0
    %1137 = vmatprep.mubr.f32.mxu0 %v106
    %1138 = vmatmul.mubr.f32.gmra.mrb[0].mxu0 %v105
    %v1139 = vpop.f32.mrb[0].mxu0
    %v1140 = vadd.f32 %v1015, %v1139
    %v1141 = vpop.f32.mrb[0].mxu0
    %1142 = vmatprep.mubr.f32.mxu0 %v119
    %1143 = vmatmul.mubr.f32.gmra.mrb[0].mxu0 %v118
    %v1144 = vpop.f32.mrb[0].mxu0
    %v1145 = vadd.f32 %v1020, %v1144
    %v1146 = vpop.f32.mrb[0].mxu0
    %1147 = vmatprep.mubr.f32.mxu0 %v132
    %1148 = vmatmul.mubr.f32.gmra.mrb[0].mxu0 %v131
    %v1149 = vpop.f32.mrb[0].mxu0
    %v1150 = vadd.f32 %v1025, %v1149
    %v1151 = vpop.f32.mrb[0].mxu0
    %1152 = vmatprep.mubr.f32.mxu0 %v145
    %1153 = vmatmul.mubr.f32.gmra.mrb[0].mxu0 %v144
    %v1154 = vpop.f32.mrb[0].mxu0
    %v1155 = vadd.f32 %v1030, %v1154
    %v1156 = vpop.f32.mrb[0].mxu0
    %1157 = vmatprep.mubr.f32.mxu0 %v158
    %1158 = vmatmul.mubr.f32.gmra.mrb[0].mxu0 %v157
    %v1159 = vpop.f32.mrb[0].mxu0
    %v1160 = vadd.f32 %v1035, %v1159
    %v1161 = vpop.f32.mrb[0].mxu0
    %1162 = vmatprep.mubr.f32.mxu0 %v171
    %1163 = vmatmul.mubr.f32.gmra.mrb[0].mxu0 %v170
    %v1164 = vpop.f32.mrb[0].mxu0
    %v1165 = vadd.f32 %v1040, %v1164
    %v1166 = vpop.f32.mrb[0].mxu0
    %1167 = vmatprep.mubr.f32.mxu0 %v184
    %1168 = vmatmul.mubr.f32.gmra.mrb[0].mxu0 %v183
    %v1169 = vpop.f32.mrb[0].mxu0
    %v1170 = vadd.f32 %v1045, %v1169
    %v1171 = vpop.f32.mrb[0].mxu0
    %1172 = vdwg.mxu0
    %1173 = vmatprep.subr.mxu0 0.0
    %1174 = vmatpush1.msra.mxu0 %v378
    %1175 = vmatprep.subr.mxu0 0.0
    %1176 = vmatpush1.msra.mxu0 %v379
    %1177 = vmatprep.subr.mxu0 0.0
    %1178 = vmatpush1.msra.mxu0 %v380
    %1179 = vmatprep.subr.mxu0 0.0
    %1180 = vmatpush1.msra.mxu0 %v381
    %1181 = vmatprep.subr.mxu0 0.0
    %1182 = vmatpush1.msra.mxu0 %v382
    %1183 = vmatprep.subr.mxu0 0.0
    %1184 = vmatpush1.msra.mxu0 %v383
    %1185 = vmatprep.subr.mxu0 0.0
    %1186 = vmatpush1.msra.mxu0 %v384
    %1187 = vmatprep.subr.mxu0 0.0
    %1188 = vmatpush1.msra.mxu0 %v385
    %1189 = vmatprep.subr.mxu0 0.0
    %1190 = vmatpush1.msra.mxu0 0.0
    %1191 = vmatprep.subr.mxu0 0.0
    %1192 = vmatpush1.msra.mxu0 0.0
    %1193 = vmatprep.subr.mxu0 0.0
    %1194 = vmatpush1.msra.mxu0 0.0
    %1195 = vmatprep.subr.mxu0 0.0
    %1196 = vmatpush1.msra.mxu0 0.0
    %1197 = vmatprep.subr.mxu0 0.0
    %1198 = vmatpush1.msra.mxu0 0.0
    %1199 = vmatprep.subr.mxu0 0.0
    %1200 = vmatpush1.msra.mxu0 0.0
    %1201 = vmatprep.subr.mxu0 0.0
    %1202 = vmatpush1.msra.mxu0 0.0
    %1203 = vmatprep.subr.mxu0 0.0
    %1204 = vmatpush1.msra.mxu0 0.0
    %1205 = vmatprep.subr.mxu0 0.0
    %1206 = vmatpush1.msra.mxu0 0.0
    %1207 = vmatprep.subr.mxu0 0.0
    %1208 = vmatpush1.msra.mxu0 0.0
    %1209 = vmatprep.subr.mxu0 0.0
    %1210 = vmatpush1.msra.mxu0 0.0
    %1211 = vmatprep.subr.mxu0 0.0
    %1212 = vmatpush1.msra.mxu0 0.0
    %1213 = vmatprep.subr.mxu0 0.0
    %1214 = vmatpush1.msra.mxu0 0.0
    %1215 = vmatprep.subr.mxu0 0.0
    %1216 = vmatpush1.msra.mxu0 0.0
    %1217 = vmatprep.subr.mxu0 0.0
    %1218 = vmatpush1.msra.mxu0 0.0
    %1219 = vmatprep.subr.mxu0 0.0
    %1220 = vmatpush1.msra.mxu0 0.0
    %1221 = vmatprep.subr.mxu0 0.0
    %1222 = vmatpush1.msra.mxu0 0.0
    %1223 = vmatprep.subr.mxu0 0.0
    %1224 = vmatpush1.msra.mxu0 0.0
    %1225 = vmatprep.subr.mxu0 0.0
    %1226 = vmatpush1.msra.mxu0 0.0
    %1227 = vmatprep.subr.mxu0 0.0
    %1228 = vmatpush1.msra.mxu0 0.0
    %1229 = vmatprep.subr.mxu0 0.0
    %1230 = vmatpush1.msra.mxu0 0.0
    %1231 = vmatprep.subr.mxu0 0.0
    %1232 = vmatpush1.msra.mxu0 0.0
    %1233 = vmatprep.subr.mxu0 0.0
    %1234 = vmatpush1.msra.mxu0 0.0
    %1235 = vmatprep.subr.mxu0 0.0
    %1236 = vmatpush1.msra.mxu0 0.0
    %1237 = vmatprep.mubr.f32.mxu0 0.0
    %1238 = vmatmul.mubr.f32.gmra.mrb[0].mxu0 %v388
    %v1239 = vpop.f32.mrb[0].mxu0
    %v1240 = vadd.f32 %v1115, %v1239
    %v1241 = vpop.f32.mrb[0].mxu0
    %1242 = vmatprep.mubr.f32.mxu0 0.0
    %1243 = vmatmul.mubr.f32.gmra.mrb[0].mxu0 %v391
    %v1244 = vpop.f32.mrb[0].mxu0
    %v1245 = vadd.f32 %v1120, %v1244
    %v1246 = vpop.f32.mrb[0].mxu0
    %1247 = vmatprep.mubr.f32.mxu0 0.0
    %1248 = vmatmul.mubr.f32.gmra.mrb[0].mxu0 %v394
    %v1249 = vpop.f32.mrb[0].mxu0
    %v1250 = vadd.f32 %v1125, %v1249
    %v1251 = vpop.f32.mrb[0].mxu0
    %1252 = vmatprep.mubr.f32.mxu0 0.0
    %1253 = vmatmul.mubr.f32.gmra.mrb[0].mxu0 %v397
    %v1254 = vpop.f32.mrb[0].mxu0
    %v1255 = vadd.f32 %v1130, %v1254
    %v1256 = vpop.f32.mrb[0].mxu0
    %1257 = vmatprep.mubr.f32.mxu0 0.0
    %1258 = vmatmul.mubr.f32.gmra.mrb[0].mxu0 %v400
    %v1259 = vpop.f32.mrb[0].mxu0
    %v1260 = vadd.f32 %v1135, %v1259
    %v1261 = vpop.f32.mrb[0].mxu0
    %1262 = vmatprep.mubr.f32.mxu0 0.0
    %1263 = vmatmul.mubr.f32.gmra.mrb[0].mxu0 %v403
    %v1264 = vpop.f32.mrb[0].mxu0
    %v1265 = vadd.f32 %v1140, %v1264
    %v1266 = vpop.f32.mrb[0].mxu0
    %1267 = vmatprep.mubr.f32.mxu0 0.0
    %1268 = vmatmul.mubr.f32.gmra.mrb[0].mxu0 %v406
    %v1269 = vpop.f32.mrb[0].mxu0
    %v1270 = vadd.f32 %v1145, %v1269
    %v1271 = vpop.f32.mrb[0].mxu0
    %1272 = vmatprep.mubr.f32.mxu0 0.0
    %1273 = vmatmul.mubr.f32.gmra.mrb[0].mxu0 %v409
    %v1274 = vpop.f32.mrb[0].mxu0
    %v1275 = vadd.f32 %v1150, %v1274
    %v1276 = vpop.f32.mrb[0].mxu0
    %1277 = vmatprep.mubr.f32.mxu0 0.0
    %1278 = vmatmul.mubr.f32.gmra.mrb[0].mxu0 %v412
    %v1279 = vpop.f32.mrb[0].mxu0
    %v1280 = vadd.f32 %v1155, %v1279
    %v1281 = vpop.f32.mrb[0].mxu0
    %1282 = vmatprep.mubr.f32.mxu0 0.0
    %1283 = vmatmul.mubr.f32.gmra.mrb[0].mxu0 %v415
    %v1284 = vpop.f32.mrb[0].mxu0
    %v1285 = vadd.f32 %v1160, %v1284
    %v1286 = vpop.f32.mrb[0].mxu0
    %1287 = vmatprep.mubr.f32.mxu0 0.0
    %1288 = vmatmul.mubr.f32.gmra.mrb[0].mxu0 %v418
    %v1289 = vpop.f32.mrb[0].mxu0
    %v1290 = vadd.f32 %v1165, %v1289
    %v1291 = vpop.f32.mrb[0].mxu0
    %1292 = vmatprep.mubr.f32.mxu0 0.0
    %1293 = vmatmul.mubr.f32.gmra.mrb[0].mxu0 %v421
    %v1294 = vpop.f32.mrb[0].mxu0
    %v1295 = vadd.f32 %v1170, %v1294
    %v1296 = vpop.f32.mrb[0].mxu0
    %1297 = vdwg.mxu0
    %v1298 = vmax.f32 %v1240, %v1255
    %v1299 = vmax.f32 %v1245, %v1260
    %v1300 = vmax.f32 %v1250, %v1265
    %v1301 = vmax.f32 %v1270, %v1285
    %v1302 = vmax.f32 %v1275, %v1290
    %v1303 = vmax.f32 %v1280, %v1295
    %v1304 = vmax.f32 %v1298, %v1301
    %v1305 = vmax.f32 %v1299, %v1302
    %v1306 = vmax.f32 %v1300, %v1303
    %v1307 = vld [vmem:[%s2] sm:$0x1]
    %v1309 = vlaneseq
    %v1310 = vshrl.u32 %v1309, 7
    %v1311 = vsub.s32 0, %v1310
    %v1312 = vrot.slane %v1307, %v1311
    %v1314 = vadd.f32 %v1304, %v1312
    %v1315 = vadd.f32 %v1305, %v1312
    %v1316 = vadd.f32 %v1306, %v1312
    %vm1317 = vcmp.gt.f32.partialorder %v1314, 0.0
    %vm1318 = vcmp.gt.f32.partialorder %v1315, 0.0
    %vm1319 = vcmp.gt.f32.partialorder %v1316, 0.0
    %v1320 = vmul.f32 %v1314, 0.01
    %v1321 = vmul.f32 %v1315, 0.01
    %v1322 = vmul.f32 %v1316, 0.01
    %v1323 = vsel %vm1317, %v1314, %v1320
    %v1324 = vsel %vm1318, %v1315, %v1321
    %v1325 = vsel %vm1319, %v1316, %v1322
    %v1326 = vld [vmem:[%s3] sm:$0xff]
    %v1327 = vld [vmem:[%s3 + $0x8] sm:$0xff]
    %v1328 = vld [vmem:[%s3 + $0x10] sm:$0xff]
    %v1329 = vld [vmem:[%s3 + $0x18] sm:$0xff]
    %v1330 = vld [vmem:[%s3 + $0x20] sm:$0xff]
    %v1331 = vld [vmem:[%s3 + $0x28] sm:$0xff]
    %v1332 = vld [vmem:[%s3 + $0x30] sm:$0xff]
    %v1333 = vld [vmem:[%s3 + $0x38] sm:$0xff]
    %v1334 = vld [vmem:[%s3 + $0x40] sm:$0xff]
    %vm1335 = vcmask 195584
    %v1337 = vsel %vm1335, %v1326, 0
    %v1340 = vsel %vm1335, %v1327, 0
    %v1343 = vsel %vm1335, %v1328, 0
    %v1346 = vsel %vm1335, %v1329, 0
    %v1349 = vsel %vm1335, %v1330, 0
    %v1352 = vsel %vm1335, %v1331, 0
    %v1355 = vsel %vm1335, %v1332, 0
    %v1358 = vsel %vm1335, %v1333, 0
    %v1361 = vsel %vm1335, %v1334, 0
    %1363 = vmatprep.subr.mxu0 0.0
    %1364 = vmatpush1.msra.mxu0 %v1323
    %1365 = vmatprep.subr.mxu0 0.0
    %1366 = vmatpush1.msra.mxu0 %v1324
    %1367 = vmatprep.subr.mxu0 0.0
    %1368 = vmatpush1.msra.mxu0 %v1325
    %1369 = vmatprep.subr.mxu0 0.0
    %1370 = vmatpush1.msra.mxu0 0.0
    %1371 = vmatprep.subr.mxu0 0.0
    %1372 = vmatpush1.msra.mxu0 0.0
    %1373 = vmatprep.subr.mxu0 0.0
    %1374 = vmatpush1.msra.mxu0 0.0
    %1375 = vmatprep.subr.mxu0 0.0
    %1376 = vmatpush1.msra.mxu0 0.0
    %1377 = vmatprep.subr.mxu0 0.0
    %1378 = vmatpush1.msra.mxu0 0.0
    %1379 = vmatprep.subr.mxu0 0.0
    %1380 = vmatpush1.msra.mxu0 0.0
    %1381 = vmatprep.subr.mxu0 0.0
    %1382 = vmatpush1.msra.mxu0 0.0
    %1383 = vmatprep.subr.mxu0 0.0
    %1384 = vmatpush1.msra.mxu0 0.0
    %1385 = vmatprep.subr.mxu0 0.0
    %1386 = vmatpush1.msra.mxu0 0.0
    %1387 = vmatprep.subr.mxu0 0.0
    %1388 = vmatpush1.msra.mxu0 0.0
    %1389 = vmatprep.subr.mxu0 0.0
    %1390 = vmatpush1.msra.mxu0 0.0
    %1391 = vmatprep.subr.mxu0 0.0
    %1392 = vmatpush1.msra.mxu0 0.0
    %1393 = vmatprep.subr.mxu0 0.0
    %1394 = vmatpush1.msra.mxu0 0.0
    %1395 = vmatprep.subr.mxu0 0.0
    %1396 = vmatpush1.msra.mxu0 0.0
    %1397 = vmatprep.subr.mxu0 0.0
    %1398 = vmatpush1.msra.mxu0 0.0
    %1399 = vmatprep.subr.mxu0 0.0
    %1400 = vmatpush1.msra.mxu0 0.0
    %1401 = vmatprep.subr.mxu0 0.0
    %1402 = vmatpush1.msra.mxu0 0.0
    %1403 = vmatprep.subr.mxu0 0.0
    %1404 = vmatpush1.msra.mxu0 0.0
    %1405 = vmatprep.subr.mxu0 0.0
    %1406 = vmatpush1.msra.mxu0 0.0
    %1407 = vmatprep.subr.mxu0 0.0
    %1408 = vmatpush1.msra.mxu0 0.0
    %1409 = vmatprep.subr.mxu0 0.0
    %1410 = vmatpush1.msra.mxu0 0.0
    %1411 = vmatprep.subr.mxu0 0.0
    %1412 = vmatpush1.msra.mxu0 0.0
    %1413 = vmatprep.subr.mxu0 0.0
    %1414 = vmatpush1.msra.mxu0 0.0
    %1415 = vmatprep.subr.mxu0 0.0
    %1416 = vmatpush1.msra.mxu0 0.0
    %1417 = vmatprep.subr.mxu0 0.0
    %1418 = vmatpush1.msra.mxu0 0.0
    %1419 = vmatprep.subr.mxu0 0.0
    %1420 = vmatpush1.msra.mxu0 0.0
    %1421 = vmatprep.subr.mxu0 0.0
    %1422 = vmatpush1.msra.mxu0 0.0
    %1423 = vmatprep.subr.mxu0 0.0
    %1424 = vmatpush1.msra.mxu0 0.0
    %1425 = vmatprep.subr.mxu0 0.0
    %1426 = vmatpush1.msra.mxu0 0.0
    %1427 = vmatprep.mubr.f32.mxu0 0.0
    %1428 = vmatmul.mubr.f32.gmra.mrb[0].mxu0 %v1337
    %v1429 = vpop.f32.mrb[0].mxu0
    %v1430 = vadd.f32 0.0, %v1429
    %v1431 = vpop.f32.mrb[0].mxu0
    %1432 = vmatprep.mubr.f32.mxu0 0.0
    %1433 = vmatmul.mubr.f32.gmra.mrb[0].mxu0 %v1340
    %v1434 = vpop.f32.mrb[0].mxu0
    %v1435 = vadd.f32 0.0, %v1434
    %v1436 = vpop.f32.mrb[0].mxu0
    %1437 = vmatprep.mubr.f32.mxu0 0.0
    %1438 = vmatmul.mubr.f32.gmra.mrb[0].mxu0 %v1343
    %v1439 = vpop.f32.mrb[0].mxu0
    %v1440 = vadd.f32 0.0, %v1439
    %v1441 = vpop.f32.mrb[0].mxu0
    %1442 = vmatprep.mubr.f32.mxu0 0.0
    %1443 = vmatmul.mubr.f32.gmra.mrb[0].mxu0 %v1346
    %v1444 = vpop.f32.mrb[0].mxu0
    %v1445 = vadd.f32 0.0, %v1444
    %v1446 = vpop.f32.mrb[0].mxu0
    %1447 = vmatprep.mubr.f32.mxu0 0.0
    %1448 = vmatmul.mubr.f32.gmra.mrb[0].mxu0 %v1349
    %v1449 = vpop.f32.mrb[0].mxu0
    %v1450 = vadd.f32 0.0, %v1449
    %v1451 = vpop.f32.mrb[0].mxu0
    %1452 = vmatprep.mubr.f32.mxu0 0.0
    %1453 = vmatmul.mubr.f32.gmra.mrb[0].mxu0 %v1352
    %v1454 = vpop.f32.mrb[0].mxu0
    %v1455 = vadd.f32 0.0, %v1454
    %v1456 = vpop.f32.mrb[0].mxu0
    %1457 = vmatprep.mubr.f32.mxu0 0.0
    %1458 = vmatmul.mubr.f32.gmra.mrb[0].mxu0 %v1355
    %v1459 = vpop.f32.mrb[0].mxu0
    %v1460 = vadd.f32 0.0, %v1459
    %v1461 = vpop.f32.mrb[0].mxu0
    %1462 = vmatprep.mubr.f32.mxu0 0.0
    %1463 = vmatmul.mubr.f32.gmra.mrb[0].mxu0 %v1358
    %v1464 = vpop.f32.mrb[0].mxu0
    %v1465 = vadd.f32 0.0, %v1464
    %v1466 = vpop.f32.mrb[0].mxu0
    %1467 = vmatprep.mubr.f32.mxu0 0.0
    %1468 = vmatmul.mubr.f32.gmra.mrb[0].mxu0 %v1361
    %v1469 = vpop.f32.mrb[0].mxu0
    %v1470 = vadd.f32 0.0, %v1469
    %v1471 = vpop.f32.mrb[0].mxu0
    %1472 = vdwg.mxu0
    %v1473 = vld [vmem:[%s4] sm:$0xff]
    %v1474 = vld [vmem:[%s4 + $0x8] sm:$0xff]
    %v1475 = vld [vmem:[%s4 + $0x10] sm:$0xff]
    %v1476 = vld [vmem:[%s4 + $0x18] sm:$0xff]
    %v1477 = vld [vmem:[%s4 + $0x20] sm:$0xff]
    %v1478 = vld [vmem:[%s4 + $0x28] sm:$0xff]
    %v1479 = vld [vmem:[%s4 + $0x30] sm:$0xff]
    %v1480 = vld [vmem:[%s4 + $0x38] sm:$0xff]
    %v1481 = vld [vmem:[%s4 + $0x40] sm:$0xff]
    %v1482 = vld [vmem:[%s4 + $0x48] sm:$0xff]
    %v1483 = vld [vmem:[%s4 + $0x50] sm:$0xff]
    %v1484 = vld [vmem:[%s4 + $0x58] sm:$0xff]
    %v1485 = vld [vmem:[%s4 + $0x60] sm:$0xff]
    %v1486 = vld [vmem:[%s4 + $0x68] sm:$0xff]
    %v1487 = vld [vmem:[%s4 + $0x70] sm:$0xff]
    %v1488 = vld [vmem:[%s4 + $0x78] sm:$0xff]
    %v1489 = vld [vmem:[%s4 + $0x80] sm:$0xff]
    %v1490 = vld [vmem:[%s4 + $0x88] sm:$0xff]
    %v1491 = vld [vmem:[%s4 + $0x90] sm:$0xff]
    %v1492 = vld [vmem:[%s4 + $0x98] sm:$0xff]
    %v1493 = vld [vmem:[%s4 + $0xa0] sm:$0xff]
    %v1494 = vld [vmem:[%s4 + $0xa8] sm:$0xff]
    %v1495 = vld [vmem:[%s4 + $0xb0] sm:$0xff]
    %v1496 = vld [vmem:[%s4 + $0xb8] sm:$0xff]
    %v1497 = vld [vmem:[%s4 + $0xc0] sm:$0xff]
    %v1498 = vld [vmem:[%s4 + $0xc8] sm:$0xff]
    %v1499 = vld [vmem:[%s4 + $0xd0] sm:$0xff]
    %v1500 = vld [vmem:[%s4 + $0xd8] sm:$0xff]
    %v1501 = vld [vmem:[%s4 + $0xe0] sm:$0xff]
    %v1502 = vld [vmem:[%s4 + $0xe8] sm:$0xff]
    %v1503 = vld [vmem:[%s4 + $0xf0] sm:$0xff]
    %v1504 = vld [vmem:[%s4 + $0xf8] sm:$0xff]
    %v1505 = vld [vmem:[%s4 + $0x100] sm:$0xff]
    %v1506 = vld [vmem:[%s4 + $0x108] sm:$0xff]
    %v1507 = vld [vmem:[%s4 + $0x110] sm:$0xff]
    %v1508 = vld [vmem:[%s4 + $0x118] sm:$0xff]
    %v1509 = vld [vmem:[%s4 + $0x120] sm:$0xff]
    %v1510 = vld [vmem:[%s4 + $0x128] sm:$0xff]
    %v1511 = vld [vmem:[%s4 + $0x130] sm:$0xff]
    %v1512 = vld [vmem:[%s4 + $0x138] sm:$0xff]
    %v1513 = vld [vmem:[%s4 + $0x140] sm:$0xff]
    %v1514 = vld [vmem:[%s4 + $0x148] sm:$0xff]
    %v1515 = vld [vmem:[%s4 + $0x150] sm:$0xff]
    %v1516 = vld [vmem:[%s4 + $0x158] sm:$0xff]
    %v1517 = vld [vmem:[%s4 + $0x160] sm:$0xff]
    %v1518 = vld [vmem:[%s4 + $0x168] sm:$0xff]
    %v1519 = vld [vmem:[%s4 + $0x170] sm:$0xff]
    %v1520 = vld [vmem:[%s4 + $0x178] sm:$0xff]
    %v1521 = vld [vmem:[%s4 + $0x180] sm:$0xff]
    %v1522 = vld [vmem:[%s4 + $0x188] sm:$0xff]
    %v1523 = vld [vmem:[%s4 + $0x190] sm:$0xff]
    %v1524 = vld [vmem:[%s4 + $0x198] sm:$0xff]
    %v1525 = vld [vmem:[%s4 + $0x1a0] sm:$0xff]
    %v1526 = vld [vmem:[%s4 + $0x1a8] sm:$0xff]
    %v1527 = vld [vmem:[%s4 + $0x1b0] sm:$0xff]
    %v1528 = vld [vmem:[%s4 + $0x1b8] sm:$0xff]
    %v1529 = vld [vmem:[%s4 + $0x1c0] sm:$0xff]
    %v1530 = vld [vmem:[%s4 + $0x1c8] sm:$0xff]
    %v1531 = vld [vmem:[%s4 + $0x1d0] sm:$0xff]
    %v1532 = vld [vmem:[%s4 + $0x1d8] sm:$0xff]
    %v1533 = vld [vmem:[%s4 + $0x1e0] sm:$0xff]
    %v1534 = vld [vmem:[%s4 + $0x1e8] sm:$0xff]
    %v1535 = vld [vmem:[%s4 + $0x1f0] sm:$0xff]
    %v1536 = vld [vmem:[%s4 + $0x1f8] sm:$0xff]
    %1537 = vmatprep.subr.mxu0 %v1506
    %1538 = vmatpush1.msra.mxu0 %v1505
    %1539 = vmatprep.subr.mxu0 %v1508
    %1540 = vmatpush1.msra.mxu0 %v1507
    %1541 = vmatprep.subr.mxu0 %v1510
    %1542 = vmatpush1.msra.mxu0 %v1509
    %1543 = vmatprep.subr.mxu0 %v1512
    %1544 = vmatpush1.msra.mxu0 %v1511
    %1545 = vmatprep.subr.mxu0 %v1514
    %1546 = vmatpush1.msra.mxu0 %v1513
    %1547 = vmatprep.subr.mxu0 %v1516
    %1548 = vmatpush1.msra.mxu0 %v1515
    %1549 = vmatprep.subr.mxu0 %v1518
    %1550 = vmatpush1.msra.mxu0 %v1517
    %1551 = vmatprep.subr.mxu0 %v1520
    %1552 = vmatpush1.msra.mxu0 %v1519
    %1553 = vmatprep.subr.mxu0 %v1522
    %1554 = vmatpush1.msra.mxu0 %v1521
    %1555 = vmatprep.subr.mxu0 %v1524
    %1556 = vmatpush1.msra.mxu0 %v1523
    %1557 = vmatprep.subr.mxu0 %v1526
    %1558 = vmatpush1.msra.mxu0 %v1525
    %1559 = vmatprep.subr.mxu0 %v1528
    %1560 = vmatpush1.msra.mxu0 %v1527
    %1561 = vmatprep.subr.mxu0 %v1530
    %1562 = vmatpush1.msra.mxu0 %v1529
    %1563 = vmatprep.subr.mxu0 %v1532
    %1564 = vmatpush1.msra.mxu0 %v1531
    %1565 = vmatprep.subr.mxu0 %v1534
    %1566 = vmatpush1.msra.mxu0 %v1533
    %1567 = vmatprep.subr.mxu0 %v1536
    %1568 = vmatpush1.msra.mxu0 %v1535
    %1569 = vmatprep.subr.mxu0 0.0
    %1570 = vmatpush1.msra.mxu0 0.0
    %1571 = vmatprep.subr.mxu0 0.0
    %1572 = vmatpush1.msra.mxu0 0.0
    %1573 = vmatprep.subr.mxu0 0.0
    %1574 = vmatpush1.msra.mxu0 0.0
    %1575 = vmatprep.subr.mxu0 0.0
    %1576 = vmatpush1.msra.mxu0 0.0
    %1577 = vmatprep.subr.mxu0 0.0
    %1578 = vmatpush1.msra.mxu0 0.0
    %1579 = vmatprep.subr.mxu0 0.0
    %1580 = vmatpush1.msra.mxu0 0.0
    %1581 = vmatprep.subr.mxu0 0.0
    %1582 = vmatpush1.msra.mxu0 0.0
    %1583 = vmatprep.subr.mxu0 0.0
    %1584 = vmatpush1.msra.mxu0 0.0
    %1585 = vmatprep.subr.mxu0 0.0
    %1586 = vmatpush1.msra.mxu0 0.0
    %1587 = vmatprep.subr.mxu0 0.0
    %1588 = vmatpush1.msra.mxu0 0.0
    %1589 = vmatprep.subr.mxu0 0.0
    %1590 = vmatpush1.msra.mxu0 0.0
    %1591 = vmatprep.subr.mxu0 0.0
    %1592 = vmatpush1.msra.mxu0 0.0
    %1593 = vmatprep.subr.mxu0 0.0
    %1594 = vmatpush1.msra.mxu0 0.0
    %1595 = vmatprep.subr.mxu0 0.0
    %1596 = vmatpush1.msra.mxu0 0.0
    %1597 = vmatprep.subr.mxu0 0.0
    %1598 = vmatpush1.msra.mxu0 0.0
    %1599 = vmatprep.subr.mxu0 0.0
    %1600 = vmatpush1.msra.mxu0 0.0
    %1601 = vmatprep.mubr.f32.mxu0 0.0
    %1602 = vmatmul.mubr.f32.gmra.mrb[0].mxu0 %v1435
    %v1603 = vpop.f32.mrb[0].mxu0
    %v1604 = vadd.f32 0.0, %v1603
    %v1605 = vpop.f32.mrb[0].mxu0
    %v1606 = vadd.f32 0.0, %v1605
    %1607 = vdwg.mxu0
    %1608 = vmatprep.subr.mxu0 %v1474
    %1609 = vmatpush1.msra.mxu0 %v1473
    %1610 = vmatprep.subr.mxu0 %v1476
    %1611 = vmatpush1.msra.mxu0 %v1475
    %1612 = vmatprep.subr.mxu0 %v1478
    %1613 = vmatpush1.msra.mxu0 %v1477
    %1614 = vmatprep.subr.mxu0 %v1480
    %1615 = vmatpush1.msra.mxu0 %v1479
    %1616 = vmatprep.subr.mxu0 %v1482
    %1617 = vmatpush1.msra.mxu0 %v1481
    %1618 = vmatprep.subr.mxu0 %v1484
    %1619 = vmatpush1.msra.mxu0 %v1483
    %1620 = vmatprep.subr.mxu0 %v1486
    %1621 = vmatpush1.msra.mxu0 %v1485
    %1622 = vmatprep.subr.mxu0 %v1488
    %1623 = vmatpush1.msra.mxu0 %v1487
    %1624 = vmatprep.subr.mxu0 %v1490
    %1625 = vmatpush1.msra.mxu0 %v1489
    %1626 = vmatprep.subr.mxu0 %v1492
    %1627 = vmatpush1.msra.mxu0 %v1491
    %1628 = vmatprep.subr.mxu0 %v1494
    %1629 = vmatpush1.msra.mxu0 %v1493
    %1630 = vmatprep.subr.mxu0 %v1496
    %1631 = vmatpush1.msra.mxu0 %v1495
    %1632 = vmatprep.subr.mxu0 %v1498
    %1633 = vmatpush1.msra.mxu0 %v1497
    %1634 = vmatprep.subr.mxu0 %v1500
    %1635 = vmatpush1.msra.mxu0 %v1499
    %1636 = vmatprep.subr.mxu0 %v1502
    %1637 = vmatpush1.msra.mxu0 %v1501
    %1638 = vmatprep.subr.mxu0 %v1504
    %1639 = vmatpush1.msra.mxu0 %v1503
    %1640 = vmatprep.subr.mxu0 0.0
    %1641 = vmatpush1.msra.mxu0 0.0
    %1642 = vmatprep.subr.mxu0 0.0
    %1643 = vmatpush1.msra.mxu0 0.0
    %1644 = vmatprep.subr.mxu0 0.0
    %1645 = vmatpush1.msra.mxu0 0.0
    %1646 = vmatprep.subr.mxu0 0.0
    %1647 = vmatpush1.msra.mxu0 0.0
    %1648 = vmatprep.subr.mxu0 0.0
    %1649 = vmatpush1.msra.mxu0 0.0
    %1650 = vmatprep.subr.mxu0 0.0
    %1651 = vmatpush1.msra.mxu0 0.0
    %1652 = vmatprep.subr.mxu0 0.0
    %1653 = vmatpush1.msra.mxu0 0.0
    %1654 = vmatprep.subr.mxu0 0.0
    %1655 = vmatpush1.msra.mxu0 0.0
    %1656 = vmatprep.subr.mxu0 0.0
    %1657 = vmatpush1.msra.mxu0 0.0
    %1658 = vmatprep.subr.mxu0 0.0
    %1659 = vmatpush1.msra.mxu0 0.0
    %1660 = vmatprep.subr.mxu0 0.0
    %1661 = vmatpush1.msra.mxu0 0.0
    %1662 = vmatprep.subr.mxu0 0.0
    %1663 = vmatpush1.msra.mxu0 0.0
    %1664 = vmatprep.subr.mxu0 0.0
    %1665 = vmatpush1.msra.mxu0 0.0
    %1666 = vmatprep.subr.mxu0 0.0
    %1667 = vmatpush1.msra.mxu0 0.0
    %1668 = vmatprep.subr.mxu0 0.0
    %1669 = vmatpush1.msra.mxu0 0.0
    %1670 = vmatprep.subr.mxu0 0.0
    %1671 = vmatpush1.msra.mxu0 0.0
    %1672 = vmatprep.mubr.f32.mxu0 0.0
    %1673 = vmatmul.mubr.f32.gmra.mrb[0].mxu0 %v1430
    %v1674 = vpop.f32.mrb[0].mxu0
    %v1675 = vadd.f32 %v1604, %v1674
    %v1676 = vpop.f32.mrb[0].mxu0
    %v1677 = vadd.f32 %v1606, %v1676
    %1678 = vdwg.mxu0
    %v1679 = vld [vmem:[%s4 + $0x200] sm:$0xff]
    %v1680 = vld [vmem:[%s4 + $0x208] sm:$0xff]
    %v1681 = vld [vmem:[%s4 + $0x210] sm:$0xff]
    %v1682 = vld [vmem:[%s4 + $0x218] sm:$0xff]
    %v1683 = vld [vmem:[%s4 + $0x220] sm:$0xff]
    %v1684 = vld [vmem:[%s4 + $0x228] sm:$0xff]
    %v1685 = vld [vmem:[%s4 + $0x230] sm:$0xff]
    %v1686 = vld [vmem:[%s4 + $0x238] sm:$0xff]
    %v1687 = vld [vmem:[%s4 + $0x240] sm:$0xff]
    %v1688 = vld [vmem:[%s4 + $0x248] sm:$0xff]
    %v1689 = vld [vmem:[%s4 + $0x250] sm:$0xff]
    %v1690 = vld [vmem:[%s4 + $0x258] sm:$0xff]
    %v1691 = vld [vmem:[%s4 + $0x260] sm:$0xff]
    %v1692 = vld [vmem:[%s4 + $0x268] sm:$0xff]
    %v1693 = vld [vmem:[%s4 + $0x270] sm:$0xff]
    %v1694 = vld [vmem:[%s4 + $0x278] sm:$0xff]
    %v1695 = vld [vmem:[%s4 + $0x280] sm:$0xff]
    %v1696 = vld [vmem:[%s4 + $0x288] sm:$0xff]
    %v1697 = vld [vmem:[%s4 + $0x290] sm:$0xff]
    %v1698 = vld [vmem:[%s4 + $0x298] sm:$0xff]
    %v1699 = vld [vmem:[%s4 + $0x2a0] sm:$0xff]
    %v1700 = vld [vmem:[%s4 + $0x2a8] sm:$0xff]
    %v1701 = vld [vmem:[%s4 + $0x2b0] sm:$0xff]
    %v1702 = vld [vmem:[%s4 + $0x2b8] sm:$0xff]
    %v1703 = vld [vmem:[%s4 + $0x2c0] sm:$0xff]
    %v1704 = vld [vmem:[%s4 + $0x2c8] sm:$0xff]
    %v1705 = vld [vmem:[%s4 + $0x2d0] sm:$0xff]
    %v1706 = vld [vmem:[%s4 + $0x2d8] sm:$0xff]
    %v1707 = vld [vmem:[%s4 + $0x2e0] sm:$0xff]
    %v1708 = vld [vmem:[%s4 + $0x2e8] sm:$0xff]
    %v1709 = vld [vmem:[%s4 + $0x2f0] sm:$0xff]
    %v1710 = vld [vmem:[%s4 + $0x2f8] sm:$0xff]
    %1711 = vmatprep.subr.mxu0 %v1680
    %1712 = vmatpush1.msra.mxu0 %v1679
    %1713 = vmatprep.subr.mxu0 %v1682
    %1714 = vmatpush1.msra.mxu0 %v1681
    %1715 = vmatprep.subr.mxu0 %v1684
    %1716 = vmatpush1.msra.mxu0 %v1683
    %1717 = vmatprep.subr.mxu0 %v1686
    %1718 = vmatpush1.msra.mxu0 %v1685
    %1719 = vmatprep.subr.mxu0 %v1688
    %1720 = vmatpush1.msra.mxu0 %v1687
    %1721 = vmatprep.subr.mxu0 %v1690
    %1722 = vmatpush1.msra.mxu0 %v1689
    %1723 = vmatprep.subr.mxu0 %v1692
    %1724 = vmatpush1.msra.mxu0 %v1691
    %1725 = vmatprep.subr.mxu0 %v1694
    %1726 = vmatpush1.msra.mxu0 %v1693
    %1727 = vmatprep.subr.mxu0 %v1696
    %1728 = vmatpush1.msra.mxu0 %v1695
    %1729 = vmatprep.subr.mxu0 %v1698
    %1730 = vmatpush1.msra.mxu0 %v1697
    %1731 = vmatprep.subr.mxu0 %v1700
    %1732 = vmatpush1.msra.mxu0 %v1699
    %1733 = vmatprep.subr.mxu0 %v1702
    %1734 = vmatpush1.msra.mxu0 %v1701
    %1735 = vmatprep.subr.mxu0 %v1704
    %1736 = vmatpush1.msra.mxu0 %v1703
    %1737 = vmatprep.subr.mxu0 %v1706
    %1738 = vmatpush1.msra.mxu0 %v1705
    %1739 = vmatprep.subr.mxu0 %v1708
    %1740 = vmatpush1.msra.mxu0 %v1707
    %1741 = vmatprep.subr.mxu0 %v1710
    %1742 = vmatpush1.msra.mxu0 %v1709
    %1743 = vmatprep.subr.mxu0 0.0
    %1744 = vmatpush1.msra.mxu0 0.0
    %1745 = vmatprep.subr.mxu0 0.0
    %1746 = vmatpush1.msra.mxu0 0.0
    %1747 = vmatprep.subr.mxu0 0.0
    %1748 = vmatpush1.msra.mxu0 0.0
    %1749 = vmatprep.subr.mxu0 0.0
    %1750 = vmatpush1.msra.mxu0 0.0
    %1751 = vmatprep.subr.mxu0 0.0
    %1752 = vmatpush1.msra.mxu0 0.0
    %1753 = vmatprep.subr.mxu0 0.0
    %1754 = vmatpush1.msra.mxu0 0.0
    %1755 = vmatprep.subr.mxu0 0.0
    %1756 = vmatpush1.msra.mxu0 0.0
    %1757 = vmatprep.subr.mxu0 0.0
    %1758 = vmatpush1.msra.mxu0 0.0
    %1759 = vmatprep.subr.mxu0 0.0
    %1760 = vmatpush1.msra.mxu0 0.0
    %1761 = vmatprep.subr.mxu0 0.0
    %1762 = vmatpush1.msra.mxu0 0.0
    %1763 = vmatprep.subr.mxu0 0.0
    %1764 = vmatpush1.msra.mxu0 0.0
    %1765 = vmatprep.subr.mxu0 0.0
    %1766 = vmatpush1.msra.mxu0 0.0
    %1767 = vmatprep.subr.mxu0 0.0
    %1768 = vmatpush1.msra.mxu0 0.0
    %1769 = vmatprep.subr.mxu0 0.0
    %1770 = vmatpush1.msra.mxu0 0.0
    %1771 = vmatprep.subr.mxu0 0.0
    %1772 = vmatpush1.msra.mxu0 0.0
    %1773 = vmatprep.subr.mxu0 0.0
    %1774 = vmatpush1.msra.mxu0 0.0
    %1775 = vmatprep.mubr.f32.mxu0 0.0
    %1776 = vmatmul.mubr.f32.gmra.mrb[0].mxu0 %v1440
    %v1777 = vpop.f32.mrb[0].mxu0
    %v1778 = vadd.f32 0.0, %v1777
    %v1779 = vpop.f32.mrb[0].mxu0
    %v1780 = vadd.f32 0.0, %v1779
    %1781 = vdwg.mxu0
    %v1782 = vadd.f32 %v1675, %v1778
    %v1783 = vadd.f32 %v1677, %v1780
    %v1784 = vld [vmem:[%s4 + $0x300] sm:$0xff]
    %v1785 = vld [vmem:[%s4 + $0x308] sm:$0xff]
    %v1786 = vld [vmem:[%s4 + $0x310] sm:$0xff]
    %v1787 = vld [vmem:[%s4 + $0x318] sm:$0xff]
    %v1788 = vld [vmem:[%s4 + $0x320] sm:$0xff]
    %v1789 = vld [vmem:[%s4 + $0x328] sm:$0xff]
    %v1790 = vld [vmem:[%s4 + $0x330] sm:$0xff]
    %v1791 = vld [vmem:[%s4 + $0x338] sm:$0xff]
    %v1792 = vld [vmem:[%s4 + $0x340] sm:$0xff]
    %v1793 = vld [vmem:[%s4 + $0x348] sm:$0xff]
    %v1794 = vld [vmem:[%s4 + $0x350] sm:$0xff]
    %v1795 = vld [vmem:[%s4 + $0x358] sm:$0xff]
    %v1796 = vld [vmem:[%s4 + $0x360] sm:$0xff]
    %v1797 = vld [vmem:[%s4 + $0x368] sm:$0xff]
    %v1798 = vld [vmem:[%s4 + $0x370] sm:$0xff]
    %v1799 = vld [vmem:[%s4 + $0x378] sm:$0xff]
    %v1800 = vld [vmem:[%s4 + $0x380] sm:$0xff]
    %v1801 = vld [vmem:[%s4 + $0x388] sm:$0xff]
    %v1802 = vld [vmem:[%s4 + $0x390] sm:$0xff]
    %v1803 = vld [vmem:[%s4 + $0x398] sm:$0xff]
    %v1804 = vld [vmem:[%s4 + $0x3a0] sm:$0xff]
    %v1805 = vld [vmem:[%s4 + $0x3a8] sm:$0xff]
    %v1806 = vld [vmem:[%s4 + $0x3b0] sm:$0xff]
    %v1807 = vld [vmem:[%s4 + $0x3b8] sm:$0xff]
    %v1808 = vld [vmem:[%s4 + $0x3c0] sm:$0xff]
    %v1809 = vld [vmem:[%s4 + $0x3c8] sm:$0xff]
    %v1810 = vld [vmem:[%s4 + $0x3d0] sm:$0xff]
    %v1811 = vld [vmem:[%s4 + $0x3d8] sm:$0xff]
    %v1812 = vld [vmem:[%s4 + $0x3e0] sm:$0xff]
    %v1813 = vld [vmem:[%s4 + $0x3e8] sm:$0xff]
    %v1814 = vld [vmem:[%s4 + $0x3f0] sm:$0xff]
    %v1815 = vld [vmem:[%s4 + $0x3f8] sm:$0xff]
    %1816 = vmatprep.subr.mxu0 %v1785
    %1817 = vmatpush1.msra.mxu0 %v1784
    %1818 = vmatprep.subr.mxu0 %v1787
    %1819 = vmatpush1.msra.mxu0 %v1786
    %1820 = vmatprep.subr.mxu0 %v1789
    %1821 = vmatpush1.msra.mxu0 %v1788
    %1822 = vmatprep.subr.mxu0 %v1791
    %1823 = vmatpush1.msra.mxu0 %v1790
    %1824 = vmatprep.subr.mxu0 %v1793
    %1825 = vmatpush1.msra.mxu0 %v1792
    %1826 = vmatprep.subr.mxu0 %v1795
    %1827 = vmatpush1.msra.mxu0 %v1794
    %1828 = vmatprep.subr.mxu0 %v1797
    %1829 = vmatpush1.msra.mxu0 %v1796
    %1830 = vmatprep.subr.mxu0 %v1799
    %1831 = vmatpush1.msra.mxu0 %v1798
    %1832 = vmatprep.subr.mxu0 %v1801
    %1833 = vmatpush1.msra.mxu0 %v1800
    %1834 = vmatprep.subr.mxu0 %v1803
    %1835 = vmatpush1.msra.mxu0 %v1802
    %1836 = vmatprep.subr.mxu0 %v1805
    %1837 = vmatpush1.msra.mxu0 %v1804
    %1838 = vmatprep.subr.mxu0 %v1807
    %1839 = vmatpush1.msra.mxu0 %v1806
    %1840 = vmatprep.subr.mxu0 %v1809
    %1841 = vmatpush1.msra.mxu0 %v1808
    %1842 = vmatprep.subr.mxu0 %v1811
    %1843 = vmatpush1.msra.mxu0 %v1810
    %1844 = vmatprep.subr.mxu0 %v1813
    %1845 = vmatpush1.msra.mxu0 %v1812
    %1846 = vmatprep.subr.mxu0 %v1815
    %1847 = vmatpush1.msra.mxu0 %v1814
    %1848 = vmatprep.subr.mxu0 0.0
    %1849 = vmatpush1.msra.mxu0 0.0
    %1850 = vmatprep.subr.mxu0 0.0
    %1851 = vmatpush1.msra.mxu0 0.0
    %1852 = vmatprep.subr.mxu0 0.0
    %1853 = vmatpush1.msra.mxu0 0.0
    %1854 = vmatprep.subr.mxu0 0.0
    %1855 = vmatpush1.msra.mxu0 0.0
    %1856 = vmatprep.subr.mxu0 0.0
    %1857 = vmatpush1.msra.mxu0 0.0
    %1858 = vmatprep.subr.mxu0 0.0
    %1859 = vmatpush1.msra.mxu0 0.0
    %1860 = vmatprep.subr.mxu0 0.0
    %1861 = vmatpush1.msra.mxu0 0.0
    %1862 = vmatprep.subr.mxu0 0.0
    %1863 = vmatpush1.msra.mxu0 0.0
    %1864 = vmatprep.subr.mxu0 0.0
    %1865 = vmatpush1.msra.mxu0 0.0
    %1866 = vmatprep.subr.mxu0 0.0
    %1867 = vmatpush1.msra.mxu0 0.0
    %1868 = vmatprep.subr.mxu0 0.0
    %1869 = vmatpush1.msra.mxu0 0.0
    %1870 = vmatprep.subr.mxu0 0.0
    %1871 = vmatpush1.msra.mxu0 0.0
    %1872 = vmatprep.subr.mxu0 0.0
    %1873 = vmatpush1.msra.mxu0 0.0
    %1874 = vmatprep.subr.mxu0 0.0
    %1875 = vmatpush1.msra.mxu0 0.0
    %1876 = vmatprep.subr.mxu0 0.0
    %1877 = vmatpush1.msra.mxu0 0.0
    %1878 = vmatprep.subr.mxu0 0.0
    %1879 = vmatpush1.msra.mxu0 0.0
    %1880 = vmatprep.mubr.f32.mxu0 0.0
    %1881 = vmatmul.mubr.f32.gmra.mrb[0].mxu0 %v1445
    %v1882 = vpop.f32.mrb[0].mxu0
    %v1883 = vadd.f32 0.0, %v1882
    %v1884 = vpop.f32.mrb[0].mxu0
    %v1885 = vadd.f32 0.0, %v1884
    %1886 = vdwg.mxu0
    %v1887 = vadd.f32 %v1782, %v1883
    %v1888 = vadd.f32 %v1783, %v1885
    %v1889 = vld [vmem:[%s4 + $0x400] sm:$0xff]
    %v1890 = vld [vmem:[%s4 + $0x408] sm:$0xff]
    %v1891 = vld [vmem:[%s4 + $0x410] sm:$0xff]
    %v1892 = vld [vmem:[%s4 + $0x418] sm:$0xff]
    %v1893 = vld [vmem:[%s4 + $0x420] sm:$0xff]
    %v1894 = vld [vmem:[%s4 + $0x428] sm:$0xff]
    %v1895 = vld [vmem:[%s4 + $0x430] sm:$0xff]
    %v1896 = vld [vmem:[%s4 + $0x438] sm:$0xff]
    %v1897 = vld [vmem:[%s4 + $0x440] sm:$0xff]
    %v1898 = vld [vmem:[%s4 + $0x448] sm:$0xff]
    %v1899 = vld [vmem:[%s4 + $0x450] sm:$0xff]
    %v1900 = vld [vmem:[%s4 + $0x458] sm:$0xff]
    %v1901 = vld [vmem:[%s4 + $0x460] sm:$0xff]
    %v1902 = vld [vmem:[%s4 + $0x468] sm:$0xff]
    %v1903 = vld [vmem:[%s4 + $0x470] sm:$0xff]
    %v1904 = vld [vmem:[%s4 + $0x478] sm:$0xff]
    %v1905 = vld [vmem:[%s4 + $0x480] sm:$0xff]
    %v1906 = vld [vmem:[%s4 + $0x488] sm:$0xff]
    %v1907 = vld [vmem:[%s4 + $0x490] sm:$0xff]
    %v1908 = vld [vmem:[%s4 + $0x498] sm:$0xff]
    %v1909 = vld [vmem:[%s4 + $0x4a0] sm:$0xff]
    %v1910 = vld [vmem:[%s4 + $0x4a8] sm:$0xff]
    %v1911 = vld [vmem:[%s4 + $0x4b0] sm:$0xff]
    %v1912 = vld [vmem:[%s4 + $0x4b8] sm:$0xff]
    %v1913 = vld [vmem:[%s4 + $0x4c0] sm:$0xff]
    %v1914 = vld [vmem:[%s4 + $0x4c8] sm:$0xff]
    %v1915 = vld [vmem:[%s4 + $0x4d0] sm:$0xff]
    %v1916 = vld [vmem:[%s4 + $0x4d8] sm:$0xff]
    %v1917 = vld [vmem:[%s4 + $0x4e0] sm:$0xff]
    %v1918 = vld [vmem:[%s4 + $0x4e8] sm:$0xff]
    %v1919 = vld [vmem:[%s4 + $0x4f0] sm:$0xff]
    %v1920 = vld [vmem:[%s4 + $0x4f8] sm:$0xff]
    %1921 = vmatprep.subr.mxu0 %v1890
    %1922 = vmatpush1.msra.mxu0 %v1889
    %1923 = vmatprep.subr.mxu0 %v1892
    %1924 = vmatpush1.msra.mxu0 %v1891
    %1925 = vmatprep.subr.mxu0 %v1894
    %1926 = vmatpush1.msra.mxu0 %v1893
    %1927 = vmatprep.subr.mxu0 %v1896
    %1928 = vmatpush1.msra.mxu0 %v1895
    %1929 = vmatprep.subr.mxu0 %v1898
    %1930 = vmatpush1.msra.mxu0 %v1897
    %1931 = vmatprep.subr.mxu0 %v1900
    %1932 = vmatpush1.msra.mxu0 %v1899
    %1933 = vmatprep.subr.mxu0 %v1902
    %1934 = vmatpush1.msra.mxu0 %v1901
    %1935 = vmatprep.subr.mxu0 %v1904
    %1936 = vmatpush1.msra.mxu0 %v1903
    %1937 = vmatprep.subr.mxu0 %v1906
    %1938 = vmatpush1.msra.mxu0 %v1905
    %1939 = vmatprep.subr.mxu0 %v1908
    %1940 = vmatpush1.msra.mxu0 %v1907
    %1941 = vmatprep.subr.mxu0 %v1910
    %1942 = vmatpush1.msra.mxu0 %v1909
    %1943 = vmatprep.subr.mxu0 %v1912
    %1944 = vmatpush1.msra.mxu0 %v1911
    %1945 = vmatprep.subr.mxu0 %v1914
    %1946 = vmatpush1.msra.mxu0 %v1913
    %1947 = vmatprep.subr.mxu0 %v1916
    %1948 = vmatpush1.msra.mxu0 %v1915
    %1949 = vmatprep.subr.mxu0 %v1918
    %1950 = vmatpush1.msra.mxu0 %v1917
    %1951 = vmatprep.subr.mxu0 %v1920
    %1952 = vmatpush1.msra.mxu0 %v1919
    %1953 = vmatprep.subr.mxu0 0.0
    %1954 = vmatpush1.msra.mxu0 0.0
    %1955 = vmatprep.subr.mxu0 0.0
    %1956 = vmatpush1.msra.mxu0 0.0
    %1957 = vmatprep.subr.mxu0 0.0
    %1958 = vmatpush1.msra.mxu0 0.0
    %1959 = vmatprep.subr.mxu0 0.0
    %1960 = vmatpush1.msra.mxu0 0.0
    %1961 = vmatprep.subr.mxu0 0.0
    %1962 = vmatpush1.msra.mxu0 0.0
    %1963 = vmatprep.subr.mxu0 0.0
    %1964 = vmatpush1.msra.mxu0 0.0
    %1965 = vmatprep.subr.mxu0 0.0
    %1966 = vmatpush1.msra.mxu0 0.0
    %1967 = vmatprep.subr.mxu0 0.0
    %1968 = vmatpush1.msra.mxu0 0.0
    %1969 = vmatprep.subr.mxu0 0.0
    %1970 = vmatpush1.msra.mxu0 0.0
    %1971 = vmatprep.subr.mxu0 0.0
    %1972 = vmatpush1.msra.mxu0 0.0
    %1973 = vmatprep.subr.mxu0 0.0
    %1974 = vmatpush1.msra.mxu0 0.0
    %1975 = vmatprep.subr.mxu0 0.0
    %1976 = vmatpush1.msra.mxu0 0.0
    %1977 = vmatprep.subr.mxu0 0.0
    %1978 = vmatpush1.msra.mxu0 0.0
    %1979 = vmatprep.subr.mxu0 0.0
    %1980 = vmatpush1.msra.mxu0 0.0
    %1981 = vmatprep.subr.mxu0 0.0
    %1982 = vmatpush1.msra.mxu0 0.0
    %1983 = vmatprep.subr.mxu0 0.0
    %1984 = vmatpush1.msra.mxu0 0.0
    %1985 = vmatprep.mubr.f32.mxu0 0.0
    %1986 = vmatmul.mubr.f32.gmra.mrb[0].mxu0 %v1450
    %v1987 = vpop.f32.mrb[0].mxu0
    %v1988 = vadd.f32 0.0, %v1987
    %v1989 = vpop.f32.mrb[0].mxu0
    %v1990 = vadd.f32 0.0, %v1989
    %1991 = vdwg.mxu0
    %v1992 = vadd.f32 %v1887, %v1988
    %v1993 = vadd.f32 %v1888, %v1990
    %v1994 = vld [vmem:[%s4 + $0x500] sm:$0xff]
    %v1995 = vld [vmem:[%s4 + $0x508] sm:$0xff]
    %v1996 = vld [vmem:[%s4 + $0x510] sm:$0xff]
    %v1997 = vld [vmem:[%s4 + $0x518] sm:$0xff]
    %v1998 = vld [vmem:[%s4 + $0x520] sm:$0xff]
    %v1999 = vld [vmem:[%s4 + $0x528] sm:$0xff]
    %v2000 = vld [vmem:[%s4 + $0x530] sm:$0xff]
    %v2001 = vld [vmem:[%s4 + $0x538] sm:$0xff]
    %v2002 = vld [vmem:[%s4 + $0x540] sm:$0xff]
    %v2003 = vld [vmem:[%s4 + $0x548] sm:$0xff]
    %v2004 = vld [vmem:[%s4 + $0x550] sm:$0xff]
    %v2005 = vld [vmem:[%s4 + $0x558] sm:$0xff]
    %v2006 = vld [vmem:[%s4 + $0x560] sm:$0xff]
    %v2007 = vld [vmem:[%s4 + $0x568] sm:$0xff]
    %v2008 = vld [vmem:[%s4 + $0x570] sm:$0xff]
    %v2009 = vld [vmem:[%s4 + $0x578] sm:$0xff]
    %v2010 = vld [vmem:[%s4 + $0x580] sm:$0xff]
    %v2011 = vld [vmem:[%s4 + $0x588] sm:$0xff]
    %v2012 = vld [vmem:[%s4 + $0x590] sm:$0xff]
    %v2013 = vld [vmem:[%s4 + $0x598] sm:$0xff]
    %v2014 = vld [vmem:[%s4 + $0x5a0] sm:$0xff]
    %v2015 = vld [vmem:[%s4 + $0x5a8] sm:$0xff]
    %v2016 = vld [vmem:[%s4 + $0x5b0] sm:$0xff]
    %v2017 = vld [vmem:[%s4 + $0x5b8] sm:$0xff]
    %v2018 = vld [vmem:[%s4 + $0x5c0] sm:$0xff]
    %v2019 = vld [vmem:[%s4 + $0x5c8] sm:$0xff]
    %v2020 = vld [vmem:[%s4 + $0x5d0] sm:$0xff]
    %v2021 = vld [vmem:[%s4 + $0x5d8] sm:$0xff]
    %v2022 = vld [vmem:[%s4 + $0x5e0] sm:$0xff]
    %v2023 = vld [vmem:[%s4 + $0x5e8] sm:$0xff]
    %v2024 = vld [vmem:[%s4 + $0x5f0] sm:$0xff]
    %v2025 = vld [vmem:[%s4 + $0x5f8] sm:$0xff]
    %2026 = vmatprep.subr.mxu0 %v1995
    %2027 = vmatpush1.msra.mxu0 %v1994
    %2028 = vmatprep.subr.mxu0 %v1997
    %2029 = vmatpush1.msra.mxu0 %v1996
    %2030 = vmatprep.subr.mxu0 %v1999
    %2031 = vmatpush1.msra.mxu0 %v1998
    %2032 = vmatprep.subr.mxu0 %v2001
    %2033 = vmatpush1.msra.mxu0 %v2000
    %2034 = vmatprep.subr.mxu0 %v2003
    %2035 = vmatpush1.msra.mxu0 %v2002
    %2036 = vmatprep.subr.mxu0 %v2005
    %2037 = vmatpush1.msra.mxu0 %v2004
    %2038 = vmatprep.subr.mxu0 %v2007
    %2039 = vmatpush1.msra.mxu0 %v2006
    %2040 = vmatprep.subr.mxu0 %v2009
    %2041 = vmatpush1.msra.mxu0 %v2008
    %2042 = vmatprep.subr.mxu0 %v2011
    %2043 = vmatpush1.msra.mxu0 %v2010
    %2044 = vmatprep.subr.mxu0 %v2013
    %2045 = vmatpush1.msra.mxu0 %v2012
    %2046 = vmatprep.subr.mxu0 %v2015
    %2047 = vmatpush1.msra.mxu0 %v2014
    %2048 = vmatprep.subr.mxu0 %v2017
    %2049 = vmatpush1.msra.mxu0 %v2016
    %2050 = vmatprep.subr.mxu0 %v2019
    %2051 = vmatpush1.msra.mxu0 %v2018
    %2052 = vmatprep.subr.mxu0 %v2021
    %2053 = vmatpush1.msra.mxu0 %v2020
    %2054 = vmatprep.subr.mxu0 %v2023
    %2055 = vmatpush1.msra.mxu0 %v2022
    %2056 = vmatprep.subr.mxu0 %v2025
    %2057 = vmatpush1.msra.mxu0 %v2024
    %2058 = vmatprep.subr.mxu0 0.0
    %2059 = vmatpush1.msra.mxu0 0.0
    %2060 = vmatprep.subr.mxu0 0.0
    %2061 = vmatpush1.msra.mxu0 0.0
    %2062 = vmatprep.subr.mxu0 0.0
    %2063 = vmatpush1.msra.mxu0 0.0
    %2064 = vmatprep.subr.mxu0 0.0
    %2065 = vmatpush1.msra.mxu0 0.0
    %2066 = vmatprep.subr.mxu0 0.0
    %2067 = vmatpush1.msra.mxu0 0.0
    %2068 = vmatprep.subr.mxu0 0.0
    %2069 = vmatpush1.msra.mxu0 0.0
    %2070 = vmatprep.subr.mxu0 0.0
    %2071 = vmatpush1.msra.mxu0 0.0
    %2072 = vmatprep.subr.mxu0 0.0
    %2073 = vmatpush1.msra.mxu0 0.0
    %2074 = vmatprep.subr.mxu0 0.0
    %2075 = vmatpush1.msra.mxu0 0.0
    %2076 = vmatprep.subr.mxu0 0.0
    %2077 = vmatpush1.msra.mxu0 0.0
    %2078 = vmatprep.subr.mxu0 0.0
    %2079 = vmatpush1.msra.mxu0 0.0
    %2080 = vmatprep.subr.mxu0 0.0
    %2081 = vmatpush1.msra.mxu0 0.0
    %2082 = vmatprep.subr.mxu0 0.0
    %2083 = vmatpush1.msra.mxu0 0.0
    %2084 = vmatprep.subr.mxu0 0.0
    %2085 = vmatpush1.msra.mxu0 0.0
    %2086 = vmatprep.subr.mxu0 0.0
    %2087 = vmatpush1.msra.mxu0 0.0
    %2088 = vmatprep.subr.mxu0 0.0
    %2089 = vmatpush1.msra.mxu0 0.0
    %2090 = vmatprep.mubr.f32.mxu0 0.0
    %2091 = vmatmul.mubr.f32.gmra.mrb[0].mxu0 %v1455
    %v2092 = vpop.f32.mrb[0].mxu0
    %v2093 = vadd.f32 0.0, %v2092
    %v2094 = vpop.f32.mrb[0].mxu0
    %v2095 = vadd.f32 0.0, %v2094
    %2096 = vdwg.mxu0
    %v2097 = vadd.f32 %v1992, %v2093
    %v2098 = vadd.f32 %v1993, %v2095
    %v2099 = vld [vmem:[%s4 + $0x600] sm:$0xff]
    %v2100 = vld [vmem:[%s4 + $0x608] sm:$0xff]
    %v2101 = vld [vmem:[%s4 + $0x610] sm:$0xff]
    %v2102 = vld [vmem:[%s4 + $0x618] sm:$0xff]
    %v2103 = vld [vmem:[%s4 + $0x620] sm:$0xff]
    %v2104 = vld [vmem:[%s4 + $0x628] sm:$0xff]
    %v2105 = vld [vmem:[%s4 + $0x630] sm:$0xff]
    %v2106 = vld [vmem:[%s4 + $0x638] sm:$0xff]
    %v2107 = vld [vmem:[%s4 + $0x640] sm:$0xff]
    %v2108 = vld [vmem:[%s4 + $0x648] sm:$0xff]
    %v2109 = vld [vmem:[%s4 + $0x650] sm:$0xff]
    %v2110 = vld [vmem:[%s4 + $0x658] sm:$0xff]
    %v2111 = vld [vmem:[%s4 + $0x660] sm:$0xff]
    %v2112 = vld [vmem:[%s4 + $0x668] sm:$0xff]
    %v2113 = vld [vmem:[%s4 + $0x670] sm:$0xff]
    %v2114 = vld [vmem:[%s4 + $0x678] sm:$0xff]
    %v2115 = vld [vmem:[%s4 + $0x680] sm:$0xff]
    %v2116 = vld [vmem:[%s4 + $0x688] sm:$0xff]
    %v2117 = vld [vmem:[%s4 + $0x690] sm:$0xff]
    %v2118 = vld [vmem:[%s4 + $0x698] sm:$0xff]
    %v2119 = vld [vmem:[%s4 + $0x6a0] sm:$0xff]
    %v2120 = vld [vmem:[%s4 + $0x6a8] sm:$0xff]
    %v2121 = vld [vmem:[%s4 + $0x6b0] sm:$0xff]
    %v2122 = vld [vmem:[%s4 + $0x6b8] sm:$0xff]
    %v2123 = vld [vmem:[%s4 + $0x6c0] sm:$0xff]
    %v2124 = vld [vmem:[%s4 + $0x6c8] sm:$0xff]
    %v2125 = vld [vmem:[%s4 + $0x6d0] sm:$0xff]
    %v2126 = vld [vmem:[%s4 + $0x6d8] sm:$0xff]
    %v2127 = vld [vmem:[%s4 + $0x6e0] sm:$0xff]
    %v2128 = vld [vmem:[%s4 + $0x6e8] sm:$0xff]
    %v2129 = vld [vmem:[%s4 + $0x6f0] sm:$0xff]
    %v2130 = vld [vmem:[%s4 + $0x6f8] sm:$0xff]
    %2131 = vmatprep.subr.mxu0 %v2100
    %2132 = vmatpush1.msra.mxu0 %v2099
    %2133 = vmatprep.subr.mxu0 %v2102
    %2134 = vmatpush1.msra.mxu0 %v2101
    %2135 = vmatprep.subr.mxu0 %v2104
    %2136 = vmatpush1.msra.mxu0 %v2103
    %2137 = vmatprep.subr.mxu0 %v2106
    %2138 = vmatpush1.msra.mxu0 %v2105
    %2139 = vmatprep.subr.mxu0 %v2108
    %2140 = vmatpush1.msra.mxu0 %v2107
    %2141 = vmatprep.subr.mxu0 %v2110
    %2142 = vmatpush1.msra.mxu0 %v2109
    %2143 = vmatprep.subr.mxu0 %v2112
    %2144 = vmatpush1.msra.mxu0 %v2111
    %2145 = vmatprep.subr.mxu0 %v2114
    %2146 = vmatpush1.msra.mxu0 %v2113
    %2147 = vmatprep.subr.mxu0 %v2116
    %2148 = vmatpush1.msra.mxu0 %v2115
    %2149 = vmatprep.subr.mxu0 %v2118
    %2150 = vmatpush1.msra.mxu0 %v2117
    %2151 = vmatprep.subr.mxu0 %v2120
    %2152 = vmatpush1.msra.mxu0 %v2119
    %2153 = vmatprep.subr.mxu0 %v2122
    %2154 = vmatpush1.msra.mxu0 %v2121
    %2155 = vmatprep.subr.mxu0 %v2124
    %2156 = vmatpush1.msra.mxu0 %v2123
    %2157 = vmatprep.subr.mxu0 %v2126
    %2158 = vmatpush1.msra.mxu0 %v2125
    %2159 = vmatprep.subr.mxu0 %v2128
    %2160 = vmatpush1.msra.mxu0 %v2127
    %2161 = vmatprep.subr.mxu0 %v2130
    %2162 = vmatpush1.msra.mxu0 %v2129
    %2163 = vmatprep.subr.mxu0 0.0
    %2164 = vmatpush1.msra.mxu0 0.0
    %2165 = vmatprep.subr.mxu0 0.0
    %2166 = vmatpush1.msra.mxu0 0.0
    %2167 = vmatprep.subr.mxu0 0.0
    %2168 = vmatpush1.msra.mxu0 0.0
    %2169 = vmatprep.subr.mxu0 0.0
    %2170 = vmatpush1.msra.mxu0 0.0
    %2171 = vmatprep.subr.mxu0 0.0
    %2172 = vmatpush1.msra.mxu0 0.0
    %2173 = vmatprep.subr.mxu0 0.0
    %2174 = vmatpush1.msra.mxu0 0.0
    %2175 = vmatprep.subr.mxu0 0.0
    %2176 = vmatpush1.msra.mxu0 0.0
    %2177 = vmatprep.subr.mxu0 0.0
    %2178 = vmatpush1.msra.mxu0 0.0
    %2179 = vmatprep.subr.mxu0 0.0
    %2180 = vmatpush1.msra.mxu0 0.0
    %2181 = vmatprep.subr.mxu0 0.0
    %2182 = vmatpush1.msra.mxu0 0.0
    %2183 = vmatprep.subr.mxu0 0.0
    %2184 = vmatpush1.msra.mxu0 0.0
    %2185 = vmatprep.subr.mxu0 0.0
    %2186 = vmatpush1.msra.mxu0 0.0
    %2187 = vmatprep.subr.mxu0 0.0
    %2188 = vmatpush1.msra.mxu0 0.0
    %2189 = vmatprep.subr.mxu0 0.0
    %2190 = vmatpush1.msra.mxu0 0.0
    %2191 = vmatprep.subr.mxu0 0.0
    %2192 = vmatpush1.msra.mxu0 0.0
    %2193 = vmatprep.subr.mxu0 0.0
    %2194 = vmatpush1.msra.mxu0 0.0
    %2195 = vmatprep.mubr.f32.mxu0 0.0
    %2196 = vmatmul.mubr.f32.gmra.mrb[0].mxu0 %v1460
    %v2197 = vpop.f32.mrb[0].mxu0
    %v2198 = vadd.f32 0.0, %v2197
    %v2199 = vpop.f32.mrb[0].mxu0
    %v2200 = vadd.f32 0.0, %v2199
    %2201 = vdwg.mxu0
    %v2202 = vadd.f32 %v2097, %v2198
    %v2203 = vadd.f32 %v2098, %v2200
    %v2204 = vld [vmem:[%s4 + $0x700] sm:$0xff]
    %v2205 = vld [vmem:[%s4 + $0x708] sm:$0xff]
    %v2206 = vld [vmem:[%s4 + $0x710] sm:$0xff]
    %v2207 = vld [vmem:[%s4 + $0x718] sm:$0xff]
    %v2208 = vld [vmem:[%s4 + $0x720] sm:$0xff]
    %v2209 = vld [vmem:[%s4 + $0x728] sm:$0xff]
    %v2210 = vld [vmem:[%s4 + $0x730] sm:$0xff]
    %v2211 = vld [vmem:[%s4 + $0x738] sm:$0xff]
    %v2212 = vld [vmem:[%s4 + $0x740] sm:$0xff]
    %v2213 = vld [vmem:[%s4 + $0x748] sm:$0xff]
    %v2214 = vld [vmem:[%s4 + $0x750] sm:$0xff]
    %v2215 = vld [vmem:[%s4 + $0x758] sm:$0xff]
    %v2216 = vld [vmem:[%s4 + $0x760] sm:$0xff]
    %v2217 = vld [vmem:[%s4 + $0x768] sm:$0xff]
    %v2218 = vld [vmem:[%s4 + $0x770] sm:$0xff]
    %v2219 = vld [vmem:[%s4 + $0x778] sm:$0xff]
    %v2220 = vld [vmem:[%s4 + $0x780] sm:$0xff]
    %v2221 = vld [vmem:[%s4 + $0x788] sm:$0xff]
    %v2222 = vld [vmem:[%s4 + $0x790] sm:$0xff]
    %v2223 = vld [vmem:[%s4 + $0x798] sm:$0xff]
    %v2224 = vld [vmem:[%s4 + $0x7a0] sm:$0xff]
    %v2225 = vld [vmem:[%s4 + $0x7a8] sm:$0xff]
    %v2226 = vld [vmem:[%s4 + $0x7b0] sm:$0xff]
    %v2227 = vld [vmem:[%s4 + $0x7b8] sm:$0xff]
    %v2228 = vld [vmem:[%s4 + $0x7c0] sm:$0xff]
    %v2229 = vld [vmem:[%s4 + $0x7c8] sm:$0xff]
    %v2230 = vld [vmem:[%s4 + $0x7d0] sm:$0xff]
    %v2231 = vld [vmem:[%s4 + $0x7d8] sm:$0xff]
    %v2232 = vld [vmem:[%s4 + $0x7e0] sm:$0xff]
    %v2233 = vld [vmem:[%s4 + $0x7e8] sm:$0xff]
    %v2234 = vld [vmem:[%s4 + $0x7f0] sm:$0xff]
    %v2235 = vld [vmem:[%s4 + $0x7f8] sm:$0xff]
    %2236 = vmatprep.subr.mxu0 %v2205
    %2237 = vmatpush1.msra.mxu0 %v2204
    %2238 = vmatprep.subr.mxu0 %v2207
    %2239 = vmatpush1.msra.mxu0 %v2206
    %2240 = vmatprep.subr.mxu0 %v2209
    %2241 = vmatpush1.msra.mxu0 %v2208
    %2242 = vmatprep.subr.mxu0 %v2211
    %2243 = vmatpush1.msra.mxu0 %v2210
    %2244 = vmatprep.subr.mxu0 %v2213
    %2245 = vmatpush1.msra.mxu0 %v2212
    %2246 = vmatprep.subr.mxu0 %v2215
    %2247 = vmatpush1.msra.mxu0 %v2214
    %2248 = vmatprep.subr.mxu0 %v2217
    %2249 = vmatpush1.msra.mxu0 %v2216
    %2250 = vmatprep.subr.mxu0 %v2219
    %2251 = vmatpush1.msra.mxu0 %v2218
    %2252 = vmatprep.subr.mxu0 %v2221
    %2253 = vmatpush1.msra.mxu0 %v2220
    %2254 = vmatprep.subr.mxu0 %v2223
    %2255 = vmatpush1.msra.mxu0 %v2222
    %2256 = vmatprep.subr.mxu0 %v2225
    %2257 = vmatpush1.msra.mxu0 %v2224
    %2258 = vmatprep.subr.mxu0 %v2227
    %2259 = vmatpush1.msra.mxu0 %v2226
    %2260 = vmatprep.subr.mxu0 %v2229
    %2261 = vmatpush1.msra.mxu0 %v2228
    %2262 = vmatprep.subr.mxu0 %v2231
    %2263 = vmatpush1.msra.mxu0 %v2230
    %2264 = vmatprep.subr.mxu0 %v2233
    %2265 = vmatpush1.msra.mxu0 %v2232
    %2266 = vmatprep.subr.mxu0 %v2235
    %2267 = vmatpush1.msra.mxu0 %v2234
    %2268 = vmatprep.subr.mxu0 0.0
    %2269 = vmatpush1.msra.mxu0 0.0
    %2270 = vmatprep.subr.mxu0 0.0
    %2271 = vmatpush1.msra.mxu0 0.0
    %2272 = vmatprep.subr.mxu0 0.0
    %2273 = vmatpush1.msra.mxu0 0.0
    %2274 = vmatprep.subr.mxu0 0.0
    %2275 = vmatpush1.msra.mxu0 0.0
    %2276 = vmatprep.subr.mxu0 0.0
    %2277 = vmatpush1.msra.mxu0 0.0
    %2278 = vmatprep.subr.mxu0 0.0
    %2279 = vmatpush1.msra.mxu0 0.0
    %2280 = vmatprep.subr.mxu0 0.0
    %2281 = vmatpush1.msra.mxu0 0.0
    %2282 = vmatprep.subr.mxu0 0.0
    %2283 = vmatpush1.msra.mxu0 0.0
    %2284 = vmatprep.subr.mxu0 0.0
    %2285 = vmatpush1.msra.mxu0 0.0
    %2286 = vmatprep.subr.mxu0 0.0
    %2287 = vmatpush1.msra.mxu0 0.0
    %2288 = vmatprep.subr.mxu0 0.0
    %2289 = vmatpush1.msra.mxu0 0.0
    %2290 = vmatprep.subr.mxu0 0.0
    %2291 = vmatpush1.msra.mxu0 0.0
    %2292 = vmatprep.subr.mxu0 0.0
    %2293 = vmatpush1.msra.mxu0 0.0
    %2294 = vmatprep.subr.mxu0 0.0
    %2295 = vmatpush1.msra.mxu0 0.0
    %2296 = vmatprep.subr.mxu0 0.0
    %2297 = vmatpush1.msra.mxu0 0.0
    %2298 = vmatprep.subr.mxu0 0.0
    %2299 = vmatpush1.msra.mxu0 0.0
    %2300 = vmatprep.mubr.f32.mxu0 0.0
    %2301 = vmatmul.mubr.f32.gmra.mrb[0].mxu0 %v1465
    %v2302 = vpop.f32.mrb[0].mxu0
    %v2303 = vadd.f32 0.0, %v2302
    %v2304 = vpop.f32.mrb[0].mxu0
    %v2305 = vadd.f32 0.0, %v2304
    %2306 = vdwg.mxu0
    %v2307 = vadd.f32 %v2202, %v2303
    %v2308 = vadd.f32 %v2203, %v2305
    %v2309 = vld [vmem:[%s4 + $0x800] sm:$0xff]
    %v2310 = vld [vmem:[%s4 + $0x808] sm:$0xff]
    %v2311 = vld [vmem:[%s4 + $0x810] sm:$0xff]
    %v2312 = vld [vmem:[%s4 + $0x818] sm:$0xff]
    %v2313 = vld [vmem:[%s4 + $0x820] sm:$0xff]
    %v2314 = vld [vmem:[%s4 + $0x828] sm:$0xff]
    %v2315 = vld [vmem:[%s4 + $0x830] sm:$0xff]
    %v2316 = vld [vmem:[%s4 + $0x838] sm:$0xff]
    %v2317 = vld [vmem:[%s4 + $0x840] sm:$0xff]
    %v2318 = vld [vmem:[%s4 + $0x848] sm:$0xff]
    %v2319 = vld [vmem:[%s4 + $0x850] sm:$0xff]
    %v2320 = vld [vmem:[%s4 + $0x858] sm:$0xff]
    %v2321 = vld [vmem:[%s4 + $0x860] sm:$0xff]
    %v2322 = vld [vmem:[%s4 + $0x868] sm:$0xff]
    %v2323 = vld [vmem:[%s4 + $0x870] sm:$0xff]
    %v2324 = vld [vmem:[%s4 + $0x878] sm:$0xff]
    %v2325 = vld [vmem:[%s4 + $0x880] sm:$0xff]
    %v2326 = vld [vmem:[%s4 + $0x888] sm:$0xff]
    %v2327 = vld [vmem:[%s4 + $0x890] sm:$0xff]
    %v2328 = vld [vmem:[%s4 + $0x898] sm:$0xff]
    %v2329 = vld [vmem:[%s4 + $0x8a0] sm:$0xff]
    %v2330 = vld [vmem:[%s4 + $0x8a8] sm:$0xff]
    %v2331 = vld [vmem:[%s4 + $0x8b0] sm:$0xff]
    %v2332 = vld [vmem:[%s4 + $0x8b8] sm:$0xff]
    %v2333 = vld [vmem:[%s4 + $0x8c0] sm:$0xff]
    %v2334 = vld [vmem:[%s4 + $0x8c8] sm:$0xff]
    %v2335 = vld [vmem:[%s4 + $0x8d0] sm:$0xff]
    %v2336 = vld [vmem:[%s4 + $0x8d8] sm:$0xff]
    %v2337 = vld [vmem:[%s4 + $0x8e0] sm:$0xff]
    %v2338 = vld [vmem:[%s4 + $0x8e8] sm:$0xff]
    %v2339 = vld [vmem:[%s4 + $0x8f0] sm:$0xff]
    %v2340 = vld [vmem:[%s4 + $0x8f8] sm:$0xff]
    %2341 = vmatprep.subr.mxu0 %v2310
    %2342 = vmatpush1.msra.mxu0 %v2309
    %2343 = vmatprep.subr.mxu0 %v2312
    %2344 = vmatpush1.msra.mxu0 %v2311
    %2345 = vmatprep.subr.mxu0 %v2314
    %2346 = vmatpush1.msra.mxu0 %v2313
    %2347 = vmatprep.subr.mxu0 %v2316
    %2348 = vmatpush1.msra.mxu0 %v2315
    %2349 = vmatprep.subr.mxu0 %v2318
    %2350 = vmatpush1.msra.mxu0 %v2317
    %2351 = vmatprep.subr.mxu0 %v2320
    %2352 = vmatpush1.msra.mxu0 %v2319
    %2353 = vmatprep.subr.mxu0 %v2322
    %2354 = vmatpush1.msra.mxu0 %v2321
    %2355 = vmatprep.subr.mxu0 %v2324
    %2356 = vmatpush1.msra.mxu0 %v2323
    %2357 = vmatprep.subr.mxu0 %v2326
    %2358 = vmatpush1.msra.mxu0 %v2325
    %2359 = vmatprep.subr.mxu0 %v2328
    %2360 = vmatpush1.msra.mxu0 %v2327
    %2361 = vmatprep.subr.mxu0 %v2330
    %2362 = vmatpush1.msra.mxu0 %v2329
    %2363 = vmatprep.subr.mxu0 %v2332
    %2364 = vmatpush1.msra.mxu0 %v2331
    %2365 = vmatprep.subr.mxu0 %v2334
    %2366 = vmatpush1.msra.mxu0 %v2333
    %2367 = vmatprep.subr.mxu0 %v2336
    %2368 = vmatpush1.msra.mxu0 %v2335
    %2369 = vmatprep.subr.mxu0 %v2338
    %2370 = vmatpush1.msra.mxu0 %v2337
    %2371 = vmatprep.subr.mxu0 %v2340
    %2372 = vmatpush1.msra.mxu0 %v2339
    %2373 = vmatprep.subr.mxu0 0.0
    %2374 = vmatpush1.msra.mxu0 0.0
    %2375 = vmatprep.subr.mxu0 0.0
    %2376 = vmatpush1.msra.mxu0 0.0
    %2377 = vmatprep.subr.mxu0 0.0
    %2378 = vmatpush1.msra.mxu0 0.0
    %2379 = vmatprep.subr.mxu0 0.0
    %2380 = vmatpush1.msra.mxu0 0.0
    %2381 = vmatprep.subr.mxu0 0.0
    %2382 = vmatpush1.msra.mxu0 0.0
    %2383 = vmatprep.subr.mxu0 0.0
    %2384 = vmatpush1.msra.mxu0 0.0
    %2385 = vmatprep.subr.mxu0 0.0
    %2386 = vmatpush1.msra.mxu0 0.0
    %2387 = vmatprep.subr.mxu0 0.0
    %2388 = vmatpush1.msra.mxu0 0.0
    %2389 = vmatprep.subr.mxu0 0.0
    %2390 = vmatpush1.msra.mxu0 0.0
    %2391 = vmatprep.subr.mxu0 0.0
    %2392 = vmatpush1.msra.mxu0 0.0
    %2393 = vmatprep.subr.mxu0 0.0
    %2394 = vmatpush1.msra.mxu0 0.0
    %2395 = vmatprep.subr.mxu0 0.0
    %2396 = vmatpush1.msra.mxu0 0.0
    %2397 = vmatprep.subr.mxu0 0.0
    %2398 = vmatpush1.msra.mxu0 0.0
    %2399 = vmatprep.subr.mxu0 0.0
    %2400 = vmatpush1.msra.mxu0 0.0
    %2401 = vmatprep.subr.mxu0 0.0
    %2402 = vmatpush1.msra.mxu0 0.0
    %2403 = vmatprep.subr.mxu0 0.0
    %2404 = vmatpush1.msra.mxu0 0.0
    %2405 = vmatprep.mubr.f32.mxu0 0.0
    %2406 = vmatmul.mubr.f32.gmra.mrb[0].mxu0 %v1470
    %v2407 = vpop.f32.mrb[0].mxu0
    %v2408 = vadd.f32 0.0, %v2407
    %v2409 = vpop.f32.mrb[0].mxu0
    %v2410 = vadd.f32 0.0, %v2409
    %2411 = vdwg.mxu0
    %v2412 = vadd.f32 %v2307, %v2408
    %v2413 = vadd.f32 %v2308, %v2410
    %v2416 = vrot.slane %v2412, 2
    %v2417 = vrot.slane %v2413, 2
    %v2420 = vmax.f32 %v2412, %v2416
    %v2421 = vmax.f32 %v2413, %v2417
    %v2424 = vrot.slane %v2420, 4
    %v2425 = vrot.slane %v2421, 4
    %v2428 = vmax.f32 %v2420, %v2424
    %v2429 = vmax.f32 %v2421, %v2425
    %v2430 = vld [vmem:[%s5] sm:$0x3]
    %v2432 = vlaneseq
    %v2433 = vshrl.u32 %v2432, 7
    %v2434 = vsub.s32 0, %v2433
    %v2435 = vrot.slane %v2430, %v2434
    %v2436 = vlaneseq
    %v2437 = vshrl.u32 %v2436, 7
    %v2438 = vsub.s32 1, %v2437
    %v2439 = vrot.slane %v2430, %v2438
    %v2442 = vadd.f32 %v2428, %v2435
    %v2443 = vadd.f32 %v2429, %v2439
    %vm2444 = vcmp.gt.f32.partialorder %v2442, 0.0
    %vm2445 = vcmp.gt.f32.partialorder %v2443, 0.0
    %v2446 = vmul.f32 %v2442, 0.01
    %v2447 = vmul.f32 %v2443, 0.01
    %v2448 = vsel %vm2444, %v2442, %v2446
    %v2449 = vsel %vm2445, %v2443, %v2447
    %v2450 = vld [vmem:[%s6] sm:$0xff]
    %v2451 = vld [vmem:[%s6 + $0x8] sm:$0xff]
    %v2452 = vld [vmem:[%s6 + $0x10] sm:$0xff]
    %v2453 = vld [vmem:[%s6 + $0x18] sm:$0xff]
    %v2454 = vld [vmem:[%s6 + $0x20] sm:$0xff]
    %v2455 = vld [vmem:[%s6 + $0x28] sm:$0xff]
    %v2456 = vld [vmem:[%s6 + $0x30] sm:$0xff]
    %v2457 = vld [vmem:[%s6 + $0x38] sm:$0xff]
    %v2458 = vld [vmem:[%s6 + $0x40] sm:$0xff]
    %v2459 = vld [vmem:[%s6 + $0x48] sm:$0xff]
    %v2460 = vld [vmem:[%s6 + $0x50] sm:$0xff]
    %v2461 = vld [vmem:[%s6 + $0x58] sm:$0xff]
    %v2462 = vld [vmem:[%s6 + $0x60] sm:$0xff]
    %v2463 = vld [vmem:[%s6 + $0x68] sm:$0xff]
    %v2464 = vld [vmem:[%s6 + $0x70] sm:$0xff]
    %v2465 = vld [vmem:[%s6 + $0x78] sm:$0xff]
    %v2466 = vld [vmem:[%s6 + $0x80] sm:$0xff]
    %v2467 = vld [vmem:[%s6 + $0x88] sm:$0xff]
    %v2468 = vld [vmem:[%s6 + $0x90] sm:$0xff]
    %v2469 = vld [vmem:[%s6 + $0x98] sm:$0xff]
    %v2470 = vld [vmem:[%s6 + $0xa0] sm:$0xff]
    %v2471 = vld [vmem:[%s6 + $0xa8] sm:$0xff]
    %v2472 = vld [vmem:[%s6 + $0xb0] sm:$0xff]
    %v2473 = vld [vmem:[%s6 + $0xb8] sm:$0xff]
    %v2474 = vld [vmem:[%s6 + $0xc0] sm:$0xff]
    %v2475 = vld [vmem:[%s6 + $0xc8] sm:$0xff]
    %v2476 = vld [vmem:[%s6 + $0xd0] sm:$0xff]
    %v2477 = vld [vmem:[%s6 + $0xd8] sm:$0xff]
    %v2478 = vld [vmem:[%s6 + $0xe0] sm:$0xff]
    %v2479 = vld [vmem:[%s6 + $0xe8] sm:$0xff]
    %v2480 = vld [vmem:[%s6 + $0xf0] sm:$0xff]
    %v2481 = vld [vmem:[%s6 + $0xf8] sm:$0xff]
    %v2482 = vld [vmem:[%s6 + $0x100] sm:$0xff]
    %v2483 = vld [vmem:[%s6 + $0x108] sm:$0xff]
    %v2484 = vld [vmem:[%s6 + $0x110] sm:$0xff]
    %v2485 = vld [vmem:[%s6 + $0x118] sm:$0xff]
    %v2486 = vld [vmem:[%s6 + $0x120] sm:$0xff]
    %v2487 = vld [vmem:[%s6 + $0x128] sm:$0xff]
    %v2488 = vld [vmem:[%s6 + $0x130] sm:$0xff]
    %v2489 = vld [vmem:[%s6 + $0x138] sm:$0xff]
    %v2490 = vld [vmem:[%s6 + $0x140] sm:$0xff]
    %v2491 = vld [vmem:[%s6 + $0x148] sm:$0xff]
    %v2492 = vld [vmem:[%s6 + $0x150] sm:$0xff]
    %v2493 = vld [vmem:[%s6 + $0x158] sm:$0xff]
    %v2494 = vld [vmem:[%s6 + $0x160] sm:$0xff]
    %v2495 = vld [vmem:[%s6 + $0x168] sm:$0xff]
    %v2496 = vld [vmem:[%s6 + $0x170] sm:$0xff]
    %v2497 = vld [vmem:[%s6 + $0x178] sm:$0xff]
    %v2498 = vld [vmem:[%s6 + $0x180] sm:$0xff]
    %v2499 = vld [vmem:[%s6 + $0x188] sm:$0xff]
    %v2500 = vld [vmem:[%s6 + $0x190] sm:$0xff]
    %v2501 = vld [vmem:[%s6 + $0x198] sm:$0xff]
    %v2502 = vld [vmem:[%s6 + $0x1a0] sm:$0xff]
    %v2503 = vld [vmem:[%s6 + $0x1a8] sm:$0xff]
    %v2504 = vld [vmem:[%s6 + $0x1b0] sm:$0xff]
    %v2505 = vld [vmem:[%s6 + $0x1b8] sm:$0xff]
    %v2506 = vld [vmem:[%s6 + $0x1c0] sm:$0xff]
    %v2507 = vld [vmem:[%s6 + $0x1c8] sm:$0xff]
    %v2508 = vld [vmem:[%s6 + $0x1d0] sm:$0xff]
    %v2509 = vld [vmem:[%s6 + $0x1d8] sm:$0xff]
    %v2510 = vld [vmem:[%s6 + $0x1e0] sm:$0xff]
    %v2511 = vld [vmem:[%s6 + $0x1e8] sm:$0xff]
    %v2512 = vld [vmem:[%s6 + $0x1f0] sm:$0xff]
    %v2513 = vld [vmem:[%s6 + $0x1f8] sm:$0xff]
    %v2514 = vld [vmem:[%s7] sm:$0x3]
    %v2516 = vlaneseq
    %v2517 = vshrl.u32 %v2516, 7
    %v2518 = vsub.s32 0, %v2517
    %v2519 = vrot.slane %v2514, %v2518
    %v2520 = vlaneseq
    %v2521 = vshrl.u32 %v2520, 7
    %v2522 = vsub.s32 1, %v2521
    %v2523 = vrot.slane %v2514, %v2522
    %2526 = vmatprep.subr.mxu0 %v2451
    %2527 = vmatpush1.msra.mxu0 %v2450
    %2528 = vmatprep.subr.mxu0 %v2453
    %2529 = vmatpush1.msra.mxu0 %v2452
    %2530 = vmatprep.subr.mxu0 %v2455
    %2531 = vmatpush1.msra.mxu0 %v2454
    %2532 = vmatprep.subr.mxu0 %v2457
    %2533 = vmatpush1.msra.mxu0 %v2456
    %2534 = vmatprep.subr.mxu0 %v2459
    %2535 = vmatpush1.msra.mxu0 %v2458
    %2536 = vmatprep.subr.mxu0 %v2461
    %2537 = vmatpush1.msra.mxu0 %v2460
    %2538 = vmatprep.subr.mxu0 %v2463
    %2539 = vmatpush1.msra.mxu0 %v2462
    %2540 = vmatprep.subr.mxu0 %v2465
    %2541 = vmatpush1.msra.mxu0 %v2464
    %2542 = vmatprep.subr.mxu0 %v2467
    %2543 = vmatpush1.msra.mxu0 %v2466
    %2544 = vmatprep.subr.mxu0 %v2469
    %2545 = vmatpush1.msra.mxu0 %v2468
    %2546 = vmatprep.subr.mxu0 %v2471
    %2547 = vmatpush1.msra.mxu0 %v2470
    %2548 = vmatprep.subr.mxu0 %v2473
    %2549 = vmatpush1.msra.mxu0 %v2472
    %2550 = vmatprep.subr.mxu0 %v2475
    %2551 = vmatpush1.msra.mxu0 %v2474
    %2552 = vmatprep.subr.mxu0 %v2477
    %2553 = vmatpush1.msra.mxu0 %v2476
    %2554 = vmatprep.subr.mxu0 %v2479
    %2555 = vmatpush1.msra.mxu0 %v2478
    %2556 = vmatprep.subr.mxu0 %v2481
    %2557 = vmatpush1.msra.mxu0 %v2480
    %2558 = vmatprep.subr.mxu0 %v2483
    %2559 = vmatpush1.msra.mxu0 %v2482
    %2560 = vmatprep.subr.mxu0 %v2485
    %2561 = vmatpush1.msra.mxu0 %v2484
    %2562 = vmatprep.subr.mxu0 %v2487
    %2563 = vmatpush1.msra.mxu0 %v2486
    %2564 = vmatprep.subr.mxu0 %v2489
    %2565 = vmatpush1.msra.mxu0 %v2488
    %2566 = vmatprep.subr.mxu0 %v2491
    %2567 = vmatpush1.msra.mxu0 %v2490
    %2568 = vmatprep.subr.mxu0 %v2493
    %2569 = vmatpush1.msra.mxu0 %v2492
    %2570 = vmatprep.subr.mxu0 %v2495
    %2571 = vmatpush1.msra.mxu0 %v2494
    %2572 = vmatprep.subr.mxu0 %v2497
    %2573 = vmatpush1.msra.mxu0 %v2496
    %2574 = vmatprep.subr.mxu0 %v2499
    %2575 = vmatpush1.msra.mxu0 %v2498
    %2576 = vmatprep.subr.mxu0 %v2501
    %2577 = vmatpush1.msra.mxu0 %v2500
    %2578 = vmatprep.subr.mxu0 %v2503
    %2579 = vmatpush1.msra.mxu0 %v2502
    %2580 = vmatprep.subr.mxu0 %v2505
    %2581 = vmatpush1.msra.mxu0 %v2504
    %2582 = vmatprep.subr.mxu0 %v2507
    %2583 = vmatpush1.msra.mxu0 %v2506
    %2584 = vmatprep.subr.mxu0 %v2509
    %2585 = vmatpush1.msra.mxu0 %v2508
    %2586 = vmatprep.subr.mxu0 %v2511
    %2587 = vmatpush1.msra.mxu0 %v2510
    %2588 = vmatprep.subr.mxu0 %v2513
    %2589 = vmatpush1.msra.mxu0 %v2512
    %2590 = vmatprep.mubr.f32.mxu0 %v2449
    %2591 = vmatmul.mubr.f32.gmra.mrb[0].mxu0 %v2448
    %v2592 = vpop.f32.mrb[0].mxu0
    %v2593 = vadd.f32 %v2519, %v2592
    %v2594 = vpop.f32.mrb[0].mxu0
    %v2595 = vadd.f32 %v2523, %v2594
    %2596 = vdwg.mxu0
    %vm2597 = vcmp.gt.f32.partialorder %v2593, 0.0
    %vm2598 = vcmp.gt.f32.partialorder %v2595, 0.0
    %v2599 = vmul.f32 %v2593, 0.01
    %v2600 = vmul.f32 %v2595, 0.01
    %v2601 = vsel %vm2597, %v2593, %v2599
    %v2602 = vsel %vm2598, %v2595, %v2600
    %v2605 = vcombine.low %v2601, %v2602
    %v2607 = vunpack.c.l.s4 1983009808
    %v2608 = vunpack.c.0.s8 %v2607
    %v2609 = vlaneseq
    %v2610 = vshrl.u32 %v2609, 7
    %v2611 = vsub.s32 %v2608, %v2610
    %v2612 = vrot.slane %v2605, %v2611
    %2614 = vst [vmem:[#allocation2] sm:$0xf] %v2612
    // Predicated region
    $region34: #{cnn_forward.3} parent=1 // pred_check
      _
    $region35: #{cnn_forward.3} parent=1 // pred_check_branch
      %2616 = sbr.rel (0) target = $region37
    $region36: #{cnn_forward.3} parent=1 // pred_region
      %s2618 = ssub.s32 64, 64
      %2619 = vsyncadd [#allocation3], %s2618
      %s2621 = sshll.u32 [#allocation2], 4
      %s2622 = int_to_ptr.vmem [resolvable:$true] %s2621
      %2624 = dma.vmem_to_hbm [thread:$0]  %s2622, 64, %s8, [#allocation3]
    $region37: #{cnn_forward.3} parent=1 // pred_fallthru
      _
    // Predicated region
    $region38: #{cnn_forward.3} parent=1 // pred_check
      _
    $region39: #{cnn_forward.3} parent=1 // pred_check_branch
      %2626 = sbr.rel (0) target = $region41
    $region40: #{cnn_forward.3} parent=1 // pred_region
      %2627 = dma.done [#allocation3], 64
    $region41: #{cnn_forward.3} parent=1 // pred_fallthru
      _
    %2628 = vsyncpa [#allocation3], 1

</llo_original>
